<compile_context>
chip_gen: v7x
topology: tpu7x:2x2x1
jax: 0.10.0
libtpu: 0.0.40
codegen_flags: <defaults>
</compile_context>

<pallas_src>
import math
import functools

import jax
import jax.numpy as jnp
from jax.experimental import pallas as pl
from jax.experimental.pallas import tpu as pltpu


# --------------------------- fused decoder layer ----------------------------

def _decoder_layer_kernel(
    x_ref, z_ref,
    sa_wq_ref, sa_bq_ref, sa_wo_ref, sa_bo_ref,
    ca_wq_ref, ca_bq_ref, ca_wo_ref, ca_bo_ref,
    w1_ref, b1_ref, w2_ref, b2_ref,
    ln1_g_ref, ln1_b_ref, ln2_g_ref, ln2_b_ref, ln3_g_ref, ln3_b_ref,
    o_ref,
    *, num_heads, d_k, eps):
    """One decoder layer for a single batch element, entirely in VMEM."""
    scale = 1.0 / math.sqrt(d_k)

    def matmul(a_f32, w_ref, b_ref):
        # bf16 MXU inputs, f32 accumulation; bias added in f32.
        return jnp.dot(a_f32.astype(jnp.bfloat16), w_ref[...],
                       preferred_element_type=jnp.float32) + b_ref[...]

    def mha(q_proj, kv_proj, wo_ref, bo_ref):
        # Reference bug reproduced: q_linear is applied to q, k and v, so the
        # caller passes the (shared) projections; k == v == kv_proj exactly.
        q = q_proj * scale                     # fold 1/sqrt(d_k) into q (O(S*dk))
        heads = []
        for h in range(num_heads):             # static unroll, H is small
            sl = slice(h * d_k, (h + 1) * d_k)
            qh = q[:, sl]                      # (S, d_k) f32
            kvh = kv_proj[:, sl]               # (S, d_k) f32  (k == v)
            s = jnp.dot(qh.astype(jnp.bfloat16), kvh.T.astype(jnp.bfloat16),
                        preferred_element_type=jnp.float32)        # (S, S)
            m = jnp.max(s, axis=-1, keepdims=True)
            e = jnp.exp(s - m)
            inv_l = pl.reciprocal(jnp.sum(e, axis=-1, keepdims=True), approx=True)
            p = e * inv_l                                           # softmax (f32)
            heads.append(jnp.dot(p.astype(jnp.bfloat16), kvh.astype(jnp.bfloat16),
                                 preferred_element_type=jnp.float32))
        attn = jnp.concatenate(heads, axis=-1)                      # (S, D) lane-dense
        return matmul(attn, wo_ref, bo_ref)

    def add_ln(a, b, g_ref, beta_ref):
        h = a + b
        mean = jnp.mean(h, axis=-1, keepdims=True)
        var = jnp.mean((h - mean) ** 2, axis=-1, keepdims=True)
        return (h - mean) * jax.lax.rsqrt(var + eps) * g_ref[...] + beta_ref[...]

    x = x_ref[...]                                                  # (S, D) f32
    z = z_ref[...]                                                  # (S, D) f32

    # ---- self-attention: q == k == v, single shared projection ----
    sa_proj = matmul(x, sa_wq_ref, sa_bq_ref)
    x = add_ln(x, mha(sa_proj, sa_proj, sa_wo_ref, sa_bo_ref),
               ln1_g_ref, ln1_b_ref)

    # ---- cross-attention: k == v == proj(z), computed once ----
    q_proj = matmul(x, ca_wq_ref, ca_bq_ref)
    kv_proj = matmul(z, ca_wq_ref, ca_bq_ref)
    x = add_ln(x, mha(q_proj, kv_proj, ca_wo_ref, ca_bo_ref),
               ln2_g_ref, ln2_b_ref)

    # ---- feed-forward: linear1 -> ReLU -> (dropout=id) -> linear2 ----
    h1 = jnp.maximum(matmul(x, w1_ref, b1_ref), 0.0)
    x = add_ln(x, matmul(h1, w2_ref, b2_ref), ln3_g_ref, ln3_b_ref)

    o_ref[...] = x


def decoder_layer(x, z, p, *, num_heads):
    """x, z: (B, S, D) f32 -> (B, S, D) f32.  One fused pallas_call per layer."""
    B, S, D = x.shape
    d_k = D // num_heads
    x2d = x.reshape(B * S, D)
    z2d = z.reshape(B * S, D)

    row_spec = pl.BlockSpec((S, D), lambda b: (b, 0))

    def const_spec(arr):
        return pl.BlockSpec(arr.shape, lambda b: (0, 0))   # weight resident in VMEM

    ins = [x2d, z2d,
           p["sa_wq"], p["sa_bq"], p["sa_wo"], p["sa_bo"],
           p["ca_wq"], p["ca_bq"], p["ca_wo"], p["ca_bo"],
           p["w1"], p["b1"], p["w2"], p["b2"],
           p["ln1_g"], p["ln1_b"], p["ln2_g"], p["ln2_b"], p["ln3_g"], p["ln3_b"]]
    in_specs = [row_spec, row_spec] + [const_spec(a) for a in ins[2:]]

    kernel = functools.partial(_decoder_layer_kernel,
                               num_heads=num_heads, d_k=d_k, eps=1e-5)
    out = pl.pallas_call(
        kernel,
        out_shape=jax.ShapeDtypeStruct((B * S, D), jnp.float32),
        grid=(B,),
        in_specs=in_specs,
        out_specs=row_spec,
        compiler_params=pltpu.CompilerParams(
            dimension_semantics=("parallel",)),       # shards over TCs on v7x
    )(*ins)
    return out.reshape(B, S, D)


# ------------------------------ output linear --------------------------------

def _linear_kernel(x_ref, w_ref, b_ref, o_ref):
    o_ref[...] = jnp.dot(x_ref[...].astype(jnp.bfloat16), w_ref[...],
                         preferred_element_type=jnp.float32) + b_ref[...]


def linear(x2d, w_bf16, b2d, *, tile_rows=None):
    """x2d: (N, Din) f32, w: (Din, Dout) bf16, b: (1, Dout) f32 -> (N, Dout) f32."""
    N, Din = x2d.shape
    Dout = w_bf16.shape[1]
    if tile_rows is None:
        tile_rows = N if N <= 256 else 256     # large row tiles; full N when small
    assert N % tile_rows == 0
    # TODO(synk): for a realistic vocab size, tile Dout / add a K grid axis with a
    # VMEM accumulator instead of keeping the full weight resident (v7x 64 MiB VMEM).
    return pl.pallas_call(
        _linear_kernel,
        out_shape=jax.ShapeDtypeStruct((N, Dout), jnp.float32),
        grid=(N // tile_rows,),
        in_specs=[
            pl.BlockSpec((tile_rows, Din), lambda i: (i, 0)),
            pl.BlockSpec((Din, Dout), lambda i: (0, 0)),
            pl.BlockSpec((1, Dout), lambda i: (0, 0)),
        ],
        out_specs=pl.BlockSpec((tile_rows, Dout), lambda i: (i, 0)),
        compiler_params=pltpu.CompilerParams(
            dimension_semantics=("parallel",)),
    )(x2d, w_bf16, b2d)


# ----------------------------- model (glue in JAX) --------------------------

def positional_encoding(max_len, d_model):
    position = jnp.arange(max_len, dtype=jnp.float32)[:, None]
    div_term = jnp.exp(jnp.arange(0, d_model, 2, dtype=jnp.float32)
                       * (-math.log(10000.0) / d_model))
    pe = jnp.zeros((max_len, d_model), dtype=jnp.float32)
    pe = pe.at[:, 0::2].set(jnp.sin(position * div_term))
    pe = pe.at[:, 1::2].set(jnp.cos(position * div_term))
    return pe


def decoder_forward(tokens, z, params, *, num_heads):
    B, S = tokens.shape
    D = params["embedding"].shape[1]
    V = params["w_out"].shape[1]
    # TODO(synk): embedding gather + positional add kept in plain JAX (tiny,
    # data-dependent gather; no benefit from a Pallas kernel at this size).
    x = jnp.take(params["embedding"], tokens, axis=0) * math.sqrt(D)   # (B,S,D)
    x = x + params["pe"][:S][None, :, :]
    # dropout -> identity (eval mode)
    for lp in params["layers"]:
        x = decoder_layer(x, z, lp, num_heads=num_heads)
    out = linear(x.reshape(B * S, D), params["w_out"], params["b_out"])
    return out.reshape(B, S, V)


# ----------------------------- parameter init -------------------------------

def _init_linear(key, din, dout):
    w = (jax.random.normal(key, (din, dout), jnp.float32) * 0.02).astype(jnp.bfloat16)
    b = jnp.zeros((1, dout), jnp.float32)
    return w, b


def init_params(key, num_layers, d_model, d_ff, vocab_size, max_len):
    keys = jax.random.split(key, 2 + num_layers)
    params = {
        "embedding": jax.random.normal(keys[0], (vocab_size, d_model),
                                       jnp.float32) * 0.02,
        "pe": positional_encoding(max_len, d_model),
        "layers": [],
    }
    params["w_out"], params["b_out"] = _init_linear(keys[1], d_model, vocab_size)
    for l in range(num_layers):
        lk = jax.random.split(keys[2 + l], 6)
        # NOTE: reference Attention reuses q_linear for k and v; k_linear /
        # v_linear are dead parameters and are therefore not materialized.
        sa_wq, sa_bq = _init_linear(lk[0], d_model, d_model)
        sa_wo, sa_bo = _init_linear(lk[1], d_model, d_model)
        ca_wq, ca_bq = _init_linear(lk[2], d_model, d_model)
        ca_wo, ca_bo = _init_linear(lk[3], d_model, d_model)
        w1, b1 = _init_linear(lk[4], d_model, d_ff)
        w2, b2 = _init_linear(lk[5], d_ff, d_model)
        params["layers"].append({
            "sa_wq": sa_wq, "sa_bq": sa_bq, "sa_wo": sa_wo, "sa_bo": sa_bo,
            "ca_wq": ca_wq, "ca_bq": ca_bq, "ca_wo": ca_wo, "ca_bo": ca_bo,
            "w1": w1, "b1": b1, "w2": w2, "b2": b2,
            "ln1_g": jnp.ones((1, d_model), jnp.float32),
            "ln1_b": jnp.zeros((1, d_model), jnp.float32),
            "ln2_g": jnp.ones((1, d_model), jnp.float32),
            "ln2_b": jnp.zeros((1, d_model), jnp.float32),
            "ln3_g": jnp.ones((1, d_model), jnp.float32),
            "ln3_b": jnp.zeros((1, d_model), jnp.float32),
        })
    return params


# ----------------------------------- main ------------------------------------

if __name__ == "__main__":
    B, S = 2, 8
    NUM_LAYERS = 2
    D_MODEL = 128
    NUM_HEADS = 4
    D_FF = 256
    VOCAB = 128
    MAX_LEN = 64

    root = jax.random.PRNGKey(0)
    k_par, k_tok, k_z = jax.random.split(root, 3)

    params = init_params(k_par, NUM_LAYERS, D_MODEL, D_FF, VOCAB, MAX_LEN)
    tokens = jax.random.randint(k_tok, (B, S), 0, VOCAB, dtype=jnp.int32)
    z = jax.random.normal(k_z, (B, S, D_MODEL), jnp.float32)   # encoder memory

    fwd = jax.jit(functools.partial(decoder_forward, num_heads=NUM_HEADS))
    out = fwd(tokens, z, params)
    out = jax.block_until_ready(out)

    assert out.shape == (B, S, VOCAB)
    assert jnp.all(jnp.isfinite(out))
    print("KERNEL_OK")
</pallas_src>

<mosaic_0001>
module attributes {stable_mosaic.version = 11 : i64} {
  func.func @_linear_kernel(%arg0: i32, %arg1: memref<16x128xf32, #tpu.memory_space<vmem>>, %arg2: memref<128x128xbf16, #tpu.memory_space<vmem>>, %arg3: memref<1x128xf32, #tpu.memory_space<vmem>>, %arg4: memref<16x128xf32, #tpu.memory_space<vmem>>) attributes {dimension_semantics = [#tpu.dimension_semantics<parallel>], iteration_bounds = array<i64: 1>, scalar_prefetch = 0 : i64, scratch_operands = 0 : i64, tpu.core_type = #tpu.core_type<tc>, window_params = [{transform_indices = @transform_0, window_bounds = array<i64: 16, 128>}, {pipeline_mode = #tpu.pipeline_mode<synchronous>, transform_indices = @transform_1, window_bounds = array<i64: 128, 128>}, {pipeline_mode = #tpu.pipeline_mode<synchronous>, transform_indices = @transform_2, window_bounds = array<i64: 1, 128>}, {transform_indices = @transform_3, window_bounds = array<i64: 16, 128>}]} {
    %c0 = arith.constant 0 : index
    %c0_0 = arith.constant 0 : index
    %0 = vector.load %arg1[%c0, %c0_0] : memref<16x128xf32, #tpu.memory_space<vmem>>, vector<16x128xf32>
    %1 = arith.truncf %0 : vector<16x128xf32> to vector<16x128xbf16>
    %c0_1 = arith.constant 0 : index
    %c0_2 = arith.constant 0 : index
    %2 = vector.load %arg2[%c0_1, %c0_2] : memref<128x128xbf16, #tpu.memory_space<vmem>>, vector<128x128xbf16>
    %cst = arith.constant dense<0.000000e+00> : vector<16x128xf32>
    %3 = tpu.matmul %1, %2, %cst {dimension_numbers = #tpu.dot_dimension_numbers<[1], [0], [0], [1], [0, 0, 1, 1], [], []>} : vector<16x128xbf16>, vector<128x128xbf16>, vector<16x128xf32> -> vector<16x128xf32>
    %c0_3 = arith.constant 0 : index
    %c0_4 = arith.constant 0 : index
    %4 = vector.load %arg3[%c0_3, %c0_4] : memref<1x128xf32, #tpu.memory_space<vmem>>, vector<1x128xf32>
    %5 = vector.broadcast %4 : vector<1x128xf32> to vector<16x128xf32>
    %6 = arith.addf %3, %5 : vector<16x128xf32>
    %c0_5 = arith.constant 0 : index
    %c0_6 = arith.constant 0 : index
    %7 = vector.load %arg4[%c0_5, %c0_6] : memref<16x128xf32, #tpu.memory_space<vmem>>, vector<16x128xf32>
    tpu.vector_store %arg4[%c0_5, %c0_6], %6 {strides = array<i32>} : memref<16x128xf32, #tpu.memory_space<vmem>>, vector<16x128xf32>,
    return
  }
  func.func @transform_0(%arg0: i32) -> (i32, i32) {
    %c0_i32 = arith.constant 0 : i32
    %c0_i32_0 = arith.constant 0 : i32
    return %arg0, %c0_i32 : i32, i32
  }
  func.func @transform_1(%arg0: i32) -> (i32, i32) {
    %c0_i32 = arith.constant 0 : i32
    %c0_i32_0 = arith.constant 0 : i32
    %c0_i32_1 = arith.constant 0 : i32
    return %c0_i32, %c0_i32_0 : i32, i32
  }
  func.func @transform_2(%arg0: i32) -> (i32, i32) {
    %c0_i32 = arith.constant 0 : i32
    %c0_i32_0 = arith.constant 0 : i32
    %c0_i32_1 = arith.constant 0 : i32
    return %c0_i32, %c0_i32_0 : i32, i32
  }
  func.func @transform_3(%arg0: i32) -> (i32, i32) {
    %c0_i32 = arith.constant 0 : i32
    %c0_i32_0 = arith.constant 0 : i32
    return %arg0, %c0_i32 : i32, i32
  }
}

module attributes {stable_mosaic.version = 11 : i64} {
  func.func @_decoder_layer_kernel(%arg0: i32, %arg1: memref<8x128xf32, #tpu.memory_space<vmem>>, %arg2: memref<8x128xf32, #tpu.memory_space<vmem>>, %arg3: memref<128x128xbf16, #tpu.memory_space<vmem>>, %arg4: memref<1x128xf32, #tpu.memory_space<vmem>>, %arg5: memref<128x128xbf16, #tpu.memory_space<vmem>>, %arg6: memref<1x128xf32, #tpu.memory_space<vmem>>, %arg7: memref<128x128xbf16, #tpu.memory_space<vmem>>, %arg8: memref<1x128xf32, #tpu.memory_space<vmem>>, %arg9: memref<128x128xbf16, #tpu.memory_space<vmem>>, %arg10: memref<1x128xf32, #tpu.memory_space<vmem>>, %arg11: memref<128x256xbf16, #tpu.memory_space<vmem>>, %arg12: memref<1x256xf32, #tpu.memory_space<vmem>>, %arg13: memref<256x128xbf16, #tpu.memory_space<vmem>>, %arg14: memref<1x128xf32, #tpu.memory_space<vmem>>, %arg15: memref<1x128xf32, #tpu.memory_space<vmem>>, %arg16: memref<1x128xf32, #tpu.memory_space<vmem>>, %arg17: memref<1x128xf32, #tpu.memory_space<vmem>>, %arg18: memref<1x128xf32, #tpu.memory_space<vmem>>, %arg19: memref<1x128xf32, #tpu.memory_space<vmem>>, %arg20: memref<1x128xf32, #tpu.memory_space<vmem>>, %arg21: memref<8x128xf32, #tpu.memory_space<vmem>>) attributes {dimension_semantics = [#tpu.dimension_semantics<parallel>], iteration_bounds = array<i64: 2>, scalar_prefetch = 0 : i64, scratch_operands = 0 : i64, tpu.core_type = #tpu.core_type<tc>, window_params = [{transform_indices = @transform_0, window_bounds = array<i64: 8, 128>}, {transform_indices = @transform_1, window_bounds = array<i64: 8, 128>}, {pipeline_mode = #tpu.pipeline_mode<synchronous>, transform_indices = @transform_2, window_bounds = array<i64: 128, 128>}, {pipeline_mode = #tpu.pipeline_mode<synchronous>, transform_indices = @transform_3, window_bounds = array<i64: 1, 128>}, {pipeline_mode = #tpu.pipeline_mode<synchronous>, transform_indices = @transform_4, window_bounds = array<i64: 128, 128>}, {pipeline_mode = #tpu.pipeline_mode<synchronous>, transform_indices = @transform_5, window_bounds = array<i64: 1, 128>}, {pipeline_mode = #tpu.pipeline_mode<synchronous>, transform_indices = @transform_6, window_bounds = array<i64: 128, 128>}, {pipeline_mode = #tpu.pipeline_mode<synchronous>, transform_indices = @transform_7, window_bounds = array<i64: 1, 128>}, {pipeline_mode = #tpu.pipeline_mode<synchronous>, transform_indices = @transform_8, window_bounds = array<i64: 128, 128>}, {pipeline_mode = #tpu.pipeline_mode<synchronous>, transform_indices = @transform_9, window_bounds = array<i64: 1, 128>}, {pipeline_mode = #tpu.pipeline_mode<synchronous>, transform_indices = @transform_10, window_bounds = array<i64: 128, 256>}, {pipeline_mode = #tpu.pipeline_mode<synchronous>, transform_indices = @transform_11, window_bounds = array<i64: 1, 256>}, {pipeline_mode = #tpu.pipeline_mode<synchronous>, transform_indices = @transform_12, window_bounds = array<i64: 256, 128>}, {pipeline_mode = #tpu.pipeline_mode<synchronous>, transform_indices = @transform_13, window_bounds = array<i64: 1, 128>}, {pipeline_mode = #tpu.pipeline_mode<synchronous>, transform_indices = @transform_14, window_bounds = array<i64: 1, 128>}, {pipeline_mode = #tpu.pipeline_mode<synchronous>, transform_indices = @transform_15, window_bounds = array<i64: 1, 128>}, {pipeline_mode = #tpu.pipeline_mode<synchronous>, transform_indices = @transform_16, window_bounds = array<i64: 1, 128>}, {pipeline_mode = #tpu.pipeline_mode<synchronous>, transform_indices = @transform_17, window_bounds = array<i64: 1, 128>}, {pipeline_mode = #tpu.pipeline_mode<synchronous>, transform_indices = @transform_18, window_bounds = array<i64: 1, 128>}, {pipeline_mode = #tpu.pipeline_mode<synchronous>, transform_indices = @transform_19, window_bounds = array<i64: 1, 128>}, {transform_indices = @transform_20, window_bounds = array<i64: 8, 128>}]} {
    %c0 = arith.constant 0 : index
    %c0_0 = arith.constant 0 : index
    %0 = vector.load %arg1[%c0, %c0_0] : memref<8x128xf32, #tpu.memory_space<vmem>>, vector<8x128xf32>
    %c0_1 = arith.constant 0 : index
    %c0_2 = arith.constant 0 : index
    %1 = vector.load %arg2[%c0_1, %c0_2] : memref<8x128xf32, #tpu.memory_space<vmem>>, vector<8x128xf32>
    %2 = arith.truncf %0 : vector<8x128xf32> to vector<8x128xbf16>
    %c0_3 = arith.constant 0 : index
    %c0_4 = arith.constant 0 : index
    %3 = vector.load %arg3[%c0_3, %c0_4] : memref<128x128xbf16, #tpu.memory_space<vmem>>, vector<128x128xbf16>
    %cst = arith.constant dense<0.000000e+00> : vector<8x128xf32>
    %4 = tpu.matmul %2, %3, %cst {dimension_numbers = #tpu.dot_dimension_numbers<[1], [0], [0], [1], [0, 0, 1, 1], [], []>} : vector<8x128xbf16>, vector<128x128xbf16>, vector<8x128xf32> -> vector<8x128xf32>
    %c0_5 = arith.constant 0 : index
    %c0_6 = arith.constant 0 : index
    %5 = vector.load %arg4[%c0_5, %c0_6] : memref<1x128xf32, #tpu.memory_space<vmem>>, vector<1x128xf32>
    %6 = vector.broadcast %5 : vector<1x128xf32> to vector<8x128xf32>
    %7 = arith.addf %4, %6 : vector<8x128xf32>
    %cst_7 = arith.constant 0.176776692 : f32
    %8 = vector.broadcast %cst_7 : f32 to vector<8x128xf32>
    %9 = arith.mulf %7, %8 : vector<8x128xf32>
    %10 = vector.extract_strided_slice %9 {offsets = [0, 0], sizes = [8, 32], strides = [1, 1]} : vector<8x128xf32> to vector<8x32xf32>
    %11 = vector.extract_strided_slice %7 {offsets = [0, 0], sizes = [8, 32], strides = [1, 1]} : vector<8x128xf32> to vector<8x32xf32>
    %12 = arith.truncf %10 : vector<8x32xf32> to vector<8x32xbf16>
    %13 = tpu.transpose %11, [1, 0] : vector<8x32xf32> -> vector<32x8xf32>
    %14 = arith.truncf %13 : vector<32x8xf32> to vector<32x8xbf16>
    %cst_8 = arith.constant dense<0.000000e+00> : vector<8x8xf32>
    %15 = tpu.matmul %12, %14, %cst_8 {dimension_numbers = #tpu.dot_dimension_numbers<[1], [0], [0], [1], [0, 0, 1, 1], [], []>} : vector<8x32xbf16>, vector<32x8xbf16>, vector<8x8xf32> -> vector<8x8xf32>
    %cst_9 = arith.constant dense<0xFF800000> : vector<8xf32>
    %16 = vector.multi_reduction <maximumf>, %15, %cst_9 [1] : vector<8x8xf32> to vector<8xf32>
    %17 = vector.shape_cast %16 : vector<8xf32> to vector<8x1xf32>
    %18 = vector.broadcast %17 : vector<8x1xf32> to vector<8x8xf32>
    %19 = arith.subf %15, %18 : vector<8x8xf32>
    %20 = math.exp %19 : vector<8x8xf32>
    %cst_10 = arith.constant dense<0.000000e+00> : vector<8xf32>
    %21 = vector.multi_reduction <add>, %20, %cst_10 [1] : vector<8x8xf32> to vector<8xf32>
    %22 = vector.shape_cast %21 : vector<8xf32> to vector<8x1xf32>
    %23 = tpu.reciprocal %22 {approx = true} : vector<8x1xf32> -> vector<8x1xf32>
    %24 = vector.broadcast %23 : vector<8x1xf32> to vector<8x8xf32>
    %25 = arith.mulf %20, %24 : vector<8x8xf32>
    %26 = arith.truncf %25 : vector<8x8xf32> to vector<8x8xbf16>
    %27 = arith.truncf %11 : vector<8x32xf32> to vector<8x32xbf16>
    %cst_11 = arith.constant dense<0.000000e+00> : vector<8x32xf32>
    %28 = tpu.matmul %26, %27, %cst_11 {dimension_numbers = #tpu.dot_dimension_numbers<[1], [0], [0], [1], [0, 0, 1, 1], [], []>} : vector<8x8xbf16>, vector<8x32xbf16>, vector<8x32xf32> -> vector<8x32xf32>
    %29 = vector.extract_strided_slice %9 {offsets = [0, 32], sizes = [8, 32], strides = [1, 1]} : vector<8x128xf32> to vector<8x32xf32>
    %30 = vector.extract_strided_slice %7 {offsets = [0, 32], sizes = [8, 32], strides = [1, 1]} : vector<8x128xf32> to vector<8x32xf32>
    %31 = arith.truncf %29 : vector<8x32xf32> to vector<8x32xbf16>
    %32 = tpu.transpose %30, [1, 0] : vector<8x32xf32> -> vector<32x8xf32>
    %33 = arith.truncf %32 : vector<32x8xf32> to vector<32x8xbf16>
    %cst_12 = arith.constant dense<0.000000e+00> : vector<8x8xf32>
    %34 = tpu.matmul %31, %33, %cst_12 {dimension_numbers = #tpu.dot_dimension_numbers<[1], [0], [0], [1], [0, 0, 1, 1], [], []>} : vector<8x32xbf16>, vector<32x8xbf16>, vector<8x8xf32> -> vector<8x8xf32>
    %cst_13 = arith.constant dense<0xFF800000> : vector<8xf32>
    %35 = vector.multi_reduction <maximumf>, %34, %cst_13 [1] : vector<8x8xf32> to vector<8xf32>
    %36 = vector.shape_cast %35 : vector<8xf32> to vector<8x1xf32>
    %37 = vector.broadcast %36 : vector<8x1xf32> to vector<8x8xf32>
    %38 = arith.subf %34, %37 : vector<8x8xf32>
    %39 = math.exp %38 : vector<8x8xf32>
    %cst_14 = arith.constant dense<0.000000e+00> : vector<8xf32>
    %40 = vector.multi_reduction <add>, %39, %cst_14 [1] : vector<8x8xf32> to vector<8xf32>
    %41 = vector.shape_cast %40 : vector<8xf32> to vector<8x1xf32>
    %42 = tpu.reciprocal %41 {approx = true} : vector<8x1xf32> -> vector<8x1xf32>
    %43 = vector.broadcast %42 : vector<8x1xf32> to vector<8x8xf32>
    %44 = arith.mulf %39, %43 : vector<8x8xf32>
    %45 = arith.truncf %44 : vector<8x8xf32> to vector<8x8xbf16>
    %46 = arith.truncf %30 : vector<8x32xf32> to vector<8x32xbf16>
    %cst_15 = arith.constant dense<0.000000e+00> : vector<8x32xf32>
    %47 = tpu.matmul %45, %46, %cst_15 {dimension_numbers = #tpu.dot_dimension_numbers<[1], [0], [0], [1], [0, 0, 1, 1], [], []>} : vector<8x8xbf16>, vector<8x32xbf16>, vector<8x32xf32> -> vector<8x32xf32>
    %48 = vector.extract_strided_slice %9 {offsets = [0, 64], sizes = [8, 32], strides = [1, 1]} : vector<8x128xf32> to vector<8x32xf32>
    %49 = vector.extract_strided_slice %7 {offsets = [0, 64], sizes = [8, 32], strides = [1, 1]} : vector<8x128xf32> to vector<8x32xf32>
    %50 = arith.truncf %48 : vector<8x32xf32> to vector<8x32xbf16>
    %51 = tpu.transpose %49, [1, 0] : vector<8x32xf32> -> vector<32x8xf32>
    %52 = arith.truncf %51 : vector<32x8xf32> to vector<32x8xbf16>
    %cst_16 = arith.constant dense<0.000000e+00> : vector<8x8xf32>
    %53 = tpu.matmul %50, %52, %cst_16 {dimension_numbers = #tpu.dot_dimension_numbers<[1], [0], [0], [1], [0, 0, 1, 1], [], []>} : vector<8x32xbf16>, vector<32x8xbf16>, vector<8x8xf32> -> vector<8x8xf32>
    %cst_17 = arith.constant dense<0xFF800000> : vector<8xf32>
    %54 = vector.multi_reduction <maximumf>, %53, %cst_17 [1] : vector<8x8xf32> to vector<8xf32>
    %55 = vector.shape_cast %54 : vector<8xf32> to vector<8x1xf32>
    %56 = vector.broadcast %55 : vector<8x1xf32> to vector<8x8xf32>
    %57 = arith.subf %53, %56 : vector<8x8xf32>
    %58 = math.exp %57 : vector<8x8xf32>
    %cst_18 = arith.constant dense<0.000000e+00> : vector<8xf32>
    %59 = vector.multi_reduction <add>, %58, %cst_18 [1] : vector<8x8xf32> to vector<8xf32>
    %60 = vector.shape_cast %59 : vector<8xf32> to vector<8x1xf32>
    %61 = tpu.reciprocal %60 {approx = true} : vector<8x1xf32> -> vector<8x1xf32>
    %62 = vector.broadcast %61 : vector<8x1xf32> to vector<8x8xf32>
    %63 = arith.mulf %58, %62 : vector<8x8xf32>
    %64 = arith.truncf %63 : vector<8x8xf32> to vector<8x8xbf16>
    %65 = arith.truncf %49 : vector<8x32xf32> to vector<8x32xbf16>
    %cst_19 = arith.constant dense<0.000000e+00> : vector<8x32xf32>
    %66 = tpu.matmul %64, %65, %cst_19 {dimension_numbers = #tpu.dot_dimension_numbers<[1], [0], [0], [1], [0, 0, 1, 1], [], []>} : vector<8x8xbf16>, vector<8x32xbf16>, vector<8x32xf32> -> vector<8x32xf32>
    %67 = vector.extract_strided_slice %9 {offsets = [0, 96], sizes = [8, 32], strides = [1, 1]} : vector<8x128xf32> to vector<8x32xf32>
    %68 = vector.extract_strided_slice %7 {offsets = [0, 96], sizes = [8, 32], strides = [1, 1]} : vector<8x128xf32> to vector<8x32xf32>
    %69 = arith.truncf %67 : vector<8x32xf32> to vector<8x32xbf16>
    %70 = tpu.transpose %68, [1, 0] : vector<8x32xf32> -> vector<32x8xf32>
    %71 = arith.truncf %70 : vector<32x8xf32> to vector<32x8xbf16>
    %cst_20 = arith.constant dense<0.000000e+00> : vector<8x8xf32>
    %72 = tpu.matmul %69, %71, %cst_20 {dimension_numbers = #tpu.dot_dimension_numbers<[1], [0], [0], [1], [0, 0, 1, 1], [], []>} : vector<8x32xbf16>, vector<32x8xbf16>, vector<8x8xf32> -> vector<8x8xf32>
    %cst_21 = arith.constant dense<0xFF800000> : vector<8xf32>
    %73 = vector.multi_reduction <maximumf>, %72, %cst_21 [1] : vector<8x8xf32> to vector<8xf32>
    %74 = vector.shape_cast %73 : vector<8xf32> to vector<8x1xf32>
    %75 = vector.broadcast %74 : vector<8x1xf32> to vector<8x8xf32>
    %76 = arith.subf %72, %75 : vector<8x8xf32>
    %77 = math.exp %76 : vector<8x8xf32>
    %cst_22 = arith.constant dense<0.000000e+00> : vector<8xf32>
    %78 = vector.multi_reduction <add>, %77, %cst_22 [1] : vector<8x8xf32> to vector<8xf32>
    %79 = vector.shape_cast %78 : vector<8xf32> to vector<8x1xf32>
    %80 = tpu.reciprocal %79 {approx = true} : vector<8x1xf32> -> vector<8x1xf32>
    %81 = vector.broadcast %80 : vector<8x1xf32> to vector<8x8xf32>
    %82 = arith.mulf %77, %81 : vector<8x8xf32>
    %83 = arith.truncf %82 : vector<8x8xf32> to vector<8x8xbf16>
    %84 = arith.truncf %68 : vector<8x32xf32> to vector<8x32xbf16>
    %cst_23 = arith.constant dense<0.000000e+00> : vector<8x32xf32>
    %85 = tpu.matmul %83, %84, %cst_23 {dimension_numbers = #tpu.dot_dimension_numbers<[1], [0], [0], [1], [0, 0, 1, 1], [], []>} : vector<8x8xbf16>, vector<8x32xbf16>, vector<8x32xf32> -> vector<8x32xf32>
    %86 = tpu.concatenate %28, %47, %66, %85 in 1 : vector<8x32xf32>, vector<8x32xf32>, vector<8x32xf32>, vector<8x32xf32> -> vector<8x128xf32>
    %87 = arith.truncf %86 : vector<8x128xf32> to vector<8x128xbf16>
    %c0_24 = arith.constant 0 : index
    %c0_25 = arith.constant 0 : index
    %88 = vector.load %arg5[%c0_24, %c0_25] : memref<128x128xbf16, #tpu.memory_space<vmem>>, vector<128x128xbf16>
    %cst_26 = arith.constant dense<0.000000e+00> : vector<8x128xf32>
    %89 = tpu.matmul %87, %88, %cst_26 {dimension_numbers = #tpu.dot_dimension_numbers<[1], [0], [0], [1], [0, 0, 1, 1], [], []>} : vector<8x128xbf16>, vector<128x128xbf16>, vector<8x128xf32> -> vector<8x128xf32>
    %c0_27 = arith.constant 0 : index
    %c0_28 = arith.constant 0 : index
    %90 = vector.load %arg6[%c0_27, %c0_28] : memref<1x128xf32, #tpu.memory_space<vmem>>, vector<1x128xf32>
    %91 = vector.broadcast %90 : vector<1x128xf32> to vector<8x128xf32>
    %92 = arith.addf %89, %91 : vector<8x128xf32>
    %93 = arith.addf %0, %92 : vector<8x128xf32>
    %cst_29 = arith.constant dense<0.000000e+00> : vector<8xf32>
    %94 = vector.multi_reduction <add>, %93, %cst_29 [1] : vector<8x128xf32> to vector<8xf32>
    %95 = vector.shape_cast %94 : vector<8xf32> to vector<8x1xf32>
    %cst_30 = arith.constant 1.280000e+02 : f32
    %96 = vector.broadcast %cst_30 : f32 to vector<8x1xf32>
    %97 = arith.divf %95, %96 : vector<8x1xf32>
    %98 = vector.broadcast %97 : vector<8x1xf32> to vector<8x128xf32>
    %99 = arith.subf %93, %98 : vector<8x128xf32>
    %100 = arith.mulf %99, %99 : vector<8x128xf32>
    %cst_31 = arith.constant dense<0.000000e+00> : vector<8xf32>
    %101 = vector.multi_reduction <add>, %100, %cst_31 [1] : vector<8x128xf32> to vector<8xf32>
    %102 = vector.shape_cast %101 : vector<8xf32> to vector<8x1xf32>
    %cst_32 = arith.constant 1.280000e+02 : f32
    %103 = vector.broadcast %cst_32 : f32 to vector<8x1xf32>
    %104 = arith.divf %102, %103 : vector<8x1xf32>
    %105 = vector.broadcast %97 : vector<8x1xf32> to vector<8x128xf32>
    %106 = arith.subf %93, %105 : vector<8x128xf32>
    %cst_33 = arith.constant 9.99999974E-6 : f32
    %107 = vector.broadcast %cst_33 : f32 to vector<8x1xf32>
    %108 = arith.addf %104, %107 : vector<8x1xf32>
    %109 = math.rsqrt %108 : vector<8x1xf32>
    %110 = vector.broadcast %109 : vector<8x1xf32> to vector<8x128xf32>
    %111 = arith.mulf %106, %110 : vector<8x128xf32>
    %c0_34 = arith.constant 0 : index
    %c0_35 = arith.constant 0 : index
    %112 = vector.load %arg15[%c0_34, %c0_35] : memref<1x128xf32, #tpu.memory_space<vmem>>, vector<1x128xf32>
    %113 = vector.broadcast %112 : vector<1x128xf32> to vector<8x128xf32>
    %114 = arith.mulf %111, %113 : vector<8x128xf32>
    %c0_36 = arith.constant 0 : index
    %c0_37 = arith.constant 0 : index
    %115 = vector.load %arg16[%c0_36, %c0_37] : memref<1x128xf32, #tpu.memory_space<vmem>>, vector<1x128xf32>
    %116 = vector.broadcast %115 : vector<1x128xf32> to vector<8x128xf32>
    %117 = arith.addf %114, %116 : vector<8x128xf32>
    %118 = arith.truncf %117 : vector<8x128xf32> to vector<8x128xbf16>
    %c0_38 = arith.constant 0 : index
    %c0_39 = arith.constant 0 : index
    %119 = vector.load %arg7[%c0_38, %c0_39] : memref<128x128xbf16, #tpu.memory_space<vmem>>, vector<128x128xbf16>
    %cst_40 = arith.constant dense<0.000000e+00> : vector<8x128xf32>
    %120 = tpu.matmul %118, %119, %cst_40 {dimension_numbers = #tpu.dot_dimension_numbers<[1], [0], [0], [1], [0, 0, 1, 1], [], []>} : vector<8x128xbf16>, vector<128x128xbf16>, vector<8x128xf32> -> vector<8x128xf32>
    %c0_41 = arith.constant 0 : index
    %c0_42 = arith.constant 0 : index
    %121 = vector.load %arg8[%c0_41, %c0_42] : memref<1x128xf32, #tpu.memory_space<vmem>>, vector<1x128xf32>
    %122 = vector.broadcast %121 : vector<1x128xf32> to vector<8x128xf32>
    %123 = arith.addf %120, %122 : vector<8x128xf32>
    %124 = arith.truncf %1 : vector<8x128xf32> to vector<8x128xbf16>
    %c0_43 = arith.constant 0 : index
    %c0_44 = arith.constant 0 : index
    %125 = vector.load %arg7[%c0_43, %c0_44] : memref<128x128xbf16, #tpu.memory_space<vmem>>, vector<128x128xbf16>
    %cst_45 = arith.constant dense<0.000000e+00> : vector<8x128xf32>
    %126 = tpu.matmul %124, %125, %cst_45 {dimension_numbers = #tpu.dot_dimension_numbers<[1], [0], [0], [1], [0, 0, 1, 1], [], []>} : vector<8x128xbf16>, vector<128x128xbf16>, vector<8x128xf32> -> vector<8x128xf32>
    %c0_46 = arith.constant 0 : index
    %c0_47 = arith.constant 0 : index
    %127 = vector.load %arg8[%c0_46, %c0_47] : memref<1x128xf32, #tpu.memory_space<vmem>>, vector<1x128xf32>
    %128 = vector.broadcast %127 : vector<1x128xf32> to vector<8x128xf32>
    %129 = arith.addf %126, %128 : vector<8x128xf32>
    %cst_48 = arith.constant 0.176776692 : f32
    %130 = vector.broadcast %cst_48 : f32 to vector<8x128xf32>
    %131 = arith.mulf %123, %130 : vector<8x128xf32>
    %132 = vector.extract_strided_slice %131 {offsets = [0, 0], sizes = [8, 32], strides = [1, 1]} : vector<8x128xf32> to vector<8x32xf32>
    %133 = vector.extract_strided_slice %129 {offsets = [0, 0], sizes = [8, 32], strides = [1, 1]} : vector<8x128xf32> to vector<8x32xf32>
    %134 = arith.truncf %132 : vector<8x32xf32> to vector<8x32xbf16>
    %135 = tpu.transpose %133, [1, 0] : vector<8x32xf32> -> vector<32x8xf32>
    %136 = arith.truncf %135 : vector<32x8xf32> to vector<32x8xbf16>
    %cst_49 = arith.constant dense<0.000000e+00> : vector<8x8xf32>
    %137 = tpu.matmul %134, %136, %cst_49 {dimension_numbers = #tpu.dot_dimension_numbers<[1], [0], [0], [1], [0, 0, 1, 1], [], []>} : vector<8x32xbf16>, vector<32x8xbf16>, vector<8x8xf32> -> vector<8x8xf32>
    %cst_50 = arith.constant dense<0xFF800000> : vector<8xf32>
    %138 = vector.multi_reduction <maximumf>, %137, %cst_50 [1] : vector<8x8xf32> to vector<8xf32>
    %139 = vector.shape_cast %138 : vector<8xf32> to vector<8x1xf32>
    %140 = vector.broadcast %139 : vector<8x1xf32> to vector<8x8xf32>
    %141 = arith.subf %137, %140 : vector<8x8xf32>
    %142 = math.exp %141 : vector<8x8xf32>
    %cst_51 = arith.constant dense<0.000000e+00> : vector<8xf32>
    %143 = vector.multi_reduction <add>, %142, %cst_51 [1] : vector<8x8xf32> to vector<8xf32>
    %144 = vector.shape_cast %143 : vector<8xf32> to vector<8x1xf32>
    %145 = tpu.reciprocal %144 {approx = true} : vector<8x1xf32> -> vector<8x1xf32>
    %146 = vector.broadcast %145 : vector<8x1xf32> to vector<8x8xf32>
    %147 = arith.mulf %142, %146 : vector<8x8xf32>
    %148 = arith.truncf %147 : vector<8x8xf32> to vector<8x8xbf16>
    %149 = arith.truncf %133 : vector<8x32xf32> to vector<8x32xbf16>
    %cst_52 = arith.constant dense<0.000000e+00> : vector<8x32xf32>
    %150 = tpu.matmul %148, %149, %cst_52 {dimension_numbers = #tpu.dot_dimension_numbers<[1], [0], [0], [1], [0, 0, 1, 1], [], []>} : vector<8x8xbf16>, vector<8x32xbf16>, vector<8x32xf32> -> vector<8x32xf32>
    %151 = vector.extract_strided_slice %131 {offsets = [0, 32], sizes = [8, 32], strides = [1, 1]} : vector<8x128xf32> to vector<8x32xf32>
    %152 = vector.extract_strided_slice %129 {offsets = [0, 32], sizes = [8, 32], strides = [1, 1]} : vector<8x128xf32> to vector<8x32xf32>
    %153 = arith.truncf %151 : vector<8x32xf32> to vector<8x32xbf16>
    %154 = tpu.transpose %152, [1, 0] : vector<8x32xf32> -> vector<32x8xf32>
    %155 = arith.truncf %154 : vector<32x8xf32> to vector<32x8xbf16>
    %cst_53 = arith.constant dense<0.000000e+00> : vector<8x8xf32>
    %156 = tpu.matmul %153, %155, %cst_53 {dimension_numbers = #tpu.dot_dimension_numbers<[1], [0], [0], [1], [0, 0, 1, 1], [], []>} : vector<8x32xbf16>, vector<32x8xbf16>, vector<8x8xf32> -> vector<8x8xf32>
    %cst_54 = arith.constant dense<0xFF800000> : vector<8xf32>
    %157 = vector.multi_reduction <maximumf>, %156, %cst_54 [1] : vector<8x8xf32> to vector<8xf32>
    %158 = vector.shape_cast %157 : vector<8xf32> to vector<8x1xf32>
    %159 = vector.broadcast %158 : vector<8x1xf32> to vector<8x8xf32>
    %160 = arith.subf %156, %159 : vector<8x8xf32>
    %161 = math.exp %160 : vector<8x8xf32>
    %cst_55 = arith.constant dense<0.000000e+00> : vector<8xf32>
    %162 = vector.multi_reduction <add>, %161, %cst_55 [1] : vector<8x8xf32> to vector<8xf32>
    %163 = vector.shape_cast %162 : vector<8xf32> to vector<8x1xf32>
    %164 = tpu.reciprocal %163 {approx = true} : vector<8x1xf32> -> vector<8x1xf32>
    %165 = vector.broadcast %164 : vector<8x1xf32> to vector<8x8xf32>
    %166 = arith.mulf %161, %165 : vector<8x8xf32>
    %167 = arith.truncf %166 : vector<8x8xf32> to vector<8x8xbf16>
    %168 = arith.truncf %152 : vector<8x32xf32> to vector<8x32xbf16>
    %cst_56 = arith.constant dense<0.000000e+00> : vector<8x32xf32>
    %169 = tpu.matmul %167, %168, %cst_56 {dimension_numbers = #tpu.dot_dimension_numbers<[1], [0], [0], [1], [0, 0, 1, 1], [], []>} : vector<8x8xbf16>, vector<8x32xbf16>, vector<8x32xf32> -> vector<8x32xf32>
    %170 = vector.extract_strided_slice %131 {offsets = [0, 64], sizes = [8, 32], strides = [1, 1]} : vector<8x128xf32> to vector<8x32xf32>
    %171 = vector.extract_strided_slice %129 {offsets = [0, 64], sizes = [8, 32], strides = [1, 1]} : vector<8x128xf32> to vector<8x32xf32>
    %172 = arith.truncf %170 : vector<8x32xf32> to vector<8x32xbf16>
    %173 = tpu.transpose %171, [1, 0] : vector<8x32xf32> -> vector<32x8xf32>
    %174 = arith.truncf %173 : vector<32x8xf32> to vector<32x8xbf16>
    %cst_57 = arith.constant dense<0.000000e+00> : vector<8x8xf32>
    %175 = tpu.matmul %172, %174, %cst_57 {dimension_numbers = #tpu.dot_dimension_numbers<[1], [0], [0], [1], [0, 0, 1, 1], [], []>} : vector<8x32xbf16>, vector<32x8xbf16>, vector<8x8xf32> -> vector<8x8xf32>
    %cst_58 = arith.constant dense<0xFF800000> : vector<8xf32>
    %176 = vector.multi_reduction <maximumf>, %175, %cst_58 [1] : vector<8x8xf32> to vector<8xf32>
    %177 = vector.shape_cast %176 : vector<8xf32> to vector<8x1xf32>
    %178 = vector.broadcast %177 : vector<8x1xf32> to vector<8x8xf32>
    %179 = arith.subf %175, %178 : vector<8x8xf32>
    %180 = math.exp %179 : vector<8x8xf32>
    %cst_59 = arith.constant dense<0.000000e+00> : vector<8xf32>
    %181 = vector.multi_reduction <add>, %180, %cst_59 [1] : vector<8x8xf32> to vector<8xf32>
    %182 = vector.shape_cast %181 : vector<8xf32> to vector<8x1xf32>
    %183 = tpu.reciprocal %182 {approx = true} : vector<8x1xf32> -> vector<8x1xf32>
    %184 = vector.broadcast %183 : vector<8x1xf32> to vector<8x8xf32>
    %185 = arith.mulf %180, %184 : vector<8x8xf32>
    %186 = arith.truncf %185 : vector<8x8xf32> to vector<8x8xbf16>
    %187 = arith.truncf %171 : vector<8x32xf32> to vector<8x32xbf16>
    %cst_60 = arith.constant dense<0.000000e+00> : vector<8x32xf32>
    %188 = tpu.matmul %186, %187, %cst_60 {dimension_numbers = #tpu.dot_dimension_numbers<[1], [0], [0], [1], [0, 0, 1, 1], [], []>} : vector<8x8xbf16>, vector<8x32xbf16>, vector<8x32xf32> -> vector<8x32xf32>
    %189 = vector.extract_strided_slice %131 {offsets = [0, 96], sizes = [8, 32], strides = [1, 1]} : vector<8x128xf32> to vector<8x32xf32>
    %190 = vector.extract_strided_slice %129 {offsets = [0, 96], sizes = [8, 32], strides = [1, 1]} : vector<8x128xf32> to vector<8x32xf32>
    %191 = arith.truncf %189 : vector<8x32xf32> to vector<8x32xbf16>
    %192 = tpu.transpose %190, [1, 0] : vector<8x32xf32> -> vector<32x8xf32>
    %193 = arith.truncf %192 : vector<32x8xf32> to vector<32x8xbf16>
    %cst_61 = arith.constant dense<0.000000e+00> : vector<8x8xf32>
    %194 = tpu.matmul %191, %193, %cst_61 {dimension_numbers = #tpu.dot_dimension_numbers<[1], [0], [0], [1], [0, 0, 1, 1], [], []>} : vector<8x32xbf16>, vector<32x8xbf16>, vector<8x8xf32> -> vector<8x8xf32>
    %cst_62 = arith.constant dense<0xFF800000> : vector<8xf32>
    %195 = vector.multi_reduction <maximumf>, %194, %cst_62 [1] : vector<8x8xf32> to vector<8xf32>
    %196 = vector.shape_cast %195 : vector<8xf32> to vector<8x1xf32>
    %197 = vector.broadcast %196 : vector<8x1xf32> to vector<8x8xf32>
    %198 = arith.subf %194, %197 : vector<8x8xf32>
    %199 = math.exp %198 : vector<8x8xf32>
    %cst_63 = arith.constant dense<0.000000e+00> : vector<8xf32>
    %200 = vector.multi_reduction <add>, %199, %cst_63 [1] : vector<8x8xf32> to vector<8xf32>
    %201 = vector.shape_cast %200 : vector<8xf32> to vector<8x1xf32>
    %202 = tpu.reciprocal %201 {approx = true} : vector<8x1xf32> -> vector<8x1xf32>
    %203 = vector.broadcast %202 : vector<8x1xf32> to vector<8x8xf32>
    %204 = arith.mulf %199, %203 : vector<8x8xf32>
    %205 = arith.truncf %204 : vector<8x8xf32> to vector<8x8xbf16>
    %206 = arith.truncf %190 : vector<8x32xf32> to vector<8x32xbf16>
    %cst_64 = arith.constant dense<0.000000e+00> : vector<8x32xf32>
    %207 = tpu.matmul %205, %206, %cst_64 {dimension_numbers = #tpu.dot_dimension_numbers<[1], [0], [0], [1], [0, 0, 1, 1], [], []>} : vector<8x8xbf16>, vector<8x32xbf16>, vector<8x32xf32> -> vector<8x32xf32>
    %208 = tpu.concatenate %150, %169, %188, %207 in 1 : vector<8x32xf32>, vector<8x32xf32>, vector<8x32xf32>, vector<8x32xf32> -> vector<8x128xf32>
    %209 = arith.truncf %208 : vector<8x128xf32> to vector<8x128xbf16>
    %c0_65 = arith.constant 0 : index
    %c0_66 = arith.constant 0 : index
    %210 = vector.load %arg9[%c0_65, %c0_66] : memref<128x128xbf16, #tpu.memory_space<vmem>>, vector<128x128xbf16>
    %cst_67 = arith.constant dense<0.000000e+00> : vector<8x128xf32>
    %211 = tpu.matmul %209, %210, %cst_67 {dimension_numbers = #tpu.dot_dimension_numbers<[1], [0], [0], [1], [0, 0, 1, 1], [], []>} : vector<8x128xbf16>, vector<128x128xbf16>, vector<8x128xf32> -> vector<8x128xf32>
    %c0_68 = arith.constant 0 : index
    %c0_69 = arith.constant 0 : index
    %212 = vector.load %arg10[%c0_68, %c0_69] : memref<1x128xf32, #tpu.memory_space<vmem>>, vector<1x128xf32>
    %213 = vector.broadcast %212 : vector<1x128xf32> to vector<8x128xf32>
    %214 = arith.addf %211, %213 : vector<8x128xf32>
    %215 = arith.addf %117, %214 : vector<8x128xf32>
    %cst_70 = arith.constant dense<0.000000e+00> : vector<8xf32>
    %216 = vector.multi_reduction <add>, %215, %cst_70 [1] : vector<8x128xf32> to vector<8xf32>
    %217 = vector.shape_cast %216 : vector<8xf32> to vector<8x1xf32>
    %cst_71 = arith.constant 1.280000e+02 : f32
    %218 = vector.broadcast %cst_71 : f32 to vector<8x1xf32>
    %219 = arith.divf %217, %218 : vector<8x1xf32>
    %220 = vector.broadcast %219 : vector<8x1xf32> to vector<8x128xf32>
    %221 = arith.subf %215, %220 : vector<8x128xf32>
    %222 = arith.mulf %221, %221 : vector<8x128xf32>
    %cst_72 = arith.constant dense<0.000000e+00> : vector<8xf32>
    %223 = vector.multi_reduction <add>, %222, %cst_72 [1] : vector<8x128xf32> to vector<8xf32>
    %224 = vector.shape_cast %223 : vector<8xf32> to vector<8x1xf32>
    %cst_73 = arith.constant 1.280000e+02 : f32
    %225 = vector.broadcast %cst_73 : f32 to vector<8x1xf32>
    %226 = arith.divf %224, %225 : vector<8x1xf32>
    %227 = vector.broadcast %219 : vector<8x1xf32> to vector<8x128xf32>
    %228 = arith.subf %215, %227 : vector<8x128xf32>
    %cst_74 = arith.constant 9.99999974E-6 : f32
    %229 = vector.broadcast %cst_74 : f32 to vector<8x1xf32>
    %230 = arith.addf %226, %229 : vector<8x1xf32>
    %231 = math.rsqrt %230 : vector<8x1xf32>
    %232 = vector.broadcast %231 : vector<8x1xf32> to vector<8x128xf32>
    %233 = arith.mulf %228, %232 : vector<8x128xf32>
    %c0_75 = arith.constant 0 : index
    %c0_76 = arith.constant 0 : index
    %234 = vector.load %arg17[%c0_75, %c0_76] : memref<1x128xf32, #tpu.memory_space<vmem>>, vector<1x128xf32>
    %235 = vector.broadcast %234 : vector<1x128xf32> to vector<8x128xf32>
    %236 = arith.mulf %233, %235 : vector<8x128xf32>
    %c0_77 = arith.constant 0 : index
    %c0_78 = arith.constant 0 : index
    %237 = vector.load %arg18[%c0_77, %c0_78] : memref<1x128xf32, #tpu.memory_space<vmem>>, vector<1x128xf32>
    %238 = vector.broadcast %237 : vector<1x128xf32> to vector<8x128xf32>
    %239 = arith.addf %236, %238 : vector<8x128xf32>
    %240 = arith.truncf %239 : vector<8x128xf32> to vector<8x128xbf16>
    %c0_79 = arith.constant 0 : index
    %c0_80 = arith.constant 0 : index
    %241 = vector.load %arg11[%c0_79, %c0_80] : memref<128x256xbf16, #tpu.memory_space<vmem>>, vector<128x256xbf16>
    %cst_81 = arith.constant dense<0.000000e+00> : vector<8x256xf32>
    %242 = tpu.matmul %240, %241, %cst_81 {dimension_numbers = #tpu.dot_dimension_numbers<[1], [0], [0], [1], [0, 0, 1, 1], [], []>} : vector<8x128xbf16>, vector<128x256xbf16>, vector<8x256xf32> -> vector<8x256xf32>
    %c0_82 = arith.constant 0 : index
    %c0_83 = arith.constant 0 : index
    %243 = vector.load %arg12[%c0_82, %c0_83] : memref<1x256xf32, #tpu.memory_space<vmem>>, vector<1x256xf32>
    %244 = vector.broadcast %243 : vector<1x256xf32> to vector<8x256xf32>
    %245 = arith.addf %242, %244 : vector<8x256xf32>
    %cst_84 = arith.constant 0.000000e+00 : f32
    %246 = vector.broadcast %cst_84 : f32 to vector<8x256xf32>
    %247 = arith.maximumf %245, %246 : vector<8x256xf32>
    %248 = arith.truncf %247 : vector<8x256xf32> to vector<8x256xbf16>
    %c0_85 = arith.constant 0 : index
    %c0_86 = arith.constant 0 : index
    %249 = vector.load %arg13[%c0_85, %c0_86] : memref<256x128xbf16, #tpu.memory_space<vmem>>, vector<256x128xbf16>
    %cst_87 = arith.constant dense<0.000000e+00> : vector<8x128xf32>
    %250 = tpu.matmul %248, %249, %cst_87 {dimension_numbers = #tpu.dot_dimension_numbers<[1], [0], [0], [1], [0, 0, 1, 1], [], []>} : vector<8x256xbf16>, vector<256x128xbf16>, vector<8x128xf32> -> vector<8x128xf32>
    %c0_88 = arith.constant 0 : index
    %c0_89 = arith.constant 0 : index
    %251 = vector.load %arg14[%c0_88, %c0_89] : memref<1x128xf32, #tpu.memory_space<vmem>>, vector<1x128xf32>
    %252 = vector.broadcast %251 : vector<1x128xf32> to vector<8x128xf32>
    %253 = arith.addf %250, %252 : vector<8x128xf32>
    %254 = arith.addf %239, %253 : vector<8x128xf32>
    %cst_90 = arith.constant dense<0.000000e+00> : vector<8xf32>
    %255 = vector.multi_reduction <add>, %254, %cst_90 [1] : vector<8x128xf32> to vector<8xf32>
    %256 = vector.shape_cast %255 : vector<8xf32> to vector<8x1xf32>
    %cst_91 = arith.constant 1.280000e+02 : f32
    %257 = vector.broadcast %cst_91 : f32 to vector<8x1xf32>
    %258 = arith.divf %256, %257 : vector<8x1xf32>
    %259 = vector.broadcast %258 : vector<8x1xf32> to vector<8x128xf32>
    %260 = arith.subf %254, %259 : vector<8x128xf32>
    %261 = arith.mulf %260, %260 : vector<8x128xf32>
    %cst_92 = arith.constant dense<0.000000e+00> : vector<8xf32>
    %262 = vector.multi_reduction <add>, %261, %cst_92 [1] : vector<8x128xf32> to vector<8xf32>
    %263 = vector.shape_cast %262 : vector<8xf32> to vector<8x1xf32>
    %cst_93 = arith.constant 1.280000e+02 : f32
    %264 = vector.broadcast %cst_93 : f32 to vector<8x1xf32>
    %265 = arith.divf %263, %264 : vector<8x1xf32>
    %266 = vector.broadcast %258 : vector<8x1xf32> to vector<8x128xf32>
    %267 = arith.subf %254, %266 : vector<8x128xf32>
    %cst_94 = arith.constant 9.99999974E-6 : f32
    %268 = vector.broadcast %cst_94 : f32 to vector<8x1xf32>
    %269 = arith.addf %265, %268 : vector<8x1xf32>
    %270 = math.rsqrt %269 : vector<8x1xf32>
    %271 = vector.broadcast %270 : vector<8x1xf32> to vector<8x128xf32>
    %272 = arith.mulf %267, %271 : vector<8x128xf32>
    %c0_95 = arith.constant 0 : index
    %c0_96 = arith.constant 0 : index
    %273 = vector.load %arg19[%c0_95, %c0_96] : memref<1x128xf32, #tpu.memory_space<vmem>>, vector<1x128xf32>
    %274 = vector.broadcast %273 : vector<1x128xf32> to vector<8x128xf32>
    %275 = arith.mulf %272, %274 : vector<8x128xf32>
    %c0_97 = arith.constant 0 : index
    %c0_98 = arith.constant 0 : index
    %276 = vector.load %arg20[%c0_97, %c0_98] : memref<1x128xf32, #tpu.memory_space<vmem>>, vector<1x128xf32>
    %277 = vector.broadcast %276 : vector<1x128xf32> to vector<8x128xf32>
    %278 = arith.addf %275, %277 : vector<8x128xf32>
    %c0_99 = arith.constant 0 : index
    %c0_100 = arith.constant 0 : index
    %279 = vector.load %arg21[%c0_99, %c0_100] : memref<8x128xf32, #tpu.memory_space<vmem>>, vector<8x128xf32>
    tpu.vector_store %arg21[%c0_99, %c0_100], %278 {strides = array<i32>} : memref<8x128xf32, #tpu.memory_space<vmem>>, vector<8x128xf32>,
    return
  }
  func.func @transform_0(%arg0: i32) -> (i32, i32) {
    %c0_i32 = arith.constant 0 : i32
    %c0_i32_0 = arith.constant 0 : i32
    return %arg0, %c0_i32 : i32, i32
  }
  func.func @transform_1(%arg0: i32) -> (i32, i32) {
    %c0_i32 = arith.constant 0 : i32
    %c0_i32_0 = arith.constant 0 : i32
    return %arg0, %c0_i32 : i32, i32
  }
  func.func @transform_2(%arg0: i32) -> (i32, i32) {
    %c0_i32 = arith.constant 0 : i32
    %c0_i32_0 = arith.constant 0 : i32
    %c0_i32_1 = arith.constant 0 : i32
    return %c0_i32, %c0_i32_0 : i32, i32
  }
  func.func @transform_3(%arg0: i32) -> (i32, i32) {
    %c0_i32 = arith.constant 0 : i32
    %c0_i32_0 = arith.constant 0 : i32
    %c0_i32_1 = arith.constant 0 : i32
    return %c0_i32, %c0_i32_0 : i32, i32
  }
  func.func @transform_4(%arg0: i32) -> (i32, i32) {
    %c0_i32 = arith.constant 0 : i32
    %c0_i32_0 = arith.constant 0 : i32
    %c0_i32_1 = arith.constant 0 : i32
    return %c0_i32, %c0_i32_0 : i32, i32
  }
  func.func @transform_5(%arg0: i32) -> (i32, i32) {
    %c0_i32 = arith.constant 0 : i32
    %c0_i32_0 = arith.constant 0 : i32
    %c0_i32_1 = arith.constant 0 : i32
    return %c0_i32, %c0_i32_0 : i32, i32
  }
  func.func @transform_6(%arg0: i32) -> (i32, i32) {
    %c0_i32 = arith.constant 0 : i32
    %c0_i32_0 = arith.constant 0 : i32
    %c0_i32_1 = arith.constant 0 : i32
    return %c0_i32, %c0_i32_0 : i32, i32
  }
  func.func @transform_7(%arg0: i32) -> (i32, i32) {
    %c0_i32 = arith.constant 0 : i32
    %c0_i32_0 = arith.constant 0 : i32
    %c0_i32_1 = arith.constant 0 : i32
    return %c0_i32, %c0_i32_0 : i32, i32
  }
  func.func @transform_8(%arg0: i32) -> (i32, i32) {
    %c0_i32 = arith.constant 0 : i32
    %c0_i32_0 = arith.constant 0 : i32
    %c0_i32_1 = arith.constant 0 : i32
    return %c0_i32, %c0_i32_0 : i32, i32
  }
  func.func @transform_9(%arg0: i32) -> (i32, i32) {
    %c0_i32 = arith.constant 0 : i32
    %c0_i32_0 = arith.constant 0 : i32
    %c0_i32_1 = arith.constant 0 : i32
    return %c0_i32, %c0_i32_0 : i32, i32
  }
  func.func @transform_10(%arg0: i32) -> (i32, i32) {
    %c0_i32 = arith.constant 0 : i32
    %c0_i32_0 = arith.constant 0 : i32
    %c0_i32_1 = arith.constant 0 : i32
    return %c0_i32, %c0_i32_0 : i32, i32
  }
  func.func @transform_11(%arg0: i32) -> (i32, i32) {
    %c0_i32 = arith.constant 0 : i32
    %c0_i32_0 = arith.constant 0 : i32
    %c0_i32_1 = arith.constant 0 : i32
    return %c0_i32, %c0_i32_0 : i32, i32
  }
  func.func @transform_12(%arg0: i32) -> (i32, i32) {
    %c0_i32 = arith.constant 0 : i32
    %c0_i32_0 = arith.constant 0 : i32
    %c0_i32_1 = arith.constant 0 : i32
    return %c0_i32, %c0_i32_0 : i32, i32
  }
  func.func @transform_13(%arg0: i32) -> (i32, i32) {
    %c0_i32 = arith.constant 0 : i32
    %c0_i32_0 = arith.constant 0 : i32
    %c0_i32_1 = arith.constant 0 : i32
    return %c0_i32, %c0_i32_0 : i32, i32
  }
  func.func @transform_14(%arg0: i32) -> (i32, i32) {
    %c0_i32 = arith.constant 0 : i32
    %c0_i32_0 = arith.constant 0 : i32
    %c0_i32_1 = arith.constant 0 : i32
    return %c0_i32, %c0_i32_0 : i32, i32
  }
  func.func @transform_15(%arg0: i32) -> (i32, i32) {
    %c0_i32 = arith.constant 0 : i32
    %c0_i32_0 = arith.constant 0 : i32
    %c0_i32_1 = arith.constant 0 : i32
    return %c0_i32, %c0_i32_0 : i32, i32
  }
  func.func @transform_16(%arg0: i32) -> (i32, i32) {
    %c0_i32 = arith.constant 0 : i32
    %c0_i32_0 = arith.constant 0 : i32
    %c0_i32_1 = arith.constant 0 : i32
    return %c0_i32, %c0_i32_0 : i32, i32
  }
  func.func @transform_17(%arg0: i32) -> (i32, i32) {
    %c0_i32 = arith.constant 0 : i32
    %c0_i32_0 = arith.constant 0 : i32
    %c0_i32_1 = arith.constant 0 : i32
    return %c0_i32, %c0_i32_0 : i32, i32
  }
  func.func @transform_18(%arg0: i32) -> (i32, i32) {
    %c0_i32 = arith.constant 0 : i32
    %c0_i32_0 = arith.constant 0 : i32
    %c0_i32_1 = arith.constant 0 : i32
    return %c0_i32, %c0_i32_0 : i32, i32
  }
  func.func @transform_19(%arg0: i32) -> (i32, i32) {
    %c0_i32 = arith.constant 0 : i32
    %c0_i32_0 = arith.constant 0 : i32
    %c0_i32_1 = arith.constant 0 : i32
    return %c0_i32, %c0_i32_0 : i32, i32
  }
  func.func @transform_20(%arg0: i32) -> (i32, i32) {
    %c0_i32 = arith.constant 0 : i32
    %c0_i32_0 = arith.constant 0 : i32
    return %arg0, %c0_i32 : i32, i32
  }
}

module attributes {stable_mosaic.version = 11 : i64} {
  func.func @_decoder_layer_kernel(%arg0: i32, %arg1: memref<8x128xf32, #tpu.memory_space<vmem>>, %arg2: memref<8x128xf32, #tpu.memory_space<vmem>>, %arg3: memref<128x128xbf16, #tpu.memory_space<vmem>>, %arg4: memref<1x128xf32, #tpu.memory_space<vmem>>, %arg5: memref<128x128xbf16, #tpu.memory_space<vmem>>, %arg6: memref<1x128xf32, #tpu.memory_space<vmem>>, %arg7: memref<128x128xbf16, #tpu.memory_space<vmem>>, %arg8: memref<1x128xf32, #tpu.memory_space<vmem>>, %arg9: memref<128x128xbf16, #tpu.memory_space<vmem>>, %arg10: memref<1x128xf32, #tpu.memory_space<vmem>>, %arg11: memref<128x256xbf16, #tpu.memory_space<vmem>>, %arg12: memref<1x256xf32, #tpu.memory_space<vmem>>, %arg13: memref<256x128xbf16, #tpu.memory_space<vmem>>, %arg14: memref<1x128xf32, #tpu.memory_space<vmem>>, %arg15: memref<1x128xf32, #tpu.memory_space<vmem>>, %arg16: memref<1x128xf32, #tpu.memory_space<vmem>>, %arg17: memref<1x128xf32, #tpu.memory_space<vmem>>, %arg18: memref<1x128xf32, #tpu.memory_space<vmem>>, %arg19: memref<1x128xf32, #tpu.memory_space<vmem>>, %arg20: memref<1x128xf32, #tpu.memory_space<vmem>>, %arg21: memref<8x128xf32, #tpu.memory_space<vmem>>) attributes {dimension_semantics = [#tpu.dimension_semantics<parallel>], iteration_bounds = array<i64: 2>, scalar_prefetch = 0 : i64, scratch_operands = 0 : i64, tpu.core_type = #tpu.core_type<tc>, window_params = [{transform_indices = @transform_0, window_bounds = array<i64: 8, 128>}, {transform_indices = @transform_1, window_bounds = array<i64: 8, 128>}, {pipeline_mode = #tpu.pipeline_mode<synchronous>, transform_indices = @transform_2, window_bounds = array<i64: 128, 128>}, {pipeline_mode = #tpu.pipeline_mode<synchronous>, transform_indices = @transform_3, window_bounds = array<i64: 1, 128>}, {pipeline_mode = #tpu.pipeline_mode<synchronous>, transform_indices = @transform_4, window_bounds = array<i64: 128, 128>}, {pipeline_mode = #tpu.pipeline_mode<synchronous>, transform_indices = @transform_5, window_bounds = array<i64: 1, 128>}, {pipeline_mode = #tpu.pipeline_mode<synchronous>, transform_indices = @transform_6, window_bounds = array<i64: 128, 128>}, {pipeline_mode = #tpu.pipeline_mode<synchronous>, transform_indices = @transform_7, window_bounds = array<i64: 1, 128>}, {pipeline_mode = #tpu.pipeline_mode<synchronous>, transform_indices = @transform_8, window_bounds = array<i64: 128, 128>}, {pipeline_mode = #tpu.pipeline_mode<synchronous>, transform_indices = @transform_9, window_bounds = array<i64: 1, 128>}, {pipeline_mode = #tpu.pipeline_mode<synchronous>, transform_indices = @transform_10, window_bounds = array<i64: 128, 256>}, {pipeline_mode = #tpu.pipeline_mode<synchronous>, transform_indices = @transform_11, window_bounds = array<i64: 1, 256>}, {pipeline_mode = #tpu.pipeline_mode<synchronous>, transform_indices = @transform_12, window_bounds = array<i64: 256, 128>}, {pipeline_mode = #tpu.pipeline_mode<synchronous>, transform_indices = @transform_13, window_bounds = array<i64: 1, 128>}, {pipeline_mode = #tpu.pipeline_mode<synchronous>, transform_indices = @transform_14, window_bounds = array<i64: 1, 128>}, {pipeline_mode = #tpu.pipeline_mode<synchronous>, transform_indices = @transform_15, window_bounds = array<i64: 1, 128>}, {pipeline_mode = #tpu.pipeline_mode<synchronous>, transform_indices = @transform_16, window_bounds = array<i64: 1, 128>}, {pipeline_mode = #tpu.pipeline_mode<synchronous>, transform_indices = @transform_17, window_bounds = array<i64: 1, 128>}, {pipeline_mode = #tpu.pipeline_mode<synchronous>, transform_indices = @transform_18, window_bounds = array<i64: 1, 128>}, {pipeline_mode = #tpu.pipeline_mode<synchronous>, transform_indices = @transform_19, window_bounds = array<i64: 1, 128>}, {transform_indices = @transform_20, window_bounds = array<i64: 8, 128>}]} {
    %c0 = arith.constant 0 : index
    %c0_0 = arith.constant 0 : index
    %0 = vector.load %arg1[%c0, %c0_0] : memref<8x128xf32, #tpu.memory_space<vmem>>, vector<8x128xf32>
    %c0_1 = arith.constant 0 : index
    %c0_2 = arith.constant 0 : index
    %1 = vector.load %arg2[%c0_1, %c0_2] : memref<8x128xf32, #tpu.memory_space<vmem>>, vector<8x128xf32>
    %2 = arith.truncf %0 : vector<8x128xf32> to vector<8x128xbf16>
    %c0_3 = arith.constant 0 : index
    %c0_4 = arith.constant 0 : index
    %3 = vector.load %arg3[%c0_3, %c0_4] : memref<128x128xbf16, #tpu.memory_space<vmem>>, vector<128x128xbf16>
    %cst = arith.constant dense<0.000000e+00> : vector<8x128xf32>
    %4 = tpu.matmul %2, %3, %cst {dimension_numbers = #tpu.dot_dimension_numbers<[1], [0], [0], [1], [0, 0, 1, 1], [], []>} : vector<8x128xbf16>, vector<128x128xbf16>, vector<8x128xf32> -> vector<8x128xf32>
    %c0_5 = arith.constant 0 : index
    %c0_6 = arith.constant 0 : index
    %5 = vector.load %arg4[%c0_5, %c0_6] : memref<1x128xf32, #tpu.memory_space<vmem>>, vector<1x128xf32>
    %6 = vector.broadcast %5 : vector<1x128xf32> to vector<8x128xf32>
    %7 = arith.addf %4, %6 : vector<8x128xf32>
    %cst_7 = arith.constant 0.176776692 : f32
    %8 = vector.broadcast %cst_7 : f32 to vector<8x128xf32>
    %9 = arith.mulf %7, %8 : vector<8x128xf32>
    %10 = vector.extract_strided_slice %9 {offsets = [0, 0], sizes = [8, 32], strides = [1, 1]} : vector<8x128xf32> to vector<8x32xf32>
    %11 = vector.extract_strided_slice %7 {offsets = [0, 0], sizes = [8, 32], strides = [1, 1]} : vector<8x128xf32> to vector<8x32xf32>
    %12 = arith.truncf %10 : vector<8x32xf32> to vector<8x32xbf16>
    %13 = tpu.transpose %11, [1, 0] : vector<8x32xf32> -> vector<32x8xf32>
    %14 = arith.truncf %13 : vector<32x8xf32> to vector<32x8xbf16>
    %cst_8 = arith.constant dense<0.000000e+00> : vector<8x8xf32>
    %15 = tpu.matmul %12, %14, %cst_8 {dimension_numbers = #tpu.dot_dimension_numbers<[1], [0], [0], [1], [0, 0, 1, 1], [], []>} : vector<8x32xbf16>, vector<32x8xbf16>, vector<8x8xf32> -> vector<8x8xf32>
    %cst_9 = arith.constant dense<0xFF800000> : vector<8xf32>
    %16 = vector.multi_reduction <maximumf>, %15, %cst_9 [1] : vector<8x8xf32> to vector<8xf32>
    %17 = vector.shape_cast %16 : vector<8xf32> to vector<8x1xf32>
    %18 = vector.broadcast %17 : vector<8x1xf32> to vector<8x8xf32>
    %19 = arith.subf %15, %18 : vector<8x8xf32>
    %20 = math.exp %19 : vector<8x8xf32>
    %cst_10 = arith.constant dense<0.000000e+00> : vector<8xf32>
    %21 = vector.multi_reduction <add>, %20, %cst_10 [1] : vector<8x8xf32> to vector<8xf32>
    %22 = vector.shape_cast %21 : vector<8xf32> to vector<8x1xf32>
    %23 = tpu.reciprocal %22 {approx = true} : vector<8x1xf32> -> vector<8x1xf32>
    %24 = vector.broadcast %23 : vector<8x1xf32> to vector<8x8xf32>
    %25 = arith.mulf %20, %24 : vector<8x8xf32>
    %26 = arith.truncf %25 : vector<8x8xf32> to vector<8x8xbf16>
    %27 = arith.truncf %11 : vector<8x32xf32> to vector<8x32xbf16>
    %cst_11 = arith.constant dense<0.000000e+00> : vector<8x32xf32>
    %28 = tpu.matmul %26, %27, %cst_11 {dimension_numbers = #tpu.dot_dimension_numbers<[1], [0], [0], [1], [0, 0, 1, 1], [], []>} : vector<8x8xbf16>, vector<8x32xbf16>, vector<8x32xf32> -> vector<8x32xf32>
    %29 = vector.extract_strided_slice %9 {offsets = [0, 32], sizes = [8, 32], strides = [1, 1]} : vector<8x128xf32> to vector<8x32xf32>
    %30 = vector.extract_strided_slice %7 {offsets = [0, 32], sizes = [8, 32], strides = [1, 1]} : vector<8x128xf32> to vector<8x32xf32>
    %31 = arith.truncf %29 : vector<8x32xf32> to vector<8x32xbf16>
    %32 = tpu.transpose %30, [1, 0] : vector<8x32xf32> -> vector<32x8xf32>
    %33 = arith.truncf %32 : vector<32x8xf32> to vector<32x8xbf16>
    %cst_12 = arith.constant dense<0.000000e+00> : vector<8x8xf32>
    %34 = tpu.matmul %31, %33, %cst_12 {dimension_numbers = #tpu.dot_dimension_numbers<[1], [0], [0], [1], [0, 0, 1, 1], [], []>} : vector<8x32xbf16>, vector<32x8xbf16>, vector<8x8xf32> -> vector<8x8xf32>
    %cst_13 = arith.constant dense<0xFF800000> : vector<8xf32>
    %35 = vector.multi_reduction <maximumf>, %34, %cst_13 [1] : vector<8x8xf32> to vector<8xf32>
    %36 = vector.shape_cast %35 : vector<8xf32> to vector<8x1xf32>
    %37 = vector.broadcast %36 : vector<8x1xf32> to vector<8x8xf32>
    %38 = arith.subf %34, %37 : vector<8x8xf32>
    %39 = math.exp %38 : vector<8x8xf32>
    %cst_14 = arith.constant dense<0.000000e+00> : vector<8xf32>
    %40 = vector.multi_reduction <add>, %39, %cst_14 [1] : vector<8x8xf32> to vector<8xf32>
    %41 = vector.shape_cast %40 : vector<8xf32> to vector<8x1xf32>
    %42 = tpu.reciprocal %41 {approx = true} : vector<8x1xf32> -> vector<8x1xf32>
    %43 = vector.broadcast %42 : vector<8x1xf32> to vector<8x8xf32>
    %44 = arith.mulf %39, %43 : vector<8x8xf32>
    %45 = arith.truncf %44 : vector<8x8xf32> to vector<8x8xbf16>
    %46 = arith.truncf %30 : vector<8x32xf32> to vector<8x32xbf16>
    %cst_15 = arith.constant dense<0.000000e+00> : vector<8x32xf32>
    %47 = tpu.matmul %45, %46, %cst_15 {dimension_numbers = #tpu.dot_dimension_numbers<[1], [0], [0], [1], [0, 0, 1, 1], [], []>} : vector<8x8xbf16>, vector<8x32xbf16>, vector<8x32xf32> -> vector<8x32xf32>
    %48 = vector.extract_strided_slice %9 {offsets = [0, 64], sizes = [8, 32], strides = [1, 1]} : vector<8x128xf32> to vector<8x32xf32>
    %49 = vector.extract_strided_slice %7 {offsets = [0, 64], sizes = [8, 32], strides = [1, 1]} : vector<8x128xf32> to vector<8x32xf32>
    %50 = arith.truncf %48 : vector<8x32xf32> to vector<8x32xbf16>
    %51 = tpu.transpose %49, [1, 0] : vector<8x32xf32> -> vector<32x8xf32>
    %52 = arith.truncf %51 : vector<32x8xf32> to vector<32x8xbf16>
    %cst_16 = arith.constant dense<0.000000e+00> : vector<8x8xf32>
    %53 = tpu.matmul %50, %52, %cst_16 {dimension_numbers = #tpu.dot_dimension_numbers<[1], [0], [0], [1], [0, 0, 1, 1], [], []>} : vector<8x32xbf16>, vector<32x8xbf16>, vector<8x8xf32> -> vector<8x8xf32>
    %cst_17 = arith.constant dense<0xFF800000> : vector<8xf32>
    %54 = vector.multi_reduction <maximumf>, %53, %cst_17 [1] : vector<8x8xf32> to vector<8xf32>
    %55 = vector.shape_cast %54 : vector<8xf32> to vector<8x1xf32>
    %56 = vector.broadcast %55 : vector<8x1xf32> to vector<8x8xf32>
    %57 = arith.subf %53, %56 : vector<8x8xf32>
    %58 = math.exp %57 : vector<8x8xf32>
    %cst_18 = arith.constant dense<0.000000e+00> : vector<8xf32>
    %59 = vector.multi_reduction <add>, %58, %cst_18 [1] : vector<8x8xf32> to vector<8xf32>
    %60 = vector.shape_cast %59 : vector<8xf32> to vector<8x1xf32>
    %61 = tpu.reciprocal %60 {approx = true} : vector<8x1xf32> -> vector<8x1xf32>
    %62 = vector.broadcast %61 : vector<8x1xf32> to vector<8x8xf32>
    %63 = arith.mulf %58, %62 : vector<8x8xf32>
    %64 = arith.truncf %63 : vector<8x8xf32> to vector<8x8xbf16>
    %65 = arith.truncf %49 : vector<8x32xf32> to vector<8x32xbf16>
    %cst_19 = arith.constant dense<0.000000e+00> : vector<8x32xf32>
    %66 = tpu.matmul %64, %65, %cst_19 {dimension_numbers = #tpu.dot_dimension_numbers<[1], [0], [0], [1], [0, 0, 1, 1], [], []>} : vector<8x8xbf16>, vector<8x32xbf16>, vector<8x32xf32> -> vector<8x32xf32>
    %67 = vector.extract_strided_slice %9 {offsets = [0, 96], sizes = [8, 32], strides = [1, 1]} : vector<8x128xf32> to vector<8x32xf32>
    %68 = vector.extract_strided_slice %7 {offsets = [0, 96], sizes = [8, 32], strides = [1, 1]} : vector<8x128xf32> to vector<8x32xf32>
    %69 = arith.truncf %67 : vector<8x32xf32> to vector<8x32xbf16>
    %70 = tpu.transpose %68, [1, 0] : vector<8x32xf32> -> vector<32x8xf32>
    %71 = arith.truncf %70 : vector<32x8xf32> to vector<32x8xbf16>
    %cst_20 = arith.constant dense<0.000000e+00> : vector<8x8xf32>
    %72 = tpu.matmul %69, %71, %cst_20 {dimension_numbers = #tpu.dot_dimension_numbers<[1], [0], [0], [1], [0, 0, 1, 1], [], []>} : vector<8x32xbf16>, vector<32x8xbf16>, vector<8x8xf32> -> vector<8x8xf32>
    %cst_21 = arith.constant dense<0xFF800000> : vector<8xf32>
    %73 = vector.multi_reduction <maximumf>, %72, %cst_21 [1] : vector<8x8xf32> to vector<8xf32>
    %74 = vector.shape_cast %73 : vector<8xf32> to vector<8x1xf32>
    %75 = vector.broadcast %74 : vector<8x1xf32> to vector<8x8xf32>
    %76 = arith.subf %72, %75 : vector<8x8xf32>
    %77 = math.exp %76 : vector<8x8xf32>
    %cst_22 = arith.constant dense<0.000000e+00> : vector<8xf32>
    %78 = vector.multi_reduction <add>, %77, %cst_22 [1] : vector<8x8xf32> to vector<8xf32>
    %79 = vector.shape_cast %78 : vector<8xf32> to vector<8x1xf32>
    %80 = tpu.reciprocal %79 {approx = true} : vector<8x1xf32> -> vector<8x1xf32>
    %81 = vector.broadcast %80 : vector<8x1xf32> to vector<8x8xf32>
    %82 = arith.mulf %77, %81 : vector<8x8xf32>
    %83 = arith.truncf %82 : vector<8x8xf32> to vector<8x8xbf16>
    %84 = arith.truncf %68 : vector<8x32xf32> to vector<8x32xbf16>
    %cst_23 = arith.constant dense<0.000000e+00> : vector<8x32xf32>
    %85 = tpu.matmul %83, %84, %cst_23 {dimension_numbers = #tpu.dot_dimension_numbers<[1], [0], [0], [1], [0, 0, 1, 1], [], []>} : vector<8x8xbf16>, vector<8x32xbf16>, vector<8x32xf32> -> vector<8x32xf32>
    %86 = tpu.concatenate %28, %47, %66, %85 in 1 : vector<8x32xf32>, vector<8x32xf32>, vector<8x32xf32>, vector<8x32xf32> -> vector<8x128xf32>
    %87 = arith.truncf %86 : vector<8x128xf32> to vector<8x128xbf16>
    %c0_24 = arith.constant 0 : index
    %c0_25 = arith.constant 0 : index
    %88 = vector.load %arg5[%c0_24, %c0_25] : memref<128x128xbf16, #tpu.memory_space<vmem>>, vector<128x128xbf16>
    %cst_26 = arith.constant dense<0.000000e+00> : vector<8x128xf32>
    %89 = tpu.matmul %87, %88, %cst_26 {dimension_numbers = #tpu.dot_dimension_numbers<[1], [0], [0], [1], [0, 0, 1, 1], [], []>} : vector<8x128xbf16>, vector<128x128xbf16>, vector<8x128xf32> -> vector<8x128xf32>
    %c0_27 = arith.constant 0 : index
    %c0_28 = arith.constant 0 : index
    %90 = vector.load %arg6[%c0_27, %c0_28] : memref<1x128xf32, #tpu.memory_space<vmem>>, vector<1x128xf32>
    %91 = vector.broadcast %90 : vector<1x128xf32> to vector<8x128xf32>
    %92 = arith.addf %89, %91 : vector<8x128xf32>
    %93 = arith.addf %0, %92 : vector<8x128xf32>
    %cst_29 = arith.constant dense<0.000000e+00> : vector<8xf32>
    %94 = vector.multi_reduction <add>, %93, %cst_29 [1] : vector<8x128xf32> to vector<8xf32>
    %95 = vector.shape_cast %94 : vector<8xf32> to vector<8x1xf32>
    %cst_30 = arith.constant 1.280000e+02 : f32
    %96 = vector.broadcast %cst_30 : f32 to vector<8x1xf32>
    %97 = arith.divf %95, %96 : vector<8x1xf32>
    %98 = vector.broadcast %97 : vector<8x1xf32> to vector<8x128xf32>
    %99 = arith.subf %93, %98 : vector<8x128xf32>
    %100 = arith.mulf %99, %99 : vector<8x128xf32>
    %cst_31 = arith.constant dense<0.000000e+00> : vector<8xf32>
    %101 = vector.multi_reduction <add>, %100, %cst_31 [1] : vector<8x128xf32> to vector<8xf32>
    %102 = vector.shape_cast %101 : vector<8xf32> to vector<8x1xf32>
    %cst_32 = arith.constant 1.280000e+02 : f32
    %103 = vector.broadcast %cst_32 : f32 to vector<8x1xf32>
    %104 = arith.divf %102, %103 : vector<8x1xf32>
    %105 = vector.broadcast %97 : vector<8x1xf32> to vector<8x128xf32>
    %106 = arith.subf %93, %105 : vector<8x128xf32>
    %cst_33 = arith.constant 9.99999974E-6 : f32
    %107 = vector.broadcast %cst_33 : f32 to vector<8x1xf32>
    %108 = arith.addf %104, %107 : vector<8x1xf32>
    %109 = math.rsqrt %108 : vector<8x1xf32>
    %110 = vector.broadcast %109 : vector<8x1xf32> to vector<8x128xf32>
    %111 = arith.mulf %106, %110 : vector<8x128xf32>
    %c0_34 = arith.constant 0 : index
    %c0_35 = arith.constant 0 : index
    %112 = vector.load %arg15[%c0_34, %c0_35] : memref<1x128xf32, #tpu.memory_space<vmem>>, vector<1x128xf32>
    %113 = vector.broadcast %112 : vector<1x128xf32> to vector<8x128xf32>
    %114 = arith.mulf %111, %113 : vector<8x128xf32>
    %c0_36 = arith.constant 0 : index
    %c0_37 = arith.constant 0 : index
    %115 = vector.load %arg16[%c0_36, %c0_37] : memref<1x128xf32, #tpu.memory_space<vmem>>, vector<1x128xf32>
    %116 = vector.broadcast %115 : vector<1x128xf32> to vector<8x128xf32>
    %117 = arith.addf %114, %116 : vector<8x128xf32>
    %118 = arith.truncf %117 : vector<8x128xf32> to vector<8x128xbf16>
    %c0_38 = arith.constant 0 : index
    %c0_39 = arith.constant 0 : index
    %119 = vector.load %arg7[%c0_38, %c0_39] : memref<128x128xbf16, #tpu.memory_space<vmem>>, vector<128x128xbf16>
    %cst_40 = arith.constant dense<0.000000e+00> : vector<8x128xf32>
    %120 = tpu.matmul %118, %119, %cst_40 {dimension_numbers = #tpu.dot_dimension_numbers<[1], [0], [0], [1], [0, 0, 1, 1], [], []>} : vector<8x128xbf16>, vector<128x128xbf16>, vector<8x128xf32> -> vector<8x128xf32>
    %c0_41 = arith.constant 0 : index
    %c0_42 = arith.constant 0 : index
    %121 = vector.load %arg8[%c0_41, %c0_42] : memref<1x128xf32, #tpu.memory_space<vmem>>, vector<1x128xf32>
    %122 = vector.broadcast %121 : vector<1x128xf32> to vector<8x128xf32>
    %123 = arith.addf %120, %122 : vector<8x128xf32>
    %124 = arith.truncf %1 : vector<8x128xf32> to vector<8x128xbf16>
    %c0_43 = arith.constant 0 : index
    %c0_44 = arith.constant 0 : index
    %125 = vector.load %arg7[%c0_43, %c0_44] : memref<128x128xbf16, #tpu.memory_space<vmem>>, vector<128x128xbf16>
    %cst_45 = arith.constant dense<0.000000e+00> : vector<8x128xf32>
    %126 = tpu.matmul %124, %125, %cst_45 {dimension_numbers = #tpu.dot_dimension_numbers<[1], [0], [0], [1], [0, 0, 1, 1], [], []>} : vector<8x128xbf16>, vector<128x128xbf16>, vector<8x128xf32> -> vector<8x128xf32>
    %c0_46 = arith.constant 0 : index
    %c0_47 = arith.constant 0 : index
    %127 = vector.load %arg8[%c0_46, %c0_47] : memref<1x128xf32, #tpu.memory_space<vmem>>, vector<1x128xf32>
    %128 = vector.broadcast %127 : vector<1x128xf32> to vector<8x128xf32>
    %129 = arith.addf %126, %128 : vector<8x128xf32>
    %cst_48 = arith.constant 0.176776692 : f32
    %130 = vector.broadcast %cst_48 : f32 to vector<8x128xf32>
    %131 = arith.mulf %123, %130 : vector<8x128xf32>
    %132 = vector.extract_strided_slice %131 {offsets = [0, 0], sizes = [8, 32], strides = [1, 1]} : vector<8x128xf32> to vector<8x32xf32>
    %133 = vector.extract_strided_slice %129 {offsets = [0, 0], sizes = [8, 32], strides = [1, 1]} : vector<8x128xf32> to vector<8x32xf32>
    %134 = arith.truncf %132 : vector<8x32xf32> to vector<8x32xbf16>
    %135 = tpu.transpose %133, [1, 0] : vector<8x32xf32> -> vector<32x8xf32>
    %136 = arith.truncf %135 : vector<32x8xf32> to vector<32x8xbf16>
    %cst_49 = arith.constant dense<0.000000e+00> : vector<8x8xf32>
    %137 = tpu.matmul %134, %136, %cst_49 {dimension_numbers = #tpu.dot_dimension_numbers<[1], [0], [0], [1], [0, 0, 1, 1], [], []>} : vector<8x32xbf16>, vector<32x8xbf16>, vector<8x8xf32> -> vector<8x8xf32>
    %cst_50 = arith.constant dense<0xFF800000> : vector<8xf32>
    %138 = vector.multi_reduction <maximumf>, %137, %cst_50 [1] : vector<8x8xf32> to vector<8xf32>
    %139 = vector.shape_cast %138 : vector<8xf32> to vector<8x1xf32>
    %140 = vector.broadcast %139 : vector<8x1xf32> to vector<8x8xf32>
    %141 = arith.subf %137, %140 : vector<8x8xf32>
    %142 = math.exp %141 : vector<8x8xf32>
    %cst_51 = arith.constant dense<0.000000e+00> : vector<8xf32>
    %143 = vector.multi_reduction <add>, %142, %cst_51 [1] : vector<8x8xf32> to vector<8xf32>
    %144 = vector.shape_cast %143 : vector<8xf32> to vector<8x1xf32>
    %145 = tpu.reciprocal %144 {approx = true} : vector<8x1xf32> -> vector<8x1xf32>
    %146 = vector.broadcast %145 : vector<8x1xf32> to vector<8x8xf32>
    %147 = arith.mulf %142, %146 : vector<8x8xf32>
    %148 = arith.truncf %147 : vector<8x8xf32> to vector<8x8xbf16>
    %149 = arith.truncf %133 : vector<8x32xf32> to vector<8x32xbf16>
    %cst_52 = arith.constant dense<0.000000e+00> : vector<8x32xf32>
    %150 = tpu.matmul %148, %149, %cst_52 {dimension_numbers = #tpu.dot_dimension_numbers<[1], [0], [0], [1], [0, 0, 1, 1], [], []>} : vector<8x8xbf16>, vector<8x32xbf16>, vector<8x32xf32> -> vector<8x32xf32>
    %151 = vector.extract_strided_slice %131 {offsets = [0, 32], sizes = [8, 32], strides = [1, 1]} : vector<8x128xf32> to vector<8x32xf32>
    %152 = vector.extract_strided_slice %129 {offsets = [0, 32], sizes = [8, 32], strides = [1, 1]} : vector<8x128xf32> to vector<8x32xf32>
    %153 = arith.truncf %151 : vector<8x32xf32> to vector<8x32xbf16>
    %154 = tpu.transpose %152, [1, 0] : vector<8x32xf32> -> vector<32x8xf32>
    %155 = arith.truncf %154 : vector<32x8xf32> to vector<32x8xbf16>
    %cst_53 = arith.constant dense<0.000000e+00> : vector<8x8xf32>
    %156 = tpu.matmul %153, %155, %cst_53 {dimension_numbers = #tpu.dot_dimension_numbers<[1], [0], [0], [1], [0, 0, 1, 1], [], []>} : vector<8x32xbf16>, vector<32x8xbf16>, vector<8x8xf32> -> vector<8x8xf32>
    %cst_54 = arith.constant dense<0xFF800000> : vector<8xf32>
    %157 = vector.multi_reduction <maximumf>, %156, %cst_54 [1] : vector<8x8xf32> to vector<8xf32>
    %158 = vector.shape_cast %157 : vector<8xf32> to vector<8x1xf32>
    %159 = vector.broadcast %158 : vector<8x1xf32> to vector<8x8xf32>
    %160 = arith.subf %156, %159 : vector<8x8xf32>
    %161 = math.exp %160 : vector<8x8xf32>
    %cst_55 = arith.constant dense<0.000000e+00> : vector<8xf32>
    %162 = vector.multi_reduction <add>, %161, %cst_55 [1] : vector<8x8xf32> to vector<8xf32>
    %163 = vector.shape_cast %162 : vector<8xf32> to vector<8x1xf32>
    %164 = tpu.reciprocal %163 {approx = true} : vector<8x1xf32> -> vector<8x1xf32>
    %165 = vector.broadcast %164 : vector<8x1xf32> to vector<8x8xf32>
    %166 = arith.mulf %161, %165 : vector<8x8xf32>
    %167 = arith.truncf %166 : vector<8x8xf32> to vector<8x8xbf16>
    %168 = arith.truncf %152 : vector<8x32xf32> to vector<8x32xbf16>
    %cst_56 = arith.constant dense<0.000000e+00> : vector<8x32xf32>
    %169 = tpu.matmul %167, %168, %cst_56 {dimension_numbers = #tpu.dot_dimension_numbers<[1], [0], [0], [1], [0, 0, 1, 1], [], []>} : vector<8x8xbf16>, vector<8x32xbf16>, vector<8x32xf32> -> vector<8x32xf32>
    %170 = vector.extract_strided_slice %131 {offsets = [0, 64], sizes = [8, 32], strides = [1, 1]} : vector<8x128xf32> to vector<8x32xf32>
    %171 = vector.extract_strided_slice %129 {offsets = [0, 64], sizes = [8, 32], strides = [1, 1]} : vector<8x128xf32> to vector<8x32xf32>
    %172 = arith.truncf %170 : vector<8x32xf32> to vector<8x32xbf16>
    %173 = tpu.transpose %171, [1, 0] : vector<8x32xf32> -> vector<32x8xf32>
    %174 = arith.truncf %173 : vector<32x8xf32> to vector<32x8xbf16>
    %cst_57 = arith.constant dense<0.000000e+00> : vector<8x8xf32>
    %175 = tpu.matmul %172, %174, %cst_57 {dimension_numbers = #tpu.dot_dimension_numbers<[1], [0], [0], [1], [0, 0, 1, 1], [], []>} : vector<8x32xbf16>, vector<32x8xbf16>, vector<8x8xf32> -> vector<8x8xf32>
    %cst_58 = arith.constant dense<0xFF800000> : vector<8xf32>
    %176 = vector.multi_reduction <maximumf>, %175, %cst_58 [1] : vector<8x8xf32> to vector<8xf32>
    %177 = vector.shape_cast %176 : vector<8xf32> to vector<8x1xf32>
    %178 = vector.broadcast %177 : vector<8x1xf32> to vector<8x8xf32>
    %179 = arith.subf %175, %178 : vector<8x8xf32>
    %180 = math.exp %179 : vector<8x8xf32>
    %cst_59 = arith.constant dense<0.000000e+00> : vector<8xf32>
    %181 = vector.multi_reduction <add>, %180, %cst_59 [1] : vector<8x8xf32> to vector<8xf32>
    %182 = vector.shape_cast %181 : vector<8xf32> to vector<8x1xf32>
    %183 = tpu.reciprocal %182 {approx = true} : vector<8x1xf32> -> vector<8x1xf32>
    %184 = vector.broadcast %183 : vector<8x1xf32> to vector<8x8xf32>
    %185 = arith.mulf %180, %184 : vector<8x8xf32>
    %186 = arith.truncf %185 : vector<8x8xf32> to vector<8x8xbf16>
    %187 = arith.truncf %171 : vector<8x32xf32> to vector<8x32xbf16>
    %cst_60 = arith.constant dense<0.000000e+00> : vector<8x32xf32>
    %188 = tpu.matmul %186, %187, %cst_60 {dimension_numbers = #tpu.dot_dimension_numbers<[1], [0], [0], [1], [0, 0, 1, 1], [], []>} : vector<8x8xbf16>, vector<8x32xbf16>, vector<8x32xf32> -> vector<8x32xf32>
    %189 = vector.extract_strided_slice %131 {offsets = [0, 96], sizes = [8, 32], strides = [1, 1]} : vector<8x128xf32> to vector<8x32xf32>
    %190 = vector.extract_strided_slice %129 {offsets = [0, 96], sizes = [8, 32], strides = [1, 1]} : vector<8x128xf32> to vector<8x32xf32>
    %191 = arith.truncf %189 : vector<8x32xf32> to vector<8x32xbf16>
    %192 = tpu.transpose %190, [1, 0] : vector<8x32xf32> -> vector<32x8xf32>
    %193 = arith.truncf %192 : vector<32x8xf32> to vector<32x8xbf16>
    %cst_61 = arith.constant dense<0.000000e+00> : vector<8x8xf32>
    %194 = tpu.matmul %191, %193, %cst_61 {dimension_numbers = #tpu.dot_dimension_numbers<[1], [0], [0], [1], [0, 0, 1, 1], [], []>} : vector<8x32xbf16>, vector<32x8xbf16>, vector<8x8xf32> -> vector<8x8xf32>
    %cst_62 = arith.constant dense<0xFF800000> : vector<8xf32>
    %195 = vector.multi_reduction <maximumf>, %194, %cst_62 [1] : vector<8x8xf32> to vector<8xf32>
    %196 = vector.shape_cast %195 : vector<8xf32> to vector<8x1xf32>
    %197 = vector.broadcast %196 : vector<8x1xf32> to vector<8x8xf32>
    %198 = arith.subf %194, %197 : vector<8x8xf32>
    %199 = math.exp %198 : vector<8x8xf32>
    %cst_63 = arith.constant dense<0.000000e+00> : vector<8xf32>
    %200 = vector.multi_reduction <add>, %199, %cst_63 [1] : vector<8x8xf32> to vector<8xf32>
    %201 = vector.shape_cast %200 : vector<8xf32> to vector<8x1xf32>
    %202 = tpu.reciprocal %201 {approx = true} : vector<8x1xf32> -> vector<8x1xf32>
    %203 = vector.broadcast %202 : vector<8x1xf32> to vector<8x8xf32>
    %204 = arith.mulf %199, %203 : vector<8x8xf32>
    %205 = arith.truncf %204 : vector<8x8xf32> to vector<8x8xbf16>
    %206 = arith.truncf %190 : vector<8x32xf32> to vector<8x32xbf16>
    %cst_64 = arith.constant dense<0.000000e+00> : vector<8x32xf32>
    %207 = tpu.matmul %205, %206, %cst_64 {dimension_numbers = #tpu.dot_dimension_numbers<[1], [0], [0], [1], [0, 0, 1, 1], [], []>} : vector<8x8xbf16>, vector<8x32xbf16>, vector<8x32xf32> -> vector<8x32xf32>
    %208 = tpu.concatenate %150, %169, %188, %207 in 1 : vector<8x32xf32>, vector<8x32xf32>, vector<8x32xf32>, vector<8x32xf32> -> vector<8x128xf32>
    %209 = arith.truncf %208 : vector<8x128xf32> to vector<8x128xbf16>
    %c0_65 = arith.constant 0 : index
    %c0_66 = arith.constant 0 : index
    %210 = vector.load %arg9[%c0_65, %c0_66] : memref<128x128xbf16, #tpu.memory_space<vmem>>, vector<128x128xbf16>
    %cst_67 = arith.constant dense<0.000000e+00> : vector<8x128xf32>
    %211 = tpu.matmul %209, %210, %cst_67 {dimension_numbers = #tpu.dot_dimension_numbers<[1], [0], [0], [1], [0, 0, 1, 1], [], []>} : vector<8x128xbf16>, vector<128x128xbf16>, vector<8x128xf32> -> vector<8x128xf32>
    %c0_68 = arith.constant 0 : index
    %c0_69 = arith.constant 0 : index
    %212 = vector.load %arg10[%c0_68, %c0_69] : memref<1x128xf32, #tpu.memory_space<vmem>>, vector<1x128xf32>
    %213 = vector.broadcast %212 : vector<1x128xf32> to vector<8x128xf32>
    %214 = arith.addf %211, %213 : vector<8x128xf32>
    %215 = arith.addf %117, %214 : vector<8x128xf32>
    %cst_70 = arith.constant dense<0.000000e+00> : vector<8xf32>
    %216 = vector.multi_reduction <add>, %215, %cst_70 [1] : vector<8x128xf32> to vector<8xf32>
    %217 = vector.shape_cast %216 : vector<8xf32> to vector<8x1xf32>
    %cst_71 = arith.constant 1.280000e+02 : f32
    %218 = vector.broadcast %cst_71 : f32 to vector<8x1xf32>
    %219 = arith.divf %217, %218 : vector<8x1xf32>
    %220 = vector.broadcast %219 : vector<8x1xf32> to vector<8x128xf32>
    %221 = arith.subf %215, %220 : vector<8x128xf32>
    %222 = arith.mulf %221, %221 : vector<8x128xf32>
    %cst_72 = arith.constant dense<0.000000e+00> : vector<8xf32>
    %223 = vector.multi_reduction <add>, %222, %cst_72 [1] : vector<8x128xf32> to vector<8xf32>
    %224 = vector.shape_cast %223 : vector<8xf32> to vector<8x1xf32>
    %cst_73 = arith.constant 1.280000e+02 : f32
    %225 = vector.broadcast %cst_73 : f32 to vector<8x1xf32>
    %226 = arith.divf %224, %225 : vector<8x1xf32>
    %227 = vector.broadcast %219 : vector<8x1xf32> to vector<8x128xf32>
    %228 = arith.subf %215, %227 : vector<8x128xf32>
    %cst_74 = arith.constant 9.99999974E-6 : f32
    %229 = vector.broadcast %cst_74 : f32 to vector<8x1xf32>
    %230 = arith.addf %226, %229 : vector<8x1xf32>
    %231 = math.rsqrt %230 : vector<8x1xf32>
    %232 = vector.broadcast %231 : vector<8x1xf32> to vector<8x128xf32>
    %233 = arith.mulf %228, %232 : vector<8x128xf32>
    %c0_75 = arith.constant 0 : index
    %c0_76 = arith.constant 0 : index
    %234 = vector.load %arg17[%c0_75, %c0_76] : memref<1x128xf32, #tpu.memory_space<vmem>>, vector<1x128xf32>
    %235 = vector.broadcast %234 : vector<1x128xf32> to vector<8x128xf32>
    %236 = arith.mulf %233, %235 : vector<8x128xf32>
    %c0_77 = arith.constant 0 : index
    %c0_78 = arith.constant 0 : index
    %237 = vector.load %arg18[%c0_77, %c0_78] : memref<1x128xf32, #tpu.memory_space<vmem>>, vector<1x128xf32>
    %238 = vector.broadcast %237 : vector<1x128xf32> to vector<8x128xf32>
    %239 = arith.addf %236, %238 : vector<8x128xf32>
    %240 = arith.truncf %239 : vector<8x128xf32> to vector<8x128xbf16>
    %c0_79 = arith.constant 0 : index
    %c0_80 = arith.constant 0 : index
    %241 = vector.load %arg11[%c0_79, %c0_80] : memref<128x256xbf16, #tpu.memory_space<vmem>>, vector<128x256xbf16>
    %cst_81 = arith.constant dense<0.000000e+00> : vector<8x256xf32>
    %242 = tpu.matmul %240, %241, %cst_81 {dimension_numbers = #tpu.dot_dimension_numbers<[1], [0], [0], [1], [0, 0, 1, 1], [], []>} : vector<8x128xbf16>, vector<128x256xbf16>, vector<8x256xf32> -> vector<8x256xf32>
    %c0_82 = arith.constant 0 : index
    %c0_83 = arith.constant 0 : index
    %243 = vector.load %arg12[%c0_82, %c0_83] : memref<1x256xf32, #tpu.memory_space<vmem>>, vector<1x256xf32>
    %244 = vector.broadcast %243 : vector<1x256xf32> to vector<8x256xf32>
    %245 = arith.addf %242, %244 : vector<8x256xf32>
    %cst_84 = arith.constant 0.000000e+00 : f32
    %246 = vector.broadcast %cst_84 : f32 to vector<8x256xf32>
    %247 = arith.maximumf %245, %246 : vector<8x256xf32>
    %248 = arith.truncf %247 : vector<8x256xf32> to vector<8x256xbf16>
    %c0_85 = arith.constant 0 : index
    %c0_86 = arith.constant 0 : index
    %249 = vector.load %arg13[%c0_85, %c0_86] : memref<256x128xbf16, #tpu.memory_space<vmem>>, vector<256x128xbf16>
    %cst_87 = arith.constant dense<0.000000e+00> : vector<8x128xf32>
    %250 = tpu.matmul %248, %249, %cst_87 {dimension_numbers = #tpu.dot_dimension_numbers<[1], [0], [0], [1], [0, 0, 1, 1], [], []>} : vector<8x256xbf16>, vector<256x128xbf16>, vector<8x128xf32> -> vector<8x128xf32>
    %c0_88 = arith.constant 0 : index
    %c0_89 = arith.constant 0 : index
    %251 = vector.load %arg14[%c0_88, %c0_89] : memref<1x128xf32, #tpu.memory_space<vmem>>, vector<1x128xf32>
    %252 = vector.broadcast %251 : vector<1x128xf32> to vector<8x128xf32>
    %253 = arith.addf %250, %252 : vector<8x128xf32>
    %254 = arith.addf %239, %253 : vector<8x128xf32>
    %cst_90 = arith.constant dense<0.000000e+00> : vector<8xf32>
    %255 = vector.multi_reduction <add>, %254, %cst_90 [1] : vector<8x128xf32> to vector<8xf32>
    %256 = vector.shape_cast %255 : vector<8xf32> to vector<8x1xf32>
    %cst_91 = arith.constant 1.280000e+02 : f32
    %257 = vector.broadcast %cst_91 : f32 to vector<8x1xf32>
    %258 = arith.divf %256, %257 : vector<8x1xf32>
    %259 = vector.broadcast %258 : vector<8x1xf32> to vector<8x128xf32>
    %260 = arith.subf %254, %259 : vector<8x128xf32>
    %261 = arith.mulf %260, %260 : vector<8x128xf32>
    %cst_92 = arith.constant dense<0.000000e+00> : vector<8xf32>
    %262 = vector.multi_reduction <add>, %261, %cst_92 [1] : vector<8x128xf32> to vector<8xf32>
    %263 = vector.shape_cast %262 : vector<8xf32> to vector<8x1xf32>
    %cst_93 = arith.constant 1.280000e+02 : f32
    %264 = vector.broadcast %cst_93 : f32 to vector<8x1xf32>
    %265 = arith.divf %263, %264 : vector<8x1xf32>
    %266 = vector.broadcast %258 : vector<8x1xf32> to vector<8x128xf32>
    %267 = arith.subf %254, %266 : vector<8x128xf32>
    %cst_94 = arith.constant 9.99999974E-6 : f32
    %268 = vector.broadcast %cst_94 : f32 to vector<8x1xf32>
    %269 = arith.addf %265, %268 : vector<8x1xf32>
    %270 = math.rsqrt %269 : vector<8x1xf32>
    %271 = vector.broadcast %270 : vector<8x1xf32> to vector<8x128xf32>
    %272 = arith.mulf %267, %271 : vector<8x128xf32>
    %c0_95 = arith.constant 0 : index
    %c0_96 = arith.constant 0 : index
    %273 = vector.load %arg19[%c0_95, %c0_96] : memref<1x128xf32, #tpu.memory_space<vmem>>, vector<1x128xf32>
    %274 = vector.broadcast %273 : vector<1x128xf32> to vector<8x128xf32>
    %275 = arith.mulf %272, %274 : vector<8x128xf32>
    %c0_97 = arith.constant 0 : index
    %c0_98 = arith.constant 0 : index
    %276 = vector.load %arg20[%c0_97, %c0_98] : memref<1x128xf32, #tpu.memory_space<vmem>>, vector<1x128xf32>
    %277 = vector.broadcast %276 : vector<1x128xf32> to vector<8x128xf32>
    %278 = arith.addf %275, %277 : vector<8x128xf32>
    %c0_99 = arith.constant 0 : index
    %c0_100 = arith.constant 0 : index
    %279 = vector.load %arg21[%c0_99, %c0_100] : memref<8x128xf32, #tpu.memory_space<vmem>>, vector<8x128xf32>
    tpu.vector_store %arg21[%c0_99, %c0_100], %278 {strides = array<i32>} : memref<8x128xf32, #tpu.memory_space<vmem>>, vector<8x128xf32>,
    return
  }
  func.func @transform_0(%arg0: i32) -> (i32, i32) {
    %c0_i32 = arith.constant 0 : i32
    %c0_i32_0 = arith.constant 0 : i32
    return %arg0, %c0_i32 : i32, i32
  }
  func.func @transform_1(%arg0: i32) -> (i32, i32) {
    %c0_i32 = arith.constant 0 : i32
    %c0_i32_0 = arith.constant 0 : i32
    return %arg0, %c0_i32 : i32, i32
  }
  func.func @transform_2(%arg0: i32) -> (i32, i32) {
    %c0_i32 = arith.constant 0 : i32
    %c0_i32_0 = arith.constant 0 : i32
    %c0_i32_1 = arith.constant 0 : i32
    return %c0_i32, %c0_i32_0 : i32, i32
  }
  func.func @transform_3(%arg0: i32) -> (i32, i32) {
    %c0_i32 = arith.constant 0 : i32
    %c0_i32_0 = arith.constant 0 : i32
    %c0_i32_1 = arith.constant 0 : i32
    return %c0_i32, %c0_i32_0 : i32, i32
  }
  func.func @transform_4(%arg0: i32) -> (i32, i32) {
    %c0_i32 = arith.constant 0 : i32
    %c0_i32_0 = arith.constant 0 : i32
    %c0_i32_1 = arith.constant 0 : i32
    return %c0_i32, %c0_i32_0 : i32, i32
  }
  func.func @transform_5(%arg0: i32) -> (i32, i32) {
    %c0_i32 = arith.constant 0 : i32
    %c0_i32_0 = arith.constant 0 : i32
    %c0_i32_1 = arith.constant 0 : i32
    return %c0_i32, %c0_i32_0 : i32, i32
  }
  func.func @transform_6(%arg0: i32) -> (i32, i32) {
    %c0_i32 = arith.constant 0 : i32
    %c0_i32_0 = arith.constant 0 : i32
    %c0_i32_1 = arith.constant 0 : i32
    return %c0_i32, %c0_i32_0 : i32, i32
  }
  func.func @transform_7(%arg0: i32) -> (i32, i32) {
    %c0_i32 = arith.constant 0 : i32
    %c0_i32_0 = arith.constant 0 : i32
    %c0_i32_1 = arith.constant 0 : i32
    return %c0_i32, %c0_i32_0 : i32, i32
  }
  func.func @transform_8(%arg0: i32) -> (i32, i32) {
    %c0_i32 = arith.constant 0 : i32
    %c0_i32_0 = arith.constant 0 : i32
    %c0_i32_1 = arith.constant 0 : i32
    return %c0_i32, %c0_i32_0 : i32, i32
  }
  func.func @transform_9(%arg0: i32) -> (i32, i32) {
    %c0_i32 = arith.constant 0 : i32
    %c0_i32_0 = arith.constant 0 : i32
    %c0_i32_1 = arith.constant 0 : i32
    return %c0_i32, %c0_i32_0 : i32, i32
  }
  func.func @transform_10(%arg0: i32) -> (i32, i32) {
    %c0_i32 = arith.constant 0 : i32
    %c0_i32_0 = arith.constant 0 : i32
    %c0_i32_1 = arith.constant 0 : i32
    return %c0_i32, %c0_i32_0 : i32, i32
  }
  func.func @transform_11(%arg0: i32) -> (i32, i32) {
    %c0_i32 = arith.constant 0 : i32
    %c0_i32_0 = arith.constant 0 : i32
    %c0_i32_1 = arith.constant 0 : i32
    return %c0_i32, %c0_i32_0 : i32, i32
  }
  func.func @transform_12(%arg0: i32) -> (i32, i32) {
    %c0_i32 = arith.constant 0 : i32
    %c0_i32_0 = arith.constant 0 : i32
    %c0_i32_1 = arith.constant 0 : i32
    return %c0_i32, %c0_i32_0 : i32, i32
  }
  func.func @transform_13(%arg0: i32) -> (i32, i32) {
    %c0_i32 = arith.constant 0 : i32
    %c0_i32_0 = arith.constant 0 : i32
    %c0_i32_1 = arith.constant 0 : i32
    return %c0_i32, %c0_i32_0 : i32, i32
  }
  func.func @transform_14(%arg0: i32) -> (i32, i32) {
    %c0_i32 = arith.constant 0 : i32
    %c0_i32_0 = arith.constant 0 : i32
    %c0_i32_1 = arith.constant 0 : i32
    return %c0_i32, %c0_i32_0 : i32, i32
  }
  func.func @transform_15(%arg0: i32) -> (i32, i32) {
    %c0_i32 = arith.constant 0 : i32
    %c0_i32_0 = arith.constant 0 : i32
    %c0_i32_1 = arith.constant 0 : i32
    return %c0_i32, %c0_i32_0 : i32, i32
  }
  func.func @transform_16(%arg0: i32) -> (i32, i32) {
    %c0_i32 = arith.constant 0 : i32
    %c0_i32_0 = arith.constant 0 : i32
    %c0_i32_1 = arith.constant 0 : i32
    return %c0_i32, %c0_i32_0 : i32, i32
  }
  func.func @transform_17(%arg0: i32) -> (i32, i32) {
    %c0_i32 = arith.constant 0 : i32
    %c0_i32_0 = arith.constant 0 : i32
    %c0_i32_1 = arith.constant 0 : i32
    return %c0_i32, %c0_i32_0 : i32, i32
  }
  func.func @transform_18(%arg0: i32) -> (i32, i32) {
    %c0_i32 = arith.constant 0 : i32
    %c0_i32_0 = arith.constant 0 : i32
    %c0_i32_1 = arith.constant 0 : i32
    return %c0_i32, %c0_i32_0 : i32, i32
  }
  func.func @transform_19(%arg0: i32) -> (i32, i32) {
    %c0_i32 = arith.constant 0 : i32
    %c0_i32_0 = arith.constant 0 : i32
    %c0_i32_1 = arith.constant 0 : i32
    return %c0_i32, %c0_i32_0 : i32, i32
  }
  func.func @transform_20(%arg0: i32) -> (i32, i32) {
    %c0_i32 = arith.constant 0 : i32
    %c0_i32_0 = arith.constant 0 : i32
    return %arg0, %c0_i32 : i32, i32
  }
}

</mosaic_0001>

<llo_original>
// kernel: decoder_forward.5
$region0: #{decoder_forward.5}
  #allocation0 [shape = 'u32[]', space=smem, size = 0x4, offset = 0x4, fixed_abs, tag = 'smem constant byte address 0x4 - core index']
  #allocation1 [shape = 'u32[144,128]{1,0:T(1,128)}', space=vmem, size = 0x12000, scoped, tag = 'internal scratch']
  %s0 = inlined_call_operand.vmem [shape: f32[16,128], index: 0, kind: input, shape index: {}]
  %s1 = inlined_call_operand.vmem [shape: bf16[128,128], index: 1, kind: input, shape index: {}]
  %s2 = inlined_call_operand.vmem [shape: f32[1,128], index: 2, kind: input, shape index: {}]
  %s3 = inlined_call_operand.hbm [shape: f32[16,128], index: 3, kind: output, shape index: {}]
  %s4 = sld [smem:[#allocation0]]
  $region22: #{decoder_forward.5} parent=0
    _
  %s6 = ssub.s32 1, %s4
  %s7 = scalar_select 0, %s6, %s4
  $region1: #{decoder_forward.5} parent=0
    #allocation2 [shape = 'u8[8192]{0}', space=vmem, size = 0x2000, scoped, tag = 'output window, operand 0, single buffered']
    #allocation3 [shape = 's32[1]{0}', space=sflag, size = 0x4, scoped, tag = 'scoped memory for decoder_forward.5']
    %8 = vsyncpa [#allocation3], 0
    // Predicated region
    $region2: #{decoder_forward.5} parent=1 // pred_check
      _
    $region3: #{decoder_forward.5} parent=1 // pred_check_branch
      %10 = sbr.rel (0) target = $region5
    $region4: #{decoder_forward.5} parent=1 // pred_region
      _
    $region5: #{decoder_forward.5} parent=1 // pred_fallthru
      _
    // Predicated region
    $region6: #{decoder_forward.5} parent=1 // pred_check
      _
    $region7: #{decoder_forward.5} parent=1 // pred_check_branch
      %12 = sbr.rel (0) target = $region9
    $region8: #{decoder_forward.5} parent=1 // pred_region
      _
    $region9: #{decoder_forward.5} parent=1 // pred_fallthru
      _
    // Predicated region
    $region10: #{decoder_forward.5} parent=1 // pred_check
      _
    $region11: #{decoder_forward.5} parent=1 // pred_check_branch
      %14 = sbr.rel (0) target = $region13
    $region12: #{decoder_forward.5} parent=1 // pred_region
      _
    $region13: #{decoder_forward.5} parent=1 // pred_fallthru
      _
    %v16 = vld [vmem:[%s0] sm:$0xff]
    %v17 = vld [vmem:[%s0 + $0x8] sm:$0xff]
    %v18 = vpack.c.bf16 %v17, %v16
    %v19 = vld [vmem:[%s1] sm:$0xf]
    %v20 = vld [vmem:[%s1 + $0x4] sm:$0xf]
    %v21 = vld [vmem:[%s1 + $0x8] sm:$0xf]
    %v22 = vld [vmem:[%s1 + $0xc] sm:$0xf]
    %v23 = vld [vmem:[%s1 + $0x10] sm:$0xf]
    %v24 = vld [vmem:[%s1 + $0x14] sm:$0xf]
    %v25 = vld [vmem:[%s1 + $0x18] sm:$0xf]
    %v26 = vld [vmem:[%s1 + $0x1c] sm:$0xf]
    %v27 = vld [vmem:[%s1 + $0x20] sm:$0xf]
    %v28 = vld [vmem:[%s1 + $0x24] sm:$0xf]
    %v29 = vld [vmem:[%s1 + $0x28] sm:$0xf]
    %v30 = vld [vmem:[%s1 + $0x2c] sm:$0xf]
    %v31 = vld [vmem:[%s1 + $0x30] sm:$0xf]
    %v32 = vld [vmem:[%s1 + $0x34] sm:$0xf]
    %v33 = vld [vmem:[%s1 + $0x38] sm:$0xf]
    %v34 = vld [vmem:[%s1 + $0x3c] sm:$0xf]
    %v35 = vld [vmem:[%s2] sm:$0x1]
    %v37 = vlaneseq
    %v38 = vshrl.u32 %v37, 7
    %v39 = vsub.s32 0, %v38
    %v40 = vrot.slane %v35, %v39
    %v58 = vunpack.c.l.b16 %v19
    %v59 = vunpack.c.l.b16 %v20
    %v60 = vunpack.c.l.b16 %v21
    %v61 = vunpack.c.l.b16 %v22
    %v62 = vunpack.c.l.b16 %v23
    %v63 = vunpack.c.l.b16 %v24
    %v64 = vunpack.c.l.b16 %v25
    %v65 = vunpack.c.l.b16 %v26
    %v66 = vunpack.c.l.b16 %v27
    %v67 = vunpack.c.l.b16 %v28
    %v68 = vunpack.c.l.b16 %v29
    %v69 = vunpack.c.l.b16 %v30
    %v70 = vunpack.c.l.b16 %v31
    %v71 = vunpack.c.l.b16 %v32
    %v72 = vunpack.c.l.b16 %v33
    %v73 = vunpack.c.l.b16 %v34
    %v74 = vpack.c.b16 %v59, %v58
    %v75 = vpack.c.b16 %v61, %v60
    %v76 = vpack.c.b16 %v63, %v62
    %v77 = vpack.c.b16 %v65, %v64
    %v78 = vpack.c.b16 %v67, %v66
    %v79 = vpack.c.b16 %v69, %v68
    %v80 = vpack.c.b16 %v71, %v70
    %v81 = vpack.c.b16 %v73, %v72
    %90 = vmatprep.subr.bf16.mxu0 0
    %91 = vmatpush1.bf16.msra.mxu0 %v74
    %92 = vmatprep.subr.bf16.mxu0 0
    %93 = vmatpush1.bf16.msra.mxu0 %v75
    %94 = vmatprep.subr.bf16.mxu0 0
    %95 = vmatpush1.bf16.msra.mxu0 %v76
    %96 = vmatprep.subr.bf16.mxu0 0
    %97 = vmatpush1.bf16.msra.mxu0 %v77
    %98 = vmatprep.subr.bf16.mxu0 0
    %99 = vmatpush1.bf16.msra.mxu0 %v78
    %100 = vmatprep.subr.bf16.mxu0 0
    %101 = vmatpush1.bf16.msra.mxu0 %v79
    %102 = vmatprep.subr.bf16.mxu0 0
    %103 = vmatpush1.bf16.msra.mxu0 %v80
    %104 = vmatprep.subr.bf16.mxu0 0
    %105 = vmatpush1.bf16.msra.mxu0 %v81
    %106 = vmatprep.subr.bf16.mxu0 0
    %107 = vmatpush1.bf16.msra.mxu0 0
    %108 = vmatprep.subr.bf16.mxu0 0
    %109 = vmatpush1.bf16.msra.mxu0 0
    %110 = vmatprep.subr.bf16.mxu0 0
    %111 = vmatpush1.bf16.msra.mxu0 0
    %112 = vmatprep.subr.bf16.mxu0 0
    %113 = vmatpush1.bf16.msra.mxu0 0
    %114 = vmatprep.subr.bf16.mxu0 0
    %115 = vmatpush1.bf16.msra.mxu0 0
    %116 = vmatprep.subr.bf16.mxu0 0
    %117 = vmatpush1.bf16.msra.mxu0 0
    %118 = vmatprep.subr.bf16.mxu0 0
    %119 = vmatpush1.bf16.msra.mxu0 0
    %120 = vmatprep.subr.bf16.mxu0 0
    %121 = vmatpush1.bf16.msra.mxu0 0
    %122 = vmatprep.mubr.bf16.mxu0 0
    %123 = vmatmul.mubr.bf16.gmra.mrb[0].mxu0 %v18
    %v124 = vpop.f32.mrb[0].mxu0
    %v125 = vadd.f32 %v40, %v124
    %v126 = vpop.f32.mrb[0].mxu0
    %v127 = vpop.f32.mrb[0].mxu0
    %v128 = vadd.f32 %v40, %v127
    %v129 = vpop.f32.mrb[0].mxu0
    %130 = vdwg.mxu0
    %131 = vst [vmem:[#allocation2] sm:$0xff] %v125
    %132 = vst [vmem:[#allocation2 + $0x8] sm:$0xff] %v128
    // Predicated region
    $region14: #{decoder_forward.5} parent=1 // pred_check
      _
    $region15: #{decoder_forward.5} parent=1 // pred_check_branch
      %134 = sbr.rel (0) target = $region17
    $region16: #{decoder_forward.5} parent=1 // pred_region
      %s136 = ssub.s32 256, 256
      %137 = vsyncadd [#allocation3], %s136
      %s138 = sshll.u32 [#allocation2], 4
      %s139 = int_to_ptr.vmem [resolvable:$true] %s138
      %144 = dma.vmem_to_hbm [thread:$0]  %s139, 256, %s3, [#allocation3], 128, 128, 8
    $region17: #{decoder_forward.5} parent=1 // pred_fallthru
      _
    // Predicated region
    $region18: #{decoder_forward.5} parent=1 // pred_check
      _
    $region19: #{decoder_forward.5} parent=1 // pred_check_branch
      %146 = sbr.rel (0) target = $region21
    $region20: #{decoder_forward.5} parent=1 // pred_region
      %147 = dma.done [#allocation3], 256
    $region21: #{decoder_forward.5} parent=1 // pred_fallthru
      _
    %148 = vsyncpa [#allocation3], 1

// kernel: decoder_forward.3
$region0: #{decoder_forward.3}
  #allocation0 [shape = 'u32[]', space=smem, size = 0x4, offset = 0x4, fixed_abs, tag = 'smem constant byte address 0x4 - core index']
  #allocation1 [shape = 'u32[144,128]{1,0:T(1,128)}', space=vmem, size = 0x12000, scoped, tag = 'internal scratch']
  %s0 = inlined_call_operand.vmem [shape: f32[16,128], index: 0, kind: input, shape index: {}]
  %s1 = inlined_call_operand.hbm [shape: f32[16,128], index: 1, kind: input, shape index: {}]
  %s2 = inlined_call_operand.hbm [shape: bf16[128,128], index: 2, kind: input, shape index: {}]
  %s3 = inlined_call_operand.vmem [shape: f32[1,128], index: 3, kind: input, shape index: {}]
  %s4 = inlined_call_operand.hbm [shape: bf16[128,128], index: 4, kind: input, shape index: {}]
  %s5 = inlined_call_operand.vmem [shape: f32[1,128], index: 5, kind: input, shape index: {}]
  %s6 = inlined_call_operand.hbm [shape: bf16[128,128], index: 6, kind: input, shape index: {}]
  %s7 = inlined_call_operand.hbm [shape: f32[1,128], index: 7, kind: input, shape index: {}]
  %s8 = inlined_call_operand.hbm [shape: bf16[128,128], index: 8, kind: input, shape index: {}]
  %s9 = inlined_call_operand.hbm [shape: f32[1,128], index: 9, kind: input, shape index: {}]
  %s10 = inlined_call_operand.vmem [shape: bf16[128,256], index: 10, kind: input, shape index: {}]
  %s11 = inlined_call_operand.hbm [shape: f32[1,256], index: 11, kind: input, shape index: {}]
  %s12 = inlined_call_operand.vmem [shape: bf16[256,128], index: 12, kind: input, shape index: {}]
  %s13 = inlined_call_operand.hbm [shape: f32[1,128], index: 13, kind: input, shape index: {}]
  %s14 = inlined_call_operand.vmem [shape: f32[1,128], index: 14, kind: input, shape index: {}]
  %s15 = inlined_call_operand.hbm [shape: f32[1,128], index: 15, kind: input, shape index: {}]
  %s16 = inlined_call_operand.vmem [shape: f32[1,128], index: 16, kind: input, shape index: {}]
  %s17 = inlined_call_operand.vmem [shape: f32[1,128], index: 17, kind: input, shape index: {}]
  %s18 = inlined_call_operand.vmem [shape: f32[1,128], index: 18, kind: input, shape index: {}]
  %s19 = inlined_call_operand.vmem [shape: f32[1,128], index: 19, kind: input, shape index: {}]
  %s20 = inlined_call_operand.vmem [shape: f32[16,128], index: 20, kind: output, shape index: {}]
  %s21 = sld [smem:[#allocation0]]
  $region153: #{decoder_forward.3} parent=0
    _
  %s23 = ssub.s32 1, %s21
  %s24 = scalar_select 0, %s23, %s21
  $region1: #{decoder_forward.3} parent=0
    #allocation2 [shape = 'u8[8192]{0}', space=vmem, size = 0x2000, scoped, tag = 'input window, operand 1']
    #allocation3 [shape = 's32[2]{0}', space=sflag, size = 0x8, scoped, tag = 'scoped memory for decoder_forward.3']
    #allocation4 [shape = 'u8[32768]{0}', space=vmem, size = 0x8000, scoped, tag = 'input window, operand 2, single buffered']
    #allocation5 [shape = 's32[1]{0}', space=sflag, size = 0x4, scoped, tag = 'scoped memory for decoder_forward.3']
    #allocation6 [shape = 'u8[32768]{0}', space=vmem, size = 0x8000, scoped, tag = 'input window, operand 4, single buffered']
    #allocation7 [shape = 'u8[32768]{0}', space=vmem, size = 0x8000, scoped, tag = 'input window, operand 6, single buffered']
    #allocation8 [shape = 's32[1]{0}', space=sflag, size = 0x4, scoped, tag = 'scoped memory for decoder_forward.3']
    #allocation9 [shape = 'u8[512]{0}', space=vmem, size = 0x400, scoped, tag = 'input window, operand 7, single buffered']
    #allocation10 [shape = 'u8[32768]{0}', space=vmem, size = 0x8000, scoped, tag = 'input window, operand 8, single buffered']
    #allocation11 [shape = 's32[1]{0}', space=sflag, size = 0x4, scoped, tag = 'scoped memory for decoder_forward.3']
    #allocation12 [shape = 'u8[512]{0}', space=vmem, size = 0x400, scoped, tag = 'input window, operand 9, single buffered']
    #allocation13 [shape = 'u8[1024]{0}', space=vmem, size = 0x400, scoped, tag = 'input window, operand 11, single buffered']
    #allocation14 [shape = 's32[1]{0}', space=sflag, size = 0x4, scoped, tag = 'scoped memory for decoder_forward.3']
    #allocation15 [shape = 'u8[512]{0}', space=vmem, size = 0x400, scoped, tag = 'input window, operand 13, single buffered']
    #allocation16 [shape = 'u8[512]{0}', space=vmem, size = 0x400, scoped, tag = 'input window, operand 15, single buffered']
    #allocation17 [shape = 's32[1]{0}', space=sflag, size = 0x4, scoped, tag = 'scoped memory for decoder_forward.3']
    %25 = vsyncpa [#allocation3], 0
    %s26 = scalar_lea.sflag [#allocation3], 1
    %27 = vsyncpa %s26, 0
    %28 = vsyncpa [#allocation5], 0
    %29 = vsyncpa [#allocation8], 0
    %30 = vsyncpa [#allocation11], 0
    %31 = vsyncpa [#allocation14], 0
    %32 = vsyncpa [#allocation17], 0
    loop: start=0, step=1, limit=4
    $region2: #{decoder_forward.3} parent=1 // loop_pre_header
      _
    $region3: #{decoder_forward.3} parent=1 // loop_header
      %s34 = sphi 0, %s38
      %p35 = scmp.ge.s32.totalorder %s34, 4
      %s44 = sphi 0, %s46
      %s47 = sphi 0, %s44
      %s48 = sphi 0, %s47
      %s64 = sphi 0, %s48
      %s70 = sphi 0, %s72
      %s73 = sphi 0, %s70
      %s74 = sphi 0, %s73
      %s90 = sphi 0, %s74
      %s94 = sphi 0, %s94
      %s96 = sphi 0, %s94
      %s97 = sphi 0, %s96
      %s111 = sphi 0, %s97
      %s115 = sphi 0, %s115
      %s117 = sphi 0, %s115
      %s118 = sphi 0, %s117
      %s132 = sphi 0, %s118
      %s136 = sphi 0, %s136
      %s138 = sphi 0, %s136
      %s139 = sphi 0, %s138
      %s153 = sphi 0, %s139
      %s157 = sphi 0, %s157
      %s159 = sphi 0, %s157
      %s160 = sphi 0, %s159
      %s174 = sphi 0, %s160
      %s178 = sphi 0, %s178
      %s180 = sphi 0, %s178
      %s181 = sphi 0, %s180
      %s195 = sphi 0, %s181
      %s199 = sphi 0, %s199
      %s201 = sphi 0, %s199
      %s202 = sphi 0, %s201
      %s216 = sphi 0, %s202
      %s220 = sphi 0, %s220
      %s222 = sphi 0, %s220
      %s223 = sphi 0, %s222
      %s237 = sphi 0, %s223
      %s241 = sphi 0, %s241
      %s243 = sphi 0, %s241
      %s244 = sphi 0, %s243
      %s258 = sphi 0, %s244
      %s262 = sphi 0, %s262
      %s264 = sphi 0, %s262
      %s265 = sphi 0, %s264
      %s279 = sphi 0, %s265
      %s283 = sphi 0, %s283
      %s285 = sphi 0, %s283
      %s286 = sphi 0, %s285
      %s300 = sphi 0, %s286
      %s304 = sphi 0, %s304
      %s306 = sphi 0, %s304
      %s307 = sphi 0, %s306
      %s321 = sphi 0, %s307
      %s325 = sphi 0, %s325
      %s327 = sphi 0, %s325
      %s328 = sphi 0, %s327
      %s342 = sphi 0, %s328
      %s346 = sphi 0, %s346
      %s348 = sphi 0, %s346
      %s349 = sphi 0, %s348
      %s363 = sphi 0, %s349
      %s367 = sphi 0, %s367
      %s369 = sphi 0, %s367
      %s370 = sphi 0, %s369
      %s384 = sphi 0, %s370
      %s388 = sphi 0, %s388
      %s390 = sphi 0, %s388
      %s391 = sphi 0, %s390
      %s405 = sphi 0, %s391
      %s409 = sphi 0, %s409
      %s411 = sphi 0, %s409
      %s412 = sphi 0, %s411
      %s426 = sphi 0, %s412
      %s430 = sphi 0, %s430
      %s432 = sphi 0, %s430
      %s433 = sphi 0, %s432
      %s447 = sphi 0, %s433
      %s451 = sphi 0, %s451
      %s453 = sphi 0, %s451
      %s454 = sphi 0, %s453
      %s468 = sphi 0, %s454
      %s474 = sphi 0, %s476
      %s477 = sphi 0, %s474
      %s478 = sphi 0, %s477
      %s494 = sphi 0, %s478
    $region4: #{decoder_forward.3} parent=1 // loop_header_branch
      %37 = sbr.rel (%p35) target = $region8
    $region5: #{decoder_forward.3} parent=1 // loop_body
      %s39 = ssub.s32 %s34, 1
      %s40 = ssub.s32 %s34, 2
      %s41 = sadd.s32 %s34, 1
      %s42 = ssub.s32 %s34, %s41
      %p43 = scmp.eq.s32.totalorder %s42, 0
      %s45 = sadd.s32 %s44, 1
      %s46 = scalar_select %p43, %s44, %s45
      %p49 = pneg %p43
      %p50 = scmp.eq.s32.totalorder %s34, 1
      %p51 = por %p49, %p50
      %p52 = scmp.ne.s32.totalorder %s44, %s47
      %p53 = scmp.eq.s32.totalorder %s34, 0
      %p54 = por %p52, %p53
      %p55 = scmp.ne.s32.totalorder %s44, %s47
      %p56 = scmp.eq.s32.totalorder %s39, 1
      %p57 = por %p55, %p56
      %p58 = scmp.ne.s32.totalorder %s47, %s48
      %p59 = scmp.eq.s32.totalorder %s39, 0
      %p60 = por %p58, %p59
      %p61 = scmp.ne.s32.totalorder %s47, %s48
      %p62 = scmp.eq.s32.totalorder %s40, 1
      %p63 = por %p61, %p62
      %p65 = scmp.ne.s32.totalorder %s48, %s64
      %p66 = scmp.eq.s32.totalorder %s40, 0
      %p67 = por %p65, %p66
      %s68 = ssub.s32 %s34, %s41
      %p69 = scmp.eq.s32.totalorder %s68, 0
      %s71 = sadd.s32 %s70, 1
      %s72 = scalar_select %p69, %s70, %s71
      %p75 = pneg %p69
      %p76 = scmp.eq.s32.totalorder %s34, 1
      %p77 = por %p75, %p76
      %p78 = scmp.ne.s32.totalorder %s70, %s73
      %p79 = scmp.eq.s32.totalorder %s34, 0
      %p80 = por %p78, %p79
      %p81 = scmp.ne.s32.totalorder %s70, %s73
      %p82 = scmp.eq.s32.totalorder %s39, 1
      %p83 = por %p81, %p82
      %p84 = scmp.ne.s32.totalorder %s73, %s74
      %p85 = scmp.eq.s32.totalorder %s39, 0
      %p86 = por %p84, %p85
      %p87 = scmp.ne.s32.totalorder %s73, %s74
      %p88 = scmp.eq.s32.totalorder %s40, 1
      %p89 = por %p87, %p88
      %p91 = scmp.ne.s32.totalorder %s74, %s90
      %p92 = scmp.eq.s32.totalorder %s40, 0
      %p93 = por %p91, %p92
      %s95 = sadd.s32 %s94, 1
      %p98 = scmp.eq.s32.totalorder %s34, 1
      %p99 = scmp.ne.s32.totalorder %s94, %s96
      %p100 = scmp.eq.s32.totalorder %s34, 0
      %p101 = por %p99, %p100
      %p102 = scmp.ne.s32.totalorder %s94, %s96
      %p103 = scmp.eq.s32.totalorder %s39, 1
      %p104 = por %p102, %p103
      %p105 = scmp.ne.s32.totalorder %s96, %s97
      %p106 = scmp.eq.s32.totalorder %s39, 0
      %p107 = por %p105, %p106
      %p108 = scmp.ne.s32.totalorder %s96, %s97
      %p109 = scmp.eq.s32.totalorder %s40, 1
      %p110 = por %p108, %p109
      %p112 = scmp.ne.s32.totalorder %s97, %s111
      %p113 = scmp.eq.s32.totalorder %s40, 0
      %p114 = por %p112, %p113
      %s116 = sadd.s32 %s115, 1
      %p119 = scmp.eq.s32.totalorder %s34, 1
      %p120 = scmp.ne.s32.totalorder %s115, %s117
      %p121 = scmp.eq.s32.totalorder %s34, 0
      %p122 = por %p120, %p121
      %p123 = scmp.ne.s32.totalorder %s115, %s117
      %p124 = scmp.eq.s32.totalorder %s39, 1
      %p125 = por %p123, %p124
      %p126 = scmp.ne.s32.totalorder %s117, %s118
      %p127 = scmp.eq.s32.totalorder %s39, 0
      %p128 = por %p126, %p127
      %p129 = scmp.ne.s32.totalorder %s117, %s118
      %p130 = scmp.eq.s32.totalorder %s40, 1
      %p131 = por %p129, %p130
      %p133 = scmp.ne.s32.totalorder %s118, %s132
      %p134 = scmp.eq.s32.totalorder %s40, 0
      %p135 = por %p133, %p134
      %s137 = sadd.s32 %s136, 1
      %p140 = scmp.eq.s32.totalorder %s34, 1
      %p141 = scmp.ne.s32.totalorder %s136, %s138
      %p142 = scmp.eq.s32.totalorder %s34, 0
      %p143 = por %p141, %p142
      %p144 = scmp.ne.s32.totalorder %s136, %s138
      %p145 = scmp.eq.s32.totalorder %s39, 1
      %p146 = por %p144, %p145
      %p147 = scmp.ne.s32.totalorder %s138, %s139
      %p148 = scmp.eq.s32.totalorder %s39, 0
      %p149 = por %p147, %p148
      %p150 = scmp.ne.s32.totalorder %s138, %s139
      %p151 = scmp.eq.s32.totalorder %s40, 1
      %p152 = por %p150, %p151
      %p154 = scmp.ne.s32.totalorder %s139, %s153
      %p155 = scmp.eq.s32.totalorder %s40, 0
      %p156 = por %p154, %p155
      %s158 = sadd.s32 %s157, 1
      %p161 = scmp.eq.s32.totalorder %s34, 1
      %p162 = scmp.ne.s32.totalorder %s157, %s159
      %p163 = scmp.eq.s32.totalorder %s34, 0
      %p164 = por %p162, %p163
      %p165 = scmp.ne.s32.totalorder %s157, %s159
      %p166 = scmp.eq.s32.totalorder %s39, 1
      %p167 = por %p165, %p166
      %p168 = scmp.ne.s32.totalorder %s159, %s160
      %p169 = scmp.eq.s32.totalorder %s39, 0
      %p170 = por %p168, %p169
      %p171 = scmp.ne.s32.totalorder %s159, %s160
      %p172 = scmp.eq.s32.totalorder %s40, 1
      %p173 = por %p171, %p172
      %p175 = scmp.ne.s32.totalorder %s160, %s174
      %p176 = scmp.eq.s32.totalorder %s40, 0
      %p177 = por %p175, %p176
      %s179 = sadd.s32 %s178, 1
      %p182 = scmp.eq.s32.totalorder %s34, 1
      %p183 = scmp.ne.s32.totalorder %s178, %s180
      %p184 = scmp.eq.s32.totalorder %s34, 0
      %p185 = por %p183, %p184
      %p186 = scmp.ne.s32.totalorder %s178, %s180
      %p187 = scmp.eq.s32.totalorder %s39, 1
      %p188 = por %p186, %p187
      %p189 = scmp.ne.s32.totalorder %s180, %s181
      %p190 = scmp.eq.s32.totalorder %s39, 0
      %p191 = por %p189, %p190
      %p192 = scmp.ne.s32.totalorder %s180, %s181
      %p193 = scmp.eq.s32.totalorder %s40, 1
      %p194 = por %p192, %p193
      %p196 = scmp.ne.s32.totalorder %s181, %s195
      %p197 = scmp.eq.s32.totalorder %s40, 0
      %p198 = por %p196, %p197
      %s200 = sadd.s32 %s199, 1
      %p203 = scmp.eq.s32.totalorder %s34, 1
      %p204 = scmp.ne.s32.totalorder %s199, %s201
      %p205 = scmp.eq.s32.totalorder %s34, 0
      %p206 = por %p204, %p205
      %p207 = scmp.ne.s32.totalorder %s199, %s201
      %p208 = scmp.eq.s32.totalorder %s39, 1
      %p209 = por %p207, %p208
      %p210 = scmp.ne.s32.totalorder %s201, %s202
      %p211 = scmp.eq.s32.totalorder %s39, 0
      %p212 = por %p210, %p211
      %p213 = scmp.ne.s32.totalorder %s201, %s202
      %p214 = scmp.eq.s32.totalorder %s40, 1
      %p215 = por %p213, %p214
      %p217 = scmp.ne.s32.totalorder %s202, %s216
      %p218 = scmp.eq.s32.totalorder %s40, 0
      %p219 = por %p217, %p218
      %s221 = sadd.s32 %s220, 1
      %p224 = scmp.eq.s32.totalorder %s34, 1
      %p225 = scmp.ne.s32.totalorder %s220, %s222
      %p226 = scmp.eq.s32.totalorder %s34, 0
      %p227 = por %p225, %p226
      %p228 = scmp.ne.s32.totalorder %s220, %s222
      %p229 = scmp.eq.s32.totalorder %s39, 1
      %p230 = por %p228, %p229
      %p231 = scmp.ne.s32.totalorder %s222, %s223
      %p232 = scmp.eq.s32.totalorder %s39, 0
      %p233 = por %p231, %p232
      %p234 = scmp.ne.s32.totalorder %s222, %s223
      %p235 = scmp.eq.s32.totalorder %s40, 1
      %p236 = por %p234, %p235
      %p238 = scmp.ne.s32.totalorder %s223, %s237
      %p239 = scmp.eq.s32.totalorder %s40, 0
      %p240 = por %p238, %p239
      %s242 = sadd.s32 %s241, 1
      %p245 = scmp.eq.s32.totalorder %s34, 1
      %p246 = scmp.ne.s32.totalorder %s241, %s243
      %p247 = scmp.eq.s32.totalorder %s34, 0
      %p248 = por %p246, %p247
      %p249 = scmp.ne.s32.totalorder %s241, %s243
      %p250 = scmp.eq.s32.totalorder %s39, 1
      %p251 = por %p249, %p250
      %p252 = scmp.ne.s32.totalorder %s243, %s244
      %p253 = scmp.eq.s32.totalorder %s39, 0
      %p254 = por %p252, %p253
      %p255 = scmp.ne.s32.totalorder %s243, %s244
      %p256 = scmp.eq.s32.totalorder %s40, 1
      %p257 = por %p255, %p256
      %p259 = scmp.ne.s32.totalorder %s244, %s258
      %p260 = scmp.eq.s32.totalorder %s40, 0
      %p261 = por %p259, %p260
      %s263 = sadd.s32 %s262, 1
      %p266 = scmp.eq.s32.totalorder %s34, 1
      %p267 = scmp.ne.s32.totalorder %s262, %s264
      %p268 = scmp.eq.s32.totalorder %s34, 0
      %p269 = por %p267, %p268
      %p270 = scmp.ne.s32.totalorder %s262, %s264
      %p271 = scmp.eq.s32.totalorder %s39, 1
      %p272 = por %p270, %p271
      %p273 = scmp.ne.s32.totalorder %s264, %s265
      %p274 = scmp.eq.s32.totalorder %s39, 0
      %p275 = por %p273, %p274
      %p276 = scmp.ne.s32.totalorder %s264, %s265
      %p277 = scmp.eq.s32.totalorder %s40, 1
      %p278 = por %p276, %p277
      %p280 = scmp.ne.s32.totalorder %s265, %s279
      %p281 = scmp.eq.s32.totalorder %s40, 0
      %p282 = por %p280, %p281
      %s284 = sadd.s32 %s283, 1
      %p287 = scmp.eq.s32.totalorder %s34, 1
      %p288 = scmp.ne.s32.totalorder %s283, %s285
      %p289 = scmp.eq.s32.totalorder %s34, 0
      %p290 = por %p288, %p289
      %p291 = scmp.ne.s32.totalorder %s283, %s285
      %p292 = scmp.eq.s32.totalorder %s39, 1
      %p293 = por %p291, %p292
      %p294 = scmp.ne.s32.totalorder %s285, %s286
      %p295 = scmp.eq.s32.totalorder %s39, 0
      %p296 = por %p294, %p295
      %p297 = scmp.ne.s32.totalorder %s285, %s286
      %p298 = scmp.eq.s32.totalorder %s40, 1
      %p299 = por %p297, %p298
      %p301 = scmp.ne.s32.totalorder %s286, %s300
      %p302 = scmp.eq.s32.totalorder %s40, 0
      %p303 = por %p301, %p302
      %s305 = sadd.s32 %s304, 1
      %p308 = scmp.eq.s32.totalorder %s34, 1
      %p309 = scmp.ne.s32.totalorder %s304, %s306
      %p310 = scmp.eq.s32.totalorder %s34, 0
      %p311 = por %p309, %p310
      %p312 = scmp.ne.s32.totalorder %s304, %s306
      %p313 = scmp.eq.s32.totalorder %s39, 1
      %p314 = por %p312, %p313
      %p315 = scmp.ne.s32.totalorder %s306, %s307
      %p316 = scmp.eq.s32.totalorder %s39, 0
      %p317 = por %p315, %p316
      %p318 = scmp.ne.s32.totalorder %s306, %s307
      %p319 = scmp.eq.s32.totalorder %s40, 1
      %p320 = por %p318, %p319
      %p322 = scmp.ne.s32.totalorder %s307, %s321
      %p323 = scmp.eq.s32.totalorder %s40, 0
      %p324 = por %p322, %p323
      %s326 = sadd.s32 %s325, 1
      %p329 = scmp.eq.s32.totalorder %s34, 1
      %p330 = scmp.ne.s32.totalorder %s325, %s327
      %p331 = scmp.eq.s32.totalorder %s34, 0
      %p332 = por %p330, %p331
      %p333 = scmp.ne.s32.totalorder %s325, %s327
      %p334 = scmp.eq.s32.totalorder %s39, 1
      %p335 = por %p333, %p334
      %p336 = scmp.ne.s32.totalorder %s327, %s328
      %p337 = scmp.eq.s32.totalorder %s39, 0
      %p338 = por %p336, %p337
      %p339 = scmp.ne.s32.totalorder %s327, %s328
      %p340 = scmp.eq.s32.totalorder %s40, 1
      %p341 = por %p339, %p340
      %p343 = scmp.ne.s32.totalorder %s328, %s342
      %p344 = scmp.eq.s32.totalorder %s40, 0
      %p345 = por %p343, %p344
      %s347 = sadd.s32 %s346, 1
      %p350 = scmp.eq.s32.totalorder %s34, 1
      %p351 = scmp.ne.s32.totalorder %s346, %s348
      %p352 = scmp.eq.s32.totalorder %s34, 0
      %p353 = por %p351, %p352
      %p354 = scmp.ne.s32.totalorder %s346, %s348
      %p355 = scmp.eq.s32.totalorder %s39, 1
      %p356 = por %p354, %p355
      %p357 = scmp.ne.s32.totalorder %s348, %s349
      %p358 = scmp.eq.s32.totalorder %s39, 0
      %p359 = por %p357, %p358
      %p360 = scmp.ne.s32.totalorder %s348, %s349
      %p361 = scmp.eq.s32.totalorder %s40, 1
      %p362 = por %p360, %p361
      %p364 = scmp.ne.s32.totalorder %s349, %s363
      %p365 = scmp.eq.s32.totalorder %s40, 0
      %p366 = por %p364, %p365
      %s368 = sadd.s32 %s367, 1
      %p371 = scmp.eq.s32.totalorder %s34, 1
      %p372 = scmp.ne.s32.totalorder %s367, %s369
      %p373 = scmp.eq.s32.totalorder %s34, 0
      %p374 = por %p372, %p373
      %p375 = scmp.ne.s32.totalorder %s367, %s369
      %p376 = scmp.eq.s32.totalorder %s39, 1
      %p377 = por %p375, %p376
      %p378 = scmp.ne.s32.totalorder %s369, %s370
      %p379 = scmp.eq.s32.totalorder %s39, 0
      %p380 = por %p378, %p379
      %p381 = scmp.ne.s32.totalorder %s369, %s370
      %p382 = scmp.eq.s32.totalorder %s40, 1
      %p383 = por %p381, %p382
      %p385 = scmp.ne.s32.totalorder %s370, %s384
      %p386 = scmp.eq.s32.totalorder %s40, 0
      %p387 = por %p385, %p386
      %s389 = sadd.s32 %s388, 1
      %p392 = scmp.eq.s32.totalorder %s34, 1
      %p393 = scmp.ne.s32.totalorder %s388, %s390
      %p394 = scmp.eq.s32.totalorder %s34, 0
      %p395 = por %p393, %p394
      %p396 = scmp.ne.s32.totalorder %s388, %s390
      %p397 = scmp.eq.s32.totalorder %s39, 1
      %p398 = por %p396, %p397
      %p399 = scmp.ne.s32.totalorder %s390, %s391
      %p400 = scmp.eq.s32.totalorder %s39, 0
      %p401 = por %p399, %p400
      %p402 = scmp.ne.s32.totalorder %s390, %s391
      %p403 = scmp.eq.s32.totalorder %s40, 1
      %p404 = por %p402, %p403
      %p406 = scmp.ne.s32.totalorder %s391, %s405
      %p407 = scmp.eq.s32.totalorder %s40, 0
      %p408 = por %p406, %p407
      %s410 = sadd.s32 %s409, 1
      %p413 = scmp.eq.s32.totalorder %s34, 1
      %p414 = scmp.ne.s32.totalorder %s409, %s411
      %p415 = scmp.eq.s32.totalorder %s34, 0
      %p416 = por %p414, %p415
      %p417 = scmp.ne.s32.totalorder %s409, %s411
      %p418 = scmp.eq.s32.totalorder %s39, 1
      %p419 = por %p417, %p418
      %p420 = scmp.ne.s32.totalorder %s411, %s412
      %p421 = scmp.eq.s32.totalorder %s39, 0
      %p422 = por %p420, %p421
      %p423 = scmp.ne.s32.totalorder %s411, %s412
      %p424 = scmp.eq.s32.totalorder %s40, 1
      %p425 = por %p423, %p424
      %p427 = scmp.ne.s32.totalorder %s412, %s426
      %p428 = scmp.eq.s32.totalorder %s40, 0
      %p429 = por %p427, %p428
      %s431 = sadd.s32 %s430, 1
      %p434 = scmp.eq.s32.totalorder %s34, 1
      %p435 = scmp.ne.s32.totalorder %s430, %s432
      %p436 = scmp.eq.s32.totalorder %s34, 0
      %p437 = por %p435, %p436
      %p438 = scmp.ne.s32.totalorder %s430, %s432
      %p439 = scmp.eq.s32.totalorder %s39, 1
      %p440 = por %p438, %p439
      %p441 = scmp.ne.s32.totalorder %s432, %s433
      %p442 = scmp.eq.s32.totalorder %s39, 0
      %p443 = por %p441, %p442
      %p444 = scmp.ne.s32.totalorder %s432, %s433
      %p445 = scmp.eq.s32.totalorder %s40, 1
      %p446 = por %p444, %p445
      %p448 = scmp.ne.s32.totalorder %s433, %s447
      %p449 = scmp.eq.s32.totalorder %s40, 0
      %p450 = por %p448, %p449
      %s452 = sadd.s32 %s451, 1
      %p455 = scmp.eq.s32.totalorder %s34, 1
      %p456 = scmp.ne.s32.totalorder %s451, %s453
      %p457 = scmp.eq.s32.totalorder %s34, 0
      %p458 = por %p456, %p457
      %p459 = scmp.ne.s32.totalorder %s451, %s453
      %p460 = scmp.eq.s32.totalorder %s39, 1
      %p461 = por %p459, %p460
      %p462 = scmp.ne.s32.totalorder %s453, %s454
      %p463 = scmp.eq.s32.totalorder %s39, 0
      %p464 = por %p462, %p463
      %p465 = scmp.ne.s32.totalorder %s453, %s454
      %p466 = scmp.eq.s32.totalorder %s40, 1
      %p467 = por %p465, %p466
      %p469 = scmp.ne.s32.totalorder %s454, %s468
      %p470 = scmp.eq.s32.totalorder %s40, 0
      %p471 = por %p469, %p470
      %s472 = ssub.s32 %s34, %s41
      %p473 = scmp.eq.s32.totalorder %s472, 0
      %s475 = sadd.s32 %s474, 1
      %s476 = scalar_select %p473, %s474, %s475
      %p479 = pneg %p473
      %p480 = scmp.eq.s32.totalorder %s34, 1
      %p481 = por %p479, %p480
      %p482 = scmp.ne.s32.totalorder %s474, %s477
      %p483 = scmp.eq.s32.totalorder %s34, 0
      %p484 = por %p482, %p483
      %p485 = scmp.ne.s32.totalorder %s474, %s477
      %p486 = scmp.eq.s32.totalorder %s39, 1
      %p487 = por %p485, %p486
      %p488 = scmp.ne.s32.totalorder %s477, %s478
      %p489 = scmp.eq.s32.totalorder %s39, 0
      %p490 = por %p488, %p489
      %p491 = scmp.ne.s32.totalorder %s477, %s478
      %p492 = scmp.eq.s32.totalorder %s40, 1
      %p493 = por %p491, %p492
      %p495 = scmp.ne.s32.totalorder %s478, %s494
      %p496 = scmp.eq.s32.totalorder %s40, 0
      %p497 = por %p495, %p496
      %p498 = scmp.le.s32.totalorder 1, %s34
      %p499 = scmp.lt.s32.totalorder %s34, 3
      %p500 = pnand %p498, %p499
      %p501 = pneg %p500
      // Predicated region
      $region9: #{decoder_forward.3} parent=5 // pred_check
        _
      $region10: #{decoder_forward.3} parent=5 // pred_check_branch
        %503 = sbr.rel (%p500) target = $region12
      $region11: #{decoder_forward.3} parent=5 // pred_region
        %s504 = ssub.s32 %s34, 1
        // Predicated region
        $region13: #{decoder_forward.3} parent=11 // pred_check
          %p505 = pneg %p107
        $region14: #{decoder_forward.3} parent=11 // pred_check_branch
          %507 = sbr.rel (%p505) target = $region16
        $region15: #{decoder_forward.3} parent=11 // pred_region
          %s509 = ssub.s32 1024, 1024
          %510 = vsyncadd [#allocation5], %s509
          %s511 = sshll.u32 [#allocation4], 4
          %s512 = int_to_ptr.vmem [resolvable:$true] %s511
          %517 = dma.hbm_to_vmem [thread:$0]  %s2, 1024, %s512, [#allocation5], 64, 64, 4
        $region16: #{decoder_forward.3} parent=11 // pred_fallthru
          _
        // Predicated region
        $region17: #{decoder_forward.3} parent=11 // pred_check
          %p518 = pneg %p128
        $region18: #{decoder_forward.3} parent=11 // pred_check_branch
          %520 = sbr.rel (%p518) target = $region20
        $region19: #{decoder_forward.3} parent=11 // pred_region
          _
        $region20: #{decoder_forward.3} parent=11 // pred_fallthru
          _
        // Predicated region
        $region21: #{decoder_forward.3} parent=11 // pred_check
          %p521 = pneg %p149
        $region22: #{decoder_forward.3} parent=11 // pred_check_branch
          %523 = sbr.rel (%p521) target = $region24
        $region23: #{decoder_forward.3} parent=11 // pred_region
          %s525 = ssub.s32 1024, 1024
          %526 = vsyncadd [#allocation5], %s525
          %s527 = sshll.u32 [#allocation6], 4
          %s528 = int_to_ptr.vmem [resolvable:$true] %s527
          %533 = dma.hbm_to_vmem [thread:$0]  %s4, 1024, %s528, [#allocation5], 64, 64, 4
        $region24: #{decoder_forward.3} parent=11 // pred_fallthru
          _
        // Predicated region
        $region25: #{decoder_forward.3} parent=11 // pred_check
          %p534 = pneg %p170
        $region26: #{decoder_forward.3} parent=11 // pred_check_branch
          %536 = sbr.rel (%p534) target = $region28
        $region27: #{decoder_forward.3} parent=11 // pred_region
          _
        $region28: #{decoder_forward.3} parent=11 // pred_fallthru
          _
        // Predicated region
        $region29: #{decoder_forward.3} parent=11 // pred_check
          %p537 = pneg %p191
        $region30: #{decoder_forward.3} parent=11 // pred_check_branch
          %539 = sbr.rel (%p537) target = $region32
        $region31: #{decoder_forward.3} parent=11 // pred_region
          %s541 = ssub.s32 1024, 1024
          %542 = vsyncadd [#allocation8], %s541
          %s543 = sshll.u32 [#allocation7], 4
          %s544 = int_to_ptr.vmem [resolvable:$true] %s543
          %549 = dma.hbm_to_vmem [thread:$0]  %s6, 1024, %s544, [#allocation8], 64, 64, 4
        $region32: #{decoder_forward.3} parent=11 // pred_fallthru
          _
        // Predicated region
        $region33: #{decoder_forward.3} parent=11 // pred_check
          %p550 = pneg %p212
        $region34: #{decoder_forward.3} parent=11 // pred_check_branch
          %552 = sbr.rel (%p550) target = $region36
        $region35: #{decoder_forward.3} parent=11 // pred_region
          %s554 = ssub.s32 16, 16
          %555 = vsyncadd [#allocation8], %s554
          %s557 = sshll.u32 [#allocation9], 4
          %s558 = int_to_ptr.vmem [resolvable:$true] %s557
          %560 = dma.hbm_to_vmem [thread:$0]  %s7, 16, %s558, [#allocation8]
        $region36: #{decoder_forward.3} parent=11 // pred_fallthru
          _
        // Predicated region
        $region37: #{decoder_forward.3} parent=11 // pred_check
          %p561 = pneg %p233
        $region38: #{decoder_forward.3} parent=11 // pred_check_branch
          %563 = sbr.rel (%p561) target = $region40
        $region39: #{decoder_forward.3} parent=11 // pred_region
          %s565 = ssub.s32 1024, 1024
          %566 = vsyncadd [#allocation11], %s565
          %s567 = sshll.u32 [#allocation10], 4
          %s568 = int_to_ptr.vmem [resolvable:$true] %s567
          %573 = dma.hbm_to_vmem [thread:$0]  %s8, 1024, %s568, [#allocation11], 64, 64, 4
        $region40: #{decoder_forward.3} parent=11 // pred_fallthru
          _
        // Predicated region
        $region41: #{decoder_forward.3} parent=11 // pred_check
          %p574 = pneg %p254
        $region42: #{decoder_forward.3} parent=11 // pred_check_branch
          %576 = sbr.rel (%p574) target = $region44
        $region43: #{decoder_forward.3} parent=11 // pred_region
          %s578 = ssub.s32 16, 16
          %579 = vsyncadd [#allocation11], %s578
          %s581 = sshll.u32 [#allocation12], 4
          %s582 = int_to_ptr.vmem [resolvable:$true] %s581
          %584 = dma.hbm_to_vmem [thread:$0]  %s9, 16, %s582, [#allocation11]
        $region44: #{decoder_forward.3} parent=11 // pred_fallthru
          _
        // Predicated region
        $region45: #{decoder_forward.3} parent=11 // pred_check
          %p585 = pneg %p275
        $region46: #{decoder_forward.3} parent=11 // pred_check_branch
          %587 = sbr.rel (%p585) target = $region48
        $region47: #{decoder_forward.3} parent=11 // pred_region
          _
        $region48: #{decoder_forward.3} parent=11 // pred_fallthru
          _
        // Predicated region
        $region49: #{decoder_forward.3} parent=11 // pred_check
          %p588 = pneg %p296
        $region50: #{decoder_forward.3} parent=11 // pred_check_branch
          %590 = sbr.rel (%p588) target = $region52
        $region51: #{decoder_forward.3} parent=11 // pred_region
          %s592 = ssub.s32 32, 32
          %593 = vsyncadd [#allocation14], %s592
          %s595 = sshll.u32 [#allocation13], 4
          %s596 = int_to_ptr.vmem [resolvable:$true] %s595
          %598 = dma.hbm_to_vmem [thread:$0]  %s11, 32, %s596, [#allocation14]
        $region52: #{decoder_forward.3} parent=11 // pred_fallthru
          _
        // Predicated region
        $region53: #{decoder_forward.3} parent=11 // pred_check
          %p599 = pneg %p317
        $region54: #{decoder_forward.3} parent=11 // pred_check_branch
          %601 = sbr.rel (%p599) target = $region56
        $region55: #{decoder_forward.3} parent=11 // pred_region
          _
        $region56: #{decoder_forward.3} parent=11 // pred_fallthru
          _
        // Predicated region
        $region57: #{decoder_forward.3} parent=11 // pred_check
          %p602 = pneg %p338
        $region58: #{decoder_forward.3} parent=11 // pred_check_branch
          %604 = sbr.rel (%p602) target = $region60
        $region59: #{decoder_forward.3} parent=11 // pred_region
          %s606 = ssub.s32 16, 16
          %607 = vsyncadd [#allocation14], %s606
          %s609 = sshll.u32 [#allocation15], 4
          %s610 = int_to_ptr.vmem [resolvable:$true] %s609
          %612 = dma.hbm_to_vmem [thread:$0]  %s13, 16, %s610, [#allocation14]
        $region60: #{decoder_forward.3} parent=11 // pred_fallthru
          _
        // Predicated region
        $region61: #{decoder_forward.3} parent=11 // pred_check
          %p613 = pneg %p359
        $region62: #{decoder_forward.3} parent=11 // pred_check_branch
          %615 = sbr.rel (%p613) target = $region64
        $region63: #{decoder_forward.3} parent=11 // pred_region
          _
        $region64: #{decoder_forward.3} parent=11 // pred_fallthru
          _
        // Predicated region
        $region65: #{decoder_forward.3} parent=11 // pred_check
          %p616 = pneg %p380
        $region66: #{decoder_forward.3} parent=11 // pred_check_branch
          %618 = sbr.rel (%p616) target = $region68
        $region67: #{decoder_forward.3} parent=11 // pred_region
          %s620 = ssub.s32 16, 16
          %621 = vsyncadd [#allocation17], %s620
          %s623 = sshll.u32 [#allocation16], 4
          %s624 = int_to_ptr.vmem [resolvable:$true] %s623
          %626 = dma.hbm_to_vmem [thread:$0]  %s15, 16, %s624, [#allocation17]
        $region68: #{decoder_forward.3} parent=11 // pred_fallthru
          _
        // Predicated region
        $region69: #{decoder_forward.3} parent=11 // pred_check
          %p627 = pneg %p401
        $region70: #{decoder_forward.3} parent=11 // pred_check_branch
          %629 = sbr.rel (%p627) target = $region72
        $region71: #{decoder_forward.3} parent=11 // pred_region
          _
        $region72: #{decoder_forward.3} parent=11 // pred_fallthru
          _
        // Predicated region
        $region73: #{decoder_forward.3} parent=11 // pred_check
          %p630 = pneg %p422
        $region74: #{decoder_forward.3} parent=11 // pred_check_branch
          %632 = sbr.rel (%p630) target = $region76
        $region75: #{decoder_forward.3} parent=11 // pred_region
          _
        $region76: #{decoder_forward.3} parent=11 // pred_fallthru
          _
        // Predicated region
        $region77: #{decoder_forward.3} parent=11 // pred_check
          %p633 = pneg %p443
        $region78: #{decoder_forward.3} parent=11 // pred_check_branch
          %635 = sbr.rel (%p633) target = $region80
        $region79: #{decoder_forward.3} parent=11 // pred_region
          _
        $region80: #{decoder_forward.3} parent=11 // pred_fallthru
          _
        // Predicated region
        $region81: #{decoder_forward.3} parent=11 // pred_check
          %p636 = pneg %p464
        $region82: #{decoder_forward.3} parent=11 // pred_check_branch
          %638 = sbr.rel (%p636) target = $region84
        $region83: #{decoder_forward.3} parent=11 // pred_region
          _
        $region84: #{decoder_forward.3} parent=11 // pred_fallthru
          _
      $region12: #{decoder_forward.3} parent=5 // pred_fallthru
        _
      %p639 = scmp.lt.s32.totalorder %s34, 2
      // Predicated region
      $region85: #{decoder_forward.3} parent=5 // pred_check
        %p640 = pneg %p639
      $region86: #{decoder_forward.3} parent=5 // pred_check_branch
        %642 = sbr.rel (%p640) target = $region88
      $region87: #{decoder_forward.3} parent=5 // pred_region
        // Predicated region
        $region89: #{decoder_forward.3} parent=87 // pred_check
          %p643 = pneg %p54
        $region90: #{decoder_forward.3} parent=87 // pred_check_branch
          %645 = sbr.rel (%p643) target = $region92
        $region91: #{decoder_forward.3} parent=87 // pred_region
          %p646 = scmp.lt.s32.totalorder %s34, 1
          %s647 = scalar_select %p646, %s34, 1
          %s648 = smul.addr %s647, 8
          %s649 = scalar_lea.vmem %s0, %s648
        $region92: #{decoder_forward.3} parent=87 // pred_fallthru
          _
        // Predicated region
        $region93: #{decoder_forward.3} parent=87 // pred_check
          %p650 = pneg %p80
        $region94: #{decoder_forward.3} parent=87 // pred_check_branch
          %652 = sbr.rel (%p650) target = $region96
        $region95: #{decoder_forward.3} parent=87 // pred_region
          %s653 = sand.u32 %s70, 1
          %s654 = scalar_lea.sflag [#allocation3], %s653
          %s655 = sand.u32 %s70, 1
          %s656 = smul.addr %s655, 8
          %s657 = scalar_lea.vmem [#allocation2], %s656
          %s659 = ssub.s32 128, 128
          %660 = vsyncadd %s654, %s659
          %s661 = smul.addr %s34, 128
          %s662 = scalar_lea.hbm %s1, %s661
          %s664 = sshll.u32 %s657, 4
          %s665 = int_to_ptr.vmem [resolvable:$true] %s664
          %667 = dma.hbm_to_vmem [thread:$0]  %s662, 128, %s665, %s654
        $region96: #{decoder_forward.3} parent=87 // pred_fallthru
          _
      $region88: #{decoder_forward.3} parent=5 // pred_fallthru
        _
      %p668 = scmp.le.s32.totalorder 1, %s34
      %p669 = scmp.lt.s32.totalorder %s34, 3
      %p670 = pnand %p668, %p669
      %p671 = pneg %p670
      // Predicated region
      $region97: #{decoder_forward.3} parent=5 // pred_check
        _
      $region98: #{decoder_forward.3} parent=5 // pred_check_branch
        %673 = sbr.rel (%p670) target = $region100
      $region99: #{decoder_forward.3} parent=5 // pred_region
        %s674 = ssub.s32 %s34, 1
        %s675 = sand.u32 %s73, 1
        %s676 = scalar_lea.sflag [#allocation3], %s675
        %s677 = sand.u32 %s73, 1
        %s678 = smul.addr %s677, 8
        %s679 = scalar_lea.vmem [#allocation2], %s678
        // Predicated region
        $region101: #{decoder_forward.3} parent=99 // pred_check
          %p680 = pneg %p86
        $region102: #{decoder_forward.3} parent=99 // pred_check_branch
          %682 = sbr.rel (%p680) target = $region104
        $region103: #{decoder_forward.3} parent=99 // pred_region
          %683 = dma.done %s676, 128
        $region104: #{decoder_forward.3} parent=99 // pred_fallthru
          _
        // Predicated region
        $region105: #{decoder_forward.3} parent=99 // pred_check
          %p684 = pneg %p107
        $region106: #{decoder_forward.3} parent=99 // pred_check_branch
          %686 = sbr.rel (%p684) target = $region108
        $region107: #{decoder_forward.3} parent=99 // pred_region
          %687 = dma.done [#allocation5], 1024
        $region108: #{decoder_forward.3} parent=99 // pred_fallthru
          _
        // Predicated region
        $region109: #{decoder_forward.3} parent=99 // pred_check
          %p688 = pneg %p149
        $region110: #{decoder_forward.3} parent=99 // pred_check_branch
          %690 = sbr.rel (%p688) target = $region112
        $region111: #{decoder_forward.3} parent=99 // pred_region
          %691 = dma.done [#allocation5], 1024
        $region112: #{decoder_forward.3} parent=99 // pred_fallthru
          _
        // Predicated region
        $region113: #{decoder_forward.3} parent=99 // pred_check
          %p692 = pneg %p191
        $region114: #{decoder_forward.3} parent=99 // pred_check_branch
          %694 = sbr.rel (%p692) target = $region116
        $region115: #{decoder_forward.3} parent=99 // pred_region
          %695 = dma.done [#allocation8], 1024
        $region116: #{decoder_forward.3} parent=99 // pred_fallthru
          _
        // Predicated region
        $region117: #{decoder_forward.3} parent=99 // pred_check
          %p696 = pneg %p212
        $region118: #{decoder_forward.3} parent=99 // pred_check_branch
          %698 = sbr.rel (%p696) target = $region120
        $region119: #{decoder_forward.3} parent=99 // pred_region
          %699 = dma.done [#allocation8], 16
        $region120: #{decoder_forward.3} parent=99 // pred_fallthru
          _
        // Predicated region
        $region121: #{decoder_forward.3} parent=99 // pred_check
          %p700 = pneg %p233
        $region122: #{decoder_forward.3} parent=99 // pred_check_branch
          %702 = sbr.rel (%p700) target = $region124
        $region123: #{decoder_forward.3} parent=99 // pred_region
          %703 = dma.done [#allocation11], 1024
        $region124: #{decoder_forward.3} parent=99 // pred_fallthru
          _
        // Predicated region
        $region125: #{decoder_forward.3} parent=99 // pred_check
          %p704 = pneg %p254
        $region126: #{decoder_forward.3} parent=99 // pred_check_branch
          %706 = sbr.rel (%p704) target = $region128
        $region127: #{decoder_forward.3} parent=99 // pred_region
          %707 = dma.done [#allocation11], 16
        $region128: #{decoder_forward.3} parent=99 // pred_fallthru
          _
        // Predicated region
        $region129: #{decoder_forward.3} parent=99 // pred_check
          %p708 = pneg %p296
        $region130: #{decoder_forward.3} parent=99 // pred_check_branch
          %710 = sbr.rel (%p708) target = $region132
        $region131: #{decoder_forward.3} parent=99 // pred_region
          %711 = dma.done [#allocation14], 32
        $region132: #{decoder_forward.3} parent=99 // pred_fallthru
          _
        // Predicated region
        $region133: #{decoder_forward.3} parent=99 // pred_check
          %p712 = pneg %p338
        $region134: #{decoder_forward.3} parent=99 // pred_check_branch
          %714 = sbr.rel (%p712) target = $region136
        $region135: #{decoder_forward.3} parent=99 // pred_region
          %715 = dma.done [#allocation14], 16
        $region136: #{decoder_forward.3} parent=99 // pred_fallthru
          _
        // Predicated region
        $region137: #{decoder_forward.3} parent=99 // pred_check
          %p716 = pneg %p380
        $region138: #{decoder_forward.3} parent=99 // pred_check_branch
          %718 = sbr.rel (%p716) target = $region140
        $region139: #{decoder_forward.3} parent=99 // pred_region
          %719 = dma.done [#allocation17], 16
        $region140: #{decoder_forward.3} parent=99 // pred_fallthru
          _
        %p720 = scmp.lt.s32.totalorder %s39, 1
        %s721 = scalar_select %p720, %s39, 1
        %s722 = smul.addr %s721, 8
        %s723 = scalar_lea.vmem %s0, %s722
        %p724 = pneg %p60
        %p725 = pneg %p57
        %s726 = sand.u32 %s73, 1
        %s727 = scalar_lea.sflag [#allocation3], %s726
        %s728 = sand.u32 %s73, 1
        %s729 = smul.addr %s728, 8
        %s730 = scalar_lea.vmem [#allocation2], %s729
        %p731 = pneg %p86
        %p732 = pneg %p83
        %p733 = pneg %p107
        %p734 = pneg %p104
        %p735 = pneg %p128
        %p736 = pneg %p125
        %p737 = pneg %p149
        %p738 = pneg %p146
        %p739 = pneg %p170
        %p740 = pneg %p167
        %p741 = pneg %p191
        %p742 = pneg %p188
        %p743 = pneg %p212
        %p744 = pneg %p209
        %p745 = pneg %p233
        %p746 = pneg %p230
        %p747 = pneg %p254
        %p748 = pneg %p251
        %p749 = pneg %p275
        %p750 = pneg %p272
        %p751 = pneg %p296
        %p752 = pneg %p293
        %p753 = pneg %p317
        %p754 = pneg %p314
        %p755 = pneg %p338
        %p756 = pneg %p335
        %p757 = pneg %p359
        %p758 = pneg %p356
        %p759 = pneg %p380
        %p760 = pneg %p377
        %p761 = pneg %p401
        %p762 = pneg %p398
        %p763 = pneg %p422
        %p764 = pneg %p419
        %p765 = pneg %p443
        %p766 = pneg %p440
        %p767 = pneg %p464
        %p768 = pneg %p461
        %p769 = pneg %p490
        %p770 = pneg %p487
        %p771 = scmp.lt.s32.totalorder %s39, 1
        %s772 = scalar_select %p771, %s39, 1
        %s773 = smul.addr %s772, 8
        %s774 = scalar_lea.vmem %s20, %s773
        %p775 = scmp.lt.s32.totalorder %s39, 1
        %s776 = scalar_select %p775, %s39, 1
        %s777 = smul.addr %s776, 8
        %s778 = scalar_lea.vmem %s0, %s777
        %p779 = scmp.lt.s32.totalorder %s39, 1
        %s780 = scalar_select %p779, %s39, 1
        %s781 = smul.addr %s780, 8
        %s782 = scalar_lea.vmem %s20, %s781
        %v784 = vld [vmem:[%s778] sm:$0xff]
        %v785 = vld [vmem:[%s679] sm:$0xff]
        %v786 = vpack.c.bf16 %v784, %v784
        %v787 = vld [vmem:[#allocation4] sm:$0xf]
        %v788 = vld [vmem:[#allocation4 + $0x4] sm:$0xf]
        %v789 = vld [vmem:[#allocation4 + $0x8] sm:$0xf]
        %v790 = vld [vmem:[#allocation4 + $0xc] sm:$0xf]
        %v791 = vld [vmem:[#allocation4 + $0x10] sm:$0xf]
        %v792 = vld [vmem:[#allocation4 + $0x14] sm:$0xf]
        %v793 = vld [vmem:[#allocation4 + $0x18] sm:$0xf]
        %v794 = vld [vmem:[#allocation4 + $0x1c] sm:$0xf]
        %v795 = vld [vmem:[#allocation4 + $0x20] sm:$0xf]
        %v796 = vld [vmem:[#allocation4 + $0x24] sm:$0xf]
        %v797 = vld [vmem:[#allocation4 + $0x28] sm:$0xf]
        %v798 = vld [vmem:[#allocation4 + $0x2c] sm:$0xf]
        %v799 = vld [vmem:[#allocation4 + $0x30] sm:$0xf]
        %v800 = vld [vmem:[#allocation4 + $0x34] sm:$0xf]
        %v801 = vld [vmem:[#allocation4 + $0x38] sm:$0xf]
        %v802 = vld [vmem:[#allocation4 + $0x3c] sm:$0xf]
        %v803 = vld [vmem:[%s3] sm:$0x1]
        %v805 = vlaneseq
        %v806 = vshrl.u32 %v805, 7
        %v807 = vsub.s32 0, %v806
        %v808 = vrot.slane %v803, %v807
        %v826 = vunpack.c.l.b16 %v787
        %v827 = vunpack.c.l.b16 %v788
        %v828 = vunpack.c.l.b16 %v789
        %v829 = vunpack.c.l.b16 %v790
        %v830 = vunpack.c.l.b16 %v791
        %v831 = vunpack.c.l.b16 %v792
        %v832 = vunpack.c.l.b16 %v793
        %v833 = vunpack.c.l.b16 %v794
        %v834 = vunpack.c.l.b16 %v795
        %v835 = vunpack.c.l.b16 %v796
        %v836 = vunpack.c.l.b16 %v797
        %v837 = vunpack.c.l.b16 %v798
        %v838 = vunpack.c.l.b16 %v799
        %v839 = vunpack.c.l.b16 %v800
        %v840 = vunpack.c.l.b16 %v801
        %v841 = vunpack.c.l.b16 %v802
        %v842 = vpack.c.b16 %v827, %v826
        %v843 = vpack.c.b16 %v829, %v828
        %v844 = vpack.c.b16 %v831, %v830
        %v845 = vpack.c.b16 %v833, %v832
        %v846 = vpack.c.b16 %v835, %v834
        %v847 = vpack.c.b16 %v837, %v836
        %v848 = vpack.c.b16 %v839, %v838
        %v849 = vpack.c.b16 %v841, %v840
        %858 = vmatprep.subr.bf16.mxu0 0
        %859 = vmatpush1.bf16.msra.mxu0 %v842
        %860 = vmatprep.subr.bf16.mxu0 0
        %861 = vmatpush1.bf16.msra.mxu0 %v843
        %862 = vmatprep.subr.bf16.mxu0 0
        %863 = vmatpush1.bf16.msra.mxu0 %v844
        %864 = vmatprep.subr.bf16.mxu0 0
        %865 = vmatpush1.bf16.msra.mxu0 %v845
        %866 = vmatprep.subr.bf16.mxu0 0
        %867 = vmatpush1.bf16.msra.mxu0 %v846
        %868 = vmatprep.subr.bf16.mxu0 0
        %869 = vmatpush1.bf16.msra.mxu0 %v847
        %870 = vmatprep.subr.bf16.mxu0 0
        %871 = vmatpush1.bf16.msra.mxu0 %v848
        %872 = vmatprep.subr.bf16.mxu0 0
        %873 = vmatpush1.bf16.msra.mxu0 %v849
        %874 = vmatprep.subr.bf16.mxu0 0
        %875 = vmatpush1.bf16.msra.mxu0 0
        %876 = vmatprep.subr.bf16.mxu0 0
        %877 = vmatpush1.bf16.msra.mxu0 0
        %878 = vmatprep.subr.bf16.mxu0 0
        %879 = vmatpush1.bf16.msra.mxu0 0
        %880 = vmatprep.subr.bf16.mxu0 0
        %881 = vmatpush1.bf16.msra.mxu0 0
        %882 = vmatprep.subr.bf16.mxu0 0
        %883 = vmatpush1.bf16.msra.mxu0 0
        %884 = vmatprep.subr.bf16.mxu0 0
        %885 = vmatpush1.bf16.msra.mxu0 0
        %886 = vmatprep.subr.bf16.mxu0 0
        %887 = vmatpush1.bf16.msra.mxu0 0
        %888 = vmatprep.subr.bf16.mxu0 0
        %889 = vmatpush1.bf16.msra.mxu0 0
        %890 = vmatprep.mubr.bf16.mxu0 0
        %891 = vmatmul.mubr.bf16.gmra.mrb[0].mxu0 %v786
        %v892 = vpop.f32.mrb[0].mxu0
        %v893 = vadd.f32 %v808, %v892
        %v894 = vpop.f32.mrb[0].mxu0
        %v895 = vpop.f32.mrb[0].mxu0
        %v896 = vpop.f32.mrb[0].mxu0
        %897 = vdwg.mxu0
        %v898 = vmul.f32 %v893, 0.17677669
        %v899 = vpack.c.bf16 %v898, %v898
        %900 = vxpose.xlu0.b32.start [1/16] %v893, 128
        %901 = vxpose.xlu0.b32.cont [2/16] 0.0, 128
        %902 = vxpose.xlu0.b32.cont [3/16] 0.0, 128
        %903 = vxpose.xlu0.b32.cont [4/16] 0.0, 128
        %904 = vxpose.xlu0.b32.cont [5/16] 0.0, 128
        %905 = vxpose.xlu0.b32.cont [6/16] 0.0, 128
        %906 = vxpose.xlu0.b32.cont [7/16] 0.0, 128
        %907 = vxpose.xlu0.b32.cont [8/16] 0.0, 128
        %908 = vxpose.xlu0.b32.cont [9/16] 0.0, 128
        %909 = vxpose.xlu0.b32.cont [10/16] 0.0, 128
        %910 = vxpose.xlu0.b32.cont [11/16] 0.0, 128
        %911 = vxpose.xlu0.b32.cont [12/16] 0.0, 128
        %912 = vxpose.xlu0.b32.cont [13/16] 0.0, 128
        %913 = vxpose.xlu0.b32.cont [14/16] 0.0, 128
        %914 = vxpose.xlu0.b32.cont [15/16] 0.0, 128
        %915 = vxpose.xlu0.b32.end [16/16] 0.0, 128
        %v916 = vpop.trf.xlu0
        %v917 = vpop.trf.xlu0
        %v918 = vpop.trf.xlu0
        %v919 = vpop.trf.xlu0
        %v920 = vpop.trf.xlu0
        %v921 = vpop.trf.xlu0
        %v922 = vpop.trf.xlu0
        %v923 = vpop.trf.xlu0
        %v924 = vpop.trf.xlu0
        %v925 = vpop.trf.xlu0
        %v926 = vpop.trf.xlu0
        %v927 = vpop.trf.xlu0
        %v928 = vpop.trf.xlu0
        %v929 = vpop.trf.xlu0
        %v930 = vpop.trf.xlu0
        %v931 = vpop.trf.xlu0
        %v932 = vpack.c.bf16 %v917, %v916
        %v933 = vpack.c.bf16 %v919, %v918
        %vm934 = vcmask 261120
        %v936 = vsel %vm934, %v899, 0
        %938 = vmatprep.subr.bf16.mxu0 0
        %939 = vmatpush1.bf16.msra.mxu0 %v932
        %940 = vmatprep.subr.bf16.mxu0 0
        %941 = vmatpush1.bf16.msra.mxu0 %v933
        %942 = vmatprep.subr.bf16.mxu0 0
        %943 = vmatpush1.bf16.msra.mxu0 0
        %944 = vmatprep.subr.bf16.mxu0 0
        %945 = vmatpush1.bf16.msra.mxu0 0
        %946 = vmatprep.subr.bf16.mxu0 0
        %947 = vmatpush1.bf16.msra.mxu0 0
        %948 = vmatprep.subr.bf16.mxu0 0
        %949 = vmatpush1.bf16.msra.mxu0 0
        %950 = vmatprep.subr.bf16.mxu0 0
        %951 = vmatpush1.bf16.msra.mxu0 0
        %952 = vmatprep.subr.bf16.mxu0 0
        %953 = vmatpush1.bf16.msra.mxu0 0
        %954 = vmatprep.subr.bf16.mxu0 0
        %955 = vmatpush1.bf16.msra.mxu0 0
        %956 = vmatprep.subr.bf16.mxu0 0
        %957 = vmatpush1.bf16.msra.mxu0 0
        %958 = vmatprep.subr.bf16.mxu0 0
        %959 = vmatpush1.bf16.msra.mxu0 0
        %960 = vmatprep.subr.bf16.mxu0 0
        %961 = vmatpush1.bf16.msra.mxu0 0
        %962 = vmatprep.subr.bf16.mxu0 0
        %963 = vmatpush1.bf16.msra.mxu0 0
        %964 = vmatprep.subr.bf16.mxu0 0
        %965 = vmatpush1.bf16.msra.mxu0 0
        %966 = vmatprep.subr.bf16.mxu0 0
        %967 = vmatpush1.bf16.msra.mxu0 0
        %968 = vmatprep.subr.bf16.mxu0 0
        %969 = vmatpush1.bf16.msra.mxu0 0
        %970 = vmatprep.mubr.bf16.mxu0 0
        %971 = vmatmul.mubr.bf16.gmra.mrb[0].mxu0 %v936
        %v972 = vpop.f32.mrb[0].mxu0
        %v973 = vadd.f32 0.0, %v972
        %v974 = vpop.f32.mrb[0].mxu0
        %v975 = vpop.f32.mrb[0].mxu0
        %v976 = vpop.f32.mrb[0].mxu0
        %977 = vdwg.mxu0
        %vm978 = vcmask 64512
        %v979 = vsel %vm978, %v973, -inf
        %980 = vmax.xlane.f32.xlu0 %v979
        %v981 = vpop.xlane.xlu0 %980
        %v982 = vsub.f32 %v973, %v981
        %v983 = vmul.f32 %v982, 1.442695
        %v984 = vpow.pop %v983
        %v985 = vsel %vm978, %v984, 0.0
        %986 = vadd.xlane.f32.xlu0 %v985
        %v987 = vpop.xlane.xlu0 %986
        %v988 = vrcp.pop %v987
        %v989 = vmul.f32 %v984, %v988
        %v990 = vpack.c.bf16 %v989, %v989
        %v991 = vpack.c.bf16 %v893, %v893
        %v993 = vsel %vm978, %v990, 0
        %vm995 = vcmask 1043456
        %v997 = vsel %vm995, %v991, 0
        %999 = vmatprep.subr.bf16.mxu0 0
        %1000 = vmatpush1.bf16.msra.mxu0 %v997
        %1001 = vmatprep.subr.bf16.mxu0 0
        %1002 = vmatpush1.bf16.msra.mxu0 0
        %1003 = vmatprep.subr.bf16.mxu0 0
        %1004 = vmatpush1.bf16.msra.mxu0 0
        %1005 = vmatprep.subr.bf16.mxu0 0
        %1006 = vmatpush1.bf16.msra.mxu0 0
        %1007 = vmatprep.subr.bf16.mxu0 0
        %1008 = vmatpush1.bf16.msra.mxu0 0
        %1009 = vmatprep.subr.bf16.mxu0 0
        %1010 = vmatpush1.bf16.msra.mxu0 0
        %1011 = vmatprep.subr.bf16.mxu0 0
        %1012 = vmatpush1.bf16.msra.mxu0 0
        %1013 = vmatprep.subr.bf16.mxu0 0
        %1014 = vmatpush1.bf16.msra.mxu0 0
        %1015 = vmatprep.subr.bf16.mxu0 0
        %1016 = vmatpush1.bf16.msra.mxu0 0
        %1017 = vmatprep.subr.bf16.mxu0 0
        %1018 = vmatpush1.bf16.msra.mxu0 0
        %1019 = vmatprep.subr.bf16.mxu0 0
        %1020 = vmatpush1.bf16.msra.mxu0 0
        %1021 = vmatprep.subr.bf16.mxu0 0
        %1022 = vmatpush1.bf16.msra.mxu0 0
        %1023 = vmatprep.subr.bf16.mxu0 0
        %1024 = vmatpush1.bf16.msra.mxu0 0
        %1025 = vmatprep.subr.bf16.mxu0 0
        %1026 = vmatpush1.bf16.msra.mxu0 0
        %1027 = vmatprep.subr.bf16.mxu0 0
        %1028 = vmatpush1.bf16.msra.mxu0 0
        %1029 = vmatprep.subr.bf16.mxu0 0
        %1030 = vmatpush1.bf16.msra.mxu0 0
        %1031 = vmatprep.mubr.bf16.mxu0 0
        %1032 = vmatmul.mubr.bf16.gmra.mrb[0].mxu0 %v993
        %v1033 = vpop.f32.mrb[0].mxu0
        %v1034 = vadd.f32 0.0, %v1033
        %v1035 = vpop.f32.mrb[0].mxu0
        %v1036 = vpop.f32.mrb[0].mxu0
        %v1037 = vpop.f32.mrb[0].mxu0
        %1038 = vdwg.mxu0
        %1040 = vrot.lane.b32.xlu0 %v893, 96
        %v1041 = vpop.permute.xlu0 %1040
        %1043 = vxpose.xlu0.b32.start [1/16] %v1041, 128
        %1044 = vxpose.xlu0.b32.cont [2/16] 0.0, 128
        %1045 = vxpose.xlu0.b32.cont [3/16] 0.0, 128
        %1046 = vxpose.xlu0.b32.cont [4/16] 0.0, 128
        %1047 = vxpose.xlu0.b32.cont [5/16] 0.0, 128
        %1048 = vxpose.xlu0.b32.cont [6/16] 0.0, 128
        %1049 = vxpose.xlu0.b32.cont [7/16] 0.0, 128
        %1050 = vxpose.xlu0.b32.cont [8/16] 0.0, 128
        %1051 = vxpose.xlu0.b32.cont [9/16] 0.0, 128
        %1052 = vxpose.xlu0.b32.cont [10/16] 0.0, 128
        %1053 = vxpose.xlu0.b32.cont [11/16] 0.0, 128
        %1054 = vxpose.xlu0.b32.cont [12/16] 0.0, 128
        %1055 = vxpose.xlu0.b32.cont [13/16] 0.0, 128
        %1056 = vxpose.xlu0.b32.cont [14/16] 0.0, 128
        %1057 = vxpose.xlu0.b32.cont [15/16] 0.0, 128
        %1058 = vxpose.xlu0.b32.end [16/16] 0.0, 128
        %v1059 = vpop.trf.xlu0
        %v1060 = vpop.trf.xlu0
        %v1061 = vpop.trf.xlu0
        %v1062 = vpop.trf.xlu0
        %v1063 = vpop.trf.xlu0
        %v1064 = vpop.trf.xlu0
        %v1065 = vpop.trf.xlu0
        %v1066 = vpop.trf.xlu0
        %v1067 = vpop.trf.xlu0
        %v1068 = vpop.trf.xlu0
        %v1069 = vpop.trf.xlu0
        %v1070 = vpop.trf.xlu0
        %v1071 = vpop.trf.xlu0
        %v1072 = vpop.trf.xlu0
        %v1073 = vpop.trf.xlu0
        %v1074 = vpop.trf.xlu0
        %v1075 = vpack.c.bf16 %v1060, %v1059
        %v1076 = vpack.c.bf16 %v1062, %v1061
        %1078 = vrot.lane.b32.xlu0 %v899, 96
        %v1079 = vpop.permute.xlu0 %1078
        %v1081 = vsel %vm934, %v1079, 0
        %1083 = vmatprep.subr.bf16.mxu0 0
        %1084 = vmatpush1.bf16.msra.mxu0 %v1075
        %1085 = vmatprep.subr.bf16.mxu0 0
        %1086 = vmatpush1.bf16.msra.mxu0 %v1076
        %1087 = vmatprep.subr.bf16.mxu0 0
        %1088 = vmatpush1.bf16.msra.mxu0 0
        %1089 = vmatprep.subr.bf16.mxu0 0
        %1090 = vmatpush1.bf16.msra.mxu0 0
        %1091 = vmatprep.subr.bf16.mxu0 0
        %1092 = vmatpush1.bf16.msra.mxu0 0
        %1093 = vmatprep.subr.bf16.mxu0 0
        %1094 = vmatpush1.bf16.msra.mxu0 0
        %1095 = vmatprep.subr.bf16.mxu0 0
        %1096 = vmatpush1.bf16.msra.mxu0 0
        %1097 = vmatprep.subr.bf16.mxu0 0
        %1098 = vmatpush1.bf16.msra.mxu0 0
        %1099 = vmatprep.subr.bf16.mxu0 0
        %1100 = vmatpush1.bf16.msra.mxu0 0
        %1101 = vmatprep.subr.bf16.mxu0 0
        %1102 = vmatpush1.bf16.msra.mxu0 0
        %1103 = vmatprep.subr.bf16.mxu0 0
        %1104 = vmatpush1.bf16.msra.mxu0 0
        %1105 = vmatprep.subr.bf16.mxu0 0
        %1106 = vmatpush1.bf16.msra.mxu0 0
        %1107 = vmatprep.subr.bf16.mxu0 0
        %1108 = vmatpush1.bf16.msra.mxu0 0
        %1109 = vmatprep.subr.bf16.mxu0 0
        %1110 = vmatpush1.bf16.msra.mxu0 0
        %1111 = vmatprep.subr.bf16.mxu0 0
        %1112 = vmatpush1.bf16.msra.mxu0 0
        %1113 = vmatprep.subr.bf16.mxu0 0
        %1114 = vmatpush1.bf16.msra.mxu0 0
        %1115 = vmatprep.mubr.bf16.mxu0 0
        %1116 = vmatmul.mubr.bf16.gmra.mrb[0].mxu0 %v1081
        %v1117 = vpop.f32.mrb[0].mxu0
        %v1118 = vadd.f32 0.0, %v1117
        %v1119 = vpop.f32.mrb[0].mxu0
        %v1120 = vpop.f32.mrb[0].mxu0
        %v1121 = vpop.f32.mrb[0].mxu0
        %1122 = vdwg.mxu0
        %v1123 = vsel %vm978, %v1118, -inf
        %1124 = vmax.xlane.f32.xlu0 %v1123
        %v1125 = vpop.xlane.xlu0 %1124
        %v1126 = vsub.f32 %v1118, %v1125
        %v1127 = vmul.f32 %v1126, 1.442695
        %v1128 = vpow.pop %v1127
        %v1129 = vsel %vm978, %v1128, 0.0
        %1130 = vadd.xlane.f32.xlu0 %v1129
        %v1131 = vpop.xlane.xlu0 %1130
        %v1132 = vrcp.pop %v1131
        %v1133 = vmul.f32 %v1128, %v1132
        %v1134 = vpack.c.bf16 %v1133, %v1133
        %1136 = vrot.lane.b32.xlu0 %v991, 96
        %v1137 = vpop.permute.xlu0 %1136
        %v1139 = vsel %vm978, %v1134, 0
        %v1142 = vsel %vm995, %v1137, 0
        %1144 = vmatprep.subr.bf16.mxu0 0
        %1145 = vmatpush1.bf16.msra.mxu0 %v1142
        %1146 = vmatprep.subr.bf16.mxu0 0
        %1147 = vmatpush1.bf16.msra.mxu0 0
        %1148 = vmatprep.subr.bf16.mxu0 0
        %1149 = vmatpush1.bf16.msra.mxu0 0
        %1150 = vmatprep.subr.bf16.mxu0 0
        %1151 = vmatpush1.bf16.msra.mxu0 0
        %1152 = vmatprep.subr.bf16.mxu0 0
        %1153 = vmatpush1.bf16.msra.mxu0 0
        %1154 = vmatprep.subr.bf16.mxu0 0
        %1155 = vmatpush1.bf16.msra.mxu0 0
        %1156 = vmatprep.subr.bf16.mxu0 0
        %1157 = vmatpush1.bf16.msra.mxu0 0
        %1158 = vmatprep.subr.bf16.mxu0 0
        %1159 = vmatpush1.bf16.msra.mxu0 0
        %1160 = vmatprep.subr.bf16.mxu0 0
        %1161 = vmatpush1.bf16.msra.mxu0 0
        %1162 = vmatprep.subr.bf16.mxu0 0
        %1163 = vmatpush1.bf16.msra.mxu0 0
        %1164 = vmatprep.subr.bf16.mxu0 0
        %1165 = vmatpush1.bf16.msra.mxu0 0
        %1166 = vmatprep.subr.bf16.mxu0 0
        %1167 = vmatpush1.bf16.msra.mxu0 0
        %1168 = vmatprep.subr.bf16.mxu0 0
        %1169 = vmatpush1.bf16.msra.mxu0 0
        %1170 = vmatprep.subr.bf16.mxu0 0
        %1171 = vmatpush1.bf16.msra.mxu0 0
        %1172 = vmatprep.subr.bf16.mxu0 0
        %1173 = vmatpush1.bf16.msra.mxu0 0
        %1174 = vmatprep.subr.bf16.mxu0 0
        %1175 = vmatpush1.bf16.msra.mxu0 0
        %1176 = vmatprep.mubr.bf16.mxu0 0
        %1177 = vmatmul.mubr.bf16.gmra.mrb[0].mxu0 %v1139
        %v1178 = vpop.f32.mrb[0].mxu0
        %v1179 = vadd.f32 0.0, %v1178
        %v1180 = vpop.f32.mrb[0].mxu0
        %v1181 = vpop.f32.mrb[0].mxu0
        %v1182 = vpop.f32.mrb[0].mxu0
        %1183 = vdwg.mxu0
        %1184 = vrot.lane.b32.xlu0 %v893, 64
        %v1185 = vpop.permute.xlu0 %1184
        %1187 = vxpose.xlu0.b32.start [1/16] %v1185, 128
        %1188 = vxpose.xlu0.b32.cont [2/16] 0.0, 128
        %1189 = vxpose.xlu0.b32.cont [3/16] 0.0, 128
        %1190 = vxpose.xlu0.b32.cont [4/16] 0.0, 128
        %1191 = vxpose.xlu0.b32.cont [5/16] 0.0, 128
        %1192 = vxpose.xlu0.b32.cont [6/16] 0.0, 128
        %1193 = vxpose.xlu0.b32.cont [7/16] 0.0, 128
        %1194 = vxpose.xlu0.b32.cont [8/16] 0.0, 128
        %1195 = vxpose.xlu0.b32.cont [9/16] 0.0, 128
        %1196 = vxpose.xlu0.b32.cont [10/16] 0.0, 128
        %1197 = vxpose.xlu0.b32.cont [11/16] 0.0, 128
        %1198 = vxpose.xlu0.b32.cont [12/16] 0.0, 128
        %1199 = vxpose.xlu0.b32.cont [13/16] 0.0, 128
        %1200 = vxpose.xlu0.b32.cont [14/16] 0.0, 128
        %1201 = vxpose.xlu0.b32.cont [15/16] 0.0, 128
        %1202 = vxpose.xlu0.b32.end [16/16] 0.0, 128
        %v1203 = vpop.trf.xlu0
        %v1204 = vpop.trf.xlu0
        %v1205 = vpop.trf.xlu0
        %v1206 = vpop.trf.xlu0
        %v1207 = vpop.trf.xlu0
        %v1208 = vpop.trf.xlu0
        %v1209 = vpop.trf.xlu0
        %v1210 = vpop.trf.xlu0
        %v1211 = vpop.trf.xlu0
        %v1212 = vpop.trf.xlu0
        %v1213 = vpop.trf.xlu0
        %v1214 = vpop.trf.xlu0
        %v1215 = vpop.trf.xlu0
        %v1216 = vpop.trf.xlu0
        %v1217 = vpop.trf.xlu0
        %v1218 = vpop.trf.xlu0
        %v1219 = vpack.c.bf16 %v1204, %v1203
        %v1220 = vpack.c.bf16 %v1206, %v1205
        %1221 = vrot.lane.b32.xlu0 %v899, 64
        %v1222 = vpop.permute.xlu0 %1221
        %v1224 = vsel %vm934, %v1222, 0
        %1226 = vmatprep.subr.bf16.mxu0 0
        %1227 = vmatpush1.bf16.msra.mxu0 %v1219
        %1228 = vmatprep.subr.bf16.mxu0 0
        %1229 = vmatpush1.bf16.msra.mxu0 %v1220
        %1230 = vmatprep.subr.bf16.mxu0 0
        %1231 = vmatpush1.bf16.msra.mxu0 0
        %1232 = vmatprep.subr.bf16.mxu0 0
        %1233 = vmatpush1.bf16.msra.mxu0 0
        %1234 = vmatprep.subr.bf16.mxu0 0
        %1235 = vmatpush1.bf16.msra.mxu0 0
        %1236 = vmatprep.subr.bf16.mxu0 0
        %1237 = vmatpush1.bf16.msra.mxu0 0
        %1238 = vmatprep.subr.bf16.mxu0 0
        %1239 = vmatpush1.bf16.msra.mxu0 0
        %1240 = vmatprep.subr.bf16.mxu0 0
        %1241 = vmatpush1.bf16.msra.mxu0 0
        %1242 = vmatprep.subr.bf16.mxu0 0
        %1243 = vmatpush1.bf16.msra.mxu0 0
        %1244 = vmatprep.subr.bf16.mxu0 0
        %1245 = vmatpush1.bf16.msra.mxu0 0
        %1246 = vmatprep.subr.bf16.mxu0 0
        %1247 = vmatpush1.bf16.msra.mxu0 0
        %1248 = vmatprep.subr.bf16.mxu0 0
        %1249 = vmatpush1.bf16.msra.mxu0 0
        %1250 = vmatprep.subr.bf16.mxu0 0
        %1251 = vmatpush1.bf16.msra.mxu0 0
        %1252 = vmatprep.subr.bf16.mxu0 0
        %1253 = vmatpush1.bf16.msra.mxu0 0
        %1254 = vmatprep.subr.bf16.mxu0 0
        %1255 = vmatpush1.bf16.msra.mxu0 0
        %1256 = vmatprep.subr.bf16.mxu0 0
        %1257 = vmatpush1.bf16.msra.mxu0 0
        %1258 = vmatprep.mubr.bf16.mxu0 0
        %1259 = vmatmul.mubr.bf16.gmra.mrb[0].mxu0 %v1224
        %v1260 = vpop.f32.mrb[0].mxu0
        %v1261 = vadd.f32 0.0, %v1260
        %v1262 = vpop.f32.mrb[0].mxu0
        %v1263 = vpop.f32.mrb[0].mxu0
        %v1264 = vpop.f32.mrb[0].mxu0
        %1265 = vdwg.mxu0
        %v1266 = vsel %vm978, %v1261, -inf
        %1267 = vmax.xlane.f32.xlu0 %v1266
        %v1268 = vpop.xlane.xlu0 %1267
        %v1269 = vsub.f32 %v1261, %v1268
        %v1270 = vmul.f32 %v1269, 1.442695
        %v1271 = vpow.pop %v1270
        %v1272 = vsel %vm978, %v1271, 0.0
        %1273 = vadd.xlane.f32.xlu0 %v1272
        %v1274 = vpop.xlane.xlu0 %1273
        %v1275 = vrcp.pop %v1274
        %v1276 = vmul.f32 %v1271, %v1275
        %v1277 = vpack.c.bf16 %v1276, %v1276
        %1278 = vrot.lane.b32.xlu0 %v991, 64
        %v1279 = vpop.permute.xlu0 %1278
        %v1281 = vsel %vm978, %v1277, 0
        %v1284 = vsel %vm995, %v1279, 0
        %1286 = vmatprep.subr.bf16.mxu0 0
        %1287 = vmatpush1.bf16.msra.mxu0 %v1284
        %1288 = vmatprep.subr.bf16.mxu0 0
        %1289 = vmatpush1.bf16.msra.mxu0 0
        %1290 = vmatprep.subr.bf16.mxu0 0
        %1291 = vmatpush1.bf16.msra.mxu0 0
        %1292 = vmatprep.subr.bf16.mxu0 0
        %1293 = vmatpush1.bf16.msra.mxu0 0
        %1294 = vmatprep.subr.bf16.mxu0 0
        %1295 = vmatpush1.bf16.msra.mxu0 0
        %1296 = vmatprep.subr.bf16.mxu0 0
        %1297 = vmatpush1.bf16.msra.mxu0 0
        %1298 = vmatprep.subr.bf16.mxu0 0
        %1299 = vmatpush1.bf16.msra.mxu0 0
        %1300 = vmatprep.subr.bf16.mxu0 0
        %1301 = vmatpush1.bf16.msra.mxu0 0
        %1302 = vmatprep.subr.bf16.mxu0 0
        %1303 = vmatpush1.bf16.msra.mxu0 0
        %1304 = vmatprep.subr.bf16.mxu0 0
        %1305 = vmatpush1.bf16.msra.mxu0 0
        %1306 = vmatprep.subr.bf16.mxu0 0
        %1307 = vmatpush1.bf16.msra.mxu0 0
        %1308 = vmatprep.subr.bf16.mxu0 0
        %1309 = vmatpush1.bf16.msra.mxu0 0
        %1310 = vmatprep.subr.bf16.mxu0 0
        %1311 = vmatpush1.bf16.msra.mxu0 0
        %1312 = vmatprep.subr.bf16.mxu0 0
        %1313 = vmatpush1.bf16.msra.mxu0 0
        %1314 = vmatprep.subr.bf16.mxu0 0
        %1315 = vmatpush1.bf16.msra.mxu0 0
        %1316 = vmatprep.subr.bf16.mxu0 0
        %1317 = vmatpush1.bf16.msra.mxu0 0
        %1318 = vmatprep.mubr.bf16.mxu0 0
        %1319 = vmatmul.mubr.bf16.gmra.mrb[0].mxu0 %v1281
        %v1320 = vpop.f32.mrb[0].mxu0
        %v1321 = vadd.f32 0.0, %v1320
        %v1322 = vpop.f32.mrb[0].mxu0
        %v1323 = vpop.f32.mrb[0].mxu0
        %v1324 = vpop.f32.mrb[0].mxu0
        %1325 = vdwg.mxu0
        %1326 = vrot.lane.b32.xlu0 %v893, 32
        %v1327 = vpop.permute.xlu0 %1326
        %1329 = vxpose.xlu0.b32.start [1/16] %v1327, 128
        %1330 = vxpose.xlu0.b32.cont [2/16] 0.0, 128
        %1331 = vxpose.xlu0.b32.cont [3/16] 0.0, 128
        %1332 = vxpose.xlu0.b32.cont [4/16] 0.0, 128
        %1333 = vxpose.xlu0.b32.cont [5/16] 0.0, 128
        %1334 = vxpose.xlu0.b32.cont [6/16] 0.0, 128
        %1335 = vxpose.xlu0.b32.cont [7/16] 0.0, 128
        %1336 = vxpose.xlu0.b32.cont [8/16] 0.0, 128
        %1337 = vxpose.xlu0.b32.cont [9/16] 0.0, 128
        %1338 = vxpose.xlu0.b32.cont [10/16] 0.0, 128
        %1339 = vxpose.xlu0.b32.cont [11/16] 0.0, 128
        %1340 = vxpose.xlu0.b32.cont [12/16] 0.0, 128
        %1341 = vxpose.xlu0.b32.cont [13/16] 0.0, 128
        %1342 = vxpose.xlu0.b32.cont [14/16] 0.0, 128
        %1343 = vxpose.xlu0.b32.cont [15/16] 0.0, 128
        %1344 = vxpose.xlu0.b32.end [16/16] 0.0, 128
        %v1345 = vpop.trf.xlu0
        %v1346 = vpop.trf.xlu0
        %v1347 = vpop.trf.xlu0
        %v1348 = vpop.trf.xlu0
        %v1349 = vpop.trf.xlu0
        %v1350 = vpop.trf.xlu0
        %v1351 = vpop.trf.xlu0
        %v1352 = vpop.trf.xlu0
        %v1353 = vpop.trf.xlu0
        %v1354 = vpop.trf.xlu0
        %v1355 = vpop.trf.xlu0
        %v1356 = vpop.trf.xlu0
        %v1357 = vpop.trf.xlu0
        %v1358 = vpop.trf.xlu0
        %v1359 = vpop.trf.xlu0
        %v1360 = vpop.trf.xlu0
        %v1361 = vpack.c.bf16 %v1346, %v1345
        %v1362 = vpack.c.bf16 %v1348, %v1347
        %1363 = vrot.lane.b32.xlu0 %v899, 32
        %v1364 = vpop.permute.xlu0 %1363
        %v1366 = vsel %vm934, %v1364, 0
        %1368 = vmatprep.subr.bf16.mxu0 0
        %1369 = vmatpush1.bf16.msra.mxu0 %v1361
        %1370 = vmatprep.subr.bf16.mxu0 0
        %1371 = vmatpush1.bf16.msra.mxu0 %v1362
        %1372 = vmatprep.subr.bf16.mxu0 0
        %1373 = vmatpush1.bf16.msra.mxu0 0
        %1374 = vmatprep.subr.bf16.mxu0 0
        %1375 = vmatpush1.bf16.msra.mxu0 0
        %1376 = vmatprep.subr.bf16.mxu0 0
        %1377 = vmatpush1.bf16.msra.mxu0 0
        %1378 = vmatprep.subr.bf16.mxu0 0
        %1379 = vmatpush1.bf16.msra.mxu0 0
        %1380 = vmatprep.subr.bf16.mxu0 0
        %1381 = vmatpush1.bf16.msra.mxu0 0
        %1382 = vmatprep.subr.bf16.mxu0 0
        %1383 = vmatpush1.bf16.msra.mxu0 0
        %1384 = vmatprep.subr.bf16.mxu0 0
        %1385 = vmatpush1.bf16.msra.mxu0 0
        %1386 = vmatprep.subr.bf16.mxu0 0
        %1387 = vmatpush1.bf16.msra.mxu0 0
        %1388 = vmatprep.subr.bf16.mxu0 0
        %1389 = vmatpush1.bf16.msra.mxu0 0
        %1390 = vmatprep.subr.bf16.mxu0 0
        %1391 = vmatpush1.bf16.msra.mxu0 0
        %1392 = vmatprep.subr.bf16.mxu0 0
        %1393 = vmatpush1.bf16.msra.mxu0 0
        %1394 = vmatprep.subr.bf16.mxu0 0
        %1395 = vmatpush1.bf16.msra.mxu0 0
        %1396 = vmatprep.subr.bf16.mxu0 0
        %1397 = vmatpush1.bf16.msra.mxu0 0
        %1398 = vmatprep.subr.bf16.mxu0 0
        %1399 = vmatpush1.bf16.msra.mxu0 0
        %1400 = vmatprep.mubr.bf16.mxu0 0
        %1401 = vmatmul.mubr.bf16.gmra.mrb[0].mxu0 %v1366
        %v1402 = vpop.f32.mrb[0].mxu0
        %v1403 = vadd.f32 0.0, %v1402
        %v1404 = vpop.f32.mrb[0].mxu0
        %v1405 = vpop.f32.mrb[0].mxu0
        %v1406 = vpop.f32.mrb[0].mxu0
        %1407 = vdwg.mxu0
        %v1408 = vsel %vm978, %v1403, -inf
        %1409 = vmax.xlane.f32.xlu0 %v1408
        %v1410 = vpop.xlane.xlu0 %1409
        %v1411 = vsub.f32 %v1403, %v1410
        %v1412 = vmul.f32 %v1411, 1.442695
        %v1413 = vpow.pop %v1412
        %v1414 = vsel %vm978, %v1413, 0.0
        %1415 = vadd.xlane.f32.xlu0 %v1414
        %v1416 = vpop.xlane.xlu0 %1415
        %v1417 = vrcp.pop %v1416
        %v1418 = vmul.f32 %v1413, %v1417
        %v1419 = vpack.c.bf16 %v1418, %v1418
        %1420 = vrot.lane.b32.xlu0 %v991, 32
        %v1421 = vpop.permute.xlu0 %1420
        %v1423 = vsel %vm978, %v1419, 0
        %v1426 = vsel %vm995, %v1421, 0
        %1428 = vmatprep.subr.bf16.mxu0 0
        %1429 = vmatpush1.bf16.msra.mxu0 %v1426
        %1430 = vmatprep.subr.bf16.mxu0 0
        %1431 = vmatpush1.bf16.msra.mxu0 0
        %1432 = vmatprep.subr.bf16.mxu0 0
        %1433 = vmatpush1.bf16.msra.mxu0 0
        %1434 = vmatprep.subr.bf16.mxu0 0
        %1435 = vmatpush1.bf16.msra.mxu0 0
        %1436 = vmatprep.subr.bf16.mxu0 0
        %1437 = vmatpush1.bf16.msra.mxu0 0
        %1438 = vmatprep.subr.bf16.mxu0 0
        %1439 = vmatpush1.bf16.msra.mxu0 0
        %1440 = vmatprep.subr.bf16.mxu0 0
        %1441 = vmatpush1.bf16.msra.mxu0 0
        %1442 = vmatprep.subr.bf16.mxu0 0
        %1443 = vmatpush1.bf16.msra.mxu0 0
        %1444 = vmatprep.subr.bf16.mxu0 0
        %1445 = vmatpush1.bf16.msra.mxu0 0
        %1446 = vmatprep.subr.bf16.mxu0 0
        %1447 = vmatpush1.bf16.msra.mxu0 0
        %1448 = vmatprep.subr.bf16.mxu0 0
        %1449 = vmatpush1.bf16.msra.mxu0 0
        %1450 = vmatprep.subr.bf16.mxu0 0
        %1451 = vmatpush1.bf16.msra.mxu0 0
        %1452 = vmatprep.subr.bf16.mxu0 0
        %1453 = vmatpush1.bf16.msra.mxu0 0
        %1454 = vmatprep.subr.bf16.mxu0 0
        %1455 = vmatpush1.bf16.msra.mxu0 0
        %1456 = vmatprep.subr.bf16.mxu0 0
        %1457 = vmatpush1.bf16.msra.mxu0 0
        %1458 = vmatprep.subr.bf16.mxu0 0
        %1459 = vmatpush1.bf16.msra.mxu0 0
        %1460 = vmatprep.mubr.bf16.mxu0 0
        %1461 = vmatmul.mubr.bf16.gmra.mrb[0].mxu0 %v1423
        %v1462 = vpop.f32.mrb[0].mxu0
        %v1463 = vadd.f32 0.0, %v1462
        %v1464 = vpop.f32.mrb[0].mxu0
        %v1465 = vpop.f32.mrb[0].mxu0
        %v1466 = vpop.f32.mrb[0].mxu0
        %1467 = vdwg.mxu0
        %1469 = vrot.lane.b32.xlu0 %v1179, 32
        %v1470 = vpop.permute.xlu0 %1469
        %1473 = vrot.lane.b32.xlu0 %v1321, 64
        %v1474 = vpop.permute.xlu0 %1473
        %1477 = vrot.lane.b32.xlu0 %v1463, 96
        %v1478 = vpop.permute.xlu0 %1477
        %v1480 = vsel %vm934, %v1034, %v1470
        %vm1481 = vcmask 523264
        %v1482 = vsel %vm1481, %v1480, %v1474
        %vm1483 = vcmask 785408
        %v1484 = vsel %vm1483, %v1482, %v1478
        %v1485 = vpack.c.bf16 %v1484, %v1484
        %v1486 = vld [vmem:[#allocation6] sm:$0xf]
        %v1487 = vld [vmem:[#allocation6 + $0x4] sm:$0xf]
        %v1488 = vld [vmem:[#allocation6 + $0x8] sm:$0xf]
        %v1489 = vld [vmem:[#allocation6 + $0xc] sm:$0xf]
        %v1490 = vld [vmem:[#allocation6 + $0x10] sm:$0xf]
        %v1491 = vld [vmem:[#allocation6 + $0x14] sm:$0xf]
        %v1492 = vld [vmem:[#allocation6 + $0x18] sm:$0xf]
        %v1493 = vld [vmem:[#allocation6 + $0x1c] sm:$0xf]
        %v1494 = vld [vmem:[#allocation6 + $0x20] sm:$0xf]
        %v1495 = vld [vmem:[#allocation6 + $0x24] sm:$0xf]
        %v1496 = vld [vmem:[#allocation6 + $0x28] sm:$0xf]
        %v1497 = vld [vmem:[#allocation6 + $0x2c] sm:$0xf]
        %v1498 = vld [vmem:[#allocation6 + $0x30] sm:$0xf]
        %v1499 = vld [vmem:[#allocation6 + $0x34] sm:$0xf]
        %v1500 = vld [vmem:[#allocation6 + $0x38] sm:$0xf]
        %v1501 = vld [vmem:[#allocation6 + $0x3c] sm:$0xf]
        %v1502 = vld [vmem:[%s5] sm:$0x1]
        %v1504 = vlaneseq
        %v1505 = vshrl.u32 %v1504, 7
        %v1506 = vsub.s32 0, %v1505
        %v1507 = vrot.slane %v1502, %v1506
        %v1525 = vunpack.c.l.b16 %v1486
        %v1526 = vunpack.c.l.b16 %v1487
        %v1527 = vunpack.c.l.b16 %v1488
        %v1528 = vunpack.c.l.b16 %v1489
        %v1529 = vunpack.c.l.b16 %v1490
        %v1530 = vunpack.c.l.b16 %v1491
        %v1531 = vunpack.c.l.b16 %v1492
        %v1532 = vunpack.c.l.b16 %v1493
        %v1533 = vunpack.c.l.b16 %v1494
        %v1534 = vunpack.c.l.b16 %v1495
        %v1535 = vunpack.c.l.b16 %v1496
        %v1536 = vunpack.c.l.b16 %v1497
        %v1537 = vunpack.c.l.b16 %v1498
        %v1538 = vunpack.c.l.b16 %v1499
        %v1539 = vunpack.c.l.b16 %v1500
        %v1540 = vunpack.c.l.b16 %v1501
        %v1541 = vpack.c.b16 %v1526, %v1525
        %v1542 = vpack.c.b16 %v1528, %v1527
        %v1543 = vpack.c.b16 %v1530, %v1529
        %v1544 = vpack.c.b16 %v1532, %v1531
        %v1545 = vpack.c.b16 %v1534, %v1533
        %v1546 = vpack.c.b16 %v1536, %v1535
        %v1547 = vpack.c.b16 %v1538, %v1537
        %v1548 = vpack.c.b16 %v1540, %v1539
        %1557 = vmatprep.subr.bf16.mxu0 0
        %1558 = vmatpush1.bf16.msra.mxu0 %v1541
        %1559 = vmatprep.subr.bf16.mxu0 0
        %1560 = vmatpush1.bf16.msra.mxu0 %v1542
        %1561 = vmatprep.subr.bf16.mxu0 0
        %1562 = vmatpush1.bf16.msra.mxu0 %v1543
        %1563 = vmatprep.subr.bf16.mxu0 0
        %1564 = vmatpush1.bf16.msra.mxu0 %v1544
        %1565 = vmatprep.subr.bf16.mxu0 0
        %1566 = vmatpush1.bf16.msra.mxu0 %v1545
        %1567 = vmatprep.subr.bf16.mxu0 0
        %1568 = vmatpush1.bf16.msra.mxu0 %v1546
        %1569 = vmatprep.subr.bf16.mxu0 0
        %1570 = vmatpush1.bf16.msra.mxu0 %v1547
        %1571 = vmatprep.subr.bf16.mxu0 0
        %1572 = vmatpush1.bf16.msra.mxu0 %v1548
        %1573 = vmatprep.subr.bf16.mxu0 0
        %1574 = vmatpush1.bf16.msra.mxu0 0
        %1575 = vmatprep.subr.bf16.mxu0 0
        %1576 = vmatpush1.bf16.msra.mxu0 0
        %1577 = vmatprep.subr.bf16.mxu0 0
        %1578 = vmatpush1.bf16.msra.mxu0 0
        %1579 = vmatprep.subr.bf16.mxu0 0
        %1580 = vmatpush1.bf16.msra.mxu0 0
        %1581 = vmatprep.subr.bf16.mxu0 0
        %1582 = vmatpush1.bf16.msra.mxu0 0
        %1583 = vmatprep.subr.bf16.mxu0 0
        %1584 = vmatpush1.bf16.msra.mxu0 0
        %1585 = vmatprep.subr.bf16.mxu0 0
        %1586 = vmatpush1.bf16.msra.mxu0 0
        %1587 = vmatprep.subr.bf16.mxu0 0
        %1588 = vmatpush1.bf16.msra.mxu0 0
        %1589 = vmatprep.mubr.bf16.mxu0 0
        %1590 = vmatmul.mubr.bf16.gmra.mrb[0].mxu0 %v1485
        %v1591 = vpop.f32.mrb[0].mxu0
        %v1592 = vadd.f32 %v1507, %v1591
        %v1593 = vpop.f32.mrb[0].mxu0
        %v1594 = vpop.f32.mrb[0].mxu0
        %v1595 = vpop.f32.mrb[0].mxu0
        %1596 = vdwg.mxu0
        %v1597 = vadd.f32 %v784, %v1592
        %1598 = vadd.xlane.f32.xlu0 %v1597
        %v1599 = vpop.xlane.xlu0 %1598
        %v1600 = vrcp.pop 128.0
        %v1601 = vmul.f32 %v1599, %v1600
        %v1602 = vsub.f32 %v1597, %v1601
        %v1603 = vmul.f32 %v1602, %v1602
        %1604 = vadd.xlane.f32.xlu0 %v1603
        %v1605 = vpop.xlane.xlu0 %1604
        %v1606 = vmul.f32 %v1605, %v1600
        %v1607 = vadd.f32 %v1606, 1e-05
        %v1608 = vrsqrt.pop %v1607
        %v1609 = vmul.f32 %v1602, %v1608
        %v1610 = vld [vmem:[%s14] sm:$0x1]
        %v1612 = vlaneseq
        %v1613 = vshrl.u32 %v1612, 7
        %v1614 = vsub.s32 0, %v1613
        %v1615 = vrot.slane %v1610, %v1614
        %v1617 = vmul.f32 %v1609, %v1615
        %v1618 = vld [vmem:[#allocation16] sm:$0x1]
        %v1620 = vlaneseq
        %v1621 = vshrl.u32 %v1620, 7
        %v1622 = vsub.s32 0, %v1621
        %v1623 = vrot.slane %v1618, %v1622
        %v1625 = vadd.f32 %v1617, %v1623
        %v1626 = vpack.c.bf16 %v1625, %v1625
        %v1627 = vld [vmem:[#allocation7] sm:$0xf]
        %v1628 = vld [vmem:[#allocation7 + $0x4] sm:$0xf]
        %v1629 = vld [vmem:[#allocation7 + $0x8] sm:$0xf]
        %v1630 = vld [vmem:[#allocation7 + $0xc] sm:$0xf]
        %v1631 = vld [vmem:[#allocation7 + $0x10] sm:$0xf]
        %v1632 = vld [vmem:[#allocation7 + $0x14] sm:$0xf]
        %v1633 = vld [vmem:[#allocation7 + $0x18] sm:$0xf]
        %v1634 = vld [vmem:[#allocation7 + $0x1c] sm:$0xf]
        %v1635 = vld [vmem:[#allocation7 + $0x20] sm:$0xf]
        %v1636 = vld [vmem:[#allocation7 + $0x24] sm:$0xf]
        %v1637 = vld [vmem:[#allocation7 + $0x28] sm:$0xf]
        %v1638 = vld [vmem:[#allocation7 + $0x2c] sm:$0xf]
        %v1639 = vld [vmem:[#allocation7 + $0x30] sm:$0xf]
        %v1640 = vld [vmem:[#allocation7 + $0x34] sm:$0xf]
        %v1641 = vld [vmem:[#allocation7 + $0x38] sm:$0xf]
        %v1642 = vld [vmem:[#allocation7 + $0x3c] sm:$0xf]
        %v1643 = vld [vmem:[#allocation9] sm:$0x1]
        %v1645 = vlaneseq
        %v1646 = vshrl.u32 %v1645, 7
        %v1647 = vsub.s32 0, %v1646
        %v1648 = vrot.slane %v1643, %v1647
        %v1666 = vunpack.c.l.b16 %v1627
        %v1667 = vunpack.c.l.b16 %v1628
        %v1668 = vunpack.c.l.b16 %v1629
        %v1669 = vunpack.c.l.b16 %v1630
        %v1670 = vunpack.c.l.b16 %v1631
        %v1671 = vunpack.c.l.b16 %v1632
        %v1672 = vunpack.c.l.b16 %v1633
        %v1673 = vunpack.c.l.b16 %v1634
        %v1674 = vunpack.c.l.b16 %v1635
        %v1675 = vunpack.c.l.b16 %v1636
        %v1676 = vunpack.c.l.b16 %v1637
        %v1677 = vunpack.c.l.b16 %v1638
        %v1678 = vunpack.c.l.b16 %v1639
        %v1679 = vunpack.c.l.b16 %v1640
        %v1680 = vunpack.c.l.b16 %v1641
        %v1681 = vunpack.c.l.b16 %v1642
        %v1682 = vpack.c.b16 %v1667, %v1666
        %v1683 = vpack.c.b16 %v1669, %v1668
        %v1684 = vpack.c.b16 %v1671, %v1670
        %v1685 = vpack.c.b16 %v1673, %v1672
        %v1686 = vpack.c.b16 %v1675, %v1674
        %v1687 = vpack.c.b16 %v1677, %v1676
        %v1688 = vpack.c.b16 %v1679, %v1678
        %v1689 = vpack.c.b16 %v1681, %v1680
        %1698 = vmatprep.subr.bf16.mxu0 0
        %1699 = vmatpush1.bf16.msra.mxu0 %v1682
        %1700 = vmatprep.subr.bf16.mxu0 0
        %1701 = vmatpush1.bf16.msra.mxu0 %v1683
        %1702 = vmatprep.subr.bf16.mxu0 0
        %1703 = vmatpush1.bf16.msra.mxu0 %v1684
        %1704 = vmatprep.subr.bf16.mxu0 0
        %1705 = vmatpush1.bf16.msra.mxu0 %v1685
        %1706 = vmatprep.subr.bf16.mxu0 0
        %1707 = vmatpush1.bf16.msra.mxu0 %v1686
        %1708 = vmatprep.subr.bf16.mxu0 0
        %1709 = vmatpush1.bf16.msra.mxu0 %v1687
        %1710 = vmatprep.subr.bf16.mxu0 0
        %1711 = vmatpush1.bf16.msra.mxu0 %v1688
        %1712 = vmatprep.subr.bf16.mxu0 0
        %1713 = vmatpush1.bf16.msra.mxu0 %v1689
        %1714 = vmatprep.subr.bf16.mxu0 0
        %1715 = vmatpush1.bf16.msra.mxu0 0
        %1716 = vmatprep.subr.bf16.mxu0 0
        %1717 = vmatpush1.bf16.msra.mxu0 0
        %1718 = vmatprep.subr.bf16.mxu0 0
        %1719 = vmatpush1.bf16.msra.mxu0 0
        %1720 = vmatprep.subr.bf16.mxu0 0
        %1721 = vmatpush1.bf16.msra.mxu0 0
        %1722 = vmatprep.subr.bf16.mxu0 0
        %1723 = vmatpush1.bf16.msra.mxu0 0
        %1724 = vmatprep.subr.bf16.mxu0 0
        %1725 = vmatpush1.bf16.msra.mxu0 0
        %1726 = vmatprep.subr.bf16.mxu0 0
        %1727 = vmatpush1.bf16.msra.mxu0 0
        %1728 = vmatprep.subr.bf16.mxu0 0
        %1729 = vmatpush1.bf16.msra.mxu0 0
        %1730 = vmatprep.mubr.bf16.mxu0 0
        %1731 = vmatmul.mubr.bf16.gmra.mrb[0].mxu0 %v1626
        %v1732 = vpop.f32.mrb[0].mxu0
        %v1733 = vadd.f32 %v1648, %v1732
        %v1734 = vpop.f32.mrb[0].mxu0
        %v1735 = vpop.f32.mrb[0].mxu0
        %v1736 = vpop.f32.mrb[0].mxu0
        %1737 = vdwg.mxu0
        %v1738 = vpack.c.bf16 %v785, %v785
        %1739 = vmatprep.subr.bf16.mxu0 0
        %1740 = vmatpush1.bf16.msra.mxu0 %v1682
        %1741 = vmatprep.subr.bf16.mxu0 0
        %1742 = vmatpush1.bf16.msra.mxu0 %v1683
        %1743 = vmatprep.subr.bf16.mxu0 0
        %1744 = vmatpush1.bf16.msra.mxu0 %v1684
        %1745 = vmatprep.subr.bf16.mxu0 0
        %1746 = vmatpush1.bf16.msra.mxu0 %v1685
        %1747 = vmatprep.subr.bf16.mxu0 0
        %1748 = vmatpush1.bf16.msra.mxu0 %v1686
        %1749 = vmatprep.subr.bf16.mxu0 0
        %1750 = vmatpush1.bf16.msra.mxu0 %v1687
        %1751 = vmatprep.subr.bf16.mxu0 0
        %1752 = vmatpush1.bf16.msra.mxu0 %v1688
        %1753 = vmatprep.subr.bf16.mxu0 0
        %1754 = vmatpush1.bf16.msra.mxu0 %v1689
        %1755 = vmatprep.subr.bf16.mxu0 0
        %1756 = vmatpush1.bf16.msra.mxu0 0
        %1757 = vmatprep.subr.bf16.mxu0 0
        %1758 = vmatpush1.bf16.msra.mxu0 0
        %1759 = vmatprep.subr.bf16.mxu0 0
        %1760 = vmatpush1.bf16.msra.mxu0 0
        %1761 = vmatprep.subr.bf16.mxu0 0
        %1762 = vmatpush1.bf16.msra.mxu0 0
        %1763 = vmatprep.subr.bf16.mxu0 0
        %1764 = vmatpush1.bf16.msra.mxu0 0
        %1765 = vmatprep.subr.bf16.mxu0 0
        %1766 = vmatpush1.bf16.msra.mxu0 0
        %1767 = vmatprep.subr.bf16.mxu0 0
        %1768 = vmatpush1.bf16.msra.mxu0 0
        %1769 = vmatprep.subr.bf16.mxu0 0
        %1770 = vmatpush1.bf16.msra.mxu0 0
        %1771 = vmatprep.mubr.bf16.mxu0 0
        %1772 = vmatmul.mubr.bf16.gmra.mrb[0].mxu0 %v1738
        %v1773 = vpop.f32.mrb[0].mxu0
        %v1774 = vadd.f32 %v1648, %v1773
        %v1775 = vpop.f32.mrb[0].mxu0
        %v1776 = vpop.f32.mrb[0].mxu0
        %v1777 = vpop.f32.mrb[0].mxu0
        %1778 = vdwg.mxu0
        %v1779 = vmul.f32 %v1733, 0.17677669
        %v1780 = vpack.c.bf16 %v1779, %v1779
        %1781 = vxpose.xlu0.b32.start [1/16] %v1774, 128
        %1782 = vxpose.xlu0.b32.cont [2/16] 0.0, 128
        %1783 = vxpose.xlu0.b32.cont [3/16] 0.0, 128
        %1784 = vxpose.xlu0.b32.cont [4/16] 0.0, 128
        %1785 = vxpose.xlu0.b32.cont [5/16] 0.0, 128
        %1786 = vxpose.xlu0.b32.cont [6/16] 0.0, 128
        %1787 = vxpose.xlu0.b32.cont [7/16] 0.0, 128
        %1788 = vxpose.xlu0.b32.cont [8/16] 0.0, 128
        %1789 = vxpose.xlu0.b32.cont [9/16] 0.0, 128
        %1790 = vxpose.xlu0.b32.cont [10/16] 0.0, 128
        %1791 = vxpose.xlu0.b32.cont [11/16] 0.0, 128
        %1792 = vxpose.xlu0.b32.cont [12/16] 0.0, 128
        %1793 = vxpose.xlu0.b32.cont [13/16] 0.0, 128
        %1794 = vxpose.xlu0.b32.cont [14/16] 0.0, 128
        %1795 = vxpose.xlu0.b32.cont [15/16] 0.0, 128
        %1796 = vxpose.xlu0.b32.end [16/16] 0.0, 128
        %v1797 = vpop.trf.xlu0
        %v1798 = vpop.trf.xlu0
        %v1799 = vpop.trf.xlu0
        %v1800 = vpop.trf.xlu0
        %v1801 = vpop.trf.xlu0
        %v1802 = vpop.trf.xlu0
        %v1803 = vpop.trf.xlu0
        %v1804 = vpop.trf.xlu0
        %v1805 = vpop.trf.xlu0
        %v1806 = vpop.trf.xlu0
        %v1807 = vpop.trf.xlu0
        %v1808 = vpop.trf.xlu0
        %v1809 = vpop.trf.xlu0
        %v1810 = vpop.trf.xlu0
        %v1811 = vpop.trf.xlu0
        %v1812 = vpop.trf.xlu0
        %v1813 = vpack.c.bf16 %v1798, %v1797
        %v1814 = vpack.c.bf16 %v1800, %v1799
        %v1816 = vsel %vm934, %v1780, 0
        %1818 = vmatprep.subr.bf16.mxu0 0
        %1819 = vmatpush1.bf16.msra.mxu0 %v1813
        %1820 = vmatprep.subr.bf16.mxu0 0
        %1821 = vmatpush1.bf16.msra.mxu0 %v1814
        %1822 = vmatprep.subr.bf16.mxu0 0
        %1823 = vmatpush1.bf16.msra.mxu0 0
        %1824 = vmatprep.subr.bf16.mxu0 0
        %1825 = vmatpush1.bf16.msra.mxu0 0
        %1826 = vmatprep.subr.bf16.mxu0 0
        %1827 = vmatpush1.bf16.msra.mxu0 0
        %1828 = vmatprep.subr.bf16.mxu0 0
        %1829 = vmatpush1.bf16.msra.mxu0 0
        %1830 = vmatprep.subr.bf16.mxu0 0
        %1831 = vmatpush1.bf16.msra.mxu0 0
        %1832 = vmatprep.subr.bf16.mxu0 0
        %1833 = vmatpush1.bf16.msra.mxu0 0
        %1834 = vmatprep.subr.bf16.mxu0 0
        %1835 = vmatpush1.bf16.msra.mxu0 0
        %1836 = vmatprep.subr.bf16.mxu0 0
        %1837 = vmatpush1.bf16.msra.mxu0 0
        %1838 = vmatprep.subr.bf16.mxu0 0
        %1839 = vmatpush1.bf16.msra.mxu0 0
        %1840 = vmatprep.subr.bf16.mxu0 0
        %1841 = vmatpush1.bf16.msra.mxu0 0
        %1842 = vmatprep.subr.bf16.mxu0 0
        %1843 = vmatpush1.bf16.msra.mxu0 0
        %1844 = vmatprep.subr.bf16.mxu0 0
        %1845 = vmatpush1.bf16.msra.mxu0 0
        %1846 = vmatprep.subr.bf16.mxu0 0
        %1847 = vmatpush1.bf16.msra.mxu0 0
        %1848 = vmatprep.subr.bf16.mxu0 0
        %1849 = vmatpush1.bf16.msra.mxu0 0
        %1850 = vmatprep.mubr.bf16.mxu0 0
        %1851 = vmatmul.mubr.bf16.gmra.mrb[0].mxu0 %v1816
        %v1852 = vpop.f32.mrb[0].mxu0
        %v1853 = vadd.f32 0.0, %v1852
        %v1854 = vpop.f32.mrb[0].mxu0
        %v1855 = vpop.f32.mrb[0].mxu0
        %v1856 = vpop.f32.mrb[0].mxu0
        %1857 = vdwg.mxu0
        %v1858 = vsel %vm978, %v1853, -inf
        %1859 = vmax.xlane.f32.xlu0 %v1858
        %v1860 = vpop.xlane.xlu0 %1859
        %v1861 = vsub.f32 %v1853, %v1860
        %v1862 = vmul.f32 %v1861, 1.442695
        %v1863 = vpow.pop %v1862
        %v1864 = vsel %vm978, %v1863, 0.0
        %1865 = vadd.xlane.f32.xlu0 %v1864
        %v1866 = vpop.xlane.xlu0 %1865
        %v1867 = vrcp.pop %v1866
        %v1868 = vmul.f32 %v1863, %v1867
        %v1869 = vpack.c.bf16 %v1868, %v1868
        %v1870 = vpack.c.bf16 %v1774, %v1774
        %v1872 = vsel %vm978, %v1869, 0
        %v1875 = vsel %vm995, %v1870, 0
        %1877 = vmatprep.subr.bf16.mxu0 0
        %1878 = vmatpush1.bf16.msra.mxu0 %v1875
        %1879 = vmatprep.subr.bf16.mxu0 0
        %1880 = vmatpush1.bf16.msra.mxu0 0
        %1881 = vmatprep.subr.bf16.mxu0 0
        %1882 = vmatpush1.bf16.msra.mxu0 0
        %1883 = vmatprep.subr.bf16.mxu0 0
        %1884 = vmatpush1.bf16.msra.mxu0 0
        %1885 = vmatprep.subr.bf16.mxu0 0
        %1886 = vmatpush1.bf16.msra.mxu0 0
        %1887 = vmatprep.subr.bf16.mxu0 0
        %1888 = vmatpush1.bf16.msra.mxu0 0
        %1889 = vmatprep.subr.bf16.mxu0 0
        %1890 = vmatpush1.bf16.msra.mxu0 0
        %1891 = vmatprep.subr.bf16.mxu0 0
        %1892 = vmatpush1.bf16.msra.mxu0 0
        %1893 = vmatprep.subr.bf16.mxu0 0
        %1894 = vmatpush1.bf16.msra.mxu0 0
        %1895 = vmatprep.subr.bf16.mxu0 0
        %1896 = vmatpush1.bf16.msra.mxu0 0
        %1897 = vmatprep.subr.bf16.mxu0 0
        %1898 = vmatpush1.bf16.msra.mxu0 0
        %1899 = vmatprep.subr.bf16.mxu0 0
        %1900 = vmatpush1.bf16.msra.mxu0 0
        %1901 = vmatprep.subr.bf16.mxu0 0
        %1902 = vmatpush1.bf16.msra.mxu0 0
        %1903 = vmatprep.subr.bf16.mxu0 0
        %1904 = vmatpush1.bf16.msra.mxu0 0
        %1905 = vmatprep.subr.bf16.mxu0 0
        %1906 = vmatpush1.bf16.msra.mxu0 0
        %1907 = vmatprep.subr.bf16.mxu0 0
        %1908 = vmatpush1.bf16.msra.mxu0 0
        %1909 = vmatprep.mubr.bf16.mxu0 0
        %1910 = vmatmul.mubr.bf16.gmra.mrb[0].mxu0 %v1872
        %v1911 = vpop.f32.mrb[0].mxu0
        %v1912 = vadd.f32 0.0, %v1911
        %v1913 = vpop.f32.mrb[0].mxu0
        %v1914 = vpop.f32.mrb[0].mxu0
        %v1915 = vpop.f32.mrb[0].mxu0
        %1916 = vdwg.mxu0
        %1918 = vrot.lane.b32.xlu0 %v1774, 96
        %v1919 = vpop.permute.xlu0 %1918
        %1921 = vxpose.xlu0.b32.start [1/16] %v1919, 128
        %1922 = vxpose.xlu0.b32.cont [2/16] 0.0, 128
        %1923 = vxpose.xlu0.b32.cont [3/16] 0.0, 128
        %1924 = vxpose.xlu0.b32.cont [4/16] 0.0, 128
        %1925 = vxpose.xlu0.b32.cont [5/16] 0.0, 128
        %1926 = vxpose.xlu0.b32.cont [6/16] 0.0, 128
        %1927 = vxpose.xlu0.b32.cont [7/16] 0.0, 128
        %1928 = vxpose.xlu0.b32.cont [8/16] 0.0, 128
        %1929 = vxpose.xlu0.b32.cont [9/16] 0.0, 128
        %1930 = vxpose.xlu0.b32.cont [10/16] 0.0, 128
        %1931 = vxpose.xlu0.b32.cont [11/16] 0.0, 128
        %1932 = vxpose.xlu0.b32.cont [12/16] 0.0, 128
        %1933 = vxpose.xlu0.b32.cont [13/16] 0.0, 128
        %1934 = vxpose.xlu0.b32.cont [14/16] 0.0, 128
        %1935 = vxpose.xlu0.b32.cont [15/16] 0.0, 128
        %1936 = vxpose.xlu0.b32.end [16/16] 0.0, 128
        %v1937 = vpop.trf.xlu0
        %v1938 = vpop.trf.xlu0
        %v1939 = vpop.trf.xlu0
        %v1940 = vpop.trf.xlu0
        %v1941 = vpop.trf.xlu0
        %v1942 = vpop.trf.xlu0
        %v1943 = vpop.trf.xlu0
        %v1944 = vpop.trf.xlu0
        %v1945 = vpop.trf.xlu0
        %v1946 = vpop.trf.xlu0
        %v1947 = vpop.trf.xlu0
        %v1948 = vpop.trf.xlu0
        %v1949 = vpop.trf.xlu0
        %v1950 = vpop.trf.xlu0
        %v1951 = vpop.trf.xlu0
        %v1952 = vpop.trf.xlu0
        %v1953 = vpack.c.bf16 %v1938, %v1937
        %v1954 = vpack.c.bf16 %v1940, %v1939
        %1956 = vrot.lane.b32.xlu0 %v1780, 96
        %v1957 = vpop.permute.xlu0 %1956
        %v1959 = vsel %vm934, %v1957, 0
        %1961 = vmatprep.subr.bf16.mxu0 0
        %1962 = vmatpush1.bf16.msra.mxu0 %v1953
        %1963 = vmatprep.subr.bf16.mxu0 0
        %1964 = vmatpush1.bf16.msra.mxu0 %v1954
        %1965 = vmatprep.subr.bf16.mxu0 0
        %1966 = vmatpush1.bf16.msra.mxu0 0
        %1967 = vmatprep.subr.bf16.mxu0 0
        %1968 = vmatpush1.bf16.msra.mxu0 0
        %1969 = vmatprep.subr.bf16.mxu0 0
        %1970 = vmatpush1.bf16.msra.mxu0 0
        %1971 = vmatprep.subr.bf16.mxu0 0
        %1972 = vmatpush1.bf16.msra.mxu0 0
        %1973 = vmatprep.subr.bf16.mxu0 0
        %1974 = vmatpush1.bf16.msra.mxu0 0
        %1975 = vmatprep.subr.bf16.mxu0 0
        %1976 = vmatpush1.bf16.msra.mxu0 0
        %1977 = vmatprep.subr.bf16.mxu0 0
        %1978 = vmatpush1.bf16.msra.mxu0 0
        %1979 = vmatprep.subr.bf16.mxu0 0
        %1980 = vmatpush1.bf16.msra.mxu0 0
        %1981 = vmatprep.subr.bf16.mxu0 0
        %1982 = vmatpush1.bf16.msra.mxu0 0
        %1983 = vmatprep.subr.bf16.mxu0 0
        %1984 = vmatpush1.bf16.msra.mxu0 0
        %1985 = vmatprep.subr.bf16.mxu0 0
        %1986 = vmatpush1.bf16.msra.mxu0 0
        %1987 = vmatprep.subr.bf16.mxu0 0
        %1988 = vmatpush1.bf16.msra.mxu0 0
        %1989 = vmatprep.subr.bf16.mxu0 0
        %1990 = vmatpush1.bf16.msra.mxu0 0
        %1991 = vmatprep.subr.bf16.mxu0 0
        %1992 = vmatpush1.bf16.msra.mxu0 0
        %1993 = vmatprep.mubr.bf16.mxu0 0
        %1994 = vmatmul.mubr.bf16.gmra.mrb[0].mxu0 %v1959
        %v1995 = vpop.f32.mrb[0].mxu0
        %v1996 = vadd.f32 0.0, %v1995
        %v1997 = vpop.f32.mrb[0].mxu0
        %v1998 = vpop.f32.mrb[0].mxu0
        %v1999 = vpop.f32.mrb[0].mxu0
        %2000 = vdwg.mxu0
        %v2001 = vsel %vm978, %v1996, -inf
        %2002 = vmax.xlane.f32.xlu0 %v2001
        %v2003 = vpop.xlane.xlu0 %2002
        %v2004 = vsub.f32 %v1996, %v2003
        %v2005 = vmul.f32 %v2004, 1.442695
        %v2006 = vpow.pop %v2005
        %v2007 = vsel %vm978, %v2006, 0.0
        %2008 = vadd.xlane.f32.xlu0 %v2007
        %v2009 = vpop.xlane.xlu0 %2008
        %v2010 = vrcp.pop %v2009
        %v2011 = vmul.f32 %v2006, %v2010
        %v2012 = vpack.c.bf16 %v2011, %v2011
        %2014 = vrot.lane.b32.xlu0 %v1870, 96
        %v2015 = vpop.permute.xlu0 %2014
        %v2017 = vsel %vm978, %v2012, 0
        %v2020 = vsel %vm995, %v2015, 0
        %2022 = vmatprep.subr.bf16.mxu0 0
        %2023 = vmatpush1.bf16.msra.mxu0 %v2020
        %2024 = vmatprep.subr.bf16.mxu0 0
        %2025 = vmatpush1.bf16.msra.mxu0 0
        %2026 = vmatprep.subr.bf16.mxu0 0
        %2027 = vmatpush1.bf16.msra.mxu0 0
        %2028 = vmatprep.subr.bf16.mxu0 0
        %2029 = vmatpush1.bf16.msra.mxu0 0
        %2030 = vmatprep.subr.bf16.mxu0 0
        %2031 = vmatpush1.bf16.msra.mxu0 0
        %2032 = vmatprep.subr.bf16.mxu0 0
        %2033 = vmatpush1.bf16.msra.mxu0 0
        %2034 = vmatprep.subr.bf16.mxu0 0
        %2035 = vmatpush1.bf16.msra.mxu0 0
        %2036 = vmatprep.subr.bf16.mxu0 0
        %2037 = vmatpush1.bf16.msra.mxu0 0
        %2038 = vmatprep.subr.bf16.mxu0 0
        %2039 = vmatpush1.bf16.msra.mxu0 0
        %2040 = vmatprep.subr.bf16.mxu0 0
        %2041 = vmatpush1.bf16.msra.mxu0 0
        %2042 = vmatprep.subr.bf16.mxu0 0
        %2043 = vmatpush1.bf16.msra.mxu0 0
        %2044 = vmatprep.subr.bf16.mxu0 0
        %2045 = vmatpush1.bf16.msra.mxu0 0
        %2046 = vmatprep.subr.bf16.mxu0 0
        %2047 = vmatpush1.bf16.msra.mxu0 0
        %2048 = vmatprep.subr.bf16.mxu0 0
        %2049 = vmatpush1.bf16.msra.mxu0 0
        %2050 = vmatprep.subr.bf16.mxu0 0
        %2051 = vmatpush1.bf16.msra.mxu0 0
        %2052 = vmatprep.subr.bf16.mxu0 0
        %2053 = vmatpush1.bf16.msra.mxu0 0
        %2054 = vmatprep.mubr.bf16.mxu0 0
        %2055 = vmatmul.mubr.bf16.gmra.mrb[0].mxu0 %v2017
        %v2056 = vpop.f32.mrb[0].mxu0
        %v2057 = vadd.f32 0.0, %v2056
        %v2058 = vpop.f32.mrb[0].mxu0
        %v2059 = vpop.f32.mrb[0].mxu0
        %v2060 = vpop.f32.mrb[0].mxu0
        %2061 = vdwg.mxu0
        %2062 = vrot.lane.b32.xlu0 %v1774, 64
        %v2063 = vpop.permute.xlu0 %2062
        %2065 = vxpose.xlu0.b32.start [1/16] %v2063, 128
        %2066 = vxpose.xlu0.b32.cont [2/16] 0.0, 128
        %2067 = vxpose.xlu0.b32.cont [3/16] 0.0, 128
        %2068 = vxpose.xlu0.b32.cont [4/16] 0.0, 128
        %2069 = vxpose.xlu0.b32.cont [5/16] 0.0, 128
        %2070 = vxpose.xlu0.b32.cont [6/16] 0.0, 128
        %2071 = vxpose.xlu0.b32.cont [7/16] 0.0, 128
        %2072 = vxpose.xlu0.b32.cont [8/16] 0.0, 128
        %2073 = vxpose.xlu0.b32.cont [9/16] 0.0, 128
        %2074 = vxpose.xlu0.b32.cont [10/16] 0.0, 128
        %2075 = vxpose.xlu0.b32.cont [11/16] 0.0, 128
        %2076 = vxpose.xlu0.b32.cont [12/16] 0.0, 128
        %2077 = vxpose.xlu0.b32.cont [13/16] 0.0, 128
        %2078 = vxpose.xlu0.b32.cont [14/16] 0.0, 128
        %2079 = vxpose.xlu0.b32.cont [15/16] 0.0, 128
        %2080 = vxpose.xlu0.b32.end [16/16] 0.0, 128
        %v2081 = vpop.trf.xlu0
        %v2082 = vpop.trf.xlu0
        %v2083 = vpop.trf.xlu0
        %v2084 = vpop.trf.xlu0
        %v2085 = vpop.trf.xlu0
        %v2086 = vpop.trf.xlu0
        %v2087 = vpop.trf.xlu0
        %v2088 = vpop.trf.xlu0
        %v2089 = vpop.trf.xlu0
        %v2090 = vpop.trf.xlu0
        %v2091 = vpop.trf.xlu0
        %v2092 = vpop.trf.xlu0
        %v2093 = vpop.trf.xlu0
        %v2094 = vpop.trf.xlu0
        %v2095 = vpop.trf.xlu0
        %v2096 = vpop.trf.xlu0
        %v2097 = vpack.c.bf16 %v2082, %v2081
        %v2098 = vpack.c.bf16 %v2084, %v2083
        %2099 = vrot.lane.b32.xlu0 %v1780, 64
        %v2100 = vpop.permute.xlu0 %2099
        %v2102 = vsel %vm934, %v2100, 0
        %2104 = vmatprep.subr.bf16.mxu0 0
        %2105 = vmatpush1.bf16.msra.mxu0 %v2097
        %2106 = vmatprep.subr.bf16.mxu0 0
        %2107 = vmatpush1.bf16.msra.mxu0 %v2098
        %2108 = vmatprep.subr.bf16.mxu0 0
        %2109 = vmatpush1.bf16.msra.mxu0 0
        %2110 = vmatprep.subr.bf16.mxu0 0
        %2111 = vmatpush1.bf16.msra.mxu0 0
        %2112 = vmatprep.subr.bf16.mxu0 0
        %2113 = vmatpush1.bf16.msra.mxu0 0
        %2114 = vmatprep.subr.bf16.mxu0 0
        %2115 = vmatpush1.bf16.msra.mxu0 0
        %2116 = vmatprep.subr.bf16.mxu0 0
        %2117 = vmatpush1.bf16.msra.mxu0 0
        %2118 = vmatprep.subr.bf16.mxu0 0
        %2119 = vmatpush1.bf16.msra.mxu0 0
        %2120 = vmatprep.subr.bf16.mxu0 0
        %2121 = vmatpush1.bf16.msra.mxu0 0
        %2122 = vmatprep.subr.bf16.mxu0 0
        %2123 = vmatpush1.bf16.msra.mxu0 0
        %2124 = vmatprep.subr.bf16.mxu0 0
        %2125 = vmatpush1.bf16.msra.mxu0 0
        %2126 = vmatprep.subr.bf16.mxu0 0
        %2127 = vmatpush1.bf16.msra.mxu0 0
        %2128 = vmatprep.subr.bf16.mxu0 0
        %2129 = vmatpush1.bf16.msra.mxu0 0
        %2130 = vmatprep.subr.bf16.mxu0 0
        %2131 = vmatpush1.bf16.msra.mxu0 0
        %2132 = vmatprep.subr.bf16.mxu0 0
        %2133 = vmatpush1.bf16.msra.mxu0 0
        %2134 = vmatprep.subr.bf16.mxu0 0
        %2135 = vmatpush1.bf16.msra.mxu0 0
        %2136 = vmatprep.mubr.bf16.mxu0 0
        %2137 = vmatmul.mubr.bf16.gmra.mrb[0].mxu0 %v2102
        %v2138 = vpop.f32.mrb[0].mxu0
        %v2139 = vadd.f32 0.0, %v2138
        %v2140 = vpop.f32.mrb[0].mxu0
        %v2141 = vpop.f32.mrb[0].mxu0
        %v2142 = vpop.f32.mrb[0].mxu0
        %2143 = vdwg.mxu0
        %v2144 = vsel %vm978, %v2139, -inf
        %2145 = vmax.xlane.f32.xlu0 %v2144
        %v2146 = vpop.xlane.xlu0 %2145
        %v2147 = vsub.f32 %v2139, %v2146
        %v2148 = vmul.f32 %v2147, 1.442695
        %v2149 = vpow.pop %v2148
        %v2150 = vsel %vm978, %v2149, 0.0
        %2151 = vadd.xlane.f32.xlu0 %v2150
        %v2152 = vpop.xlane.xlu0 %2151
        %v2153 = vrcp.pop %v2152
        %v2154 = vmul.f32 %v2149, %v2153
        %v2155 = vpack.c.bf16 %v2154, %v2154
        %2156 = vrot.lane.b32.xlu0 %v1870, 64
        %v2157 = vpop.permute.xlu0 %2156
        %v2159 = vsel %vm978, %v2155, 0
        %v2162 = vsel %vm995, %v2157, 0
        %2164 = vmatprep.subr.bf16.mxu0 0
        %2165 = vmatpush1.bf16.msra.mxu0 %v2162
        %2166 = vmatprep.subr.bf16.mxu0 0
        %2167 = vmatpush1.bf16.msra.mxu0 0
        %2168 = vmatprep.subr.bf16.mxu0 0
        %2169 = vmatpush1.bf16.msra.mxu0 0
        %2170 = vmatprep.subr.bf16.mxu0 0
        %2171 = vmatpush1.bf16.msra.mxu0 0
        %2172 = vmatprep.subr.bf16.mxu0 0
        %2173 = vmatpush1.bf16.msra.mxu0 0
        %2174 = vmatprep.subr.bf16.mxu0 0
        %2175 = vmatpush1.bf16.msra.mxu0 0
        %2176 = vmatprep.subr.bf16.mxu0 0
        %2177 = vmatpush1.bf16.msra.mxu0 0
        %2178 = vmatprep.subr.bf16.mxu0 0
        %2179 = vmatpush1.bf16.msra.mxu0 0
        %2180 = vmatprep.subr.bf16.mxu0 0
        %2181 = vmatpush1.bf16.msra.mxu0 0
        %2182 = vmatprep.subr.bf16.mxu0 0
        %2183 = vmatpush1.bf16.msra.mxu0 0
        %2184 = vmatprep.subr.bf16.mxu0 0
        %2185 = vmatpush1.bf16.msra.mxu0 0
        %2186 = vmatprep.subr.bf16.mxu0 0
        %2187 = vmatpush1.bf16.msra.mxu0 0
        %2188 = vmatprep.subr.bf16.mxu0 0
        %2189 = vmatpush1.bf16.msra.mxu0 0
        %2190 = vmatprep.subr.bf16.mxu0 0
        %2191 = vmatpush1.bf16.msra.mxu0 0
        %2192 = vmatprep.subr.bf16.mxu0 0
        %2193 = vmatpush1.bf16.msra.mxu0 0
        %2194 = vmatprep.subr.bf16.mxu0 0
        %2195 = vmatpush1.bf16.msra.mxu0 0
        %2196 = vmatprep.mubr.bf16.mxu0 0
        %2197 = vmatmul.mubr.bf16.gmra.mrb[0].mxu0 %v2159
        %v2198 = vpop.f32.mrb[0].mxu0
        %v2199 = vadd.f32 0.0, %v2198
        %v2200 = vpop.f32.mrb[0].mxu0
        %v2201 = vpop.f32.mrb[0].mxu0
        %v2202 = vpop.f32.mrb[0].mxu0
        %2203 = vdwg.mxu0
        %2204 = vrot.lane.b32.xlu0 %v1774, 32
        %v2205 = vpop.permute.xlu0 %2204
        %2207 = vxpose.xlu0.b32.start [1/16] %v2205, 128
        %2208 = vxpose.xlu0.b32.cont [2/16] 0.0, 128
        %2209 = vxpose.xlu0.b32.cont [3/16] 0.0, 128
        %2210 = vxpose.xlu0.b32.cont [4/16] 0.0, 128
        %2211 = vxpose.xlu0.b32.cont [5/16] 0.0, 128
        %2212 = vxpose.xlu0.b32.cont [6/16] 0.0, 128
        %2213 = vxpose.xlu0.b32.cont [7/16] 0.0, 128
        %2214 = vxpose.xlu0.b32.cont [8/16] 0.0, 128
        %2215 = vxpose.xlu0.b32.cont [9/16] 0.0, 128
        %2216 = vxpose.xlu0.b32.cont [10/16] 0.0, 128
        %2217 = vxpose.xlu0.b32.cont [11/16] 0.0, 128
        %2218 = vxpose.xlu0.b32.cont [12/16] 0.0, 128
        %2219 = vxpose.xlu0.b32.cont [13/16] 0.0, 128
        %2220 = vxpose.xlu0.b32.cont [14/16] 0.0, 128
        %2221 = vxpose.xlu0.b32.cont [15/16] 0.0, 128
        %2222 = vxpose.xlu0.b32.end [16/16] 0.0, 128
        %v2223 = vpop.trf.xlu0
        %v2224 = vpop.trf.xlu0
        %v2225 = vpop.trf.xlu0
        %v2226 = vpop.trf.xlu0
        %v2227 = vpop.trf.xlu0
        %v2228 = vpop.trf.xlu0
        %v2229 = vpop.trf.xlu0
        %v2230 = vpop.trf.xlu0
        %v2231 = vpop.trf.xlu0
        %v2232 = vpop.trf.xlu0
        %v2233 = vpop.trf.xlu0
        %v2234 = vpop.trf.xlu0
        %v2235 = vpop.trf.xlu0
        %v2236 = vpop.trf.xlu0
        %v2237 = vpop.trf.xlu0
        %v2238 = vpop.trf.xlu0
        %v2239 = vpack.c.bf16 %v2224, %v2223
        %v2240 = vpack.c.bf16 %v2226, %v2225
        %2241 = vrot.lane.b32.xlu0 %v1780, 32
        %v2242 = vpop.permute.xlu0 %2241
        %v2244 = vsel %vm934, %v2242, 0
        %2246 = vmatprep.subr.bf16.mxu0 0
        %2247 = vmatpush1.bf16.msra.mxu0 %v2239
        %2248 = vmatprep.subr.bf16.mxu0 0
        %2249 = vmatpush1.bf16.msra.mxu0 %v2240
        %2250 = vmatprep.subr.bf16.mxu0 0
        %2251 = vmatpush1.bf16.msra.mxu0 0
        %2252 = vmatprep.subr.bf16.mxu0 0
        %2253 = vmatpush1.bf16.msra.mxu0 0
        %2254 = vmatprep.subr.bf16.mxu0 0
        %2255 = vmatpush1.bf16.msra.mxu0 0
        %2256 = vmatprep.subr.bf16.mxu0 0
        %2257 = vmatpush1.bf16.msra.mxu0 0
        %2258 = vmatprep.subr.bf16.mxu0 0
        %2259 = vmatpush1.bf16.msra.mxu0 0
        %2260 = vmatprep.subr.bf16.mxu0 0
        %2261 = vmatpush1.bf16.msra.mxu0 0
        %2262 = vmatprep.subr.bf16.mxu0 0
        %2263 = vmatpush1.bf16.msra.mxu0 0
        %2264 = vmatprep.subr.bf16.mxu0 0
        %2265 = vmatpush1.bf16.msra.mxu0 0
        %2266 = vmatprep.subr.bf16.mxu0 0
        %2267 = vmatpush1.bf16.msra.mxu0 0
        %2268 = vmatprep.subr.bf16.mxu0 0
        %2269 = vmatpush1.bf16.msra.mxu0 0
        %2270 = vmatprep.subr.bf16.mxu0 0
        %2271 = vmatpush1.bf16.msra.mxu0 0
        %2272 = vmatprep.subr.bf16.mxu0 0
        %2273 = vmatpush1.bf16.msra.mxu0 0
        %2274 = vmatprep.subr.bf16.mxu0 0
        %2275 = vmatpush1.bf16.msra.mxu0 0
        %2276 = vmatprep.subr.bf16.mxu0 0
        %2277 = vmatpush1.bf16.msra.mxu0 0
        %2278 = vmatprep.mubr.bf16.mxu0 0
        %2279 = vmatmul.mubr.bf16.gmra.mrb[0].mxu0 %v2244
        %v2280 = vpop.f32.mrb[0].mxu0
        %v2281 = vadd.f32 0.0, %v2280
        %v2282 = vpop.f32.mrb[0].mxu0
        %v2283 = vpop.f32.mrb[0].mxu0
        %v2284 = vpop.f32.mrb[0].mxu0
        %2285 = vdwg.mxu0
        %v2286 = vsel %vm978, %v2281, -inf
        %2287 = vmax.xlane.f32.xlu0 %v2286
        %v2288 = vpop.xlane.xlu0 %2287
        %v2289 = vsub.f32 %v2281, %v2288
        %v2290 = vmul.f32 %v2289, 1.442695
        %v2291 = vpow.pop %v2290
        %v2292 = vsel %vm978, %v2291, 0.0
        %2293 = vadd.xlane.f32.xlu0 %v2292
        %v2294 = vpop.xlane.xlu0 %2293
        %v2295 = vrcp.pop %v2294
        %v2296 = vmul.f32 %v2291, %v2295
        %v2297 = vpack.c.bf16 %v2296, %v2296
        %2298 = vrot.lane.b32.xlu0 %v1870, 32
        %v2299 = vpop.permute.xlu0 %2298
        %v2301 = vsel %vm978, %v2297, 0
        %v2304 = vsel %vm995, %v2299, 0
        %2306 = vmatprep.subr.bf16.mxu0 0
        %2307 = vmatpush1.bf16.msra.mxu0 %v2304
        %2308 = vmatprep.subr.bf16.mxu0 0
        %2309 = vmatpush1.bf16.msra.mxu0 0
        %2310 = vmatprep.subr.bf16.mxu0 0
        %2311 = vmatpush1.bf16.msra.mxu0 0
        %2312 = vmatprep.subr.bf16.mxu0 0
        %2313 = vmatpush1.bf16.msra.mxu0 0
        %2314 = vmatprep.subr.bf16.mxu0 0
        %2315 = vmatpush1.bf16.msra.mxu0 0
        %2316 = vmatprep.subr.bf16.mxu0 0
        %2317 = vmatpush1.bf16.msra.mxu0 0
        %2318 = vmatprep.subr.bf16.mxu0 0
        %2319 = vmatpush1.bf16.msra.mxu0 0
        %2320 = vmatprep.subr.bf16.mxu0 0
        %2321 = vmatpush1.bf16.msra.mxu0 0
        %2322 = vmatprep.subr.bf16.mxu0 0
        %2323 = vmatpush1.bf16.msra.mxu0 0
        %2324 = vmatprep.subr.bf16.mxu0 0
        %2325 = vmatpush1.bf16.msra.mxu0 0
        %2326 = vmatprep.subr.bf16.mxu0 0
        %2327 = vmatpush1.bf16.msra.mxu0 0
        %2328 = vmatprep.subr.bf16.mxu0 0
        %2329 = vmatpush1.bf16.msra.mxu0 0
        %2330 = vmatprep.subr.bf16.mxu0 0
        %2331 = vmatpush1.bf16.msra.mxu0 0
        %2332 = vmatprep.subr.bf16.mxu0 0
        %2333 = vmatpush1.bf16.msra.mxu0 0
        %2334 = vmatprep.subr.bf16.mxu0 0
        %2335 = vmatpush1.bf16.msra.mxu0 0
        %2336 = vmatprep.subr.bf16.mxu0 0
        %2337 = vmatpush1.bf16.msra.mxu0 0
        %2338 = vmatprep.mubr.bf16.mxu0 0
        %2339 = vmatmul.mubr.bf16.gmra.mrb[0].mxu0 %v2301
        %v2340 = vpop.f32.mrb[0].mxu0
        %v2341 = vadd.f32 0.0, %v2340
        %v2342 = vpop.f32.mrb[0].mxu0
        %v2343 = vpop.f32.mrb[0].mxu0
        %v2344 = vpop.f32.mrb[0].mxu0
        %2345 = vdwg.mxu0
        %2347 = vrot.lane.b32.xlu0 %v2057, 32
        %v2348 = vpop.permute.xlu0 %2347
        %2351 = vrot.lane.b32.xlu0 %v2199, 64
        %v2352 = vpop.permute.xlu0 %2351
        %2355 = vrot.lane.b32.xlu0 %v2341, 96
        %v2356 = vpop.permute.xlu0 %2355
        %v2358 = vsel %vm934, %v1912, %v2348
        %v2359 = vsel %vm1481, %v2358, %v2352
        %v2360 = vsel %vm1483, %v2359, %v2356
        %v2361 = vpack.c.bf16 %v2360, %v2360
        %v2362 = vld [vmem:[#allocation10] sm:$0xf]
        %v2363 = vld [vmem:[#allocation10 + $0x4] sm:$0xf]
        %v2364 = vld [vmem:[#allocation10 + $0x8] sm:$0xf]
        %v2365 = vld [vmem:[#allocation10 + $0xc] sm:$0xf]
        %v2366 = vld [vmem:[#allocation10 + $0x10] sm:$0xf]
        %v2367 = vld [vmem:[#allocation10 + $0x14] sm:$0xf]
        %v2368 = vld [vmem:[#allocation10 + $0x18] sm:$0xf]
        %v2369 = vld [vmem:[#allocation10 + $0x1c] sm:$0xf]
        %v2370 = vld [vmem:[#allocation10 + $0x20] sm:$0xf]
        %v2371 = vld [vmem:[#allocation10 + $0x24] sm:$0xf]
        %v2372 = vld [vmem:[#allocation10 + $0x28] sm:$0xf]
        %v2373 = vld [vmem:[#allocation10 + $0x2c] sm:$0xf]
        %v2374 = vld [vmem:[#allocation10 + $0x30] sm:$0xf]
        %v2375 = vld [vmem:[#allocation10 + $0x34] sm:$0xf]
        %v2376 = vld [vmem:[#allocation10 + $0x38] sm:$0xf]
        %v2377 = vld [vmem:[#allocation10 + $0x3c] sm:$0xf]
        %v2378 = vld [vmem:[#allocation12] sm:$0x1]
        %v2380 = vlaneseq
        %v2381 = vshrl.u32 %v2380, 7
        %v2382 = vsub.s32 0, %v2381
        %v2383 = vrot.slane %v2378, %v2382
        %v2401 = vunpack.c.l.b16 %v2362
        %v2402 = vunpack.c.l.b16 %v2363
        %v2403 = vunpack.c.l.b16 %v2364
        %v2404 = vunpack.c.l.b16 %v2365
        %v2405 = vunpack.c.l.b16 %v2366
        %v2406 = vunpack.c.l.b16 %v2367
        %v2407 = vunpack.c.l.b16 %v2368
        %v2408 = vunpack.c.l.b16 %v2369
        %v2409 = vunpack.c.l.b16 %v2370
        %v2410 = vunpack.c.l.b16 %v2371
        %v2411 = vunpack.c.l.b16 %v2372
        %v2412 = vunpack.c.l.b16 %v2373
        %v2413 = vunpack.c.l.b16 %v2374
        %v2414 = vunpack.c.l.b16 %v2375
        %v2415 = vunpack.c.l.b16 %v2376
        %v2416 = vunpack.c.l.b16 %v2377
        %v2417 = vpack.c.b16 %v2402, %v2401
        %v2418 = vpack.c.b16 %v2404, %v2403
        %v2419 = vpack.c.b16 %v2406, %v2405
        %v2420 = vpack.c.b16 %v2408, %v2407
        %v2421 = vpack.c.b16 %v2410, %v2409
        %v2422 = vpack.c.b16 %v2412, %v2411
        %v2423 = vpack.c.b16 %v2414, %v2413
        %v2424 = vpack.c.b16 %v2416, %v2415
        %2433 = vmatprep.subr.bf16.mxu0 0
        %2434 = vmatpush1.bf16.msra.mxu0 %v2417
        %2435 = vmatprep.subr.bf16.mxu0 0
        %2436 = vmatpush1.bf16.msra.mxu0 %v2418
        %2437 = vmatprep.subr.bf16.mxu0 0
        %2438 = vmatpush1.bf16.msra.mxu0 %v2419
        %2439 = vmatprep.subr.bf16.mxu0 0
        %2440 = vmatpush1.bf16.msra.mxu0 %v2420
        %2441 = vmatprep.subr.bf16.mxu0 0
        %2442 = vmatpush1.bf16.msra.mxu0 %v2421
        %2443 = vmatprep.subr.bf16.mxu0 0
        %2444 = vmatpush1.bf16.msra.mxu0 %v2422
        %2445 = vmatprep.subr.bf16.mxu0 0
        %2446 = vmatpush1.bf16.msra.mxu0 %v2423
        %2447 = vmatprep.subr.bf16.mxu0 0
        %2448 = vmatpush1.bf16.msra.mxu0 %v2424
        %2449 = vmatprep.subr.bf16.mxu0 0
        %2450 = vmatpush1.bf16.msra.mxu0 0
        %2451 = vmatprep.subr.bf16.mxu0 0
        %2452 = vmatpush1.bf16.msra.mxu0 0
        %2453 = vmatprep.subr.bf16.mxu0 0
        %2454 = vmatpush1.bf16.msra.mxu0 0
        %2455 = vmatprep.subr.bf16.mxu0 0
        %2456 = vmatpush1.bf16.msra.mxu0 0
        %2457 = vmatprep.subr.bf16.mxu0 0
        %2458 = vmatpush1.bf16.msra.mxu0 0
        %2459 = vmatprep.subr.bf16.mxu0 0
        %2460 = vmatpush1.bf16.msra.mxu0 0
        %2461 = vmatprep.subr.bf16.mxu0 0
        %2462 = vmatpush1.bf16.msra.mxu0 0
        %2463 = vmatprep.subr.bf16.mxu0 0
        %2464 = vmatpush1.bf16.msra.mxu0 0
        %2465 = vmatprep.mubr.bf16.mxu0 0
        %2466 = vmatmul.mubr.bf16.gmra.mrb[0].mxu0 %v2361
        %v2467 = vpop.f32.mrb[0].mxu0
        %v2468 = vadd.f32 %v2383, %v2467
        %v2469 = vpop.f32.mrb[0].mxu0
        %v2470 = vpop.f32.mrb[0].mxu0
        %v2471 = vpop.f32.mrb[0].mxu0
        %2472 = vdwg.mxu0
        %v2473 = vadd.f32 %v1625, %v2468
        %2474 = vadd.xlane.f32.xlu0 %v2473
        %v2475 = vpop.xlane.xlu0 %2474
        %v2476 = vmul.f32 %v2475, %v1600
        %v2477 = vsub.f32 %v2473, %v2476
        %v2478 = vmul.f32 %v2477, %v2477
        %2479 = vadd.xlane.f32.xlu0 %v2478
        %v2480 = vpop.xlane.xlu0 %2479
        %v2481 = vmul.f32 %v2480, %v1600
        %v2482 = vadd.f32 %v2481, 1e-05
        %v2483 = vrsqrt.pop %v2482
        %v2484 = vmul.f32 %v2477, %v2483
        %v2485 = vld [vmem:[%s16] sm:$0x1]
        %v2487 = vlaneseq
        %v2488 = vshrl.u32 %v2487, 7
        %v2489 = vsub.s32 0, %v2488
        %v2490 = vrot.slane %v2485, %v2489
        %v2492 = vmul.f32 %v2484, %v2490
        %v2493 = vld [vmem:[%s17] sm:$0x1]
        %v2495 = vlaneseq
        %v2496 = vshrl.u32 %v2495, 7
        %v2497 = vsub.s32 0, %v2496
        %v2498 = vrot.slane %v2493, %v2497
        %v2500 = vadd.f32 %v2492, %v2498
        %v2501 = vpack.c.bf16 %v2500, %v2500
        %v2502 = vld [vmem:[%s10] sm:$0xff]
        %v2503 = vld [vmem:[%s10 + $0x8] sm:$0xff]
        %v2504 = vld [vmem:[%s10 + $0x10] sm:$0xff]
        %v2505 = vld [vmem:[%s10 + $0x18] sm:$0xff]
        %v2506 = vld [vmem:[%s10 + $0x20] sm:$0xff]
        %v2507 = vld [vmem:[%s10 + $0x28] sm:$0xff]
        %v2508 = vld [vmem:[%s10 + $0x30] sm:$0xff]
        %v2509 = vld [vmem:[%s10 + $0x38] sm:$0xff]
        %v2510 = vld [vmem:[%s10 + $0x40] sm:$0xff]
        %v2511 = vld [vmem:[%s10 + $0x48] sm:$0xff]
        %v2512 = vld [vmem:[%s10 + $0x50] sm:$0xff]
        %v2513 = vld [vmem:[%s10 + $0x58] sm:$0xff]
        %v2514 = vld [vmem:[%s10 + $0x60] sm:$0xff]
        %v2515 = vld [vmem:[%s10 + $0x68] sm:$0xff]
        %v2516 = vld [vmem:[%s10 + $0x70] sm:$0xff]
        %v2517 = vld [vmem:[%s10 + $0x78] sm:$0xff]
        %v2518 = vld [vmem:[#allocation13] sm:$0x3]
        %v2520 = vlaneseq
        %v2521 = vshrl.u32 %v2520, 7
        %v2522 = vsub.s32 0, %v2521
        %v2523 = vrot.slane %v2518, %v2522
        %v2524 = vlaneseq
        %v2525 = vshrl.u32 %v2524, 7
        %v2526 = vsub.s32 1, %v2525
        %v2527 = vrot.slane %v2518, %v2526
        %v2546 = vunpack.c.l.b16 %v2502
        %v2547 = vunpack.c.h.b16 %v2502
        %v2548 = vunpack.c.l.b16 %v2503
        %v2549 = vunpack.c.h.b16 %v2503
        %v2550 = vunpack.c.l.b16 %v2504
        %v2551 = vunpack.c.h.b16 %v2504
        %v2552 = vunpack.c.l.b16 %v2505
        %v2553 = vunpack.c.h.b16 %v2505
        %v2554 = vunpack.c.l.b16 %v2506
        %v2555 = vunpack.c.h.b16 %v2506
        %v2556 = vunpack.c.l.b16 %v2507
        %v2557 = vunpack.c.h.b16 %v2507
        %v2558 = vunpack.c.l.b16 %v2508
        %v2559 = vunpack.c.h.b16 %v2508
        %v2560 = vunpack.c.l.b16 %v2509
        %v2561 = vunpack.c.h.b16 %v2509
        %v2562 = vunpack.c.l.b16 %v2510
        %v2563 = vunpack.c.h.b16 %v2510
        %v2564 = vunpack.c.l.b16 %v2511
        %v2565 = vunpack.c.h.b16 %v2511
        %v2566 = vunpack.c.l.b16 %v2512
        %v2567 = vunpack.c.h.b16 %v2512
        %v2568 = vunpack.c.l.b16 %v2513
        %v2569 = vunpack.c.h.b16 %v2513
        %v2570 = vunpack.c.l.b16 %v2514
        %v2571 = vunpack.c.h.b16 %v2514
        %v2572 = vunpack.c.l.b16 %v2515
        %v2573 = vunpack.c.h.b16 %v2515
        %v2574 = vunpack.c.l.b16 %v2516
        %v2575 = vunpack.c.h.b16 %v2516
        %v2576 = vunpack.c.l.b16 %v2517
        %v2577 = vunpack.c.h.b16 %v2517
        %v2578 = vpack.c.b16 %v2548, %v2546
        %v2579 = vpack.c.b16 %v2549, %v2547
        %v2580 = vpack.c.b16 %v2552, %v2550
        %v2581 = vpack.c.b16 %v2553, %v2551
        %v2582 = vpack.c.b16 %v2556, %v2554
        %v2583 = vpack.c.b16 %v2557, %v2555
        %v2584 = vpack.c.b16 %v2560, %v2558
        %v2585 = vpack.c.b16 %v2561, %v2559
        %v2586 = vpack.c.b16 %v2564, %v2562
        %v2587 = vpack.c.b16 %v2565, %v2563
        %v2588 = vpack.c.b16 %v2568, %v2566
        %v2589 = vpack.c.b16 %v2569, %v2567
        %v2590 = vpack.c.b16 %v2572, %v2570
        %v2591 = vpack.c.b16 %v2573, %v2571
        %v2592 = vpack.c.b16 %v2576, %v2574
        %v2593 = vpack.c.b16 %v2577, %v2575
        %2610 = vmatprep.subr.bf16.mxu0 %v2579
        %2611 = vmatpush1.bf16.msra.mxu0 %v2578
        %2612 = vmatprep.subr.bf16.mxu0 %v2581
        %2613 = vmatpush1.bf16.msra.mxu0 %v2580
        %2614 = vmatprep.subr.bf16.mxu0 %v2583
        %2615 = vmatpush1.bf16.msra.mxu0 %v2582
        %2616 = vmatprep.subr.bf16.mxu0 %v2585
        %2617 = vmatpush1.bf16.msra.mxu0 %v2584
        %2618 = vmatprep.subr.bf16.mxu0 %v2587
        %2619 = vmatpush1.bf16.msra.mxu0 %v2586
        %2620 = vmatprep.subr.bf16.mxu0 %v2589
        %2621 = vmatpush1.bf16.msra.mxu0 %v2588
        %2622 = vmatprep.subr.bf16.mxu0 %v2591
        %2623 = vmatpush1.bf16.msra.mxu0 %v2590
        %2624 = vmatprep.subr.bf16.mxu0 %v2593
        %2625 = vmatpush1.bf16.msra.mxu0 %v2592
        %2626 = vmatprep.subr.bf16.mxu0 0
        %2627 = vmatpush1.bf16.msra.mxu0 0
        %2628 = vmatprep.subr.bf16.mxu0 0
        %2629 = vmatpush1.bf16.msra.mxu0 0
        %2630 = vmatprep.subr.bf16.mxu0 0
        %2631 = vmatpush1.bf16.msra.mxu0 0
        %2632 = vmatprep.subr.bf16.mxu0 0
        %2633 = vmatpush1.bf16.msra.mxu0 0
        %2634 = vmatprep.subr.bf16.mxu0 0
        %2635 = vmatpush1.bf16.msra.mxu0 0
        %2636 = vmatprep.subr.bf16.mxu0 0
        %2637 = vmatpush1.bf16.msra.mxu0 0
        %2638 = vmatprep.subr.bf16.mxu0 0
        %2639 = vmatpush1.bf16.msra.mxu0 0
        %2640 = vmatprep.subr.bf16.mxu0 0
        %2641 = vmatpush1.bf16.msra.mxu0 0
        %2642 = vmatprep.mubr.bf16.mxu0 0
        %2643 = vmatmul.mubr.bf16.gmra.mrb[0].mxu0 %v2501
        %v2644 = vpop.f32.mrb[0].mxu0
        %v2645 = vadd.f32 %v2523, %v2644
        %v2646 = vpop.f32.mrb[0].mxu0
        %v2647 = vadd.f32 %v2527, %v2646
        %v2648 = vpop.f32.mrb[0].mxu0
        %v2649 = vpop.f32.mrb[0].mxu0
        %2650 = vdwg.mxu0
        %v2651 = vmax.f32 %v2645, 0.0
        %v2652 = vmax.f32 %v2647, 0.0
        %v2653 = vpack.c.bf16 %v2651, %v2651
        %v2654 = vpack.c.bf16 %v2652, %v2652
        %v2655 = vld [vmem:[%s12] sm:$0xf]
        %v2656 = vld [vmem:[%s12 + $0x4] sm:$0xf]
        %v2657 = vld [vmem:[%s12 + $0x8] sm:$0xf]
        %v2658 = vld [vmem:[%s12 + $0xc] sm:$0xf]
        %v2659 = vld [vmem:[%s12 + $0x10] sm:$0xf]
        %v2660 = vld [vmem:[%s12 + $0x14] sm:$0xf]
        %v2661 = vld [vmem:[%s12 + $0x18] sm:$0xf]
        %v2662 = vld [vmem:[%s12 + $0x1c] sm:$0xf]
        %v2663 = vld [vmem:[%s12 + $0x20] sm:$0xf]
        %v2664 = vld [vmem:[%s12 + $0x24] sm:$0xf]
        %v2665 = vld [vmem:[%s12 + $0x28] sm:$0xf]
        %v2666 = vld [vmem:[%s12 + $0x2c] sm:$0xf]
        %v2667 = vld [vmem:[%s12 + $0x30] sm:$0xf]
        %v2668 = vld [vmem:[%s12 + $0x34] sm:$0xf]
        %v2669 = vld [vmem:[%s12 + $0x38] sm:$0xf]
        %v2670 = vld [vmem:[%s12 + $0x3c] sm:$0xf]
        %v2671 = vld [vmem:[%s12 + $0x40] sm:$0xf]
        %v2672 = vld [vmem:[%s12 + $0x44] sm:$0xf]
        %v2673 = vld [vmem:[%s12 + $0x48] sm:$0xf]
        %v2674 = vld [vmem:[%s12 + $0x4c] sm:$0xf]
        %v2675 = vld [vmem:[%s12 + $0x50] sm:$0xf]
        %v2676 = vld [vmem:[%s12 + $0x54] sm:$0xf]
        %v2677 = vld [vmem:[%s12 + $0x58] sm:$0xf]
        %v2678 = vld [vmem:[%s12 + $0x5c] sm:$0xf]
        %v2679 = vld [vmem:[%s12 + $0x60] sm:$0xf]
        %v2680 = vld [vmem:[%s12 + $0x64] sm:$0xf]
        %v2681 = vld [vmem:[%s12 + $0x68] sm:$0xf]
        %v2682 = vld [vmem:[%s12 + $0x6c] sm:$0xf]
        %v2683 = vld [vmem:[%s12 + $0x70] sm:$0xf]
        %v2684 = vld [vmem:[%s12 + $0x74] sm:$0xf]
        %v2685 = vld [vmem:[%s12 + $0x78] sm:$0xf]
        %v2686 = vld [vmem:[%s12 + $0x7c] sm:$0xf]
        %v2687 = vld [vmem:[#allocation15] sm:$0x1]
        %v2689 = vlaneseq
        %v2690 = vshrl.u32 %v2689, 7
        %v2691 = vsub.s32 0, %v2690
        %v2692 = vrot.slane %v2687, %v2691
        %v2726 = vunpack.c.l.b16 %v2655
        %v2727 = vunpack.c.l.b16 %v2656
        %v2728 = vunpack.c.l.b16 %v2657
        %v2729 = vunpack.c.l.b16 %v2658
        %v2730 = vunpack.c.l.b16 %v2659
        %v2731 = vunpack.c.l.b16 %v2660
        %v2732 = vunpack.c.l.b16 %v2661
        %v2733 = vunpack.c.l.b16 %v2662
        %v2734 = vunpack.c.l.b16 %v2663
        %v2735 = vunpack.c.l.b16 %v2664
        %v2736 = vunpack.c.l.b16 %v2665
        %v2737 = vunpack.c.l.b16 %v2666
        %v2738 = vunpack.c.l.b16 %v2667
        %v2739 = vunpack.c.l.b16 %v2668
        %v2740 = vunpack.c.l.b16 %v2669
        %v2741 = vunpack.c.l.b16 %v2670
        %v2742 = vunpack.c.l.b16 %v2671
        %v2743 = vunpack.c.l.b16 %v2672
        %v2744 = vunpack.c.l.b16 %v2673
        %v2745 = vunpack.c.l.b16 %v2674
        %v2746 = vunpack.c.l.b16 %v2675
        %v2747 = vunpack.c.l.b16 %v2676
        %v2748 = vunpack.c.l.b16 %v2677
        %v2749 = vunpack.c.l.b16 %v2678
        %v2750 = vunpack.c.l.b16 %v2679
        %v2751 = vunpack.c.l.b16 %v2680
        %v2752 = vunpack.c.l.b16 %v2681
        %v2753 = vunpack.c.l.b16 %v2682
        %v2754 = vunpack.c.l.b16 %v2683
        %v2755 = vunpack.c.l.b16 %v2684
        %v2756 = vunpack.c.l.b16 %v2685
        %v2757 = vunpack.c.l.b16 %v2686
        %v2758 = vpack.c.b16 %v2727, %v2726
        %v2759 = vpack.c.b16 %v2729, %v2728
        %v2760 = vpack.c.b16 %v2731, %v2730
        %v2761 = vpack.c.b16 %v2733, %v2732
        %v2762 = vpack.c.b16 %v2735, %v2734
        %v2763 = vpack.c.b16 %v2737, %v2736
        %v2764 = vpack.c.b16 %v2739, %v2738
        %v2765 = vpack.c.b16 %v2741, %v2740
        %v2766 = vpack.c.b16 %v2743, %v2742
        %v2767 = vpack.c.b16 %v2745, %v2744
        %v2768 = vpack.c.b16 %v2747, %v2746
        %v2769 = vpack.c.b16 %v2749, %v2748
        %v2770 = vpack.c.b16 %v2751, %v2750
        %v2771 = vpack.c.b16 %v2753, %v2752
        %v2772 = vpack.c.b16 %v2755, %v2754
        %v2773 = vpack.c.b16 %v2757, %v2756
        %2790 = vmatprep.subr.bf16.mxu0 0
        %2791 = vmatpush1.bf16.msra.mxu0 %v2758
        %2792 = vmatprep.subr.bf16.mxu0 0
        %2793 = vmatpush1.bf16.msra.mxu0 %v2759
        %2794 = vmatprep.subr.bf16.mxu0 0
        %2795 = vmatpush1.bf16.msra.mxu0 %v2760
        %2796 = vmatprep.subr.bf16.mxu0 0
        %2797 = vmatpush1.bf16.msra.mxu0 %v2761
        %2798 = vmatprep.subr.bf16.mxu0 0
        %2799 = vmatpush1.bf16.msra.mxu0 %v2762
        %2800 = vmatprep.subr.bf16.mxu0 0
        %2801 = vmatpush1.bf16.msra.mxu0 %v2763
        %2802 = vmatprep.subr.bf16.mxu0 0
        %2803 = vmatpush1.bf16.msra.mxu0 %v2764
        %2804 = vmatprep.subr.bf16.mxu0 0
        %2805 = vmatpush1.bf16.msra.mxu0 %v2765
        %2806 = vmatprep.subr.bf16.mxu0 0
        %2807 = vmatpush1.bf16.msra.mxu0 %v2766
        %2808 = vmatprep.subr.bf16.mxu0 0
        %2809 = vmatpush1.bf16.msra.mxu0 %v2767
        %2810 = vmatprep.subr.bf16.mxu0 0
        %2811 = vmatpush1.bf16.msra.mxu0 %v2768
        %2812 = vmatprep.subr.bf16.mxu0 0
        %2813 = vmatpush1.bf16.msra.mxu0 %v2769
        %2814 = vmatprep.subr.bf16.mxu0 0
        %2815 = vmatpush1.bf16.msra.mxu0 %v2770
        %2816 = vmatprep.subr.bf16.mxu0 0
        %2817 = vmatpush1.bf16.msra.mxu0 %v2771
        %2818 = vmatprep.subr.bf16.mxu0 0
        %2819 = vmatpush1.bf16.msra.mxu0 %v2772
        %2820 = vmatprep.subr.bf16.mxu0 0
        %2821 = vmatpush1.bf16.msra.mxu0 %v2773
        %2822 = vmatprep.mubr.bf16.mxu0 %v2654
        %2823 = vmatmul.mubr.bf16.gmra.mrb[0].mxu0 %v2653
        %v2824 = vpop.f32.mrb[0].mxu0
        %v2825 = vadd.f32 %v2692, %v2824
        %v2826 = vpop.f32.mrb[0].mxu0
        %v2827 = vpop.f32.mrb[0].mxu0
        %v2828 = vpop.f32.mrb[0].mxu0
        %2829 = vdwg.mxu0
        %v2830 = vadd.f32 %v2500, %v2825
        %2831 = vadd.xlane.f32.xlu0 %v2830
        %v2832 = vpop.xlane.xlu0 %2831
        %v2833 = vmul.f32 %v2832, %v1600
        %v2834 = vsub.f32 %v2830, %v2833
        %v2835 = vmul.f32 %v2834, %v2834
        %2836 = vadd.xlane.f32.xlu0 %v2835
        %v2837 = vpop.xlane.xlu0 %2836
        %v2838 = vmul.f32 %v2837, %v1600
        %v2839 = vadd.f32 %v2838, 1e-05
        %v2840 = vrsqrt.pop %v2839
        %v2841 = vmul.f32 %v2834, %v2840
        %v2842 = vld [vmem:[%s18] sm:$0x1]
        %v2844 = vlaneseq
        %v2845 = vshrl.u32 %v2844, 7
        %v2846 = vsub.s32 0, %v2845
        %v2847 = vrot.slane %v2842, %v2846
        %v2849 = vmul.f32 %v2841, %v2847
        %v2850 = vld [vmem:[%s19] sm:$0x1]
        %v2852 = vlaneseq
        %v2853 = vshrl.u32 %v2852, 7
        %v2854 = vsub.s32 0, %v2853
        %v2855 = vrot.slane %v2850, %v2854
        %v2857 = vadd.f32 %v2849, %v2855
        %2858 = vst [vmem:[%s782] sm:$0xff] %v2857
        %p2859 = scmp.lt.s32.totalorder %s39, 1
        %s2860 = scalar_select %p2859, %s39, 1
        %s2861 = smul.addr %s2860, 8
        %s2862 = scalar_lea.vmem %s20, %s2861
        // Predicated region
        $region141: #{decoder_forward.3} parent=99 // pred_check
          %p2863 = pneg %p487
        $region142: #{decoder_forward.3} parent=99 // pred_check_branch
          %2865 = sbr.rel (%p2863) target = $region144
        $region143: #{decoder_forward.3} parent=99 // pred_region
          _
        $region144: #{decoder_forward.3} parent=99 // pred_fallthru
          _
      $region100: #{decoder_forward.3} parent=5 // pred_fallthru
        _
      %p2866 = scmp.le.s32.totalorder 2, %s34
      // Predicated region
      $region145: #{decoder_forward.3} parent=5 // pred_check
        %p2867 = pneg %p2866
      $region146: #{decoder_forward.3} parent=5 // pred_check_branch
        %2869 = sbr.rel (%p2867) target = $region148
      $region147: #{decoder_forward.3} parent=5 // pred_region
        %s2870 = ssub.s32 %s34, 2
        // Predicated region
        $region149: #{decoder_forward.3} parent=147 // pred_check
          %p2871 = pneg %p493
        $region150: #{decoder_forward.3} parent=147 // pred_check_branch
          %2873 = sbr.rel (%p2871) target = $region152
        $region151: #{decoder_forward.3} parent=147 // pred_region
          %p2874 = scmp.lt.s32.totalorder %s40, 1
          %s2875 = scalar_select %p2874, %s40, 1
          %s2876 = smul.addr %s2875, 8
          %s2877 = scalar_lea.vmem %s20, %s2876
        $region152: #{decoder_forward.3} parent=147 // pred_fallthru
          _
      $region148: #{decoder_forward.3} parent=5 // pred_fallthru
        _
    $region6: #{decoder_forward.3} parent=1 // loop_footer
      %s38 = sadd.s32 1, %s34
    $region7: #{decoder_forward.3} parent=1 // loop_footer_branch
      %33 = sbr.rel target = $region3
    $region8: #{decoder_forward.3} parent=1 // loop_exit
      _
    %2878 = vsyncpa [#allocation3], 1
    %s2879 = scalar_lea.sflag [#allocation3], 1
    %2880 = vsyncpa %s2879, 1
    %2881 = vsyncpa [#allocation5], 1
    %2882 = vsyncpa [#allocation8], 1
    %2883 = vsyncpa [#allocation11], 1
    %2884 = vsyncpa [#allocation14], 1
    %2885 = vsyncpa [#allocation17], 1

// kernel: decoder_forward.4
$region0: #{decoder_forward.4}
  #allocation0 [shape = 'u32[]', space=smem, size = 0x4, offset = 0x4, fixed_abs, tag = 'smem constant byte address 0x4 - core index']
  #allocation1 [shape = 'u32[144,128]{1,0:T(1,128)}', space=vmem, size = 0x12000, scoped, tag = 'internal scratch']
  %s0 = inlined_call_operand.vmem [shape: f32[16,128], index: 0, kind: input, shape index: {}]
  %s1 = inlined_call_operand.vmem [shape: f32[16,128], index: 1, kind: input, shape index: {}]
  %s2 = inlined_call_operand.vmem [shape: bf16[128,128], index: 2, kind: input, shape index: {}]
  %s3 = inlined_call_operand.vmem [shape: f32[1,128], index: 3, kind: input, shape index: {}]
  %s4 = inlined_call_operand.vmem [shape: bf16[128,128], index: 4, kind: input, shape index: {}]
  %s5 = inlined_call_operand.vmem [shape: f32[1,128], index: 5, kind: input, shape index: {}]
  %s6 = inlined_call_operand.vmem [shape: bf16[128,128], index: 6, kind: input, shape index: {}]
  %s7 = inlined_call_operand.vmem [shape: f32[1,128], index: 7, kind: input, shape index: {}]
  %s8 = inlined_call_operand.vmem [shape: bf16[128,128], index: 8, kind: input, shape index: {}]
  %s9 = inlined_call_operand.vmem [shape: f32[1,128], index: 9, kind: input, shape index: {}]
  %s10 = inlined_call_operand.vmem [shape: bf16[128,256], index: 10, kind: input, shape index: {}]
  %s11 = inlined_call_operand.vmem [shape: f32[1,256], index: 11, kind: input, shape index: {}]
  %s12 = inlined_call_operand.vmem [shape: bf16[256,128], index: 12, kind: input, shape index: {}]
  %s13 = inlined_call_operand.vmem [shape: f32[1,128], index: 13, kind: input, shape index: {}]
  %s14 = inlined_call_operand.vmem [shape: f32[1,128], index: 14, kind: input, shape index: {}]
  %s15 = inlined_call_operand.vmem [shape: f32[1,128], index: 15, kind: input, shape index: {}]
  %s16 = inlined_call_operand.vmem [shape: f32[1,128], index: 16, kind: input, shape index: {}]
  %s17 = inlined_call_operand.vmem [shape: f32[1,128], index: 17, kind: input, shape index: {}]
  %s18 = inlined_call_operand.vmem [shape: f32[1,128], index: 18, kind: input, shape index: {}]
  %s19 = inlined_call_operand.vmem [shape: f32[1,128], index: 19, kind: input, shape index: {}]
  %s20 = inlined_call_operand.vmem [shape: f32[16,128], index: 20, kind: output, shape index: {}]
  %s21 = sld [smem:[#allocation0]]
  $region113: #{decoder_forward.4} parent=0
    _
  %s23 = ssub.s32 1, %s21
  %s24 = scalar_select 0, %s23, %s21
  loop: start=0, step=1, limit=4
  $region2: #{decoder_forward.4} parent=0 // loop_pre_header
    _
  $region3: #{decoder_forward.4} parent=0 // loop_header
    %s26 = sphi 0, %s30
    %p27 = scmp.ge.s32.totalorder %s26, 4
    %s36 = sphi 0, %s38
    %s39 = sphi 0, %s36
    %s40 = sphi 0, %s39
    %s56 = sphi 0, %s40
    %s62 = sphi 0, %s64
    %s65 = sphi 0, %s62
    %s66 = sphi 0, %s65
    %s82 = sphi 0, %s66
    %s86 = sphi 0, %s86
    %s88 = sphi 0, %s86
    %s89 = sphi 0, %s88
    %s103 = sphi 0, %s89
    %s107 = sphi 0, %s107
    %s109 = sphi 0, %s107
    %s110 = sphi 0, %s109
    %s124 = sphi 0, %s110
    %s128 = sphi 0, %s128
    %s130 = sphi 0, %s128
    %s131 = sphi 0, %s130
    %s145 = sphi 0, %s131
    %s149 = sphi 0, %s149
    %s151 = sphi 0, %s149
    %s152 = sphi 0, %s151
    %s166 = sphi 0, %s152
    %s170 = sphi 0, %s170
    %s172 = sphi 0, %s170
    %s173 = sphi 0, %s172
    %s187 = sphi 0, %s173
    %s191 = sphi 0, %s191
    %s193 = sphi 0, %s191
    %s194 = sphi 0, %s193
    %s208 = sphi 0, %s194
    %s212 = sphi 0, %s212
    %s214 = sphi 0, %s212
    %s215 = sphi 0, %s214
    %s229 = sphi 0, %s215
    %s233 = sphi 0, %s233
    %s235 = sphi 0, %s233
    %s236 = sphi 0, %s235
    %s250 = sphi 0, %s236
    %s254 = sphi 0, %s254
    %s256 = sphi 0, %s254
    %s257 = sphi 0, %s256
    %s271 = sphi 0, %s257
    %s275 = sphi 0, %s275
    %s277 = sphi 0, %s275
    %s278 = sphi 0, %s277
    %s292 = sphi 0, %s278
    %s296 = sphi 0, %s296
    %s298 = sphi 0, %s296
    %s299 = sphi 0, %s298
    %s313 = sphi 0, %s299
    %s317 = sphi 0, %s317
    %s319 = sphi 0, %s317
    %s320 = sphi 0, %s319
    %s334 = sphi 0, %s320
    %s338 = sphi 0, %s338
    %s340 = sphi 0, %s338
    %s341 = sphi 0, %s340
    %s355 = sphi 0, %s341
    %s359 = sphi 0, %s359
    %s361 = sphi 0, %s359
    %s362 = sphi 0, %s361
    %s376 = sphi 0, %s362
    %s380 = sphi 0, %s380
    %s382 = sphi 0, %s380
    %s383 = sphi 0, %s382
    %s397 = sphi 0, %s383
    %s401 = sphi 0, %s401
    %s403 = sphi 0, %s401
    %s404 = sphi 0, %s403
    %s418 = sphi 0, %s404
    %s422 = sphi 0, %s422
    %s424 = sphi 0, %s422
    %s425 = sphi 0, %s424
    %s439 = sphi 0, %s425
    %s443 = sphi 0, %s443
    %s445 = sphi 0, %s443
    %s446 = sphi 0, %s445
    %s460 = sphi 0, %s446
    %s466 = sphi 0, %s468
    %s469 = sphi 0, %s466
    %s470 = sphi 0, %s469
    %s486 = sphi 0, %s470
  $region4: #{decoder_forward.4} parent=0 // loop_header_branch
    %29 = sbr.rel (%p27) target = $region8
  $region5: #{decoder_forward.4} parent=0 // loop_body
    %s31 = ssub.s32 %s26, 1
    %s32 = ssub.s32 %s26, 2
    %s33 = sadd.s32 %s26, 1
    %s34 = ssub.s32 %s26, %s33
    %p35 = scmp.eq.s32.totalorder %s34, 0
    %s37 = sadd.s32 %s36, 1
    %s38 = scalar_select %p35, %s36, %s37
    %p41 = pneg %p35
    %p42 = scmp.eq.s32.totalorder %s26, 1
    %p43 = por %p41, %p42
    %p44 = scmp.ne.s32.totalorder %s36, %s39
    %p45 = scmp.eq.s32.totalorder %s26, 0
    %p46 = por %p44, %p45
    %p47 = scmp.ne.s32.totalorder %s36, %s39
    %p48 = scmp.eq.s32.totalorder %s31, 1
    %p49 = por %p47, %p48
    %p50 = scmp.ne.s32.totalorder %s39, %s40
    %p51 = scmp.eq.s32.totalorder %s31, 0
    %p52 = por %p50, %p51
    %p53 = scmp.ne.s32.totalorder %s39, %s40
    %p54 = scmp.eq.s32.totalorder %s32, 1
    %p55 = por %p53, %p54
    %p57 = scmp.ne.s32.totalorder %s40, %s56
    %p58 = scmp.eq.s32.totalorder %s32, 0
    %p59 = por %p57, %p58
    %s60 = ssub.s32 %s26, %s33
    %p61 = scmp.eq.s32.totalorder %s60, 0
    %s63 = sadd.s32 %s62, 1
    %s64 = scalar_select %p61, %s62, %s63
    %p67 = pneg %p61
    %p68 = scmp.eq.s32.totalorder %s26, 1
    %p69 = por %p67, %p68
    %p70 = scmp.ne.s32.totalorder %s62, %s65
    %p71 = scmp.eq.s32.totalorder %s26, 0
    %p72 = por %p70, %p71
    %p73 = scmp.ne.s32.totalorder %s62, %s65
    %p74 = scmp.eq.s32.totalorder %s31, 1
    %p75 = por %p73, %p74
    %p76 = scmp.ne.s32.totalorder %s65, %s66
    %p77 = scmp.eq.s32.totalorder %s31, 0
    %p78 = por %p76, %p77
    %p79 = scmp.ne.s32.totalorder %s65, %s66
    %p80 = scmp.eq.s32.totalorder %s32, 1
    %p81 = por %p79, %p80
    %p83 = scmp.ne.s32.totalorder %s66, %s82
    %p84 = scmp.eq.s32.totalorder %s32, 0
    %p85 = por %p83, %p84
    %s87 = sadd.s32 %s86, 1
    %p90 = scmp.eq.s32.totalorder %s26, 1
    %p91 = scmp.ne.s32.totalorder %s86, %s88
    %p92 = scmp.eq.s32.totalorder %s26, 0
    %p93 = por %p91, %p92
    %p94 = scmp.ne.s32.totalorder %s86, %s88
    %p95 = scmp.eq.s32.totalorder %s31, 1
    %p96 = por %p94, %p95
    %p97 = scmp.ne.s32.totalorder %s88, %s89
    %p98 = scmp.eq.s32.totalorder %s31, 0
    %p99 = por %p97, %p98
    %p100 = scmp.ne.s32.totalorder %s88, %s89
    %p101 = scmp.eq.s32.totalorder %s32, 1
    %p102 = por %p100, %p101
    %p104 = scmp.ne.s32.totalorder %s89, %s103
    %p105 = scmp.eq.s32.totalorder %s32, 0
    %p106 = por %p104, %p105
    %s108 = sadd.s32 %s107, 1
    %p111 = scmp.eq.s32.totalorder %s26, 1
    %p112 = scmp.ne.s32.totalorder %s107, %s109
    %p113 = scmp.eq.s32.totalorder %s26, 0
    %p114 = por %p112, %p113
    %p115 = scmp.ne.s32.totalorder %s107, %s109
    %p116 = scmp.eq.s32.totalorder %s31, 1
    %p117 = por %p115, %p116
    %p118 = scmp.ne.s32.totalorder %s109, %s110
    %p119 = scmp.eq.s32.totalorder %s31, 0
    %p120 = por %p118, %p119
    %p121 = scmp.ne.s32.totalorder %s109, %s110
    %p122 = scmp.eq.s32.totalorder %s32, 1
    %p123 = por %p121, %p122
    %p125 = scmp.ne.s32.totalorder %s110, %s124
    %p126 = scmp.eq.s32.totalorder %s32, 0
    %p127 = por %p125, %p126
    %s129 = sadd.s32 %s128, 1
    %p132 = scmp.eq.s32.totalorder %s26, 1
    %p133 = scmp.ne.s32.totalorder %s128, %s130
    %p134 = scmp.eq.s32.totalorder %s26, 0
    %p135 = por %p133, %p134
    %p136 = scmp.ne.s32.totalorder %s128, %s130
    %p137 = scmp.eq.s32.totalorder %s31, 1
    %p138 = por %p136, %p137
    %p139 = scmp.ne.s32.totalorder %s130, %s131
    %p140 = scmp.eq.s32.totalorder %s31, 0
    %p141 = por %p139, %p140
    %p142 = scmp.ne.s32.totalorder %s130, %s131
    %p143 = scmp.eq.s32.totalorder %s32, 1
    %p144 = por %p142, %p143
    %p146 = scmp.ne.s32.totalorder %s131, %s145
    %p147 = scmp.eq.s32.totalorder %s32, 0
    %p148 = por %p146, %p147
    %s150 = sadd.s32 %s149, 1
    %p153 = scmp.eq.s32.totalorder %s26, 1
    %p154 = scmp.ne.s32.totalorder %s149, %s151
    %p155 = scmp.eq.s32.totalorder %s26, 0
    %p156 = por %p154, %p155
    %p157 = scmp.ne.s32.totalorder %s149, %s151
    %p158 = scmp.eq.s32.totalorder %s31, 1
    %p159 = por %p157, %p158
    %p160 = scmp.ne.s32.totalorder %s151, %s152
    %p161 = scmp.eq.s32.totalorder %s31, 0
    %p162 = por %p160, %p161
    %p163 = scmp.ne.s32.totalorder %s151, %s152
    %p164 = scmp.eq.s32.totalorder %s32, 1
    %p165 = por %p163, %p164
    %p167 = scmp.ne.s32.totalorder %s152, %s166
    %p168 = scmp.eq.s32.totalorder %s32, 0
    %p169 = por %p167, %p168
    %s171 = sadd.s32 %s170, 1
    %p174 = scmp.eq.s32.totalorder %s26, 1
    %p175 = scmp.ne.s32.totalorder %s170, %s172
    %p176 = scmp.eq.s32.totalorder %s26, 0
    %p177 = por %p175, %p176
    %p178 = scmp.ne.s32.totalorder %s170, %s172
    %p179 = scmp.eq.s32.totalorder %s31, 1
    %p180 = por %p178, %p179
    %p181 = scmp.ne.s32.totalorder %s172, %s173
    %p182 = scmp.eq.s32.totalorder %s31, 0
    %p183 = por %p181, %p182
    %p184 = scmp.ne.s32.totalorder %s172, %s173
    %p185 = scmp.eq.s32.totalorder %s32, 1
    %p186 = por %p184, %p185
    %p188 = scmp.ne.s32.totalorder %s173, %s187
    %p189 = scmp.eq.s32.totalorder %s32, 0
    %p190 = por %p188, %p189
    %s192 = sadd.s32 %s191, 1
    %p195 = scmp.eq.s32.totalorder %s26, 1
    %p196 = scmp.ne.s32.totalorder %s191, %s193
    %p197 = scmp.eq.s32.totalorder %s26, 0
    %p198 = por %p196, %p197
    %p199 = scmp.ne.s32.totalorder %s191, %s193
    %p200 = scmp.eq.s32.totalorder %s31, 1
    %p201 = por %p199, %p200
    %p202 = scmp.ne.s32.totalorder %s193, %s194
    %p203 = scmp.eq.s32.totalorder %s31, 0
    %p204 = por %p202, %p203
    %p205 = scmp.ne.s32.totalorder %s193, %s194
    %p206 = scmp.eq.s32.totalorder %s32, 1
    %p207 = por %p205, %p206
    %p209 = scmp.ne.s32.totalorder %s194, %s208
    %p210 = scmp.eq.s32.totalorder %s32, 0
    %p211 = por %p209, %p210
    %s213 = sadd.s32 %s212, 1
    %p216 = scmp.eq.s32.totalorder %s26, 1
    %p217 = scmp.ne.s32.totalorder %s212, %s214
    %p218 = scmp.eq.s32.totalorder %s26, 0
    %p219 = por %p217, %p218
    %p220 = scmp.ne.s32.totalorder %s212, %s214
    %p221 = scmp.eq.s32.totalorder %s31, 1
    %p222 = por %p220, %p221
    %p223 = scmp.ne.s32.totalorder %s214, %s215
    %p224 = scmp.eq.s32.totalorder %s31, 0
    %p225 = por %p223, %p224
    %p226 = scmp.ne.s32.totalorder %s214, %s215
    %p227 = scmp.eq.s32.totalorder %s32, 1
    %p228 = por %p226, %p227
    %p230 = scmp.ne.s32.totalorder %s215, %s229
    %p231 = scmp.eq.s32.totalorder %s32, 0
    %p232 = por %p230, %p231
    %s234 = sadd.s32 %s233, 1
    %p237 = scmp.eq.s32.totalorder %s26, 1
    %p238 = scmp.ne.s32.totalorder %s233, %s235
    %p239 = scmp.eq.s32.totalorder %s26, 0
    %p240 = por %p238, %p239
    %p241 = scmp.ne.s32.totalorder %s233, %s235
    %p242 = scmp.eq.s32.totalorder %s31, 1
    %p243 = por %p241, %p242
    %p244 = scmp.ne.s32.totalorder %s235, %s236
    %p245 = scmp.eq.s32.totalorder %s31, 0
    %p246 = por %p244, %p245
    %p247 = scmp.ne.s32.totalorder %s235, %s236
    %p248 = scmp.eq.s32.totalorder %s32, 1
    %p249 = por %p247, %p248
    %p251 = scmp.ne.s32.totalorder %s236, %s250
    %p252 = scmp.eq.s32.totalorder %s32, 0
    %p253 = por %p251, %p252
    %s255 = sadd.s32 %s254, 1
    %p258 = scmp.eq.s32.totalorder %s26, 1
    %p259 = scmp.ne.s32.totalorder %s254, %s256
    %p260 = scmp.eq.s32.totalorder %s26, 0
    %p261 = por %p259, %p260
    %p262 = scmp.ne.s32.totalorder %s254, %s256
    %p263 = scmp.eq.s32.totalorder %s31, 1
    %p264 = por %p262, %p263
    %p265 = scmp.ne.s32.totalorder %s256, %s257
    %p266 = scmp.eq.s32.totalorder %s31, 0
    %p267 = por %p265, %p266
    %p268 = scmp.ne.s32.totalorder %s256, %s257
    %p269 = scmp.eq.s32.totalorder %s32, 1
    %p270 = por %p268, %p269
    %p272 = scmp.ne.s32.totalorder %s257, %s271
    %p273 = scmp.eq.s32.totalorder %s32, 0
    %p274 = por %p272, %p273
    %s276 = sadd.s32 %s275, 1
    %p279 = scmp.eq.s32.totalorder %s26, 1
    %p280 = scmp.ne.s32.totalorder %s275, %s277
    %p281 = scmp.eq.s32.totalorder %s26, 0
    %p282 = por %p280, %p281
    %p283 = scmp.ne.s32.totalorder %s275, %s277
    %p284 = scmp.eq.s32.totalorder %s31, 1
    %p285 = por %p283, %p284
    %p286 = scmp.ne.s32.totalorder %s277, %s278
    %p287 = scmp.eq.s32.totalorder %s31, 0
    %p288 = por %p286, %p287
    %p289 = scmp.ne.s32.totalorder %s277, %s278
    %p290 = scmp.eq.s32.totalorder %s32, 1
    %p291 = por %p289, %p290
    %p293 = scmp.ne.s32.totalorder %s278, %s292
    %p294 = scmp.eq.s32.totalorder %s32, 0
    %p295 = por %p293, %p294
    %s297 = sadd.s32 %s296, 1
    %p300 = scmp.eq.s32.totalorder %s26, 1
    %p301 = scmp.ne.s32.totalorder %s296, %s298
    %p302 = scmp.eq.s32.totalorder %s26, 0
    %p303 = por %p301, %p302
    %p304 = scmp.ne.s32.totalorder %s296, %s298
    %p305 = scmp.eq.s32.totalorder %s31, 1
    %p306 = por %p304, %p305
    %p307 = scmp.ne.s32.totalorder %s298, %s299
    %p308 = scmp.eq.s32.totalorder %s31, 0
    %p309 = por %p307, %p308
    %p310 = scmp.ne.s32.totalorder %s298, %s299
    %p311 = scmp.eq.s32.totalorder %s32, 1
    %p312 = por %p310, %p311
    %p314 = scmp.ne.s32.totalorder %s299, %s313
    %p315 = scmp.eq.s32.totalorder %s32, 0
    %p316 = por %p314, %p315
    %s318 = sadd.s32 %s317, 1
    %p321 = scmp.eq.s32.totalorder %s26, 1
    %p322 = scmp.ne.s32.totalorder %s317, %s319
    %p323 = scmp.eq.s32.totalorder %s26, 0
    %p324 = por %p322, %p323
    %p325 = scmp.ne.s32.totalorder %s317, %s319
    %p326 = scmp.eq.s32.totalorder %s31, 1
    %p327 = por %p325, %p326
    %p328 = scmp.ne.s32.totalorder %s319, %s320
    %p329 = scmp.eq.s32.totalorder %s31, 0
    %p330 = por %p328, %p329
    %p331 = scmp.ne.s32.totalorder %s319, %s320
    %p332 = scmp.eq.s32.totalorder %s32, 1
    %p333 = por %p331, %p332
    %p335 = scmp.ne.s32.totalorder %s320, %s334
    %p336 = scmp.eq.s32.totalorder %s32, 0
    %p337 = por %p335, %p336
    %s339 = sadd.s32 %s338, 1
    %p342 = scmp.eq.s32.totalorder %s26, 1
    %p343 = scmp.ne.s32.totalorder %s338, %s340
    %p344 = scmp.eq.s32.totalorder %s26, 0
    %p345 = por %p343, %p344
    %p346 = scmp.ne.s32.totalorder %s338, %s340
    %p347 = scmp.eq.s32.totalorder %s31, 1
    %p348 = por %p346, %p347
    %p349 = scmp.ne.s32.totalorder %s340, %s341
    %p350 = scmp.eq.s32.totalorder %s31, 0
    %p351 = por %p349, %p350
    %p352 = scmp.ne.s32.totalorder %s340, %s341
    %p353 = scmp.eq.s32.totalorder %s32, 1
    %p354 = por %p352, %p353
    %p356 = scmp.ne.s32.totalorder %s341, %s355
    %p357 = scmp.eq.s32.totalorder %s32, 0
    %p358 = por %p356, %p357
    %s360 = sadd.s32 %s359, 1
    %p363 = scmp.eq.s32.totalorder %s26, 1
    %p364 = scmp.ne.s32.totalorder %s359, %s361
    %p365 = scmp.eq.s32.totalorder %s26, 0
    %p366 = por %p364, %p365
    %p367 = scmp.ne.s32.totalorder %s359, %s361
    %p368 = scmp.eq.s32.totalorder %s31, 1
    %p369 = por %p367, %p368
    %p370 = scmp.ne.s32.totalorder %s361, %s362
    %p371 = scmp.eq.s32.totalorder %s31, 0
    %p372 = por %p370, %p371
    %p373 = scmp.ne.s32.totalorder %s361, %s362
    %p374 = scmp.eq.s32.totalorder %s32, 1
    %p375 = por %p373, %p374
    %p377 = scmp.ne.s32.totalorder %s362, %s376
    %p378 = scmp.eq.s32.totalorder %s32, 0
    %p379 = por %p377, %p378
    %s381 = sadd.s32 %s380, 1
    %p384 = scmp.eq.s32.totalorder %s26, 1
    %p385 = scmp.ne.s32.totalorder %s380, %s382
    %p386 = scmp.eq.s32.totalorder %s26, 0
    %p387 = por %p385, %p386
    %p388 = scmp.ne.s32.totalorder %s380, %s382
    %p389 = scmp.eq.s32.totalorder %s31, 1
    %p390 = por %p388, %p389
    %p391 = scmp.ne.s32.totalorder %s382, %s383
    %p392 = scmp.eq.s32.totalorder %s31, 0
    %p393 = por %p391, %p392
    %p394 = scmp.ne.s32.totalorder %s382, %s383
    %p395 = scmp.eq.s32.totalorder %s32, 1
    %p396 = por %p394, %p395
    %p398 = scmp.ne.s32.totalorder %s383, %s397
    %p399 = scmp.eq.s32.totalorder %s32, 0
    %p400 = por %p398, %p399
    %s402 = sadd.s32 %s401, 1
    %p405 = scmp.eq.s32.totalorder %s26, 1
    %p406 = scmp.ne.s32.totalorder %s401, %s403
    %p407 = scmp.eq.s32.totalorder %s26, 0
    %p408 = por %p406, %p407
    %p409 = scmp.ne.s32.totalorder %s401, %s403
    %p410 = scmp.eq.s32.totalorder %s31, 1
    %p411 = por %p409, %p410
    %p412 = scmp.ne.s32.totalorder %s403, %s404
    %p413 = scmp.eq.s32.totalorder %s31, 0
    %p414 = por %p412, %p413
    %p415 = scmp.ne.s32.totalorder %s403, %s404
    %p416 = scmp.eq.s32.totalorder %s32, 1
    %p417 = por %p415, %p416
    %p419 = scmp.ne.s32.totalorder %s404, %s418
    %p420 = scmp.eq.s32.totalorder %s32, 0
    %p421 = por %p419, %p420
    %s423 = sadd.s32 %s422, 1
    %p426 = scmp.eq.s32.totalorder %s26, 1
    %p427 = scmp.ne.s32.totalorder %s422, %s424
    %p428 = scmp.eq.s32.totalorder %s26, 0
    %p429 = por %p427, %p428
    %p430 = scmp.ne.s32.totalorder %s422, %s424
    %p431 = scmp.eq.s32.totalorder %s31, 1
    %p432 = por %p430, %p431
    %p433 = scmp.ne.s32.totalorder %s424, %s425
    %p434 = scmp.eq.s32.totalorder %s31, 0
    %p435 = por %p433, %p434
    %p436 = scmp.ne.s32.totalorder %s424, %s425
    %p437 = scmp.eq.s32.totalorder %s32, 1
    %p438 = por %p436, %p437
    %p440 = scmp.ne.s32.totalorder %s425, %s439
    %p441 = scmp.eq.s32.totalorder %s32, 0
    %p442 = por %p440, %p441
    %s444 = sadd.s32 %s443, 1
    %p447 = scmp.eq.s32.totalorder %s26, 1
    %p448 = scmp.ne.s32.totalorder %s443, %s445
    %p449 = scmp.eq.s32.totalorder %s26, 0
    %p450 = por %p448, %p449
    %p451 = scmp.ne.s32.totalorder %s443, %s445
    %p452 = scmp.eq.s32.totalorder %s31, 1
    %p453 = por %p451, %p452
    %p454 = scmp.ne.s32.totalorder %s445, %s446
    %p455 = scmp.eq.s32.totalorder %s31, 0
    %p456 = por %p454, %p455
    %p457 = scmp.ne.s32.totalorder %s445, %s446
    %p458 = scmp.eq.s32.totalorder %s32, 1
    %p459 = por %p457, %p458
    %p461 = scmp.ne.s32.totalorder %s446, %s460
    %p462 = scmp.eq.s32.totalorder %s32, 0
    %p463 = por %p461, %p462
    %s464 = ssub.s32 %s26, %s33
    %p465 = scmp.eq.s32.totalorder %s464, 0
    %s467 = sadd.s32 %s466, 1
    %s468 = scalar_select %p465, %s466, %s467
    %p471 = pneg %p465
    %p472 = scmp.eq.s32.totalorder %s26, 1
    %p473 = por %p471, %p472
    %p474 = scmp.ne.s32.totalorder %s466, %s469
    %p475 = scmp.eq.s32.totalorder %s26, 0
    %p476 = por %p474, %p475
    %p477 = scmp.ne.s32.totalorder %s466, %s469
    %p478 = scmp.eq.s32.totalorder %s31, 1
    %p479 = por %p477, %p478
    %p480 = scmp.ne.s32.totalorder %s469, %s470
    %p481 = scmp.eq.s32.totalorder %s31, 0
    %p482 = por %p480, %p481
    %p483 = scmp.ne.s32.totalorder %s469, %s470
    %p484 = scmp.eq.s32.totalorder %s32, 1
    %p485 = por %p483, %p484
    %p487 = scmp.ne.s32.totalorder %s470, %s486
    %p488 = scmp.eq.s32.totalorder %s32, 0
    %p489 = por %p487, %p488
    %p490 = scmp.le.s32.totalorder 1, %s26
    %p491 = scmp.lt.s32.totalorder %s26, 3
    %p492 = pnand %p490, %p491
    %p493 = pneg %p492
    // Predicated region
    $region9: #{decoder_forward.4} parent=5 // pred_check
      _
    $region10: #{decoder_forward.4} parent=5 // pred_check_branch
      %495 = sbr.rel (%p492) target = $region12
    $region11: #{decoder_forward.4} parent=5 // pred_region
      %s496 = ssub.s32 %s26, 1
      // Predicated region
      $region13: #{decoder_forward.4} parent=11 // pred_check
        %p497 = pneg %p99
      $region14: #{decoder_forward.4} parent=11 // pred_check_branch
        %499 = sbr.rel (%p497) target = $region16
      $region15: #{decoder_forward.4} parent=11 // pred_region
        _
      $region16: #{decoder_forward.4} parent=11 // pred_fallthru
        _
      // Predicated region
      $region17: #{decoder_forward.4} parent=11 // pred_check
        %p500 = pneg %p120
      $region18: #{decoder_forward.4} parent=11 // pred_check_branch
        %502 = sbr.rel (%p500) target = $region20
      $region19: #{decoder_forward.4} parent=11 // pred_region
        _
      $region20: #{decoder_forward.4} parent=11 // pred_fallthru
        _
      // Predicated region
      $region21: #{decoder_forward.4} parent=11 // pred_check
        %p503 = pneg %p141
      $region22: #{decoder_forward.4} parent=11 // pred_check_branch
        %505 = sbr.rel (%p503) target = $region24
      $region23: #{decoder_forward.4} parent=11 // pred_region
        _
      $region24: #{decoder_forward.4} parent=11 // pred_fallthru
        _
      // Predicated region
      $region25: #{decoder_forward.4} parent=11 // pred_check
        %p506 = pneg %p162
      $region26: #{decoder_forward.4} parent=11 // pred_check_branch
        %508 = sbr.rel (%p506) target = $region28
      $region27: #{decoder_forward.4} parent=11 // pred_region
        _
      $region28: #{decoder_forward.4} parent=11 // pred_fallthru
        _
      // Predicated region
      $region29: #{decoder_forward.4} parent=11 // pred_check
        %p509 = pneg %p183
      $region30: #{decoder_forward.4} parent=11 // pred_check_branch
        %511 = sbr.rel (%p509) target = $region32
      $region31: #{decoder_forward.4} parent=11 // pred_region
        _
      $region32: #{decoder_forward.4} parent=11 // pred_fallthru
        _
      // Predicated region
      $region33: #{decoder_forward.4} parent=11 // pred_check
        %p512 = pneg %p204
      $region34: #{decoder_forward.4} parent=11 // pred_check_branch
        %514 = sbr.rel (%p512) target = $region36
      $region35: #{decoder_forward.4} parent=11 // pred_region
        _
      $region36: #{decoder_forward.4} parent=11 // pred_fallthru
        _
      // Predicated region
      $region37: #{decoder_forward.4} parent=11 // pred_check
        %p515 = pneg %p225
      $region38: #{decoder_forward.4} parent=11 // pred_check_branch
        %517 = sbr.rel (%p515) target = $region40
      $region39: #{decoder_forward.4} parent=11 // pred_region
        _
      $region40: #{decoder_forward.4} parent=11 // pred_fallthru
        _
      // Predicated region
      $region41: #{decoder_forward.4} parent=11 // pred_check
        %p518 = pneg %p246
      $region42: #{decoder_forward.4} parent=11 // pred_check_branch
        %520 = sbr.rel (%p518) target = $region44
      $region43: #{decoder_forward.4} parent=11 // pred_region
        _
      $region44: #{decoder_forward.4} parent=11 // pred_fallthru
        _
      // Predicated region
      $region45: #{decoder_forward.4} parent=11 // pred_check
        %p521 = pneg %p267
      $region46: #{decoder_forward.4} parent=11 // pred_check_branch
        %523 = sbr.rel (%p521) target = $region48
      $region47: #{decoder_forward.4} parent=11 // pred_region
        _
      $region48: #{decoder_forward.4} parent=11 // pred_fallthru
        _
      // Predicated region
      $region49: #{decoder_forward.4} parent=11 // pred_check
        %p524 = pneg %p288
      $region50: #{decoder_forward.4} parent=11 // pred_check_branch
        %526 = sbr.rel (%p524) target = $region52
      $region51: #{decoder_forward.4} parent=11 // pred_region
        _
      $region52: #{decoder_forward.4} parent=11 // pred_fallthru
        _
      // Predicated region
      $region53: #{decoder_forward.4} parent=11 // pred_check
        %p527 = pneg %p309
      $region54: #{decoder_forward.4} parent=11 // pred_check_branch
        %529 = sbr.rel (%p527) target = $region56
      $region55: #{decoder_forward.4} parent=11 // pred_region
        _
      $region56: #{decoder_forward.4} parent=11 // pred_fallthru
        _
      // Predicated region
      $region57: #{decoder_forward.4} parent=11 // pred_check
        %p530 = pneg %p330
      $region58: #{decoder_forward.4} parent=11 // pred_check_branch
        %532 = sbr.rel (%p530) target = $region60
      $region59: #{decoder_forward.4} parent=11 // pred_region
        _
      $region60: #{decoder_forward.4} parent=11 // pred_fallthru
        _
      // Predicated region
      $region61: #{decoder_forward.4} parent=11 // pred_check
        %p533 = pneg %p351
      $region62: #{decoder_forward.4} parent=11 // pred_check_branch
        %535 = sbr.rel (%p533) target = $region64
      $region63: #{decoder_forward.4} parent=11 // pred_region
        _
      $region64: #{decoder_forward.4} parent=11 // pred_fallthru
        _
      // Predicated region
      $region65: #{decoder_forward.4} parent=11 // pred_check
        %p536 = pneg %p372
      $region66: #{decoder_forward.4} parent=11 // pred_check_branch
        %538 = sbr.rel (%p536) target = $region68
      $region67: #{decoder_forward.4} parent=11 // pred_region
        _
      $region68: #{decoder_forward.4} parent=11 // pred_fallthru
        _
      // Predicated region
      $region69: #{decoder_forward.4} parent=11 // pred_check
        %p539 = pneg %p393
      $region70: #{decoder_forward.4} parent=11 // pred_check_branch
        %541 = sbr.rel (%p539) target = $region72
      $region71: #{decoder_forward.4} parent=11 // pred_region
        _
      $region72: #{decoder_forward.4} parent=11 // pred_fallthru
        _
      // Predicated region
      $region73: #{decoder_forward.4} parent=11 // pred_check
        %p542 = pneg %p414
      $region74: #{decoder_forward.4} parent=11 // pred_check_branch
        %544 = sbr.rel (%p542) target = $region76
      $region75: #{decoder_forward.4} parent=11 // pred_region
        _
      $region76: #{decoder_forward.4} parent=11 // pred_fallthru
        _
      // Predicated region
      $region77: #{decoder_forward.4} parent=11 // pred_check
        %p545 = pneg %p435
      $region78: #{decoder_forward.4} parent=11 // pred_check_branch
        %547 = sbr.rel (%p545) target = $region80
      $region79: #{decoder_forward.4} parent=11 // pred_region
        _
      $region80: #{decoder_forward.4} parent=11 // pred_fallthru
        _
      // Predicated region
      $region81: #{decoder_forward.4} parent=11 // pred_check
        %p548 = pneg %p456
      $region82: #{decoder_forward.4} parent=11 // pred_check_branch
        %550 = sbr.rel (%p548) target = $region84
      $region83: #{decoder_forward.4} parent=11 // pred_region
        _
      $region84: #{decoder_forward.4} parent=11 // pred_fallthru
        _
    $region12: #{decoder_forward.4} parent=5 // pred_fallthru
      _
    %p551 = scmp.lt.s32.totalorder %s26, 2
    // Predicated region
    $region85: #{decoder_forward.4} parent=5 // pred_check
      %p552 = pneg %p551
    $region86: #{decoder_forward.4} parent=5 // pred_check_branch
      %554 = sbr.rel (%p552) target = $region88
    $region87: #{decoder_forward.4} parent=5 // pred_region
      // Predicated region
      $region89: #{decoder_forward.4} parent=87 // pred_check
        %p555 = pneg %p46
      $region90: #{decoder_forward.4} parent=87 // pred_check_branch
        %557 = sbr.rel (%p555) target = $region92
      $region91: #{decoder_forward.4} parent=87 // pred_region
        %p558 = scmp.lt.s32.totalorder %s26, 1
        %s559 = scalar_select %p558, %s26, 1
        %s560 = smul.addr %s559, 8
        %s561 = scalar_lea.vmem %s0, %s560
      $region92: #{decoder_forward.4} parent=87 // pred_fallthru
        _
      // Predicated region
      $region93: #{decoder_forward.4} parent=87 // pred_check
        %p562 = pneg %p72
      $region94: #{decoder_forward.4} parent=87 // pred_check_branch
        %564 = sbr.rel (%p562) target = $region96
      $region95: #{decoder_forward.4} parent=87 // pred_region
        %p565 = scmp.lt.s32.totalorder %s26, 1
        %s566 = scalar_select %p565, %s26, 1
        %s567 = smul.addr %s566, 8
        %s568 = scalar_lea.vmem %s1, %s567
      $region96: #{decoder_forward.4} parent=87 // pred_fallthru
        _
    $region88: #{decoder_forward.4} parent=5 // pred_fallthru
      _
    %p569 = scmp.le.s32.totalorder 1, %s26
    %p570 = scmp.lt.s32.totalorder %s26, 3
    %p571 = pnand %p569, %p570
    %p572 = pneg %p571
    // Predicated region
    $region97: #{decoder_forward.4} parent=5 // pred_check
      _
    $region98: #{decoder_forward.4} parent=5 // pred_check_branch
      %574 = sbr.rel (%p571) target = $region100
    $region99: #{decoder_forward.4} parent=5 // pred_region
      %s575 = ssub.s32 %s26, 1
      %p576 = scmp.lt.s32.totalorder %s31, 1
      %s577 = scalar_select %p576, %s31, 1
      %s578 = smul.addr %s577, 8
      %s579 = scalar_lea.vmem %s0, %s578
      %p580 = pneg %p52
      %p581 = pneg %p49
      %p582 = scmp.lt.s32.totalorder %s31, 1
      %s583 = scalar_select %p582, %s31, 1
      %s584 = smul.addr %s583, 8
      %s585 = scalar_lea.vmem %s1, %s584
      %p586 = pneg %p78
      %p587 = pneg %p75
      %p588 = pneg %p99
      %p589 = pneg %p96
      %p590 = pneg %p120
      %p591 = pneg %p117
      %p592 = pneg %p141
      %p593 = pneg %p138
      %p594 = pneg %p162
      %p595 = pneg %p159
      %p596 = pneg %p183
      %p597 = pneg %p180
      %p598 = pneg %p204
      %p599 = pneg %p201
      %p600 = pneg %p225
      %p601 = pneg %p222
      %p602 = pneg %p246
      %p603 = pneg %p243
      %p604 = pneg %p267
      %p605 = pneg %p264
      %p606 = pneg %p288
      %p607 = pneg %p285
      %p608 = pneg %p309
      %p609 = pneg %p306
      %p610 = pneg %p330
      %p611 = pneg %p327
      %p612 = pneg %p351
      %p613 = pneg %p348
      %p614 = pneg %p372
      %p615 = pneg %p369
      %p616 = pneg %p393
      %p617 = pneg %p390
      %p618 = pneg %p414
      %p619 = pneg %p411
      %p620 = pneg %p435
      %p621 = pneg %p432
      %p622 = pneg %p456
      %p623 = pneg %p453
      %p624 = pneg %p482
      %p625 = pneg %p479
      %p626 = scmp.lt.s32.totalorder %s31, 1
      %s627 = scalar_select %p626, %s31, 1
      %s628 = smul.addr %s627, 8
      %s629 = scalar_lea.vmem %s20, %s628
      %p630 = scmp.lt.s32.totalorder %s31, 1
      %s631 = scalar_select %p630, %s31, 1
      %s632 = smul.addr %s631, 8
      %s633 = scalar_lea.vmem %s0, %s632
      %p634 = scmp.lt.s32.totalorder %s31, 1
      %s635 = scalar_select %p634, %s31, 1
      %s636 = smul.addr %s635, 8
      %s637 = scalar_lea.vmem %s1, %s636
      %p638 = scmp.lt.s32.totalorder %s31, 1
      %s639 = scalar_select %p638, %s31, 1
      %s640 = smul.addr %s639, 8
      %s641 = scalar_lea.vmem %s20, %s640
      %v643 = vld [vmem:[%s633] sm:$0xff]
      %v644 = vld [vmem:[%s637] sm:$0xff]
      %v645 = vpack.c.bf16 %v643, %v643
      %v646 = vld [vmem:[%s2] sm:$0xf]
      %v647 = vld [vmem:[%s2 + $0x4] sm:$0xf]
      %v648 = vld [vmem:[%s2 + $0x8] sm:$0xf]
      %v649 = vld [vmem:[%s2 + $0xc] sm:$0xf]
      %v650 = vld [vmem:[%s2 + $0x10] sm:$0xf]
      %v651 = vld [vmem:[%s2 + $0x14] sm:$0xf]
      %v652 = vld [vmem:[%s2 + $0x18] sm:$0xf]
      %v653 = vld [vmem:[%s2 + $0x1c] sm:$0xf]
      %v654 = vld [vmem:[%s2 + $0x20] sm:$0xf]
      %v655 = vld [vmem:[%s2 + $0x24] sm:$0xf]
      %v656 = vld [vmem:[%s2 + $0x28] sm:$0xf]
      %v657 = vld [vmem:[%s2 + $0x2c] sm:$0xf]
      %v658 = vld [vmem:[%s2 + $0x30] sm:$0xf]
      %v659 = vld [vmem:[%s2 + $0x34] sm:$0xf]
      %v660 = vld [vmem:[%s2 + $0x38] sm:$0xf]
      %v661 = vld [vmem:[%s2 + $0x3c] sm:$0xf]
      %v662 = vld [vmem:[%s3] sm:$0x1]
      %v664 = vlaneseq
      %v665 = vshrl.u32 %v664, 7
      %v666 = vsub.s32 0, %v665
      %v667 = vrot.slane %v662, %v666
      %v685 = vunpack.c.l.b16 %v646
      %v686 = vunpack.c.l.b16 %v647
      %v687 = vunpack.c.l.b16 %v648
      %v688 = vunpack.c.l.b16 %v649
      %v689 = vunpack.c.l.b16 %v650
      %v690 = vunpack.c.l.b16 %v651
      %v691 = vunpack.c.l.b16 %v652
      %v692 = vunpack.c.l.b16 %v653
      %v693 = vunpack.c.l.b16 %v654
      %v694 = vunpack.c.l.b16 %v655
      %v695 = vunpack.c.l.b16 %v656
      %v696 = vunpack.c.l.b16 %v657
      %v697 = vunpack.c.l.b16 %v658
      %v698 = vunpack.c.l.b16 %v659
      %v699 = vunpack.c.l.b16 %v660
      %v700 = vunpack.c.l.b16 %v661
      %v701 = vpack.c.b16 %v686, %v685
      %v702 = vpack.c.b16 %v688, %v687
      %v703 = vpack.c.b16 %v690, %v689
      %v704 = vpack.c.b16 %v692, %v691
      %v705 = vpack.c.b16 %v694, %v693
      %v706 = vpack.c.b16 %v696, %v695
      %v707 = vpack.c.b16 %v698, %v697
      %v708 = vpack.c.b16 %v700, %v699
      %717 = vmatprep.subr.bf16.mxu0 0
      %718 = vmatpush1.bf16.msra.mxu0 %v701
      %719 = vmatprep.subr.bf16.mxu0 0
      %720 = vmatpush1.bf16.msra.mxu0 %v702
      %721 = vmatprep.subr.bf16.mxu0 0
      %722 = vmatpush1.bf16.msra.mxu0 %v703
      %723 = vmatprep.subr.bf16.mxu0 0
      %724 = vmatpush1.bf16.msra.mxu0 %v704
      %725 = vmatprep.subr.bf16.mxu0 0
      %726 = vmatpush1.bf16.msra.mxu0 %v705
      %727 = vmatprep.subr.bf16.mxu0 0
      %728 = vmatpush1.bf16.msra.mxu0 %v706
      %729 = vmatprep.subr.bf16.mxu0 0
      %730 = vmatpush1.bf16.msra.mxu0 %v707
      %731 = vmatprep.subr.bf16.mxu0 0
      %732 = vmatpush1.bf16.msra.mxu0 %v708
      %733 = vmatprep.subr.bf16.mxu0 0
      %734 = vmatpush1.bf16.msra.mxu0 0
      %735 = vmatprep.subr.bf16.mxu0 0
      %736 = vmatpush1.bf16.msra.mxu0 0
      %737 = vmatprep.subr.bf16.mxu0 0
      %738 = vmatpush1.bf16.msra.mxu0 0
      %739 = vmatprep.subr.bf16.mxu0 0
      %740 = vmatpush1.bf16.msra.mxu0 0
      %741 = vmatprep.subr.bf16.mxu0 0
      %742 = vmatpush1.bf16.msra.mxu0 0
      %743 = vmatprep.subr.bf16.mxu0 0
      %744 = vmatpush1.bf16.msra.mxu0 0
      %745 = vmatprep.subr.bf16.mxu0 0
      %746 = vmatpush1.bf16.msra.mxu0 0
      %747 = vmatprep.subr.bf16.mxu0 0
      %748 = vmatpush1.bf16.msra.mxu0 0
      %749 = vmatprep.mubr.bf16.mxu0 0
      %750 = vmatmul.mubr.bf16.gmra.mrb[0].mxu0 %v645
      %v751 = vpop.f32.mrb[0].mxu0
      %v752 = vadd.f32 %v667, %v751
      %v753 = vpop.f32.mrb[0].mxu0
      %v754 = vpop.f32.mrb[0].mxu0
      %v755 = vpop.f32.mrb[0].mxu0
      %756 = vdwg.mxu0
      %v757 = vmul.f32 %v752, 0.17677669
      %v758 = vpack.c.bf16 %v757, %v757
      %759 = vxpose.xlu0.b32.start [1/16] %v752, 128
      %760 = vxpose.xlu0.b32.cont [2/16] 0.0, 128
      %761 = vxpose.xlu0.b32.cont [3/16] 0.0, 128
      %762 = vxpose.xlu0.b32.cont [4/16] 0.0, 128
      %763 = vxpose.xlu0.b32.cont [5/16] 0.0, 128
      %764 = vxpose.xlu0.b32.cont [6/16] 0.0, 128
      %765 = vxpose.xlu0.b32.cont [7/16] 0.0, 128
      %766 = vxpose.xlu0.b32.cont [8/16] 0.0, 128
      %767 = vxpose.xlu0.b32.cont [9/16] 0.0, 128
      %768 = vxpose.xlu0.b32.cont [10/16] 0.0, 128
      %769 = vxpose.xlu0.b32.cont [11/16] 0.0, 128
      %770 = vxpose.xlu0.b32.cont [12/16] 0.0, 128
      %771 = vxpose.xlu0.b32.cont [13/16] 0.0, 128
      %772 = vxpose.xlu0.b32.cont [14/16] 0.0, 128
      %773 = vxpose.xlu0.b32.cont [15/16] 0.0, 128
      %774 = vxpose.xlu0.b32.end [16/16] 0.0, 128
      %v775 = vpop.trf.xlu0
      %v776 = vpop.trf.xlu0
      %v777 = vpop.trf.xlu0
      %v778 = vpop.trf.xlu0
      %v779 = vpop.trf.xlu0
      %v780 = vpop.trf.xlu0
      %v781 = vpop.trf.xlu0
      %v782 = vpop.trf.xlu0
      %v783 = vpop.trf.xlu0
      %v784 = vpop.trf.xlu0
      %v785 = vpop.trf.xlu0
      %v786 = vpop.trf.xlu0
      %v787 = vpop.trf.xlu0
      %v788 = vpop.trf.xlu0
      %v789 = vpop.trf.xlu0
      %v790 = vpop.trf.xlu0
      %v791 = vpack.c.bf16 %v776, %v775
      %v792 = vpack.c.bf16 %v778, %v777
      %vm793 = vcmask 261120
      %v795 = vsel %vm793, %v758, 0
      %797 = vmatprep.subr.bf16.mxu0 0
      %798 = vmatpush1.bf16.msra.mxu0 %v791
      %799 = vmatprep.subr.bf16.mxu0 0
      %800 = vmatpush1.bf16.msra.mxu0 %v792
      %801 = vmatprep.subr.bf16.mxu0 0
      %802 = vmatpush1.bf16.msra.mxu0 0
      %803 = vmatprep.subr.bf16.mxu0 0
      %804 = vmatpush1.bf16.msra.mxu0 0
      %805 = vmatprep.subr.bf16.mxu0 0
      %806 = vmatpush1.bf16.msra.mxu0 0
      %807 = vmatprep.subr.bf16.mxu0 0
      %808 = vmatpush1.bf16.msra.mxu0 0
      %809 = vmatprep.subr.bf16.mxu0 0
      %810 = vmatpush1.bf16.msra.mxu0 0
      %811 = vmatprep.subr.bf16.mxu0 0
      %812 = vmatpush1.bf16.msra.mxu0 0
      %813 = vmatprep.subr.bf16.mxu0 0
      %814 = vmatpush1.bf16.msra.mxu0 0
      %815 = vmatprep.subr.bf16.mxu0 0
      %816 = vmatpush1.bf16.msra.mxu0 0
      %817 = vmatprep.subr.bf16.mxu0 0
      %818 = vmatpush1.bf16.msra.mxu0 0
      %819 = vmatprep.subr.bf16.mxu0 0
      %820 = vmatpush1.bf16.msra.mxu0 0
      %821 = vmatprep.subr.bf16.mxu0 0
      %822 = vmatpush1.bf16.msra.mxu0 0
      %823 = vmatprep.subr.bf16.mxu0 0
      %824 = vmatpush1.bf16.msra.mxu0 0
      %825 = vmatprep.subr.bf16.mxu0 0
      %826 = vmatpush1.bf16.msra.mxu0 0
      %827 = vmatprep.subr.bf16.mxu0 0
      %828 = vmatpush1.bf16.msra.mxu0 0
      %829 = vmatprep.mubr.bf16.mxu0 0
      %830 = vmatmul.mubr.bf16.gmra.mrb[0].mxu0 %v795
      %v831 = vpop.f32.mrb[0].mxu0
      %v832 = vadd.f32 0.0, %v831
      %v833 = vpop.f32.mrb[0].mxu0
      %v834 = vpop.f32.mrb[0].mxu0
      %v835 = vpop.f32.mrb[0].mxu0
      %836 = vdwg.mxu0
      %vm837 = vcmask 64512
      %v838 = vsel %vm837, %v832, -inf
      %839 = vmax.xlane.f32.xlu0 %v838
      %v840 = vpop.xlane.xlu0 %839
      %v841 = vsub.f32 %v832, %v840
      %v842 = vmul.f32 %v841, 1.442695
      %v843 = vpow.pop %v842
      %v844 = vsel %vm837, %v843, 0.0
      %845 = vadd.xlane.f32.xlu0 %v844
      %v846 = vpop.xlane.xlu0 %845
      %v847 = vrcp.pop %v846
      %v848 = vmul.f32 %v843, %v847
      %v849 = vpack.c.bf16 %v848, %v848
      %v850 = vpack.c.bf16 %v752, %v752
      %v852 = vsel %vm837, %v849, 0
      %vm854 = vcmask 1043456
      %v856 = vsel %vm854, %v850, 0
      %858 = vmatprep.subr.bf16.mxu0 0
      %859 = vmatpush1.bf16.msra.mxu0 %v856
      %860 = vmatprep.subr.bf16.mxu0 0
      %861 = vmatpush1.bf16.msra.mxu0 0
      %862 = vmatprep.subr.bf16.mxu0 0
      %863 = vmatpush1.bf16.msra.mxu0 0
      %864 = vmatprep.subr.bf16.mxu0 0
      %865 = vmatpush1.bf16.msra.mxu0 0
      %866 = vmatprep.subr.bf16.mxu0 0
      %867 = vmatpush1.bf16.msra.mxu0 0
      %868 = vmatprep.subr.bf16.mxu0 0
      %869 = vmatpush1.bf16.msra.mxu0 0
      %870 = vmatprep.subr.bf16.mxu0 0
      %871 = vmatpush1.bf16.msra.mxu0 0
      %872 = vmatprep.subr.bf16.mxu0 0
      %873 = vmatpush1.bf16.msra.mxu0 0
      %874 = vmatprep.subr.bf16.mxu0 0
      %875 = vmatpush1.bf16.msra.mxu0 0
      %876 = vmatprep.subr.bf16.mxu0 0
      %877 = vmatpush1.bf16.msra.mxu0 0
      %878 = vmatprep.subr.bf16.mxu0 0
      %879 = vmatpush1.bf16.msra.mxu0 0
      %880 = vmatprep.subr.bf16.mxu0 0
      %881 = vmatpush1.bf16.msra.mxu0 0
      %882 = vmatprep.subr.bf16.mxu0 0
      %883 = vmatpush1.bf16.msra.mxu0 0
      %884 = vmatprep.subr.bf16.mxu0 0
      %885 = vmatpush1.bf16.msra.mxu0 0
      %886 = vmatprep.subr.bf16.mxu0 0
      %887 = vmatpush1.bf16.msra.mxu0 0
      %888 = vmatprep.subr.bf16.mxu0 0
      %889 = vmatpush1.bf16.msra.mxu0 0
      %890 = vmatprep.mubr.bf16.mxu0 0
      %891 = vmatmul.mubr.bf16.gmra.mrb[0].mxu0 %v852
      %v892 = vpop.f32.mrb[0].mxu0
      %v893 = vadd.f32 0.0, %v892
      %v894 = vpop.f32.mrb[0].mxu0
      %v895 = vpop.f32.mrb[0].mxu0
      %v896 = vpop.f32.mrb[0].mxu0
      %897 = vdwg.mxu0
      %899 = vrot.lane.b32.xlu0 %v752, 96
      %v900 = vpop.permute.xlu0 %899
      %902 = vxpose.xlu0.b32.start [1/16] %v900, 128
      %903 = vxpose.xlu0.b32.cont [2/16] 0.0, 128
      %904 = vxpose.xlu0.b32.cont [3/16] 0.0, 128
      %905 = vxpose.xlu0.b32.cont [4/16] 0.0, 128
      %906 = vxpose.xlu0.b32.cont [5/16] 0.0, 128
      %907 = vxpose.xlu0.b32.cont [6/16] 0.0, 128
      %908 = vxpose.xlu0.b32.cont [7/16] 0.0, 128
      %909 = vxpose.xlu0.b32.cont [8/16] 0.0, 128
      %910 = vxpose.xlu0.b32.cont [9/16] 0.0, 128
      %911 = vxpose.xlu0.b32.cont [10/16] 0.0, 128
      %912 = vxpose.xlu0.b32.cont [11/16] 0.0, 128
      %913 = vxpose.xlu0.b32.cont [12/16] 0.0, 128
      %914 = vxpose.xlu0.b32.cont [13/16] 0.0, 128
      %915 = vxpose.xlu0.b32.cont [14/16] 0.0, 128
      %916 = vxpose.xlu0.b32.cont [15/16] 0.0, 128
      %917 = vxpose.xlu0.b32.end [16/16] 0.0, 128
      %v918 = vpop.trf.xlu0
      %v919 = vpop.trf.xlu0
      %v920 = vpop.trf.xlu0
      %v921 = vpop.trf.xlu0
      %v922 = vpop.trf.xlu0
      %v923 = vpop.trf.xlu0
      %v924 = vpop.trf.xlu0
      %v925 = vpop.trf.xlu0
      %v926 = vpop.trf.xlu0
      %v927 = vpop.trf.xlu0
      %v928 = vpop.trf.xlu0
      %v929 = vpop.trf.xlu0
      %v930 = vpop.trf.xlu0
      %v931 = vpop.trf.xlu0
      %v932 = vpop.trf.xlu0
      %v933 = vpop.trf.xlu0
      %v934 = vpack.c.bf16 %v919, %v918
      %v935 = vpack.c.bf16 %v921, %v920
      %937 = vrot.lane.b32.xlu0 %v758, 96
      %v938 = vpop.permute.xlu0 %937
      %v940 = vsel %vm793, %v938, 0
      %942 = vmatprep.subr.bf16.mxu0 0
      %943 = vmatpush1.bf16.msra.mxu0 %v934
      %944 = vmatprep.subr.bf16.mxu0 0
      %945 = vmatpush1.bf16.msra.mxu0 %v935
      %946 = vmatprep.subr.bf16.mxu0 0
      %947 = vmatpush1.bf16.msra.mxu0 0
      %948 = vmatprep.subr.bf16.mxu0 0
      %949 = vmatpush1.bf16.msra.mxu0 0
      %950 = vmatprep.subr.bf16.mxu0 0
      %951 = vmatpush1.bf16.msra.mxu0 0
      %952 = vmatprep.subr.bf16.mxu0 0
      %953 = vmatpush1.bf16.msra.mxu0 0
      %954 = vmatprep.subr.bf16.mxu0 0
      %955 = vmatpush1.bf16.msra.mxu0 0
      %956 = vmatprep.subr.bf16.mxu0 0
      %957 = vmatpush1.bf16.msra.mxu0 0
      %958 = vmatprep.subr.bf16.mxu0 0
      %959 = vmatpush1.bf16.msra.mxu0 0
      %960 = vmatprep.subr.bf16.mxu0 0
      %961 = vmatpush1.bf16.msra.mxu0 0
      %962 = vmatprep.subr.bf16.mxu0 0
      %963 = vmatpush1.bf16.msra.mxu0 0
      %964 = vmatprep.subr.bf16.mxu0 0
      %965 = vmatpush1.bf16.msra.mxu0 0
      %966 = vmatprep.subr.bf16.mxu0 0
      %967 = vmatpush1.bf16.msra.mxu0 0
      %968 = vmatprep.subr.bf16.mxu0 0
      %969 = vmatpush1.bf16.msra.mxu0 0
      %970 = vmatprep.subr.bf16.mxu0 0
      %971 = vmatpush1.bf16.msra.mxu0 0
      %972 = vmatprep.subr.bf16.mxu0 0
      %973 = vmatpush1.bf16.msra.mxu0 0
      %974 = vmatprep.mubr.bf16.mxu0 0
      %975 = vmatmul.mubr.bf16.gmra.mrb[0].mxu0 %v940
      %v976 = vpop.f32.mrb[0].mxu0
      %v977 = vadd.f32 0.0, %v976
      %v978 = vpop.f32.mrb[0].mxu0
      %v979 = vpop.f32.mrb[0].mxu0
      %v980 = vpop.f32.mrb[0].mxu0
      %981 = vdwg.mxu0
      %v982 = vsel %vm837, %v977, -inf
      %983 = vmax.xlane.f32.xlu0 %v982
      %v984 = vpop.xlane.xlu0 %983
      %v985 = vsub.f32 %v977, %v984
      %v986 = vmul.f32 %v985, 1.442695
      %v987 = vpow.pop %v986
      %v988 = vsel %vm837, %v987, 0.0
      %989 = vadd.xlane.f32.xlu0 %v988
      %v990 = vpop.xlane.xlu0 %989
      %v991 = vrcp.pop %v990
      %v992 = vmul.f32 %v987, %v991
      %v993 = vpack.c.bf16 %v992, %v992
      %995 = vrot.lane.b32.xlu0 %v850, 96
      %v996 = vpop.permute.xlu0 %995
      %v998 = vsel %vm837, %v993, 0
      %v1001 = vsel %vm854, %v996, 0
      %1003 = vmatprep.subr.bf16.mxu0 0
      %1004 = vmatpush1.bf16.msra.mxu0 %v1001
      %1005 = vmatprep.subr.bf16.mxu0 0
      %1006 = vmatpush1.bf16.msra.mxu0 0
      %1007 = vmatprep.subr.bf16.mxu0 0
      %1008 = vmatpush1.bf16.msra.mxu0 0
      %1009 = vmatprep.subr.bf16.mxu0 0
      %1010 = vmatpush1.bf16.msra.mxu0 0
      %1011 = vmatprep.subr.bf16.mxu0 0
      %1012 = vmatpush1.bf16.msra.mxu0 0
      %1013 = vmatprep.subr.bf16.mxu0 0
      %1014 = vmatpush1.bf16.msra.mxu0 0
      %1015 = vmatprep.subr.bf16.mxu0 0
      %1016 = vmatpush1.bf16.msra.mxu0 0
      %1017 = vmatprep.subr.bf16.mxu0 0
      %1018 = vmatpush1.bf16.msra.mxu0 0
      %1019 = vmatprep.subr.bf16.mxu0 0
      %1020 = vmatpush1.bf16.msra.mxu0 0
      %1021 = vmatprep.subr.bf16.mxu0 0
      %1022 = vmatpush1.bf16.msra.mxu0 0
      %1023 = vmatprep.subr.bf16.mxu0 0
      %1024 = vmatpush1.bf16.msra.mxu0 0
      %1025 = vmatprep.subr.bf16.mxu0 0
      %1026 = vmatpush1.bf16.msra.mxu0 0
      %1027 = vmatprep.subr.bf16.mxu0 0
      %1028 = vmatpush1.bf16.msra.mxu0 0
      %1029 = vmatprep.subr.bf16.mxu0 0
      %1030 = vmatpush1.bf16.msra.mxu0 0
      %1031 = vmatprep.subr.bf16.mxu0 0
      %1032 = vmatpush1.bf16.msra.mxu0 0
      %1033 = vmatprep.subr.bf16.mxu0 0
      %1034 = vmatpush1.bf16.msra.mxu0 0
      %1035 = vmatprep.mubr.bf16.mxu0 0
      %1036 = vmatmul.mubr.bf16.gmra.mrb[0].mxu0 %v998
      %v1037 = vpop.f32.mrb[0].mxu0
      %v1038 = vadd.f32 0.0, %v1037
      %v1039 = vpop.f32.mrb[0].mxu0
      %v1040 = vpop.f32.mrb[0].mxu0
      %v1041 = vpop.f32.mrb[0].mxu0
      %1042 = vdwg.mxu0
      %1043 = vrot.lane.b32.xlu0 %v752, 64
      %v1044 = vpop.permute.xlu0 %1043
      %1046 = vxpose.xlu0.b32.start [1/16] %v1044, 128
      %1047 = vxpose.xlu0.b32.cont [2/16] 0.0, 128
      %1048 = vxpose.xlu0.b32.cont [3/16] 0.0, 128
      %1049 = vxpose.xlu0.b32.cont [4/16] 0.0, 128
      %1050 = vxpose.xlu0.b32.cont [5/16] 0.0, 128
      %1051 = vxpose.xlu0.b32.cont [6/16] 0.0, 128
      %1052 = vxpose.xlu0.b32.cont [7/16] 0.0, 128
      %1053 = vxpose.xlu0.b32.cont [8/16] 0.0, 128
      %1054 = vxpose.xlu0.b32.cont [9/16] 0.0, 128
      %1055 = vxpose.xlu0.b32.cont [10/16] 0.0, 128
      %1056 = vxpose.xlu0.b32.cont [11/16] 0.0, 128
      %1057 = vxpose.xlu0.b32.cont [12/16] 0.0, 128
      %1058 = vxpose.xlu0.b32.cont [13/16] 0.0, 128
      %1059 = vxpose.xlu0.b32.cont [14/16] 0.0, 128
      %1060 = vxpose.xlu0.b32.cont [15/16] 0.0, 128
      %1061 = vxpose.xlu0.b32.end [16/16] 0.0, 128
      %v1062 = vpop.trf.xlu0
      %v1063 = vpop.trf.xlu0
      %v1064 = vpop.trf.xlu0
      %v1065 = vpop.trf.xlu0
      %v1066 = vpop.trf.xlu0
      %v1067 = vpop.trf.xlu0
      %v1068 = vpop.trf.xlu0
      %v1069 = vpop.trf.xlu0
      %v1070 = vpop.trf.xlu0
      %v1071 = vpop.trf.xlu0
      %v1072 = vpop.trf.xlu0
      %v1073 = vpop.trf.xlu0
      %v1074 = vpop.trf.xlu0
      %v1075 = vpop.trf.xlu0
      %v1076 = vpop.trf.xlu0
      %v1077 = vpop.trf.xlu0
      %v1078 = vpack.c.bf16 %v1063, %v1062
      %v1079 = vpack.c.bf16 %v1065, %v1064
      %1080 = vrot.lane.b32.xlu0 %v758, 64
      %v1081 = vpop.permute.xlu0 %1080
      %v1083 = vsel %vm793, %v1081, 0
      %1085 = vmatprep.subr.bf16.mxu0 0
      %1086 = vmatpush1.bf16.msra.mxu0 %v1078
      %1087 = vmatprep.subr.bf16.mxu0 0
      %1088 = vmatpush1.bf16.msra.mxu0 %v1079
      %1089 = vmatprep.subr.bf16.mxu0 0
      %1090 = vmatpush1.bf16.msra.mxu0 0
      %1091 = vmatprep.subr.bf16.mxu0 0
      %1092 = vmatpush1.bf16.msra.mxu0 0
      %1093 = vmatprep.subr.bf16.mxu0 0
      %1094 = vmatpush1.bf16.msra.mxu0 0
      %1095 = vmatprep.subr.bf16.mxu0 0
      %1096 = vmatpush1.bf16.msra.mxu0 0
      %1097 = vmatprep.subr.bf16.mxu0 0
      %1098 = vmatpush1.bf16.msra.mxu0 0
      %1099 = vmatprep.subr.bf16.mxu0 0
      %1100 = vmatpush1.bf16.msra.mxu0 0
      %1101 = vmatprep.subr.bf16.mxu0 0
      %1102 = vmatpush1.bf16.msra.mxu0 0
      %1103 = vmatprep.subr.bf16.mxu0 0
      %1104 = vmatpush1.bf16.msra.mxu0 0
      %1105 = vmatprep.subr.bf16.mxu0 0
      %1106 = vmatpush1.bf16.msra.mxu0 0
      %1107 = vmatprep.subr.bf16.mxu0 0
      %1108 = vmatpush1.bf16.msra.mxu0 0
      %1109 = vmatprep.subr.bf16.mxu0 0
      %1110 = vmatpush1.bf16.msra.mxu0 0
      %1111 = vmatprep.subr.bf16.mxu0 0
      %1112 = vmatpush1.bf16.msra.mxu0 0
      %1113 = vmatprep.subr.bf16.mxu0 0
      %1114 = vmatpush1.bf16.msra.mxu0 0
      %1115 = vmatprep.subr.bf16.mxu0 0
      %1116 = vmatpush1.bf16.msra.mxu0 0
      %1117 = vmatprep.mubr.bf16.mxu0 0
      %1118 = vmatmul.mubr.bf16.gmra.mrb[0].mxu0 %v1083
      %v1119 = vpop.f32.mrb[0].mxu0
      %v1120 = vadd.f32 0.0, %v1119
      %v1121 = vpop.f32.mrb[0].mxu0
      %v1122 = vpop.f32.mrb[0].mxu0
      %v1123 = vpop.f32.mrb[0].mxu0
      %1124 = vdwg.mxu0
      %v1125 = vsel %vm837, %v1120, -inf
      %1126 = vmax.xlane.f32.xlu0 %v1125
      %v1127 = vpop.xlane.xlu0 %1126
      %v1128 = vsub.f32 %v1120, %v1127
      %v1129 = vmul.f32 %v1128, 1.442695
      %v1130 = vpow.pop %v1129
      %v1131 = vsel %vm837, %v1130, 0.0
      %1132 = vadd.xlane.f32.xlu0 %v1131
      %v1133 = vpop.xlane.xlu0 %1132
      %v1134 = vrcp.pop %v1133
      %v1135 = vmul.f32 %v1130, %v1134
      %v1136 = vpack.c.bf16 %v1135, %v1135
      %1137 = vrot.lane.b32.xlu0 %v850, 64
      %v1138 = vpop.permute.xlu0 %1137
      %v1140 = vsel %vm837, %v1136, 0
      %v1143 = vsel %vm854, %v1138, 0
      %1145 = vmatprep.subr.bf16.mxu0 0
      %1146 = vmatpush1.bf16.msra.mxu0 %v1143
      %1147 = vmatprep.subr.bf16.mxu0 0
      %1148 = vmatpush1.bf16.msra.mxu0 0
      %1149 = vmatprep.subr.bf16.mxu0 0
      %1150 = vmatpush1.bf16.msra.mxu0 0
      %1151 = vmatprep.subr.bf16.mxu0 0
      %1152 = vmatpush1.bf16.msra.mxu0 0
      %1153 = vmatprep.subr.bf16.mxu0 0
      %1154 = vmatpush1.bf16.msra.mxu0 0
      %1155 = vmatprep.subr.bf16.mxu0 0
      %1156 = vmatpush1.bf16.msra.mxu0 0
      %1157 = vmatprep.subr.bf16.mxu0 0
      %1158 = vmatpush1.bf16.msra.mxu0 0
      %1159 = vmatprep.subr.bf16.mxu0 0
      %1160 = vmatpush1.bf16.msra.mxu0 0
      %1161 = vmatprep.subr.bf16.mxu0 0
      %1162 = vmatpush1.bf16.msra.mxu0 0
      %1163 = vmatprep.subr.bf16.mxu0 0
      %1164 = vmatpush1.bf16.msra.mxu0 0
      %1165 = vmatprep.subr.bf16.mxu0 0
      %1166 = vmatpush1.bf16.msra.mxu0 0
      %1167 = vmatprep.subr.bf16.mxu0 0
      %1168 = vmatpush1.bf16.msra.mxu0 0
      %1169 = vmatprep.subr.bf16.mxu0 0
      %1170 = vmatpush1.bf16.msra.mxu0 0
      %1171 = vmatprep.subr.bf16.mxu0 0
      %1172 = vmatpush1.bf16.msra.mxu0 0
      %1173 = vmatprep.subr.bf16.mxu0 0
      %1174 = vmatpush1.bf16.msra.mxu0 0
      %1175 = vmatprep.subr.bf16.mxu0 0
      %1176 = vmatpush1.bf16.msra.mxu0 0
      %1177 = vmatprep.mubr.bf16.mxu0 0
      %1178 = vmatmul.mubr.bf16.gmra.mrb[0].mxu0 %v1140
      %v1179 = vpop.f32.mrb[0].mxu0
      %v1180 = vadd.f32 0.0, %v1179
      %v1181 = vpop.f32.mrb[0].mxu0
      %v1182 = vpop.f32.mrb[0].mxu0
      %v1183 = vpop.f32.mrb[0].mxu0
      %1184 = vdwg.mxu0
      %1185 = vrot.lane.b32.xlu0 %v752, 32
      %v1186 = vpop.permute.xlu0 %1185
      %1188 = vxpose.xlu0.b32.start [1/16] %v1186, 128
      %1189 = vxpose.xlu0.b32.cont [2/16] 0.0, 128
      %1190 = vxpose.xlu0.b32.cont [3/16] 0.0, 128
      %1191 = vxpose.xlu0.b32.cont [4/16] 0.0, 128
      %1192 = vxpose.xlu0.b32.cont [5/16] 0.0, 128
      %1193 = vxpose.xlu0.b32.cont [6/16] 0.0, 128
      %1194 = vxpose.xlu0.b32.cont [7/16] 0.0, 128
      %1195 = vxpose.xlu0.b32.cont [8/16] 0.0, 128
      %1196 = vxpose.xlu0.b32.cont [9/16] 0.0, 128
      %1197 = vxpose.xlu0.b32.cont [10/16] 0.0, 128
      %1198 = vxpose.xlu0.b32.cont [11/16] 0.0, 128
      %1199 = vxpose.xlu0.b32.cont [12/16] 0.0, 128
      %1200 = vxpose.xlu0.b32.cont [13/16] 0.0, 128
      %1201 = vxpose.xlu0.b32.cont [14/16] 0.0, 128
      %1202 = vxpose.xlu0.b32.cont [15/16] 0.0, 128
      %1203 = vxpose.xlu0.b32.end [16/16] 0.0, 128
      %v1204 = vpop.trf.xlu0
      %v1205 = vpop.trf.xlu0
      %v1206 = vpop.trf.xlu0
      %v1207 = vpop.trf.xlu0
      %v1208 = vpop.trf.xlu0
      %v1209 = vpop.trf.xlu0
      %v1210 = vpop.trf.xlu0
      %v1211 = vpop.trf.xlu0
      %v1212 = vpop.trf.xlu0
      %v1213 = vpop.trf.xlu0
      %v1214 = vpop.trf.xlu0
      %v1215 = vpop.trf.xlu0
      %v1216 = vpop.trf.xlu0
      %v1217 = vpop.trf.xlu0
      %v1218 = vpop.trf.xlu0
      %v1219 = vpop.trf.xlu0
      %v1220 = vpack.c.bf16 %v1205, %v1204
      %v1221 = vpack.c.bf16 %v1207, %v1206
      %1222 = vrot.lane.b32.xlu0 %v758, 32
      %v1223 = vpop.permute.xlu0 %1222
      %v1225 = vsel %vm793, %v1223, 0
      %1227 = vmatprep.subr.bf16.mxu0 0
      %1228 = vmatpush1.bf16.msra.mxu0 %v1220
      %1229 = vmatprep.subr.bf16.mxu0 0
      %1230 = vmatpush1.bf16.msra.mxu0 %v1221
      %1231 = vmatprep.subr.bf16.mxu0 0
      %1232 = vmatpush1.bf16.msra.mxu0 0
      %1233 = vmatprep.subr.bf16.mxu0 0
      %1234 = vmatpush1.bf16.msra.mxu0 0
      %1235 = vmatprep.subr.bf16.mxu0 0
      %1236 = vmatpush1.bf16.msra.mxu0 0
      %1237 = vmatprep.subr.bf16.mxu0 0
      %1238 = vmatpush1.bf16.msra.mxu0 0
      %1239 = vmatprep.subr.bf16.mxu0 0
      %1240 = vmatpush1.bf16.msra.mxu0 0
      %1241 = vmatprep.subr.bf16.mxu0 0
      %1242 = vmatpush1.bf16.msra.mxu0 0
      %1243 = vmatprep.subr.bf16.mxu0 0
      %1244 = vmatpush1.bf16.msra.mxu0 0
      %1245 = vmatprep.subr.bf16.mxu0 0
      %1246 = vmatpush1.bf16.msra.mxu0 0
      %1247 = vmatprep.subr.bf16.mxu0 0
      %1248 = vmatpush1.bf16.msra.mxu0 0
      %1249 = vmatprep.subr.bf16.mxu0 0
      %1250 = vmatpush1.bf16.msra.mxu0 0
      %1251 = vmatprep.subr.bf16.mxu0 0
      %1252 = vmatpush1.bf16.msra.mxu0 0
      %1253 = vmatprep.subr.bf16.mxu0 0
      %1254 = vmatpush1.bf16.msra.mxu0 0
      %1255 = vmatprep.subr.bf16.mxu0 0
      %1256 = vmatpush1.bf16.msra.mxu0 0
      %1257 = vmatprep.subr.bf16.mxu0 0
      %1258 = vmatpush1.bf16.msra.mxu0 0
      %1259 = vmatprep.mubr.bf16.mxu0 0
      %1260 = vmatmul.mubr.bf16.gmra.mrb[0].mxu0 %v1225
      %v1261 = vpop.f32.mrb[0].mxu0
      %v1262 = vadd.f32 0.0, %v1261
      %v1263 = vpop.f32.mrb[0].mxu0
      %v1264 = vpop.f32.mrb[0].mxu0
      %v1265 = vpop.f32.mrb[0].mxu0
      %1266 = vdwg.mxu0
      %v1267 = vsel %vm837, %v1262, -inf
      %1268 = vmax.xlane.f32.xlu0 %v1267
      %v1269 = vpop.xlane.xlu0 %1268
      %v1270 = vsub.f32 %v1262, %v1269
      %v1271 = vmul.f32 %v1270, 1.442695
      %v1272 = vpow.pop %v1271
      %v1273 = vsel %vm837, %v1272, 0.0
      %1274 = vadd.xlane.f32.xlu0 %v1273
      %v1275 = vpop.xlane.xlu0 %1274
      %v1276 = vrcp.pop %v1275
      %v1277 = vmul.f32 %v1272, %v1276
      %v1278 = vpack.c.bf16 %v1277, %v1277
      %1279 = vrot.lane.b32.xlu0 %v850, 32
      %v1280 = vpop.permute.xlu0 %1279
      %v1282 = vsel %vm837, %v1278, 0
      %v1285 = vsel %vm854, %v1280, 0
      %1287 = vmatprep.subr.bf16.mxu0 0
      %1288 = vmatpush1.bf16.msra.mxu0 %v1285
      %1289 = vmatprep.subr.bf16.mxu0 0
      %1290 = vmatpush1.bf16.msra.mxu0 0
      %1291 = vmatprep.subr.bf16.mxu0 0
      %1292 = vmatpush1.bf16.msra.mxu0 0
      %1293 = vmatprep.subr.bf16.mxu0 0
      %1294 = vmatpush1.bf16.msra.mxu0 0
      %1295 = vmatprep.subr.bf16.mxu0 0
      %1296 = vmatpush1.bf16.msra.mxu0 0
      %1297 = vmatprep.subr.bf16.mxu0 0
      %1298 = vmatpush1.bf16.msra.mxu0 0
      %1299 = vmatprep.subr.bf16.mxu0 0
      %1300 = vmatpush1.bf16.msra.mxu0 0
      %1301 = vmatprep.subr.bf16.mxu0 0
      %1302 = vmatpush1.bf16.msra.mxu0 0
      %1303 = vmatprep.subr.bf16.mxu0 0
      %1304 = vmatpush1.bf16.msra.mxu0 0
      %1305 = vmatprep.subr.bf16.mxu0 0
      %1306 = vmatpush1.bf16.msra.mxu0 0
      %1307 = vmatprep.subr.bf16.mxu0 0
      %1308 = vmatpush1.bf16.msra.mxu0 0
      %1309 = vmatprep.subr.bf16.mxu0 0
      %1310 = vmatpush1.bf16.msra.mxu0 0
      %1311 = vmatprep.subr.bf16.mxu0 0
      %1312 = vmatpush1.bf16.msra.mxu0 0
      %1313 = vmatprep.subr.bf16.mxu0 0
      %1314 = vmatpush1.bf16.msra.mxu0 0
      %1315 = vmatprep.subr.bf16.mxu0 0
      %1316 = vmatpush1.bf16.msra.mxu0 0
      %1317 = vmatprep.subr.bf16.mxu0 0
      %1318 = vmatpush1.bf16.msra.mxu0 0
      %1319 = vmatprep.mubr.bf16.mxu0 0
      %1320 = vmatmul.mubr.bf16.gmra.mrb[0].mxu0 %v1282
      %v1321 = vpop.f32.mrb[0].mxu0
      %v1322 = vadd.f32 0.0, %v1321
      %v1323 = vpop.f32.mrb[0].mxu0
      %v1324 = vpop.f32.mrb[0].mxu0
      %v1325 = vpop.f32.mrb[0].mxu0
      %1326 = vdwg.mxu0
      %1328 = vrot.lane.b32.xlu0 %v1038, 32
      %v1329 = vpop.permute.xlu0 %1328
      %1332 = vrot.lane.b32.xlu0 %v1180, 64
      %v1333 = vpop.permute.xlu0 %1332
      %1336 = vrot.lane.b32.xlu0 %v1322, 96
      %v1337 = vpop.permute.xlu0 %1336
      %v1339 = vsel %vm793, %v893, %v1329
      %vm1340 = vcmask 523264
      %v1341 = vsel %vm1340, %v1339, %v1333
      %vm1342 = vcmask 785408
      %v1343 = vsel %vm1342, %v1341, %v1337
      %v1344 = vpack.c.bf16 %v1343, %v1343
      %v1345 = vld [vmem:[%s4] sm:$0xf]
      %v1346 = vld [vmem:[%s4 + $0x4] sm:$0xf]
      %v1347 = vld [vmem:[%s4 + $0x8] sm:$0xf]
      %v1348 = vld [vmem:[%s4 + $0xc] sm:$0xf]
      %v1349 = vld [vmem:[%s4 + $0x10] sm:$0xf]
      %v1350 = vld [vmem:[%s4 + $0x14] sm:$0xf]
      %v1351 = vld [vmem:[%s4 + $0x18] sm:$0xf]
      %v1352 = vld [vmem:[%s4 + $0x1c] sm:$0xf]
      %v1353 = vld [vmem:[%s4 + $0x20] sm:$0xf]
      %v1354 = vld [vmem:[%s4 + $0x24] sm:$0xf]
      %v1355 = vld [vmem:[%s4 + $0x28] sm:$0xf]
      %v1356 = vld [vmem:[%s4 + $0x2c] sm:$0xf]
      %v1357 = vld [vmem:[%s4 + $0x30] sm:$0xf]
      %v1358 = vld [vmem:[%s4 + $0x34] sm:$0xf]
      %v1359 = vld [vmem:[%s4 + $0x38] sm:$0xf]
      %v1360 = vld [vmem:[%s4 + $0x3c] sm:$0xf]
      %v1361 = vld [vmem:[%s5] sm:$0x1]
      %v1363 = vlaneseq
      %v1364 = vshrl.u32 %v1363, 7
      %v1365 = vsub.s32 0, %v1364
      %v1366 = vrot.slane %v1361, %v1365
      %v1384 = vunpack.c.l.b16 %v1345
      %v1385 = vunpack.c.l.b16 %v1346
      %v1386 = vunpack.c.l.b16 %v1347
      %v1387 = vunpack.c.l.b16 %v1348
      %v1388 = vunpack.c.l.b16 %v1349
      %v1389 = vunpack.c.l.b16 %v1350
      %v1390 = vunpack.c.l.b16 %v1351
      %v1391 = vunpack.c.l.b16 %v1352
      %v1392 = vunpack.c.l.b16 %v1353
      %v1393 = vunpack.c.l.b16 %v1354
      %v1394 = vunpack.c.l.b16 %v1355
      %v1395 = vunpack.c.l.b16 %v1356
      %v1396 = vunpack.c.l.b16 %v1357
      %v1397 = vunpack.c.l.b16 %v1358
      %v1398 = vunpack.c.l.b16 %v1359
      %v1399 = vunpack.c.l.b16 %v1360
      %v1400 = vpack.c.b16 %v1385, %v1384
      %v1401 = vpack.c.b16 %v1387, %v1386
      %v1402 = vpack.c.b16 %v1389, %v1388
      %v1403 = vpack.c.b16 %v1391, %v1390
      %v1404 = vpack.c.b16 %v1393, %v1392
      %v1405 = vpack.c.b16 %v1395, %v1394
      %v1406 = vpack.c.b16 %v1397, %v1396
      %v1407 = vpack.c.b16 %v1399, %v1398
      %1416 = vmatprep.subr.bf16.mxu0 0
      %1417 = vmatpush1.bf16.msra.mxu0 %v1400
      %1418 = vmatprep.subr.bf16.mxu0 0
      %1419 = vmatpush1.bf16.msra.mxu0 %v1401
      %1420 = vmatprep.subr.bf16.mxu0 0
      %1421 = vmatpush1.bf16.msra.mxu0 %v1402
      %1422 = vmatprep.subr.bf16.mxu0 0
      %1423 = vmatpush1.bf16.msra.mxu0 %v1403
      %1424 = vmatprep.subr.bf16.mxu0 0
      %1425 = vmatpush1.bf16.msra.mxu0 %v1404
      %1426 = vmatprep.subr.bf16.mxu0 0
      %1427 = vmatpush1.bf16.msra.mxu0 %v1405
      %1428 = vmatprep.subr.bf16.mxu0 0
      %1429 = vmatpush1.bf16.msra.mxu0 %v1406
      %1430 = vmatprep.subr.bf16.mxu0 0
      %1431 = vmatpush1.bf16.msra.mxu0 %v1407
      %1432 = vmatprep.subr.bf16.mxu0 0
      %1433 = vmatpush1.bf16.msra.mxu0 0
      %1434 = vmatprep.subr.bf16.mxu0 0
      %1435 = vmatpush1.bf16.msra.mxu0 0
      %1436 = vmatprep.subr.bf16.mxu0 0
      %1437 = vmatpush1.bf16.msra.mxu0 0
      %1438 = vmatprep.subr.bf16.mxu0 0
      %1439 = vmatpush1.bf16.msra.mxu0 0
      %1440 = vmatprep.subr.bf16.mxu0 0
      %1441 = vmatpush1.bf16.msra.mxu0 0
      %1442 = vmatprep.subr.bf16.mxu0 0
      %1443 = vmatpush1.bf16.msra.mxu0 0
      %1444 = vmatprep.subr.bf16.mxu0 0
      %1445 = vmatpush1.bf16.msra.mxu0 0
      %1446 = vmatprep.subr.bf16.mxu0 0
      %1447 = vmatpush1.bf16.msra.mxu0 0
      %1448 = vmatprep.mubr.bf16.mxu0 0
      %1449 = vmatmul.mubr.bf16.gmra.mrb[0].mxu0 %v1344
      %v1450 = vpop.f32.mrb[0].mxu0
      %v1451 = vadd.f32 %v1366, %v1450
      %v1452 = vpop.f32.mrb[0].mxu0
      %v1453 = vpop.f32.mrb[0].mxu0
      %v1454 = vpop.f32.mrb[0].mxu0
      %1455 = vdwg.mxu0
      %v1456 = vadd.f32 %v643, %v1451
      %1457 = vadd.xlane.f32.xlu0 %v1456
      %v1458 = vpop.xlane.xlu0 %1457
      %v1459 = vrcp.pop 128.0
      %v1460 = vmul.f32 %v1458, %v1459
      %v1461 = vsub.f32 %v1456, %v1460
      %v1462 = vmul.f32 %v1461, %v1461
      %1463 = vadd.xlane.f32.xlu0 %v1462
      %v1464 = vpop.xlane.xlu0 %1463
      %v1465 = vmul.f32 %v1464, %v1459
      %v1466 = vadd.f32 %v1465, 1e-05
      %v1467 = vrsqrt.pop %v1466
      %v1468 = vmul.f32 %v1461, %v1467
      %v1469 = vld [vmem:[%s14] sm:$0x1]
      %v1471 = vlaneseq
      %v1472 = vshrl.u32 %v1471, 7
      %v1473 = vsub.s32 0, %v1472
      %v1474 = vrot.slane %v1469, %v1473
      %v1476 = vmul.f32 %v1468, %v1474
      %v1477 = vld [vmem:[%s15] sm:$0x1]
      %v1479 = vlaneseq
      %v1480 = vshrl.u32 %v1479, 7
      %v1481 = vsub.s32 0, %v1480
      %v1482 = vrot.slane %v1477, %v1481
      %v1484 = vadd.f32 %v1476, %v1482
      %v1485 = vpack.c.bf16 %v1484, %v1484
      %v1486 = vld [vmem:[%s6] sm:$0xf]
      %v1487 = vld [vmem:[%s6 + $0x4] sm:$0xf]
      %v1488 = vld [vmem:[%s6 + $0x8] sm:$0xf]
      %v1489 = vld [vmem:[%s6 + $0xc] sm:$0xf]
      %v1490 = vld [vmem:[%s6 + $0x10] sm:$0xf]
      %v1491 = vld [vmem:[%s6 + $0x14] sm:$0xf]
      %v1492 = vld [vmem:[%s6 + $0x18] sm:$0xf]
      %v1493 = vld [vmem:[%s6 + $0x1c] sm:$0xf]
      %v1494 = vld [vmem:[%s6 + $0x20] sm:$0xf]
      %v1495 = vld [vmem:[%s6 + $0x24] sm:$0xf]
      %v1496 = vld [vmem:[%s6 + $0x28] sm:$0xf]
      %v1497 = vld [vmem:[%s6 + $0x2c] sm:$0xf]
      %v1498 = vld [vmem:[%s6 + $0x30] sm:$0xf]
      %v1499 = vld [vmem:[%s6 + $0x34] sm:$0xf]
      %v1500 = vld [vmem:[%s6 + $0x38] sm:$0xf]
      %v1501 = vld [vmem:[%s6 + $0x3c] sm:$0xf]
      %v1502 = vld [vmem:[%s7] sm:$0x1]
      %v1504 = vlaneseq
      %v1505 = vshrl.u32 %v1504, 7
      %v1506 = vsub.s32 0, %v1505
      %v1507 = vrot.slane %v1502, %v1506
      %v1525 = vunpack.c.l.b16 %v1486
      %v1526 = vunpack.c.l.b16 %v1487
      %v1527 = vunpack.c.l.b16 %v1488
      %v1528 = vunpack.c.l.b16 %v1489
      %v1529 = vunpack.c.l.b16 %v1490
      %v1530 = vunpack.c.l.b16 %v1491
      %v1531 = vunpack.c.l.b16 %v1492
      %v1532 = vunpack.c.l.b16 %v1493
      %v1533 = vunpack.c.l.b16 %v1494
      %v1534 = vunpack.c.l.b16 %v1495
      %v1535 = vunpack.c.l.b16 %v1496
      %v1536 = vunpack.c.l.b16 %v1497
      %v1537 = vunpack.c.l.b16 %v1498
      %v1538 = vunpack.c.l.b16 %v1499
      %v1539 = vunpack.c.l.b16 %v1500
      %v1540 = vunpack.c.l.b16 %v1501
      %v1541 = vpack.c.b16 %v1526, %v1525
      %v1542 = vpack.c.b16 %v1528, %v1527
      %v1543 = vpack.c.b16 %v1530, %v1529
      %v1544 = vpack.c.b16 %v1532, %v1531
      %v1545 = vpack.c.b16 %v1534, %v1533
      %v1546 = vpack.c.b16 %v1536, %v1535
      %v1547 = vpack.c.b16 %v1538, %v1537
      %v1548 = vpack.c.b16 %v1540, %v1539
      %1557 = vmatprep.subr.bf16.mxu0 0
      %1558 = vmatpush1.bf16.msra.mxu0 %v1541
      %1559 = vmatprep.subr.bf16.mxu0 0
      %1560 = vmatpush1.bf16.msra.mxu0 %v1542
      %1561 = vmatprep.subr.bf16.mxu0 0
      %1562 = vmatpush1.bf16.msra.mxu0 %v1543
      %1563 = vmatprep.subr.bf16.mxu0 0
      %1564 = vmatpush1.bf16.msra.mxu0 %v1544
      %1565 = vmatprep.subr.bf16.mxu0 0
      %1566 = vmatpush1.bf16.msra.mxu0 %v1545
      %1567 = vmatprep.subr.bf16.mxu0 0
      %1568 = vmatpush1.bf16.msra.mxu0 %v1546
      %1569 = vmatprep.subr.bf16.mxu0 0
      %1570 = vmatpush1.bf16.msra.mxu0 %v1547
      %1571 = vmatprep.subr.bf16.mxu0 0
      %1572 = vmatpush1.bf16.msra.mxu0 %v1548
      %1573 = vmatprep.subr.bf16.mxu0 0
      %1574 = vmatpush1.bf16.msra.mxu0 0
      %1575 = vmatprep.subr.bf16.mxu0 0
      %1576 = vmatpush1.bf16.msra.mxu0 0
      %1577 = vmatprep.subr.bf16.mxu0 0
      %1578 = vmatpush1.bf16.msra.mxu0 0
      %1579 = vmatprep.subr.bf16.mxu0 0
      %1580 = vmatpush1.bf16.msra.mxu0 0
      %1581 = vmatprep.subr.bf16.mxu0 0
      %1582 = vmatpush1.bf16.msra.mxu0 0
      %1583 = vmatprep.subr.bf16.mxu0 0
      %1584 = vmatpush1.bf16.msra.mxu0 0
      %1585 = vmatprep.subr.bf16.mxu0 0
      %1586 = vmatpush1.bf16.msra.mxu0 0
      %1587 = vmatprep.subr.bf16.mxu0 0
      %1588 = vmatpush1.bf16.msra.mxu0 0
      %1589 = vmatprep.mubr.bf16.mxu0 0
      %1590 = vmatmul.mubr.bf16.gmra.mrb[0].mxu0 %v1485
      %v1591 = vpop.f32.mrb[0].mxu0
      %v1592 = vadd.f32 %v1507, %v1591
      %v1593 = vpop.f32.mrb[0].mxu0
      %v1594 = vpop.f32.mrb[0].mxu0
      %v1595 = vpop.f32.mrb[0].mxu0
      %1596 = vdwg.mxu0
      %v1597 = vpack.c.bf16 %v644, %v644
      %1598 = vmatprep.subr.bf16.mxu0 0
      %1599 = vmatpush1.bf16.msra.mxu0 %v1541
      %1600 = vmatprep.subr.bf16.mxu0 0
      %1601 = vmatpush1.bf16.msra.mxu0 %v1542
      %1602 = vmatprep.subr.bf16.mxu0 0
      %1603 = vmatpush1.bf16.msra.mxu0 %v1543
      %1604 = vmatprep.subr.bf16.mxu0 0
      %1605 = vmatpush1.bf16.msra.mxu0 %v1544
      %1606 = vmatprep.subr.bf16.mxu0 0
      %1607 = vmatpush1.bf16.msra.mxu0 %v1545
      %1608 = vmatprep.subr.bf16.mxu0 0
      %1609 = vmatpush1.bf16.msra.mxu0 %v1546
      %1610 = vmatprep.subr.bf16.mxu0 0
      %1611 = vmatpush1.bf16.msra.mxu0 %v1547
      %1612 = vmatprep.subr.bf16.mxu0 0
      %1613 = vmatpush1.bf16.msra.mxu0 %v1548
      %1614 = vmatprep.subr.bf16.mxu0 0
      %1615 = vmatpush1.bf16.msra.mxu0 0
      %1616 = vmatprep.subr.bf16.mxu0 0
      %1617 = vmatpush1.bf16.msra.mxu0 0
      %1618 = vmatprep.subr.bf16.mxu0 0
      %1619 = vmatpush1.bf16.msra.mxu0 0
      %1620 = vmatprep.subr.bf16.mxu0 0
      %1621 = vmatpush1.bf16.msra.mxu0 0
      %1622 = vmatprep.subr.bf16.mxu0 0
      %1623 = vmatpush1.bf16.msra.mxu0 0
      %1624 = vmatprep.subr.bf16.mxu0 0
      %1625 = vmatpush1.bf16.msra.mxu0 0
      %1626 = vmatprep.subr.bf16.mxu0 0
      %1627 = vmatpush1.bf16.msra.mxu0 0
      %1628 = vmatprep.subr.bf16.mxu0 0
      %1629 = vmatpush1.bf16.msra.mxu0 0
      %1630 = vmatprep.mubr.bf16.mxu0 0
      %1631 = vmatmul.mubr.bf16.gmra.mrb[0].mxu0 %v1597
      %v1632 = vpop.f32.mrb[0].mxu0
      %v1633 = vadd.f32 %v1507, %v1632
      %v1634 = vpop.f32.mrb[0].mxu0
      %v1635 = vpop.f32.mrb[0].mxu0
      %v1636 = vpop.f32.mrb[0].mxu0
      %1637 = vdwg.mxu0
      %v1638 = vmul.f32 %v1592, 0.17677669
      %v1639 = vpack.c.bf16 %v1638, %v1638
      %1640 = vxpose.xlu0.b32.start [1/16] %v1633, 128
      %1641 = vxpose.xlu0.b32.cont [2/16] 0.0, 128
      %1642 = vxpose.xlu0.b32.cont [3/16] 0.0, 128
      %1643 = vxpose.xlu0.b32.cont [4/16] 0.0, 128
      %1644 = vxpose.xlu0.b32.cont [5/16] 0.0, 128
      %1645 = vxpose.xlu0.b32.cont [6/16] 0.0, 128
      %1646 = vxpose.xlu0.b32.cont [7/16] 0.0, 128
      %1647 = vxpose.xlu0.b32.cont [8/16] 0.0, 128
      %1648 = vxpose.xlu0.b32.cont [9/16] 0.0, 128
      %1649 = vxpose.xlu0.b32.cont [10/16] 0.0, 128
      %1650 = vxpose.xlu0.b32.cont [11/16] 0.0, 128
      %1651 = vxpose.xlu0.b32.cont [12/16] 0.0, 128
      %1652 = vxpose.xlu0.b32.cont [13/16] 0.0, 128
      %1653 = vxpose.xlu0.b32.cont [14/16] 0.0, 128
      %1654 = vxpose.xlu0.b32.cont [15/16] 0.0, 128
      %1655 = vxpose.xlu0.b32.end [16/16] 0.0, 128
      %v1656 = vpop.trf.xlu0
      %v1657 = vpop.trf.xlu0
      %v1658 = vpop.trf.xlu0
      %v1659 = vpop.trf.xlu0
      %v1660 = vpop.trf.xlu0
      %v1661 = vpop.trf.xlu0
      %v1662 = vpop.trf.xlu0
      %v1663 = vpop.trf.xlu0
      %v1664 = vpop.trf.xlu0
      %v1665 = vpop.trf.xlu0
      %v1666 = vpop.trf.xlu0
      %v1667 = vpop.trf.xlu0
      %v1668 = vpop.trf.xlu0
      %v1669 = vpop.trf.xlu0
      %v1670 = vpop.trf.xlu0
      %v1671 = vpop.trf.xlu0
      %v1672 = vpack.c.bf16 %v1657, %v1656
      %v1673 = vpack.c.bf16 %v1659, %v1658
      %v1675 = vsel %vm793, %v1639, 0
      %1677 = vmatprep.subr.bf16.mxu0 0
      %1678 = vmatpush1.bf16.msra.mxu0 %v1672
      %1679 = vmatprep.subr.bf16.mxu0 0
      %1680 = vmatpush1.bf16.msra.mxu0 %v1673
      %1681 = vmatprep.subr.bf16.mxu0 0
      %1682 = vmatpush1.bf16.msra.mxu0 0
      %1683 = vmatprep.subr.bf16.mxu0 0
      %1684 = vmatpush1.bf16.msra.mxu0 0
      %1685 = vmatprep.subr.bf16.mxu0 0
      %1686 = vmatpush1.bf16.msra.mxu0 0
      %1687 = vmatprep.subr.bf16.mxu0 0
      %1688 = vmatpush1.bf16.msra.mxu0 0
      %1689 = vmatprep.subr.bf16.mxu0 0
      %1690 = vmatpush1.bf16.msra.mxu0 0
      %1691 = vmatprep.subr.bf16.mxu0 0
      %1692 = vmatpush1.bf16.msra.mxu0 0
      %1693 = vmatprep.subr.bf16.mxu0 0
      %1694 = vmatpush1.bf16.msra.mxu0 0
      %1695 = vmatprep.subr.bf16.mxu0 0
      %1696 = vmatpush1.bf16.msra.mxu0 0
      %1697 = vmatprep.subr.bf16.mxu0 0
      %1698 = vmatpush1.bf16.msra.mxu0 0
      %1699 = vmatprep.subr.bf16.mxu0 0
      %1700 = vmatpush1.bf16.msra.mxu0 0
      %1701 = vmatprep.subr.bf16.mxu0 0
      %1702 = vmatpush1.bf16.msra.mxu0 0
      %1703 = vmatprep.subr.bf16.mxu0 0
      %1704 = vmatpush1.bf16.msra.mxu0 0
      %1705 = vmatprep.subr.bf16.mxu0 0
      %1706 = vmatpush1.bf16.msra.mxu0 0
      %1707 = vmatprep.subr.bf16.mxu0 0
      %1708 = vmatpush1.bf16.msra.mxu0 0
      %1709 = vmatprep.mubr.bf16.mxu0 0
      %1710 = vmatmul.mubr.bf16.gmra.mrb[0].mxu0 %v1675
      %v1711 = vpop.f32.mrb[0].mxu0
      %v1712 = vadd.f32 0.0, %v1711
      %v1713 = vpop.f32.mrb[0].mxu0
      %v1714 = vpop.f32.mrb[0].mxu0
      %v1715 = vpop.f32.mrb[0].mxu0
      %1716 = vdwg.mxu0
      %v1717 = vsel %vm837, %v1712, -inf
      %1718 = vmax.xlane.f32.xlu0 %v1717
      %v1719 = vpop.xlane.xlu0 %1718
      %v1720 = vsub.f32 %v1712, %v1719
      %v1721 = vmul.f32 %v1720, 1.442695
      %v1722 = vpow.pop %v1721
      %v1723 = vsel %vm837, %v1722, 0.0
      %1724 = vadd.xlane.f32.xlu0 %v1723
      %v1725 = vpop.xlane.xlu0 %1724
      %v1726 = vrcp.pop %v1725
      %v1727 = vmul.f32 %v1722, %v1726
      %v1728 = vpack.c.bf16 %v1727, %v1727
      %v1729 = vpack.c.bf16 %v1633, %v1633
      %v1731 = vsel %vm837, %v1728, 0
      %v1734 = vsel %vm854, %v1729, 0
      %1736 = vmatprep.subr.bf16.mxu0 0
      %1737 = vmatpush1.bf16.msra.mxu0 %v1734
      %1738 = vmatprep.subr.bf16.mxu0 0
      %1739 = vmatpush1.bf16.msra.mxu0 0
      %1740 = vmatprep.subr.bf16.mxu0 0
      %1741 = vmatpush1.bf16.msra.mxu0 0
      %1742 = vmatprep.subr.bf16.mxu0 0
      %1743 = vmatpush1.bf16.msra.mxu0 0
      %1744 = vmatprep.subr.bf16.mxu0 0
      %1745 = vmatpush1.bf16.msra.mxu0 0
      %1746 = vmatprep.subr.bf16.mxu0 0
      %1747 = vmatpush1.bf16.msra.mxu0 0
      %1748 = vmatprep.subr.bf16.mxu0 0
      %1749 = vmatpush1.bf16.msra.mxu0 0
      %1750 = vmatprep.subr.bf16.mxu0 0
      %1751 = vmatpush1.bf16.msra.mxu0 0
      %1752 = vmatprep.subr.bf16.mxu0 0
      %1753 = vmatpush1.bf16.msra.mxu0 0
      %1754 = vmatprep.subr.bf16.mxu0 0
      %1755 = vmatpush1.bf16.msra.mxu0 0
      %1756 = vmatprep.subr.bf16.mxu0 0
      %1757 = vmatpush1.bf16.msra.mxu0 0
      %1758 = vmatprep.subr.bf16.mxu0 0
      %1759 = vmatpush1.bf16.msra.mxu0 0
      %1760 = vmatprep.subr.bf16.mxu0 0
      %1761 = vmatpush1.bf16.msra.mxu0 0
      %1762 = vmatprep.subr.bf16.mxu0 0
      %1763 = vmatpush1.bf16.msra.mxu0 0
      %1764 = vmatprep.subr.bf16.mxu0 0
      %1765 = vmatpush1.bf16.msra.mxu0 0
      %1766 = vmatprep.subr.bf16.mxu0 0
      %1767 = vmatpush1.bf16.msra.mxu0 0
      %1768 = vmatprep.mubr.bf16.mxu0 0
      %1769 = vmatmul.mubr.bf16.gmra.mrb[0].mxu0 %v1731
      %v1770 = vpop.f32.mrb[0].mxu0
      %v1771 = vadd.f32 0.0, %v1770
      %v1772 = vpop.f32.mrb[0].mxu0
      %v1773 = vpop.f32.mrb[0].mxu0
      %v1774 = vpop.f32.mrb[0].mxu0
      %1775 = vdwg.mxu0
      %1777 = vrot.lane.b32.xlu0 %v1633, 96
      %v1778 = vpop.permute.xlu0 %1777
      %1780 = vxpose.xlu0.b32.start [1/16] %v1778, 128
      %1781 = vxpose.xlu0.b32.cont [2/16] 0.0, 128
      %1782 = vxpose.xlu0.b32.cont [3/16] 0.0, 128
      %1783 = vxpose.xlu0.b32.cont [4/16] 0.0, 128
      %1784 = vxpose.xlu0.b32.cont [5/16] 0.0, 128
      %1785 = vxpose.xlu0.b32.cont [6/16] 0.0, 128
      %1786 = vxpose.xlu0.b32.cont [7/16] 0.0, 128
      %1787 = vxpose.xlu0.b32.cont [8/16] 0.0, 128
      %1788 = vxpose.xlu0.b32.cont [9/16] 0.0, 128
      %1789 = vxpose.xlu0.b32.cont [10/16] 0.0, 128
      %1790 = vxpose.xlu0.b32.cont [11/16] 0.0, 128
      %1791 = vxpose.xlu0.b32.cont [12/16] 0.0, 128
      %1792 = vxpose.xlu0.b32.cont [13/16] 0.0, 128
      %1793 = vxpose.xlu0.b32.cont [14/16] 0.0, 128
      %1794 = vxpose.xlu0.b32.cont [15/16] 0.0, 128
      %1795 = vxpose.xlu0.b32.end [16/16] 0.0, 128
      %v1796 = vpop.trf.xlu0
      %v1797 = vpop.trf.xlu0
      %v1798 = vpop.trf.xlu0
      %v1799 = vpop.trf.xlu0
      %v1800 = vpop.trf.xlu0
      %v1801 = vpop.trf.xlu0
      %v1802 = vpop.trf.xlu0
      %v1803 = vpop.trf.xlu0
      %v1804 = vpop.trf.xlu0
      %v1805 = vpop.trf.xlu0
      %v1806 = vpop.trf.xlu0
      %v1807 = vpop.trf.xlu0
      %v1808 = vpop.trf.xlu0
      %v1809 = vpop.trf.xlu0
      %v1810 = vpop.trf.xlu0
      %v1811 = vpop.trf.xlu0
      %v1812 = vpack.c.bf16 %v1797, %v1796
      %v1813 = vpack.c.bf16 %v1799, %v1798
      %1815 = vrot.lane.b32.xlu0 %v1639, 96
      %v1816 = vpop.permute.xlu0 %1815
      %v1818 = vsel %vm793, %v1816, 0
      %1820 = vmatprep.subr.bf16.mxu0 0
      %1821 = vmatpush1.bf16.msra.mxu0 %v1812
      %1822 = vmatprep.subr.bf16.mxu0 0
      %1823 = vmatpush1.bf16.msra.mxu0 %v1813
      %1824 = vmatprep.subr.bf16.mxu0 0
      %1825 = vmatpush1.bf16.msra.mxu0 0
      %1826 = vmatprep.subr.bf16.mxu0 0
      %1827 = vmatpush1.bf16.msra.mxu0 0
      %1828 = vmatprep.subr.bf16.mxu0 0
      %1829 = vmatpush1.bf16.msra.mxu0 0
      %1830 = vmatprep.subr.bf16.mxu0 0
      %1831 = vmatpush1.bf16.msra.mxu0 0
      %1832 = vmatprep.subr.bf16.mxu0 0
      %1833 = vmatpush1.bf16.msra.mxu0 0
      %1834 = vmatprep.subr.bf16.mxu0 0
      %1835 = vmatpush1.bf16.msra.mxu0 0
      %1836 = vmatprep.subr.bf16.mxu0 0
      %1837 = vmatpush1.bf16.msra.mxu0 0
      %1838 = vmatprep.subr.bf16.mxu0 0
      %1839 = vmatpush1.bf16.msra.mxu0 0
      %1840 = vmatprep.subr.bf16.mxu0 0
      %1841 = vmatpush1.bf16.msra.mxu0 0
      %1842 = vmatprep.subr.bf16.mxu0 0
      %1843 = vmatpush1.bf16.msra.mxu0 0
      %1844 = vmatprep.subr.bf16.mxu0 0
      %1845 = vmatpush1.bf16.msra.mxu0 0
      %1846 = vmatprep.subr.bf16.mxu0 0
      %1847 = vmatpush1.bf16.msra.mxu0 0
      %1848 = vmatprep.subr.bf16.mxu0 0
      %1849 = vmatpush1.bf16.msra.mxu0 0
      %1850 = vmatprep.subr.bf16.mxu0 0
      %1851 = vmatpush1.bf16.msra.mxu0 0
      %1852 = vmatprep.mubr.bf16.mxu0 0
      %1853 = vmatmul.mubr.bf16.gmra.mrb[0].mxu0 %v1818
      %v1854 = vpop.f32.mrb[0].mxu0
      %v1855 = vadd.f32 0.0, %v1854
      %v1856 = vpop.f32.mrb[0].mxu0
      %v1857 = vpop.f32.mrb[0].mxu0
      %v1858 = vpop.f32.mrb[0].mxu0
      %1859 = vdwg.mxu0
      %v1860 = vsel %vm837, %v1855, -inf
      %1861 = vmax.xlane.f32.xlu0 %v1860
      %v1862 = vpop.xlane.xlu0 %1861
      %v1863 = vsub.f32 %v1855, %v1862
      %v1864 = vmul.f32 %v1863, 1.442695
      %v1865 = vpow.pop %v1864
      %v1866 = vsel %vm837, %v1865, 0.0
      %1867 = vadd.xlane.f32.xlu0 %v1866
      %v1868 = vpop.xlane.xlu0 %1867
      %v1869 = vrcp.pop %v1868
      %v1870 = vmul.f32 %v1865, %v1869
      %v1871 = vpack.c.bf16 %v1870, %v1870
      %1873 = vrot.lane.b32.xlu0 %v1729, 96
      %v1874 = vpop.permute.xlu0 %1873
      %v1876 = vsel %vm837, %v1871, 0
      %v1879 = vsel %vm854, %v1874, 0
      %1881 = vmatprep.subr.bf16.mxu0 0
      %1882 = vmatpush1.bf16.msra.mxu0 %v1879
      %1883 = vmatprep.subr.bf16.mxu0 0
      %1884 = vmatpush1.bf16.msra.mxu0 0
      %1885 = vmatprep.subr.bf16.mxu0 0
      %1886 = vmatpush1.bf16.msra.mxu0 0
      %1887 = vmatprep.subr.bf16.mxu0 0
      %1888 = vmatpush1.bf16.msra.mxu0 0
      %1889 = vmatprep.subr.bf16.mxu0 0
      %1890 = vmatpush1.bf16.msra.mxu0 0
      %1891 = vmatprep.subr.bf16.mxu0 0
      %1892 = vmatpush1.bf16.msra.mxu0 0
      %1893 = vmatprep.subr.bf16.mxu0 0
      %1894 = vmatpush1.bf16.msra.mxu0 0
      %1895 = vmatprep.subr.bf16.mxu0 0
      %1896 = vmatpush1.bf16.msra.mxu0 0
      %1897 = vmatprep.subr.bf16.mxu0 0
      %1898 = vmatpush1.bf16.msra.mxu0 0
      %1899 = vmatprep.subr.bf16.mxu0 0
      %1900 = vmatpush1.bf16.msra.mxu0 0
      %1901 = vmatprep.subr.bf16.mxu0 0
      %1902 = vmatpush1.bf16.msra.mxu0 0
      %1903 = vmatprep.subr.bf16.mxu0 0
      %1904 = vmatpush1.bf16.msra.mxu0 0
      %1905 = vmatprep.subr.bf16.mxu0 0
      %1906 = vmatpush1.bf16.msra.mxu0 0
      %1907 = vmatprep.subr.bf16.mxu0 0
      %1908 = vmatpush1.bf16.msra.mxu0 0
      %1909 = vmatprep.subr.bf16.mxu0 0
      %1910 = vmatpush1.bf16.msra.mxu0 0
      %1911 = vmatprep.subr.bf16.mxu0 0
      %1912 = vmatpush1.bf16.msra.mxu0 0
      %1913 = vmatprep.mubr.bf16.mxu0 0
      %1914 = vmatmul.mubr.bf16.gmra.mrb[0].mxu0 %v1876
      %v1915 = vpop.f32.mrb[0].mxu0
      %v1916 = vadd.f32 0.0, %v1915
      %v1917 = vpop.f32.mrb[0].mxu0
      %v1918 = vpop.f32.mrb[0].mxu0
      %v1919 = vpop.f32.mrb[0].mxu0
      %1920 = vdwg.mxu0
      %1921 = vrot.lane.b32.xlu0 %v1633, 64
      %v1922 = vpop.permute.xlu0 %1921
      %1924 = vxpose.xlu0.b32.start [1/16] %v1922, 128
      %1925 = vxpose.xlu0.b32.cont [2/16] 0.0, 128
      %1926 = vxpose.xlu0.b32.cont [3/16] 0.0, 128
      %1927 = vxpose.xlu0.b32.cont [4/16] 0.0, 128
      %1928 = vxpose.xlu0.b32.cont [5/16] 0.0, 128
      %1929 = vxpose.xlu0.b32.cont [6/16] 0.0, 128
      %1930 = vxpose.xlu0.b32.cont [7/16] 0.0, 128
      %1931 = vxpose.xlu0.b32.cont [8/16] 0.0, 128
      %1932 = vxpose.xlu0.b32.cont [9/16] 0.0, 128
      %1933 = vxpose.xlu0.b32.cont [10/16] 0.0, 128
      %1934 = vxpose.xlu0.b32.cont [11/16] 0.0, 128
      %1935 = vxpose.xlu0.b32.cont [12/16] 0.0, 128
      %1936 = vxpose.xlu0.b32.cont [13/16] 0.0, 128
      %1937 = vxpose.xlu0.b32.cont [14/16] 0.0, 128
      %1938 = vxpose.xlu0.b32.cont [15/16] 0.0, 128
      %1939 = vxpose.xlu0.b32.end [16/16] 0.0, 128
      %v1940 = vpop.trf.xlu0
      %v1941 = vpop.trf.xlu0
      %v1942 = vpop.trf.xlu0
      %v1943 = vpop.trf.xlu0
      %v1944 = vpop.trf.xlu0
      %v1945 = vpop.trf.xlu0
      %v1946 = vpop.trf.xlu0
      %v1947 = vpop.trf.xlu0
      %v1948 = vpop.trf.xlu0
      %v1949 = vpop.trf.xlu0
      %v1950 = vpop.trf.xlu0
      %v1951 = vpop.trf.xlu0
      %v1952 = vpop.trf.xlu0
      %v1953 = vpop.trf.xlu0
      %v1954 = vpop.trf.xlu0
      %v1955 = vpop.trf.xlu0
      %v1956 = vpack.c.bf16 %v1941, %v1940
      %v1957 = vpack.c.bf16 %v1943, %v1942
      %1958 = vrot.lane.b32.xlu0 %v1639, 64
      %v1959 = vpop.permute.xlu0 %1958
      %v1961 = vsel %vm793, %v1959, 0
      %1963 = vmatprep.subr.bf16.mxu0 0
      %1964 = vmatpush1.bf16.msra.mxu0 %v1956
      %1965 = vmatprep.subr.bf16.mxu0 0
      %1966 = vmatpush1.bf16.msra.mxu0 %v1957
      %1967 = vmatprep.subr.bf16.mxu0 0
      %1968 = vmatpush1.bf16.msra.mxu0 0
      %1969 = vmatprep.subr.bf16.mxu0 0
      %1970 = vmatpush1.bf16.msra.mxu0 0
      %1971 = vmatprep.subr.bf16.mxu0 0
      %1972 = vmatpush1.bf16.msra.mxu0 0
      %1973 = vmatprep.subr.bf16.mxu0 0
      %1974 = vmatpush1.bf16.msra.mxu0 0
      %1975 = vmatprep.subr.bf16.mxu0 0
      %1976 = vmatpush1.bf16.msra.mxu0 0
      %1977 = vmatprep.subr.bf16.mxu0 0
      %1978 = vmatpush1.bf16.msra.mxu0 0
      %1979 = vmatprep.subr.bf16.mxu0 0
      %1980 = vmatpush1.bf16.msra.mxu0 0
      %1981 = vmatprep.subr.bf16.mxu0 0
      %1982 = vmatpush1.bf16.msra.mxu0 0
      %1983 = vmatprep.subr.bf16.mxu0 0
      %1984 = vmatpush1.bf16.msra.mxu0 0
      %1985 = vmatprep.subr.bf16.mxu0 0
      %1986 = vmatpush1.bf16.msra.mxu0 0
      %1987 = vmatprep.subr.bf16.mxu0 0
      %1988 = vmatpush1.bf16.msra.mxu0 0
      %1989 = vmatprep.subr.bf16.mxu0 0
      %1990 = vmatpush1.bf16.msra.mxu0 0
      %1991 = vmatprep.subr.bf16.mxu0 0
      %1992 = vmatpush1.bf16.msra.mxu0 0
      %1993 = vmatprep.subr.bf16.mxu0 0
      %1994 = vmatpush1.bf16.msra.mxu0 0
      %1995 = vmatprep.mubr.bf16.mxu0 0
      %1996 = vmatmul.mubr.bf16.gmra.mrb[0].mxu0 %v1961
      %v1997 = vpop.f32.mrb[0].mxu0
      %v1998 = vadd.f32 0.0, %v1997
      %v1999 = vpop.f32.mrb[0].mxu0
      %v2000 = vpop.f32.mrb[0].mxu0
      %v2001 = vpop.f32.mrb[0].mxu0
      %2002 = vdwg.mxu0
      %v2003 = vsel %vm837, %v1998, -inf
      %2004 = vmax.xlane.f32.xlu0 %v2003
      %v2005 = vpop.xlane.xlu0 %2004
      %v2006 = vsub.f32 %v1998, %v2005
      %v2007 = vmul.f32 %v2006, 1.442695
      %v2008 = vpow.pop %v2007
      %v2009 = vsel %vm837, %v2008, 0.0
      %2010 = vadd.xlane.f32.xlu0 %v2009
      %v2011 = vpop.xlane.xlu0 %2010
      %v2012 = vrcp.pop %v2011
      %v2013 = vmul.f32 %v2008, %v2012
      %v2014 = vpack.c.bf16 %v2013, %v2013
      %2015 = vrot.lane.b32.xlu0 %v1729, 64
      %v2016 = vpop.permute.xlu0 %2015
      %v2018 = vsel %vm837, %v2014, 0
      %v2021 = vsel %vm854, %v2016, 0
      %2023 = vmatprep.subr.bf16.mxu0 0
      %2024 = vmatpush1.bf16.msra.mxu0 %v2021
      %2025 = vmatprep.subr.bf16.mxu0 0
      %2026 = vmatpush1.bf16.msra.mxu0 0
      %2027 = vmatprep.subr.bf16.mxu0 0
      %2028 = vmatpush1.bf16.msra.mxu0 0
      %2029 = vmatprep.subr.bf16.mxu0 0
      %2030 = vmatpush1.bf16.msra.mxu0 0
      %2031 = vmatprep.subr.bf16.mxu0 0
      %2032 = vmatpush1.bf16.msra.mxu0 0
      %2033 = vmatprep.subr.bf16.mxu0 0
      %2034 = vmatpush1.bf16.msra.mxu0 0
      %2035 = vmatprep.subr.bf16.mxu0 0
      %2036 = vmatpush1.bf16.msra.mxu0 0
      %2037 = vmatprep.subr.bf16.mxu0 0
      %2038 = vmatpush1.bf16.msra.mxu0 0
      %2039 = vmatprep.subr.bf16.mxu0 0
      %2040 = vmatpush1.bf16.msra.mxu0 0
      %2041 = vmatprep.subr.bf16.mxu0 0
      %2042 = vmatpush1.bf16.msra.mxu0 0
      %2043 = vmatprep.subr.bf16.mxu0 0
      %2044 = vmatpush1.bf16.msra.mxu0 0
      %2045 = vmatprep.subr.bf16.mxu0 0
      %2046 = vmatpush1.bf16.msra.mxu0 0
      %2047 = vmatprep.subr.bf16.mxu0 0
      %2048 = vmatpush1.bf16.msra.mxu0 0
      %2049 = vmatprep.subr.bf16.mxu0 0
      %2050 = vmatpush1.bf16.msra.mxu0 0
      %2051 = vmatprep.subr.bf16.mxu0 0
      %2052 = vmatpush1.bf16.msra.mxu0 0
      %2053 = vmatprep.subr.bf16.mxu0 0
      %2054 = vmatpush1.bf16.msra.mxu0 0
      %2055 = vmatprep.mubr.bf16.mxu0 0
      %2056 = vmatmul.mubr.bf16.gmra.mrb[0].mxu0 %v2018
      %v2057 = vpop.f32.mrb[0].mxu0
      %v2058 = vadd.f32 0.0, %v2057
      %v2059 = vpop.f32.mrb[0].mxu0
      %v2060 = vpop.f32.mrb[0].mxu0
      %v2061 = vpop.f32.mrb[0].mxu0
      %2062 = vdwg.mxu0
      %2063 = vrot.lane.b32.xlu0 %v1633, 32
      %v2064 = vpop.permute.xlu0 %2063
      %2066 = vxpose.xlu0.b32.start [1/16] %v2064, 128
      %2067 = vxpose.xlu0.b32.cont [2/16] 0.0, 128
      %2068 = vxpose.xlu0.b32.cont [3/16] 0.0, 128
      %2069 = vxpose.xlu0.b32.cont [4/16] 0.0, 128
      %2070 = vxpose.xlu0.b32.cont [5/16] 0.0, 128
      %2071 = vxpose.xlu0.b32.cont [6/16] 0.0, 128
      %2072 = vxpose.xlu0.b32.cont [7/16] 0.0, 128
      %2073 = vxpose.xlu0.b32.cont [8/16] 0.0, 128
      %2074 = vxpose.xlu0.b32.cont [9/16] 0.0, 128
      %2075 = vxpose.xlu0.b32.cont [10/16] 0.0, 128
      %2076 = vxpose.xlu0.b32.cont [11/16] 0.0, 128
      %2077 = vxpose.xlu0.b32.cont [12/16] 0.0, 128
      %2078 = vxpose.xlu0.b32.cont [13/16] 0.0, 128
      %2079 = vxpose.xlu0.b32.cont [14/16] 0.0, 128
      %2080 = vxpose.xlu0.b32.cont [15/16] 0.0, 128
      %2081 = vxpose.xlu0.b32.end [16/16] 0.0, 128
      %v2082 = vpop.trf.xlu0
      %v2083 = vpop.trf.xlu0
      %v2084 = vpop.trf.xlu0
      %v2085 = vpop.trf.xlu0
      %v2086 = vpop.trf.xlu0
      %v2087 = vpop.trf.xlu0
      %v2088 = vpop.trf.xlu0
      %v2089 = vpop.trf.xlu0
      %v2090 = vpop.trf.xlu0
      %v2091 = vpop.trf.xlu0
      %v2092 = vpop.trf.xlu0
      %v2093 = vpop.trf.xlu0
      %v2094 = vpop.trf.xlu0
      %v2095 = vpop.trf.xlu0
      %v2096 = vpop.trf.xlu0
      %v2097 = vpop.trf.xlu0
      %v2098 = vpack.c.bf16 %v2083, %v2082
      %v2099 = vpack.c.bf16 %v2085, %v2084
      %2100 = vrot.lane.b32.xlu0 %v1639, 32
      %v2101 = vpop.permute.xlu0 %2100
      %v2103 = vsel %vm793, %v2101, 0
      %2105 = vmatprep.subr.bf16.mxu0 0
      %2106 = vmatpush1.bf16.msra.mxu0 %v2098
      %2107 = vmatprep.subr.bf16.mxu0 0
      %2108 = vmatpush1.bf16.msra.mxu0 %v2099
      %2109 = vmatprep.subr.bf16.mxu0 0
      %2110 = vmatpush1.bf16.msra.mxu0 0
      %2111 = vmatprep.subr.bf16.mxu0 0
      %2112 = vmatpush1.bf16.msra.mxu0 0
      %2113 = vmatprep.subr.bf16.mxu0 0
      %2114 = vmatpush1.bf16.msra.mxu0 0
      %2115 = vmatprep.subr.bf16.mxu0 0
      %2116 = vmatpush1.bf16.msra.mxu0 0
      %2117 = vmatprep.subr.bf16.mxu0 0
      %2118 = vmatpush1.bf16.msra.mxu0 0
      %2119 = vmatprep.subr.bf16.mxu0 0
      %2120 = vmatpush1.bf16.msra.mxu0 0
      %2121 = vmatprep.subr.bf16.mxu0 0
      %2122 = vmatpush1.bf16.msra.mxu0 0
      %2123 = vmatprep.subr.bf16.mxu0 0
      %2124 = vmatpush1.bf16.msra.mxu0 0
      %2125 = vmatprep.subr.bf16.mxu0 0
      %2126 = vmatpush1.bf16.msra.mxu0 0
      %2127 = vmatprep.subr.bf16.mxu0 0
      %2128 = vmatpush1.bf16.msra.mxu0 0
      %2129 = vmatprep.subr.bf16.mxu0 0
      %2130 = vmatpush1.bf16.msra.mxu0 0
      %2131 = vmatprep.subr.bf16.mxu0 0
      %2132 = vmatpush1.bf16.msra.mxu0 0
      %2133 = vmatprep.subr.bf16.mxu0 0
      %2134 = vmatpush1.bf16.msra.mxu0 0
      %2135 = vmatprep.subr.bf16.mxu0 0
      %2136 = vmatpush1.bf16.msra.mxu0 0
      %2137 = vmatprep.mubr.bf16.mxu0 0
      %2138 = vmatmul.mubr.bf16.gmra.mrb[0].mxu0 %v2103
      %v2139 = vpop.f32.mrb[0].mxu0
      %v2140 = vadd.f32 0.0, %v2139
      %v2141 = vpop.f32.mrb[0].mxu0
      %v2142 = vpop.f32.mrb[0].mxu0
      %v2143 = vpop.f32.mrb[0].mxu0
      %2144 = vdwg.mxu0
      %v2145 = vsel %vm837, %v2140, -inf
      %2146 = vmax.xlane.f32.xlu0 %v2145
      %v2147 = vpop.xlane.xlu0 %2146
      %v2148 = vsub.f32 %v2140, %v2147
      %v2149 = vmul.f32 %v2148, 1.442695
      %v2150 = vpow.pop %v2149
      %v2151 = vsel %vm837, %v2150, 0.0
      %2152 = vadd.xlane.f32.xlu0 %v2151
      %v2153 = vpop.xlane.xlu0 %2152
      %v2154 = vrcp.pop %v2153
      %v2155 = vmul.f32 %v2150, %v2154
      %v2156 = vpack.c.bf16 %v2155, %v2155
      %2157 = vrot.lane.b32.xlu0 %v1729, 32
      %v2158 = vpop.permute.xlu0 %2157
      %v2160 = vsel %vm837, %v2156, 0
      %v2163 = vsel %vm854, %v2158, 0
      %2165 = vmatprep.subr.bf16.mxu0 0
      %2166 = vmatpush1.bf16.msra.mxu0 %v2163
      %2167 = vmatprep.subr.bf16.mxu0 0
      %2168 = vmatpush1.bf16.msra.mxu0 0
      %2169 = vmatprep.subr.bf16.mxu0 0
      %2170 = vmatpush1.bf16.msra.mxu0 0
      %2171 = vmatprep.subr.bf16.mxu0 0
      %2172 = vmatpush1.bf16.msra.mxu0 0
      %2173 = vmatprep.subr.bf16.mxu0 0
      %2174 = vmatpush1.bf16.msra.mxu0 0
      %2175 = vmatprep.subr.bf16.mxu0 0
      %2176 = vmatpush1.bf16.msra.mxu0 0
      %2177 = vmatprep.subr.bf16.mxu0 0
      %2178 = vmatpush1.bf16.msra.mxu0 0
      %2179 = vmatprep.subr.bf16.mxu0 0
      %2180 = vmatpush1.bf16.msra.mxu0 0
      %2181 = vmatprep.subr.bf16.mxu0 0
      %2182 = vmatpush1.bf16.msra.mxu0 0
      %2183 = vmatprep.subr.bf16.mxu0 0
      %2184 = vmatpush1.bf16.msra.mxu0 0
      %2185 = vmatprep.subr.bf16.mxu0 0
      %2186 = vmatpush1.bf16.msra.mxu0 0
      %2187 = vmatprep.subr.bf16.mxu0 0
      %2188 = vmatpush1.bf16.msra.mxu0 0
      %2189 = vmatprep.subr.bf16.mxu0 0
      %2190 = vmatpush1.bf16.msra.mxu0 0
      %2191 = vmatprep.subr.bf16.mxu0 0
      %2192 = vmatpush1.bf16.msra.mxu0 0
      %2193 = vmatprep.subr.bf16.mxu0 0
      %2194 = vmatpush1.bf16.msra.mxu0 0
      %2195 = vmatprep.subr.bf16.mxu0 0
      %2196 = vmatpush1.bf16.msra.mxu0 0
      %2197 = vmatprep.mubr.bf16.mxu0 0
      %2198 = vmatmul.mubr.bf16.gmra.mrb[0].mxu0 %v2160
      %v2199 = vpop.f32.mrb[0].mxu0
      %v2200 = vadd.f32 0.0, %v2199
      %v2201 = vpop.f32.mrb[0].mxu0
      %v2202 = vpop.f32.mrb[0].mxu0
      %v2203 = vpop.f32.mrb[0].mxu0
      %2204 = vdwg.mxu0
      %2206 = vrot.lane.b32.xlu0 %v1916, 32
      %v2207 = vpop.permute.xlu0 %2206
      %2210 = vrot.lane.b32.xlu0 %v2058, 64
      %v2211 = vpop.permute.xlu0 %2210
      %2214 = vrot.lane.b32.xlu0 %v2200, 96
      %v2215 = vpop.permute.xlu0 %2214
      %v2217 = vsel %vm793, %v1771, %v2207
      %v2218 = vsel %vm1340, %v2217, %v2211
      %v2219 = vsel %vm1342, %v2218, %v2215
      %v2220 = vpack.c.bf16 %v2219, %v2219
      %v2221 = vld [vmem:[%s8] sm:$0xf]
      %v2222 = vld [vmem:[%s8 + $0x4] sm:$0xf]
      %v2223 = vld [vmem:[%s8 + $0x8] sm:$0xf]
      %v2224 = vld [vmem:[%s8 + $0xc] sm:$0xf]
      %v2225 = vld [vmem:[%s8 + $0x10] sm:$0xf]
      %v2226 = vld [vmem:[%s8 + $0x14] sm:$0xf]
      %v2227 = vld [vmem:[%s8 + $0x18] sm:$0xf]
      %v2228 = vld [vmem:[%s8 + $0x1c] sm:$0xf]
      %v2229 = vld [vmem:[%s8 + $0x20] sm:$0xf]
      %v2230 = vld [vmem:[%s8 + $0x24] sm:$0xf]
      %v2231 = vld [vmem:[%s8 + $0x28] sm:$0xf]
      %v2232 = vld [vmem:[%s8 + $0x2c] sm:$0xf]
      %v2233 = vld [vmem:[%s8 + $0x30] sm:$0xf]
      %v2234 = vld [vmem:[%s8 + $0x34] sm:$0xf]
      %v2235 = vld [vmem:[%s8 + $0x38] sm:$0xf]
      %v2236 = vld [vmem:[%s8 + $0x3c] sm:$0xf]
      %v2237 = vld [vmem:[%s9] sm:$0x1]
      %v2239 = vlaneseq
      %v2240 = vshrl.u32 %v2239, 7
      %v2241 = vsub.s32 0, %v2240
      %v2242 = vrot.slane %v2237, %v2241
      %v2260 = vunpack.c.l.b16 %v2221
      %v2261 = vunpack.c.l.b16 %v2222
      %v2262 = vunpack.c.l.b16 %v2223
      %v2263 = vunpack.c.l.b16 %v2224
      %v2264 = vunpack.c.l.b16 %v2225
      %v2265 = vunpack.c.l.b16 %v2226
      %v2266 = vunpack.c.l.b16 %v2227
      %v2267 = vunpack.c.l.b16 %v2228
      %v2268 = vunpack.c.l.b16 %v2229
      %v2269 = vunpack.c.l.b16 %v2230
      %v2270 = vunpack.c.l.b16 %v2231
      %v2271 = vunpack.c.l.b16 %v2232
      %v2272 = vunpack.c.l.b16 %v2233
      %v2273 = vunpack.c.l.b16 %v2234
      %v2274 = vunpack.c.l.b16 %v2235
      %v2275 = vunpack.c.l.b16 %v2236
      %v2276 = vpack.c.b16 %v2261, %v2260
      %v2277 = vpack.c.b16 %v2263, %v2262
      %v2278 = vpack.c.b16 %v2265, %v2264
      %v2279 = vpack.c.b16 %v2267, %v2266
      %v2280 = vpack.c.b16 %v2269, %v2268
      %v2281 = vpack.c.b16 %v2271, %v2270
      %v2282 = vpack.c.b16 %v2273, %v2272
      %v2283 = vpack.c.b16 %v2275, %v2274
      %2292 = vmatprep.subr.bf16.mxu0 0
      %2293 = vmatpush1.bf16.msra.mxu0 %v2276
      %2294 = vmatprep.subr.bf16.mxu0 0
      %2295 = vmatpush1.bf16.msra.mxu0 %v2277
      %2296 = vmatprep.subr.bf16.mxu0 0
      %2297 = vmatpush1.bf16.msra.mxu0 %v2278
      %2298 = vmatprep.subr.bf16.mxu0 0
      %2299 = vmatpush1.bf16.msra.mxu0 %v2279
      %2300 = vmatprep.subr.bf16.mxu0 0
      %2301 = vmatpush1.bf16.msra.mxu0 %v2280
      %2302 = vmatprep.subr.bf16.mxu0 0
      %2303 = vmatpush1.bf16.msra.mxu0 %v2281
      %2304 = vmatprep.subr.bf16.mxu0 0
      %2305 = vmatpush1.bf16.msra.mxu0 %v2282
      %2306 = vmatprep.subr.bf16.mxu0 0
      %2307 = vmatpush1.bf16.msra.mxu0 %v2283
      %2308 = vmatprep.subr.bf16.mxu0 0
      %2309 = vmatpush1.bf16.msra.mxu0 0
      %2310 = vmatprep.subr.bf16.mxu0 0
      %2311 = vmatpush1.bf16.msra.mxu0 0
      %2312 = vmatprep.subr.bf16.mxu0 0
      %2313 = vmatpush1.bf16.msra.mxu0 0
      %2314 = vmatprep.subr.bf16.mxu0 0
      %2315 = vmatpush1.bf16.msra.mxu0 0
      %2316 = vmatprep.subr.bf16.mxu0 0
      %2317 = vmatpush1.bf16.msra.mxu0 0
      %2318 = vmatprep.subr.bf16.mxu0 0
      %2319 = vmatpush1.bf16.msra.mxu0 0
      %2320 = vmatprep.subr.bf16.mxu0 0
      %2321 = vmatpush1.bf16.msra.mxu0 0
      %2322 = vmatprep.subr.bf16.mxu0 0
      %2323 = vmatpush1.bf16.msra.mxu0 0
      %2324 = vmatprep.mubr.bf16.mxu0 0
      %2325 = vmatmul.mubr.bf16.gmra.mrb[0].mxu0 %v2220
      %v2326 = vpop.f32.mrb[0].mxu0
      %v2327 = vadd.f32 %v2242, %v2326
      %v2328 = vpop.f32.mrb[0].mxu0
      %v2329 = vpop.f32.mrb[0].mxu0
      %v2330 = vpop.f32.mrb[0].mxu0
      %2331 = vdwg.mxu0
      %v2332 = vadd.f32 %v1484, %v2327
      %2333 = vadd.xlane.f32.xlu0 %v2332
      %v2334 = vpop.xlane.xlu0 %2333
      %v2335 = vmul.f32 %v2334, %v1459
      %v2336 = vsub.f32 %v2332, %v2335
      %v2337 = vmul.f32 %v2336, %v2336
      %2338 = vadd.xlane.f32.xlu0 %v2337
      %v2339 = vpop.xlane.xlu0 %2338
      %v2340 = vmul.f32 %v2339, %v1459
      %v2341 = vadd.f32 %v2340, 1e-05
      %v2342 = vrsqrt.pop %v2341
      %v2343 = vmul.f32 %v2336, %v2342
      %v2344 = vld [vmem:[%s16] sm:$0x1]
      %v2346 = vlaneseq
      %v2347 = vshrl.u32 %v2346, 7
      %v2348 = vsub.s32 0, %v2347
      %v2349 = vrot.slane %v2344, %v2348
      %v2351 = vmul.f32 %v2343, %v2349
      %v2352 = vld [vmem:[%s17] sm:$0x1]
      %v2354 = vlaneseq
      %v2355 = vshrl.u32 %v2354, 7
      %v2356 = vsub.s32 0, %v2355
      %v2357 = vrot.slane %v2352, %v2356
      %v2359 = vadd.f32 %v2351, %v2357
      %v2360 = vpack.c.bf16 %v2359, %v2359
      %v2361 = vld [vmem:[%s10] sm:$0xff]
      %v2362 = vld [vmem:[%s10 + $0x8] sm:$0xff]
      %v2363 = vld [vmem:[%s10 + $0x10] sm:$0xff]
      %v2364 = vld [vmem:[%s10 + $0x18] sm:$0xff]
      %v2365 = vld [vmem:[%s10 + $0x20] sm:$0xff]
      %v2366 = vld [vmem:[%s10 + $0x28] sm:$0xff]
      %v2367 = vld [vmem:[%s10 + $0x30] sm:$0xff]
      %v2368 = vld [vmem:[%s10 + $0x38] sm:$0xff]
      %v2369 = vld [vmem:[%s10 + $0x40] sm:$0xff]
      %v2370 = vld [vmem:[%s10 + $0x48] sm:$0xff]
      %v2371 = vld [vmem:[%s10 + $0x50] sm:$0xff]
      %v2372 = vld [vmem:[%s10 + $0x58] sm:$0xff]
      %v2373 = vld [vmem:[%s10 + $0x60] sm:$0xff]
      %v2374 = vld [vmem:[%s10 + $0x68] sm:$0xff]
      %v2375 = vld [vmem:[%s10 + $0x70] sm:$0xff]
      %v2376 = vld [vmem:[%s10 + $0x78] sm:$0xff]
      %v2377 = vld [vmem:[%s11] sm:$0x3]
      %v2379 = vlaneseq
      %v2380 = vshrl.u32 %v2379, 7
      %v2381 = vsub.s32 0, %v2380
      %v2382 = vrot.slane %v2377, %v2381
      %v2383 = vlaneseq
      %v2384 = vshrl.u32 %v2383, 7
      %v2385 = vsub.s32 1, %v2384
      %v2386 = vrot.slane %v2377, %v2385
      %v2405 = vunpack.c.l.b16 %v2361
      %v2406 = vunpack.c.h.b16 %v2361
      %v2407 = vunpack.c.l.b16 %v2362
      %v2408 = vunpack.c.h.b16 %v2362
      %v2409 = vunpack.c.l.b16 %v2363
      %v2410 = vunpack.c.h.b16 %v2363
      %v2411 = vunpack.c.l.b16 %v2364
      %v2412 = vunpack.c.h.b16 %v2364
      %v2413 = vunpack.c.l.b16 %v2365
      %v2414 = vunpack.c.h.b16 %v2365
      %v2415 = vunpack.c.l.b16 %v2366
      %v2416 = vunpack.c.h.b16 %v2366
      %v2417 = vunpack.c.l.b16 %v2367
      %v2418 = vunpack.c.h.b16 %v2367
      %v2419 = vunpack.c.l.b16 %v2368
      %v2420 = vunpack.c.h.b16 %v2368
      %v2421 = vunpack.c.l.b16 %v2369
      %v2422 = vunpack.c.h.b16 %v2369
      %v2423 = vunpack.c.l.b16 %v2370
      %v2424 = vunpack.c.h.b16 %v2370
      %v2425 = vunpack.c.l.b16 %v2371
      %v2426 = vunpack.c.h.b16 %v2371
      %v2427 = vunpack.c.l.b16 %v2372
      %v2428 = vunpack.c.h.b16 %v2372
      %v2429 = vunpack.c.l.b16 %v2373
      %v2430 = vunpack.c.h.b16 %v2373
      %v2431 = vunpack.c.l.b16 %v2374
      %v2432 = vunpack.c.h.b16 %v2374
      %v2433 = vunpack.c.l.b16 %v2375
      %v2434 = vunpack.c.h.b16 %v2375
      %v2435 = vunpack.c.l.b16 %v2376
      %v2436 = vunpack.c.h.b16 %v2376
      %v2437 = vpack.c.b16 %v2407, %v2405
      %v2438 = vpack.c.b16 %v2408, %v2406
      %v2439 = vpack.c.b16 %v2411, %v2409
      %v2440 = vpack.c.b16 %v2412, %v2410
      %v2441 = vpack.c.b16 %v2415, %v2413
      %v2442 = vpack.c.b16 %v2416, %v2414
      %v2443 = vpack.c.b16 %v2419, %v2417
      %v2444 = vpack.c.b16 %v2420, %v2418
      %v2445 = vpack.c.b16 %v2423, %v2421
      %v2446 = vpack.c.b16 %v2424, %v2422
      %v2447 = vpack.c.b16 %v2427, %v2425
      %v2448 = vpack.c.b16 %v2428, %v2426
      %v2449 = vpack.c.b16 %v2431, %v2429
      %v2450 = vpack.c.b16 %v2432, %v2430
      %v2451 = vpack.c.b16 %v2435, %v2433
      %v2452 = vpack.c.b16 %v2436, %v2434
      %2469 = vmatprep.subr.bf16.mxu0 %v2438
      %2470 = vmatpush1.bf16.msra.mxu0 %v2437
      %2471 = vmatprep.subr.bf16.mxu0 %v2440
      %2472 = vmatpush1.bf16.msra.mxu0 %v2439
      %2473 = vmatprep.subr.bf16.mxu0 %v2442
      %2474 = vmatpush1.bf16.msra.mxu0 %v2441
      %2475 = vmatprep.subr.bf16.mxu0 %v2444
      %2476 = vmatpush1.bf16.msra.mxu0 %v2443
      %2477 = vmatprep.subr.bf16.mxu0 %v2446
      %2478 = vmatpush1.bf16.msra.mxu0 %v2445
      %2479 = vmatprep.subr.bf16.mxu0 %v2448
      %2480 = vmatpush1.bf16.msra.mxu0 %v2447
      %2481 = vmatprep.subr.bf16.mxu0 %v2450
      %2482 = vmatpush1.bf16.msra.mxu0 %v2449
      %2483 = vmatprep.subr.bf16.mxu0 %v2452
      %2484 = vmatpush1.bf16.msra.mxu0 %v2451
      %2485 = vmatprep.subr.bf16.mxu0 0
      %2486 = vmatpush1.bf16.msra.mxu0 0
      %2487 = vmatprep.subr.bf16.mxu0 0
      %2488 = vmatpush1.bf16.msra.mxu0 0
      %2489 = vmatprep.subr.bf16.mxu0 0
      %2490 = vmatpush1.bf16.msra.mxu0 0
      %2491 = vmatprep.subr.bf16.mxu0 0
      %2492 = vmatpush1.bf16.msra.mxu0 0
      %2493 = vmatprep.subr.bf16.mxu0 0
      %2494 = vmatpush1.bf16.msra.mxu0 0
      %2495 = vmatprep.subr.bf16.mxu0 0
      %2496 = vmatpush1.bf16.msra.mxu0 0
      %2497 = vmatprep.subr.bf16.mxu0 0
      %2498 = vmatpush1.bf16.msra.mxu0 0
      %2499 = vmatprep.subr.bf16.mxu0 0
      %2500 = vmatpush1.bf16.msra.mxu0 0
      %2501 = vmatprep.mubr.bf16.mxu0 0
      %2502 = vmatmul.mubr.bf16.gmra.mrb[0].mxu0 %v2360
      %v2503 = vpop.f32.mrb[0].mxu0
      %v2504 = vadd.f32 %v2382, %v2503
      %v2505 = vpop.f32.mrb[0].mxu0
      %v2506 = vadd.f32 %v2386, %v2505
      %v2507 = vpop.f32.mrb[0].mxu0
      %v2508 = vpop.f32.mrb[0].mxu0
      %2509 = vdwg.mxu0
      %v2510 = vmax.f32 %v2504, 0.0
      %v2511 = vmax.f32 %v2506, 0.0
      %v2512 = vpack.c.bf16 %v2510, %v2510
      %v2513 = vpack.c.bf16 %v2511, %v2511
      %v2514 = vld [vmem:[%s12] sm:$0xf]
      %v2515 = vld [vmem:[%s12 + $0x4] sm:$0xf]
      %v2516 = vld [vmem:[%s12 + $0x8] sm:$0xf]
      %v2517 = vld [vmem:[%s12 + $0xc] sm:$0xf]
      %v2518 = vld [vmem:[%s12 + $0x10] sm:$0xf]
      %v2519 = vld [vmem:[%s12 + $0x14] sm:$0xf]
      %v2520 = vld [vmem:[%s12 + $0x18] sm:$0xf]
      %v2521 = vld [vmem:[%s12 + $0x1c] sm:$0xf]
      %v2522 = vld [vmem:[%s12 + $0x20] sm:$0xf]
      %v2523 = vld [vmem:[%s12 + $0x24] sm:$0xf]
      %v2524 = vld [vmem:[%s12 + $0x28] sm:$0xf]
      %v2525 = vld [vmem:[%s12 + $0x2c] sm:$0xf]
      %v2526 = vld [vmem:[%s12 + $0x30] sm:$0xf]
      %v2527 = vld [vmem:[%s12 + $0x34] sm:$0xf]
      %v2528 = vld [vmem:[%s12 + $0x38] sm:$0xf]
      %v2529 = vld [vmem:[%s12 + $0x3c] sm:$0xf]
      %v2530 = vld [vmem:[%s12 + $0x40] sm:$0xf]
      %v2531 = vld [vmem:[%s12 + $0x44] sm:$0xf]
      %v2532 = vld [vmem:[%s12 + $0x48] sm:$0xf]
      %v2533 = vld [vmem:[%s12 + $0x4c] sm:$0xf]
      %v2534 = vld [vmem:[%s12 + $0x50] sm:$0xf]
      %v2535 = vld [vmem:[%s12 + $0x54] sm:$0xf]
      %v2536 = vld [vmem:[%s12 + $0x58] sm:$0xf]
      %v2537 = vld [vmem:[%s12 + $0x5c] sm:$0xf]
      %v2538 = vld [vmem:[%s12 + $0x60] sm:$0xf]
      %v2539 = vld [vmem:[%s12 + $0x64] sm:$0xf]
      %v2540 = vld [vmem:[%s12 + $0x68] sm:$0xf]
      %v2541 = vld [vmem:[%s12 + $0x6c] sm:$0xf]
      %v2542 = vld [vmem:[%s12 + $0x70] sm:$0xf]
      %v2543 = vld [vmem:[%s12 + $0x74] sm:$0xf]
      %v2544 = vld [vmem:[%s12 + $0x78] sm:$0xf]
      %v2545 = vld [vmem:[%s12 + $0x7c] sm:$0xf]
      %v2546 = vld [vmem:[%s13] sm:$0x1]
      %v2548 = vlaneseq
      %v2549 = vshrl.u32 %v2548, 7
      %v2550 = vsub.s32 0, %v2549
      %v2551 = vrot.slane %v2546, %v2550
      %v2585 = vunpack.c.l.b16 %v2514
      %v2586 = vunpack.c.l.b16 %v2515
      %v2587 = vunpack.c.l.b16 %v2516
      %v2588 = vunpack.c.l.b16 %v2517
      %v2589 = vunpack.c.l.b16 %v2518
      %v2590 = vunpack.c.l.b16 %v2519
      %v2591 = vunpack.c.l.b16 %v2520
      %v2592 = vunpack.c.l.b16 %v2521
      %v2593 = vunpack.c.l.b16 %v2522
      %v2594 = vunpack.c.l.b16 %v2523
      %v2595 = vunpack.c.l.b16 %v2524
      %v2596 = vunpack.c.l.b16 %v2525
      %v2597 = vunpack.c.l.b16 %v2526
      %v2598 = vunpack.c.l.b16 %v2527
      %v2599 = vunpack.c.l.b16 %v2528
      %v2600 = vunpack.c.l.b16 %v2529
      %v2601 = vunpack.c.l.b16 %v2530
      %v2602 = vunpack.c.l.b16 %v2531
      %v2603 = vunpack.c.l.b16 %v2532
      %v2604 = vunpack.c.l.b16 %v2533
      %v2605 = vunpack.c.l.b16 %v2534
      %v2606 = vunpack.c.l.b16 %v2535
      %v2607 = vunpack.c.l.b16 %v2536
      %v2608 = vunpack.c.l.b16 %v2537
      %v2609 = vunpack.c.l.b16 %v2538
      %v2610 = vunpack.c.l.b16 %v2539
      %v2611 = vunpack.c.l.b16 %v2540
      %v2612 = vunpack.c.l.b16 %v2541
      %v2613 = vunpack.c.l.b16 %v2542
      %v2614 = vunpack.c.l.b16 %v2543
      %v2615 = vunpack.c.l.b16 %v2544
      %v2616 = vunpack.c.l.b16 %v2545
      %v2617 = vpack.c.b16 %v2586, %v2585
      %v2618 = vpack.c.b16 %v2588, %v2587
      %v2619 = vpack.c.b16 %v2590, %v2589
      %v2620 = vpack.c.b16 %v2592, %v2591
      %v2621 = vpack.c.b16 %v2594, %v2593
      %v2622 = vpack.c.b16 %v2596, %v2595
      %v2623 = vpack.c.b16 %v2598, %v2597
      %v2624 = vpack.c.b16 %v2600, %v2599
      %v2625 = vpack.c.b16 %v2602, %v2601
      %v2626 = vpack.c.b16 %v2604, %v2603
      %v2627 = vpack.c.b16 %v2606, %v2605
      %v2628 = vpack.c.b16 %v2608, %v2607
      %v2629 = vpack.c.b16 %v2610, %v2609
      %v2630 = vpack.c.b16 %v2612, %v2611
      %v2631 = vpack.c.b16 %v2614, %v2613
      %v2632 = vpack.c.b16 %v2616, %v2615
      %2649 = vmatprep.subr.bf16.mxu0 0
      %2650 = vmatpush1.bf16.msra.mxu0 %v2617
      %2651 = vmatprep.subr.bf16.mxu0 0
      %2652 = vmatpush1.bf16.msra.mxu0 %v2618
      %2653 = vmatprep.subr.bf16.mxu0 0
      %2654 = vmatpush1.bf16.msra.mxu0 %v2619
      %2655 = vmatprep.subr.bf16.mxu0 0
      %2656 = vmatpush1.bf16.msra.mxu0 %v2620
      %2657 = vmatprep.subr.bf16.mxu0 0
      %2658 = vmatpush1.bf16.msra.mxu0 %v2621
      %2659 = vmatprep.subr.bf16.mxu0 0
      %2660 = vmatpush1.bf16.msra.mxu0 %v2622
      %2661 = vmatprep.subr.bf16.mxu0 0
      %2662 = vmatpush1.bf16.msra.mxu0 %v2623
      %2663 = vmatprep.subr.bf16.mxu0 0
      %2664 = vmatpush1.bf16.msra.mxu0 %v2624
      %2665 = vmatprep.subr.bf16.mxu0 0
      %2666 = vmatpush1.bf16.msra.mxu0 %v2625
      %2667 = vmatprep.subr.bf16.mxu0 0
      %2668 = vmatpush1.bf16.msra.mxu0 %v2626
      %2669 = vmatprep.subr.bf16.mxu0 0
      %2670 = vmatpush1.bf16.msra.mxu0 %v2627
      %2671 = vmatprep.subr.bf16.mxu0 0
      %2672 = vmatpush1.bf16.msra.mxu0 %v2628
      %2673 = vmatprep.subr.bf16.mxu0 0
      %2674 = vmatpush1.bf16.msra.mxu0 %v2629
      %2675 = vmatprep.subr.bf16.mxu0 0
      %2676 = vmatpush1.bf16.msra.mxu0 %v2630
      %2677 = vmatprep.subr.bf16.mxu0 0
      %2678 = vmatpush1.bf16.msra.mxu0 %v2631
      %2679 = vmatprep.subr.bf16.mxu0 0
      %2680 = vmatpush1.bf16.msra.mxu0 %v2632
      %2681 = vmatprep.mubr.bf16.mxu0 %v2513
      %2682 = vmatmul.mubr.bf16.gmra.mrb[0].mxu0 %v2512
      %v2683 = vpop.f32.mrb[0].mxu0
      %v2684 = vadd.f32 %v2551, %v2683
      %v2685 = vpop.f32.mrb[0].mxu0
      %v2686 = vpop.f32.mrb[0].mxu0
      %v2687 = vpop.f32.mrb[0].mxu0
      %2688 = vdwg.mxu0
      %v2689 = vadd.f32 %v2359, %v2684
      %2690 = vadd.xlane.f32.xlu0 %v2689
      %v2691 = vpop.xlane.xlu0 %2690
      %v2692 = vmul.f32 %v2691, %v1459
      %v2693 = vsub.f32 %v2689, %v2692
      %v2694 = vmul.f32 %v2693, %v2693
      %2695 = vadd.xlane.f32.xlu0 %v2694
      %v2696 = vpop.xlane.xlu0 %2695
      %v2697 = vmul.f32 %v2696, %v1459
      %v2698 = vadd.f32 %v2697, 1e-05
      %v2699 = vrsqrt.pop %v2698
      %v2700 = vmul.f32 %v2693, %v2699
      %v2701 = vld [vmem:[%s18] sm:$0x1]
      %v2703 = vlaneseq
      %v2704 = vshrl.u32 %v2703, 7
      %v2705 = vsub.s32 0, %v2704
      %v2706 = vrot.slane %v2701, %v2705
      %v2708 = vmul.f32 %v2700, %v2706
      %v2709 = vld [vmem:[%s19] sm:$0x1]
      %v2711 = vlaneseq
      %v2712 = vshrl.u32 %v2711, 7
      %v2713 = vsub.s32 0, %v2712
      %v2714 = vrot.slane %v2709, %v2713
      %v2716 = vadd.f32 %v2708, %v2714
      %2717 = vst [vmem:[%s641] sm:$0xff] %v2716
      %p2718 = scmp.lt.s32.totalorder %s31, 1
      %s2719 = scalar_select %p2718, %s31, 1
      %s2720 = smul.addr %s2719, 8
      %s2721 = scalar_lea.vmem %s20, %s2720
      // Predicated region
      $region101: #{decoder_forward.4} parent=99 // pred_check
        %p2722 = pneg %p479
      $region102: #{decoder_forward.4} parent=99 // pred_check_branch
        %2724 = sbr.rel (%p2722) target = $region104
      $region103: #{decoder_forward.4} parent=99 // pred_region
        _
      $region104: #{decoder_forward.4} parent=99 // pred_fallthru
        _
    $region100: #{decoder_forward.4} parent=5 // pred_fallthru
      _
    %p2725 = scmp.le.s32.totalorder 2, %s26
    // Predicated region
    $region105: #{decoder_forward.4} parent=5 // pred_check
      %p2726 = pneg %p2725
    $region106: #{decoder_forward.4} parent=5 // pred_check_branch
      %2728 = sbr.rel (%p2726) target = $region108
    $region107: #{decoder_forward.4} parent=5 // pred_region
      %s2729 = ssub.s32 %s26, 2
      // Predicated region
      $region109: #{decoder_forward.4} parent=107 // pred_check
        %p2730 = pneg %p485
      $region110: #{decoder_forward.4} parent=107 // pred_check_branch
        %2732 = sbr.rel (%p2730) target = $region112
      $region111: #{decoder_forward.4} parent=107 // pred_region
        %p2733 = scmp.lt.s32.totalorder %s32, 1
        %s2734 = scalar_select %p2733, %s32, 1
        %s2735 = smul.addr %s2734, 8
        %s2736 = scalar_lea.vmem %s20, %s2735
      $region112: #{decoder_forward.4} parent=107 // pred_fallthru
        _
    $region108: #{decoder_forward.4} parent=5 // pred_fallthru
      _
  $region6: #{decoder_forward.4} parent=0 // loop_footer
    %s30 = sadd.s32 1, %s26
  $region7: #{decoder_forward.4} parent=0 // loop_footer_branch
    %25 = sbr.rel target = $region3
  $region8: #{decoder_forward.4} parent=0 // loop_exit
    _

</llo_original>
